<compile_context>
chip_gen: v5e
topology: v5e:2x2
jax: 0.10.0
libtpu: 0.0.40
codegen_flags: <defaults>
</compile_context>

<pallas_src>
import math

import numpy as np
import jax
import jax.numpy as jnp
from jax.experimental import pallas as pl
from jax.experimental.pallas import tpu as pltpu

_SQRT_HALF = 0.7071067811865476
_LANE = 128            # TPU lane width; all feature dims are padded to this.
_GW = 3 * _LANE        # packed r|z|n gate width (128-aligned gate offsets)


# ----------------------------------------------------------------------------
# In-kernel math helpers (VPU / EUP friendly)
# ----------------------------------------------------------------------------
def _erf(x):
    # Abramowitz & Stegun 7.1.26 (max abs error ~1.5e-7).
    p = 0.3275911
    a1, a2, a3, a4, a5 = (0.254829592, -0.284496736, 1.421413741,
                          -1.453152027, 1.061405429)
    sign = jnp.where(x >= 0.0, 1.0, -1.0)
    ax = jnp.abs(x)
    t = 1.0 / (1.0 + p * ax)
    poly = ((((a5 * t + a4) * t + a3) * t + a2) * t + a1) * t
    return sign * (1.0 - poly * jnp.exp(-ax * ax))


def _gelu(x):
    # nn.GELU() default = exact erf GELU.
    return 0.5 * x * (1.0 + _erf(x * _SQRT_HALF))


def _sigmoid(x):
    # Exact identity; uses the EUP tanh unit.
    return 0.5 * (jnp.tanh(0.5 * x) + 1.0)


def _mm(a, b):
    # Default MXU precision, f32 accumulate.
    return jnp.dot(a, b, preferred_element_type=jnp.float32)


# ----------------------------------------------------------------------------
# Fused kernel: BatchNorm2d(S) + multi-layer GRU (wavefronted) + 4x(Linear+GELU)
#   x_ref  : (S, 8, 128)  padded time-major input (row b<B, lane c<F real)
#   gb_ref : (2, S, 8, 128) BN gamma (idx 0) / beta (idx 1), pre-broadcast
#   wg_ref : (L, 2, 128, 384) packed GRU weights: [l,0]=W_ih_rzn, [l,1]=W_hh_rzn
#   bg_ref : (L, 2, 8, 384) packed GRU biases: [l,0]=b_r|b_z|b_in, [l,1]=b_hn
#   wm_ref : (4, 128, 128) packed MLP weights
#   bm_ref : (4, 8, 128)   packed MLP biases
#   o_ref  : (S, 8, 128)   lane-dense padded output
#   gi0_ref: (S, 8, 384)   scratch: layer-0 input gates for all timesteps
#   hs_ref : (S, 8, 128)   scratch: last-layer hidden state per timestep
# ----------------------------------------------------------------------------
def make_fused_kernel(num_layers, S, B, F, eps=1e-5):
    L = num_layers
    R = S * 8
    inv_cnt = 1.0 / float(B * F)

    def kernel(x_ref, gb_ref, wg_ref, bg_ref, wm_ref, bm_ref,
               o_ref, gi0_ref, hs_ref):
        # ---- BatchNorm2d(S): training-mode stats per timestep over (B, C, D).
        # Per-(8,128)-tile sublane+lane reductions; padded rows/lanes are zero
        # so they add nothing to the sums; two-pass masked variance (exact f32).
        x3 = x_ref[...]                                            # (S,8,128)
        jrow = jax.lax.broadcasted_iota(jnp.int32, (S, 8, _LANE), 1)
        jcol = jax.lax.broadcasted_iota(jnp.int32, (S, 8, _LANE), 2)
        valid = jnp.logical_and(jrow < B, jcol < F)
        mean = jnp.sum(jnp.sum(x3, axis=2, keepdims=True),
                       axis=1, keepdims=True) * inv_cnt            # (S,1,1)
        cent = x3 - mean
        cm = jnp.where(valid, cent, 0.0)
        var = jnp.sum(jnp.sum(cm * cm, axis=2, keepdims=True),
                      axis=1, keepdims=True) * inv_cnt             # (S,1,1)
        inv = jax.lax.rsqrt(var + eps)
        xbn = (cent * inv) * gb_ref[0] + gb_ref[1]                  # (S,8,128)
        xbn2 = xbn.reshape(R, _LANE)                                # tile-aligned

        # ---- Layer-0 input-to-hidden gates for ALL timesteps: one matmul. ----
        gi0_ref[...] = (_mm(xbn2, wg_ref[0, 0]) +
                        bg_ref[0, 0, 0:1, :]).reshape(S, 8, _GW)

        # Hoisted small per-layer bias tiles used inside the step loop.
        bhn8 = [bg_ref[l, 1, :, 0:_LANE] for l in range(L)]         # (8,128)
        brzn8 = [None] + [bg_ref[l, 0] for l in range(1, L)]        # (8,384)

        # ---- Wavefronted multi-layer GRU recurrence. ----
        # Iteration k runs layer l at timestep t = k - l.  Layers are processed
        # in DECREASING order so h[l-1] still holds its step-t value when layer
        # l consumes it; the L recurrence chains are independent within an
        # iteration and can be interleaved by the scheduler.
        h = [jnp.zeros((8, _LANE), jnp.float32) for _ in range(L)]
        for k in range(S + L - 1):
            for l in range(L - 1, -1, -1):
                t = k - l
                if t < 0 or t >= S:
                    continue
                if l == 0:
                    gi = gi0_ref[t]                                  # (8,384)
                else:
                    gi = _mm(h[l - 1], wg_ref[l, 0]) + brzn8[l]      # (8,384)
                gh = _mm(h[l], wg_ref[l, 1])                         # one fused
                r = _sigmoid(gi[:, 0:_LANE] + gh[:, 0:_LANE])        # h@Whh_rzn
                z = _sigmoid(gi[:, _LANE:2 * _LANE] + gh[:, _LANE:2 * _LANE])
                n = jnp.tanh(gi[:, 2 * _LANE:_GW] +
                             r * (gh[:, 2 * _LANE:_GW] + bhn8[l]))
                h[l] = (1.0 - z) * n + z * h[l]
                if l == L - 1:
                    hs_ref[t] = h[l]                                 # aligned store

        # ---- MLP: 4 x (Linear + exact-erf GELU), batched over all rows. ----
        a = hs_ref[...].reshape(R, _LANE)
        for m in range(4):
            a = _gelu(_mm(a, wm_ref[m]) + bm_ref[m, 0:1, :])
        o_ref[...] = a.reshape(S, 8, _LANE)                          # lane-dense

    return kernel


# ----------------------------------------------------------------------------
# Parameters (deterministic, PyTorch-style uniform init)
# ----------------------------------------------------------------------------
def init_params(key, input_dim, hidden_dim, num_layers, output_dim, seq_len):
    F = 3 * input_dim
    keys = iter(jax.random.split(key, 64))
    params = {
        "bn_gamma": jnp.ones((seq_len,), jnp.float32),
        "bn_beta": jnp.zeros((seq_len,), jnp.float32),
        "gru": [],
        "mlp": [],
    }
    k = 1.0 / math.sqrt(hidden_dim)
    for layer in range(num_layers):
        in_size = F if layer == 0 else hidden_dim
        w_ih = jax.random.uniform(next(keys), (3 * hidden_dim, in_size),
                                  jnp.float32, -k, k)
        w_hh = jax.random.uniform(next(keys), (3 * hidden_dim, hidden_dim),
                                  jnp.float32, -k, k)
        b_ih = jax.random.uniform(next(keys), (3 * hidden_dim,), jnp.float32, -k, k)
        b_hh = jax.random.uniform(next(keys), (3 * hidden_dim,), jnp.float32, -k, k)
        params["gru"].append((w_ih, w_hh, b_ih, b_hh))
    for fin, fout in [(hidden_dim, 64), (64, 32), (32, 16), (16, output_dim)]:
        bound = 1.0 / math.sqrt(fin)
        w = jax.random.uniform(next(keys), (fout, fin), jnp.float32, -bound, bound)
        b = jax.random.uniform(next(keys), (fout,), jnp.float32, -bound, bound)
        params["mlp"].append((w, b))
    return params


def pack_params(params, hidden_dim, n_channel, input_dim):
    """Zero-pad every weight/bias to K=128 rows and 128-aligned gate/output
    lanes, host-side, so the kernel never lane-slices below a vreg tile."""
    H = hidden_dim
    F = n_channel * input_dim
    L = len(params["gru"])
    assert F <= _LANE and H <= _LANE

    w_gru = np.zeros((L, 2, _LANE, _GW), np.float32)
    b_gru = np.zeros((L, 2, 8, _GW), np.float32)
    for l, (w_ih, w_hh, b_ih, b_hh) in enumerate(params["gru"]):
        w_ih = np.asarray(w_ih); w_hh = np.asarray(w_hh)
        b_ih = np.asarray(b_ih); b_hh = np.asarray(b_hh)
        K = F if l == 0 else H
        for g in range(3):                                  # gates r, z, n
            w_gru[l, 0, :K, g * _LANE:g * _LANE + H] = w_ih[g * H:(g + 1) * H, :].T
            w_gru[l, 1, :H, g * _LANE:g * _LANE + H] = w_hh[g * H:(g + 1) * H, :].T
        # r/z biases folded (b_ih + b_hh); n split: b_in outside r*(.), b_hn inside.
        b_gru[l, 0, :, 0:H] = b_ih[0:H] + b_hh[0:H]
        b_gru[l, 0, :, _LANE:_LANE + H] = b_ih[H:2 * H] + b_hh[H:2 * H]
        b_gru[l, 0, :, 2 * _LANE:2 * _LANE + H] = b_ih[2 * H:3 * H]
        b_gru[l, 1, :, 0:H] = b_hh[2 * H:3 * H]

    w_mlp = np.zeros((4, _LANE, _LANE), np.float32)
    b_mlp = np.zeros((4, 8, _LANE), np.float32)
    for m, (w, b) in enumerate(params["mlp"]):
        w = np.asarray(w); b = np.asarray(b)
        fout, fin = w.shape
        assert fin <= _LANE and fout <= _LANE
        w_mlp[m, :fin, :fout] = w.T
        b_mlp[m, :, :fout] = b

    return dict(w_gru=jnp.asarray(w_gru), b_gru=jnp.asarray(b_gru),
                w_mlp=jnp.asarray(w_mlp), b_mlp=jnp.asarray(b_mlp),
                bn_gamma=jnp.asarray(params["bn_gamma"]),
                bn_beta=jnp.asarray(params["bn_beta"]))


# ----------------------------------------------------------------------------
# Forward wrapper: layout plumbing in plain JAX, all compute in ONE pallas_call.
# ----------------------------------------------------------------------------
def gru_mlp_softmax_forward(x, packed, hidden_dim, num_layers, output_dim):
    B, S, C, D = x.shape
    F = C * D
    assert B <= 8 and F <= _LANE and hidden_dim <= _LANE and output_dim <= _LANE
    R = S * 8

    # (B,S,C,D) -> time-major, padded to 8 sublanes x 128 lanes per timestep:
    # entry (t, b, c) is real for b < B, c < F; the rest is zero padding whose
    # downstream garbage never reaches a real output (padded weight rows are 0).
    xt = jnp.transpose(x, (1, 0, 2, 3)).reshape(S, B, F).astype(jnp.float32)
    x_p = jnp.zeros((S, 8, _LANE), jnp.float32).at[:, :B, :F].set(xt)

    # BN gamma/beta per timestep, pre-broadcast to the padded layout and merged
    # into ONE input (single DMA).
    g = jnp.broadcast_to(packed["bn_gamma"].astype(jnp.float32)[:, None, None],
                         (S, 8, _LANE))
    be = jnp.broadcast_to(packed["bn_beta"].astype(jnp.float32)[:, None, None],
                          (S, 8, _LANE))
    gb = jnp.stack([g, be], axis=0)

    kernel = make_fused_kernel(num_layers, S, B, F)
    vmem = pl.BlockSpec(memory_space=pltpu.MemorySpace.VMEM)
    y = pl.pallas_call(
        kernel,
        out_shape=jax.ShapeDtypeStruct((S, 8, _LANE), jnp.float32),
        in_specs=[vmem] * 6,
        out_specs=vmem,
        scratch_shapes=[pltpu.VMEM((S, 8, _GW), jnp.float32),     # layer-0 gi
                        pltpu.VMEM((S, 8, _LANE), jnp.float32)],  # last-layer h_t
    )(x_p, gb, packed["w_gru"], packed["b_gru"],
      packed["w_mlp"], packed["b_mlp"])

    # (t, b) rows, lanes 0:out  ->  (B, S, out) -> (B*S, out) == out.view(B*S, out)
    y = y[:, :B, :output_dim]
    return jnp.transpose(y, (1, 0, 2)).reshape(B * S, output_dim)


# ----------------------------------------------------------------------------
# Pure-JAX reference (for numerical check)
# ----------------------------------------------------------------------------
def reference_forward(x, params, hidden_dim, num_layers, output_dim):
    B, S, C, D = x.shape
    H = hidden_dim
    gamma, beta = params["bn_gamma"], params["bn_beta"]
    mean = jnp.mean(x, axis=(0, 2, 3), keepdims=True)
    var = jnp.mean((x - mean) ** 2, axis=(0, 2, 3), keepdims=True)
    xn = (x - mean) / jnp.sqrt(var + 1e-5)
    xn = xn * gamma[None, :, None, None] + beta[None, :, None, None]
    inp = xn.reshape(B, S, C * D)
    for layer in range(num_layers):
        w_ih, w_hh, b_ih, b_hh = params["gru"][layer]
        h = jnp.zeros((B, H), jnp.float32)
        outs = []
        for t in range(S):
            xt = inp[:, t, :]
            gi = xt @ w_ih.T + b_ih
            gh = h @ w_hh.T + b_hh
            r = jax.nn.sigmoid(gi[:, :H] + gh[:, :H])
            z = jax.nn.sigmoid(gi[:, H:2 * H] + gh[:, H:2 * H])
            n = jnp.tanh(gi[:, 2 * H:] + r * gh[:, 2 * H:])
            h = (1.0 - z) * n + z * h
            outs.append(h)
        inp = jnp.stack(outs, axis=1)
    out = inp
    for (w, b) in params["mlp"]:
        out = jax.nn.gelu(out @ w.T + b, approximate=False)
    return out.reshape(B * S, output_dim)


# ----------------------------------------------------------------------------
if __name__ == "__main__":
    # Shapes implied by the module: seq_len must be 10 (BatchNorm2d(10)),
    # n_channel must be 3 (GRU input size = 3 * input_dim).
    B, S, C, D = 2, 10, 3, 16        # batch, seq, channels, input_dim
    HIDDEN, LAYERS, OUT = 32, 2, 8

    key = jax.random.PRNGKey(0)
    kx, kp = jax.random.split(key)
    x = jax.random.normal(kx, (B, S, C, D), dtype=jnp.float32)
    params = init_params(kp, D, HIDDEN, LAYERS, OUT, S)
    packed = pack_params(params, HIDDEN, C, D)

    fwd = jax.jit(lambda xx: gru_mlp_softmax_forward(xx, packed, HIDDEN, LAYERS, OUT))
    out = jax.block_until_ready(fwd(x))

    ref = reference_forward(x, params, HIDDEN, LAYERS, OUT)
    assert out.shape == (B * S, OUT), out.shape
    # Default (single-pass) MXU precision in the GRU/MLP matmuls -> 1e-2 tol.
    np.testing.assert_allclose(np.asarray(out), np.asarray(ref),
                               rtol=1e-2, atol=1e-2)
    print("KERNEL_OK")
</pallas_src>

<mosaic_0001>
module attributes {stable_mosaic.version = 11 : i64} {
  func.func @kernel(%arg0: memref<10x8x128xf32, #tpu.memory_space<vmem>>, %arg1: memref<2x10x8x128xf32, #tpu.memory_space<vmem>>, %arg2: memref<2x2x128x384xf32, #tpu.memory_space<vmem>>, %arg3: memref<2x2x8x384xf32, #tpu.memory_space<vmem>>, %arg4: memref<4x128x128xf32, #tpu.memory_space<vmem>>, %arg5: memref<4x8x128xf32, #tpu.memory_space<vmem>>, %arg6: memref<10x8x128xf32, #tpu.memory_space<vmem>>, %arg7: memref<10x8x384xf32, #tpu.memory_space<vmem>>, %arg8: memref<10x8x128xf32, #tpu.memory_space<vmem>>) attributes {dimension_semantics = [], scalar_prefetch = 0 : i64, scratch_operands = 2 : i64, tpu.core_type = #tpu.core_type<tc>} {
    %c0 = arith.constant 0 : index
    %c0_0 = arith.constant 0 : index
    %c0_1 = arith.constant 0 : index
    %0 = vector.load %arg0[%c0, %c0_0, %c0_1] : memref<10x8x128xf32, #tpu.memory_space<vmem>>, vector<10x8x128xf32>
    %1 = tpu.iota {dimensions = array<i32: 1>} : vector<10x8x128xi32>
    %2 = tpu.iota {dimensions = array<i32: 2>} : vector<10x8x128xi32>
    %c2_i32 = arith.constant 2 : i32
    %3 = vector.broadcast %c2_i32 : i32 to vector<10x8x128xi32>
    %4 = arith.cmpi slt, %1, %3 : vector<10x8x128xi32>
    %c48_i32 = arith.constant 48 : i32
    %5 = vector.broadcast %c48_i32 : i32 to vector<10x8x128xi32>
    %6 = arith.cmpi slt, %2, %5 : vector<10x8x128xi32>
    %7 = arith.andi %4, %6 : vector<10x8x128xi1>
    %cst = arith.constant dense<0.000000e+00> : vector<10x8xf32>
    %8 = vector.multi_reduction <add>, %0, %cst [2] : vector<10x8x128xf32> to vector<10x8xf32>
    %9 = vector.shape_cast %8 : vector<10x8xf32> to vector<10x8x1xf32>
    %cst_2 = arith.constant dense<0.000000e+00> : vector<10x1xf32>
    %10 = vector.multi_reduction <add>, %9, %cst_2 [1] : vector<10x8x1xf32> to vector<10x1xf32>
    %11 = vector.shape_cast %10 : vector<10x1xf32> to vector<10x1x1xf32>
    %cst_3 = arith.constant 0.010416667 : f32
    %12 = vector.broadcast %cst_3 : f32 to vector<10x1x1xf32>
    %13 = arith.mulf %11, %12 : vector<10x1x1xf32>
    %14 = vector.broadcast %13 : vector<10x1x1xf32> to vector<10x8x128xf32>
    %15 = arith.subf %0, %14 : vector<10x8x128xf32>
    %cst_4 = arith.constant 0.000000e+00 : f32
    %16 = vector.broadcast %cst_4 : f32 to vector<10x8x128xf32>
    %17 = arith.select %7, %15, %16 : vector<10x8x128xi1>, vector<10x8x128xf32>
    %18 = arith.mulf %17, %17 : vector<10x8x128xf32>
    %cst_5 = arith.constant dense<0.000000e+00> : vector<10x8xf32>
    %19 = vector.multi_reduction <add>, %18, %cst_5 [2] : vector<10x8x128xf32> to vector<10x8xf32>
    %20 = vector.shape_cast %19 : vector<10x8xf32> to vector<10x8x1xf32>
    %cst_6 = arith.constant dense<0.000000e+00> : vector<10x1xf32>
    %21 = vector.multi_reduction <add>, %20, %cst_6 [1] : vector<10x8x1xf32> to vector<10x1xf32>
    %22 = vector.shape_cast %21 : vector<10x1xf32> to vector<10x1x1xf32>
    %cst_7 = arith.constant 0.010416667 : f32
    %23 = vector.broadcast %cst_7 : f32 to vector<10x1x1xf32>
    %24 = arith.mulf %22, %23 : vector<10x1x1xf32>
    %cst_8 = arith.constant 9.99999974E-6 : f32
    %25 = vector.broadcast %cst_8 : f32 to vector<10x1x1xf32>
    %26 = arith.addf %24, %25 : vector<10x1x1xf32>
    %27 = math.rsqrt %26 : vector<10x1x1xf32>
    %28 = vector.broadcast %27 : vector<10x1x1xf32> to vector<10x8x128xf32>
    %29 = arith.mulf %15, %28 : vector<10x8x128xf32>
    %c0_9 = arith.constant 0 : index
    %c0_10 = arith.constant 0 : index
    %c0_11 = arith.constant 0 : index
    %c0_12 = arith.constant 0 : index
    %30 = vector.load %arg1[%c0_9, %c0_10, %c0_11, %c0_12] : memref<2x10x8x128xf32, #tpu.memory_space<vmem>>, vector<1x10x8x128xf32>
    %31 = vector.shape_cast %30 : vector<1x10x8x128xf32> to vector<10x8x128xf32>
    %32 = arith.mulf %29, %31 : vector<10x8x128xf32>
    %c1 = arith.constant 1 : index
    %c0_13 = arith.constant 0 : index
    %c0_14 = arith.constant 0 : index
    %c0_15 = arith.constant 0 : index
    %33 = vector.load %arg1[%c1, %c0_13, %c0_14, %c0_15] : memref<2x10x8x128xf32, #tpu.memory_space<vmem>>, vector<1x10x8x128xf32>
    %34 = vector.shape_cast %33 : vector<1x10x8x128xf32> to vector<10x8x128xf32>
    %35 = arith.addf %32, %34 : vector<10x8x128xf32>
    %36 = vector.shape_cast %35 : vector<10x8x128xf32> to vector<80x128xf32>
    %c0_16 = arith.constant 0 : index
    %c0_17 = arith.constant 0 : index
    %c0_18 = arith.constant 0 : index
    %c0_19 = arith.constant 0 : index
    %37 = vector.load %arg2[%c0_16, %c0_17, %c0_18, %c0_19] : memref<2x2x128x384xf32, #tpu.memory_space<vmem>>, vector<1x1x128x384xf32>
    %38 = vector.shape_cast %37 : vector<1x1x128x384xf32> to vector<128x384xf32>
    %cst_20 = arith.constant dense<0.000000e+00> : vector<80x384xf32>
    %39 = tpu.matmul %36, %38, %cst_20 {dimension_numbers = #tpu.dot_dimension_numbers<[1], [0], [0], [1], [0, 0, 1, 1], [], []>} : vector<80x128xf32>, vector<128x384xf32>, vector<80x384xf32> -> vector<80x384xf32>
    %c0_21 = arith.constant 0 : index
    %c0_22 = arith.constant 0 : index
    %c0_23 = arith.constant 0 : index
    %c0_24 = arith.constant 0 : index
    %40 = vector.load %arg3[%c0_21, %c0_22, %c0_23, %c0_24] : memref<2x2x8x384xf32, #tpu.memory_space<vmem>>, vector<1x1x1x384xf32>
    %41 = vector.shape_cast %40 : vector<1x1x1x384xf32> to vector<1x384xf32>
    %42 = vector.broadcast %41 : vector<1x384xf32> to vector<80x384xf32>
    %43 = arith.addf %39, %42 : vector<80x384xf32>
    %44 = vector.shape_cast %43 : vector<80x384xf32> to vector<10x8x384xf32>
    %c0_25 = arith.constant 0 : index
    %c0_26 = arith.constant 0 : index
    %c0_27 = arith.constant 0 : index
    %45 = vector.load %arg7[%c0_25, %c0_26, %c0_27] : memref<10x8x384xf32, #tpu.memory_space<vmem>>, vector<10x8x384xf32>
    tpu.vector_store %arg7[%c0_25, %c0_26, %c0_27], %44 {strides = array<i32>} : memref<10x8x384xf32, #tpu.memory_space<vmem>>, vector<10x8x384xf32>,
    %c0_28 = arith.constant 0 : index
    %c1_29 = arith.constant 1 : index
    %c0_30 = arith.constant 0 : index
    %c0_31 = arith.constant 0 : index
    %46 = vector.load %arg3[%c0_28, %c1_29, %c0_30, %c0_31] : memref<2x2x8x384xf32, #tpu.memory_space<vmem>>, vector<1x1x8x128xf32>
    %47 = vector.shape_cast %46 : vector<1x1x8x128xf32> to vector<8x128xf32>
    %c1_32 = arith.constant 1 : index
    %c1_33 = arith.constant 1 : index
    %c0_34 = arith.constant 0 : index
    %c0_35 = arith.constant 0 : index
    %48 = vector.load %arg3[%c1_32, %c1_33, %c0_34, %c0_35] : memref<2x2x8x384xf32, #tpu.memory_space<vmem>>, vector<1x1x8x128xf32>
    %49 = vector.shape_cast %48 : vector<1x1x8x128xf32> to vector<8x128xf32>
    %c1_36 = arith.constant 1 : index
    %c0_37 = arith.constant 0 : index
    %c0_38 = arith.constant 0 : index
    %c0_39 = arith.constant 0 : index
    %50 = vector.load %arg3[%c1_36, %c0_37, %c0_38, %c0_39] : memref<2x2x8x384xf32, #tpu.memory_space<vmem>>, vector<1x1x8x384xf32>
    %51 = vector.shape_cast %50 : vector<1x1x8x384xf32> to vector<8x384xf32>
    %cst_40 = arith.constant 0.000000e+00 : f32
    %52 = vector.broadcast %cst_40 : f32 to vector<8x128xf32>
    %cst_41 = arith.constant 0.000000e+00 : f32
    %53 = vector.broadcast %cst_41 : f32 to vector<8x128xf32>
    %c0_42 = arith.constant 0 : index
    %c0_43 = arith.constant 0 : index
    %c0_44 = arith.constant 0 : index
    %54 = vector.load %arg7[%c0_42, %c0_43, %c0_44] : memref<10x8x384xf32, #tpu.memory_space<vmem>>, vector<1x8x384xf32>
    %55 = vector.shape_cast %54 : vector<1x8x384xf32> to vector<8x384xf32>
    %c0_45 = arith.constant 0 : index
    %c1_46 = arith.constant 1 : index
    %c0_47 = arith.constant 0 : index
    %c0_48 = arith.constant 0 : index
    %56 = vector.load %arg2[%c0_45, %c1_46, %c0_47, %c0_48] : memref<2x2x128x384xf32, #tpu.memory_space<vmem>>, vector<1x1x128x384xf32>
    %57 = vector.shape_cast %56 : vector<1x1x128x384xf32> to vector<128x384xf32>
    %cst_49 = arith.constant dense<0.000000e+00> : vector<8x384xf32>
    %58 = tpu.matmul %52, %57, %cst_49 {dimension_numbers = #tpu.dot_dimension_numbers<[1], [0], [0], [1], [0, 0, 1, 1], [], []>} : vector<8x128xf32>, vector<128x384xf32>, vector<8x384xf32> -> vector<8x384xf32>
    %59 = vector.extract_strided_slice %55 {offsets = [0, 0], sizes = [8, 128], strides = [1, 1]} : vector<8x384xf32> to vector<8x128xf32>
    %60 = vector.extract_strided_slice %58 {offsets = [0, 0], sizes = [8, 128], strides = [1, 1]} : vector<8x384xf32> to vector<8x128xf32>
    %61 = arith.addf %59, %60 : vector<8x128xf32>
    %cst_50 = arith.constant 5.000000e-01 : f32
    %62 = vector.broadcast %cst_50 : f32 to vector<8x128xf32>
    %63 = arith.mulf %62, %61 : vector<8x128xf32>
    %64 = math.tanh %63 : vector<8x128xf32>
    %cst_51 = arith.constant 1.000000e+00 : f32
    %65 = vector.broadcast %cst_51 : f32 to vector<8x128xf32>
    %66 = arith.addf %64, %65 : vector<8x128xf32>
    %cst_52 = arith.constant 5.000000e-01 : f32
    %67 = vector.broadcast %cst_52 : f32 to vector<8x128xf32>
    %68 = arith.mulf %67, %66 : vector<8x128xf32>
    %69 = vector.extract_strided_slice %55 {offsets = [0, 128], sizes = [8, 128], strides = [1, 1]} : vector<8x384xf32> to vector<8x128xf32>
    %70 = vector.extract_strided_slice %58 {offsets = [0, 128], sizes = [8, 128], strides = [1, 1]} : vector<8x384xf32> to vector<8x128xf32>
    %71 = arith.addf %69, %70 : vector<8x128xf32>
    %cst_53 = arith.constant 5.000000e-01 : f32
    %72 = vector.broadcast %cst_53 : f32 to vector<8x128xf32>
    %73 = arith.mulf %72, %71 : vector<8x128xf32>
    %74 = math.tanh %73 : vector<8x128xf32>
    %cst_54 = arith.constant 1.000000e+00 : f32
    %75 = vector.broadcast %cst_54 : f32 to vector<8x128xf32>
    %76 = arith.addf %74, %75 : vector<8x128xf32>
    %cst_55 = arith.constant 5.000000e-01 : f32
    %77 = vector.broadcast %cst_55 : f32 to vector<8x128xf32>
    %78 = arith.mulf %77, %76 : vector<8x128xf32>
    %79 = vector.extract_strided_slice %55 {offsets = [0, 256], sizes = [8, 128], strides = [1, 1]} : vector<8x384xf32> to vector<8x128xf32>
    %80 = vector.extract_strided_slice %58 {offsets = [0, 256], sizes = [8, 128], strides = [1, 1]} : vector<8x384xf32> to vector<8x128xf32>
    %81 = arith.addf %80, %47 : vector<8x128xf32>
    %82 = arith.mulf %68, %81 : vector<8x128xf32>
    %83 = arith.addf %79, %82 : vector<8x128xf32>
    %84 = math.tanh %83 : vector<8x128xf32>
    %cst_56 = arith.constant 1.000000e+00 : f32
    %85 = vector.broadcast %cst_56 : f32 to vector<8x128xf32>
    %86 = arith.subf %85, %78 : vector<8x128xf32>
    %87 = arith.mulf %86, %84 : vector<8x128xf32>
    %88 = arith.mulf %78, %52 : vector<8x128xf32>
    %89 = arith.addf %87, %88 : vector<8x128xf32>
    %c1_57 = arith.constant 1 : index
    %c0_58 = arith.constant 0 : index
    %c0_59 = arith.constant 0 : index
    %c0_60 = arith.constant 0 : index
    %90 = vector.load %arg2[%c1_57, %c0_58, %c0_59, %c0_60] : memref<2x2x128x384xf32, #tpu.memory_space<vmem>>, vector<1x1x128x384xf32>
    %91 = vector.shape_cast %90 : vector<1x1x128x384xf32> to vector<128x384xf32>
    %cst_61 = arith.constant dense<0.000000e+00> : vector<8x384xf32>
    %92 = tpu.matmul %89, %91, %cst_61 {dimension_numbers = #tpu.dot_dimension_numbers<[1], [0], [0], [1], [0, 0, 1, 1], [], []>} : vector<8x128xf32>, vector<128x384xf32>, vector<8x384xf32> -> vector<8x384xf32>
    %93 = arith.addf %92, %51 : vector<8x384xf32>
    %c1_62 = arith.constant 1 : index
    %c1_63 = arith.constant 1 : index
    %c0_64 = arith.constant 0 : index
    %c0_65 = arith.constant 0 : index
    %94 = vector.load %arg2[%c1_62, %c1_63, %c0_64, %c0_65] : memref<2x2x128x384xf32, #tpu.memory_space<vmem>>, vector<1x1x128x384xf32>
    %95 = vector.shape_cast %94 : vector<1x1x128x384xf32> to vector<128x384xf32>
    %cst_66 = arith.constant dense<0.000000e+00> : vector<8x384xf32>
    %96 = tpu.matmul %53, %95, %cst_66 {dimension_numbers = #tpu.dot_dimension_numbers<[1], [0], [0], [1], [0, 0, 1, 1], [], []>} : vector<8x128xf32>, vector<128x384xf32>, vector<8x384xf32> -> vector<8x384xf32>
    %97 = vector.extract_strided_slice %93 {offsets = [0, 0], sizes = [8, 128], strides = [1, 1]} : vector<8x384xf32> to vector<8x128xf32>
    %98 = vector.extract_strided_slice %96 {offsets = [0, 0], sizes = [8, 128], strides = [1, 1]} : vector<8x384xf32> to vector<8x128xf32>
    %99 = arith.addf %97, %98 : vector<8x128xf32>
    %cst_67 = arith.constant 5.000000e-01 : f32
    %100 = vector.broadcast %cst_67 : f32 to vector<8x128xf32>
    %101 = arith.mulf %100, %99 : vector<8x128xf32>
    %102 = math.tanh %101 : vector<8x128xf32>
    %cst_68 = arith.constant 1.000000e+00 : f32
    %103 = vector.broadcast %cst_68 : f32 to vector<8x128xf32>
    %104 = arith.addf %102, %103 : vector<8x128xf32>
    %cst_69 = arith.constant 5.000000e-01 : f32
    %105 = vector.broadcast %cst_69 : f32 to vector<8x128xf32>
    %106 = arith.mulf %105, %104 : vector<8x128xf32>
    %107 = vector.extract_strided_slice %93 {offsets = [0, 128], sizes = [8, 128], strides = [1, 1]} : vector<8x384xf32> to vector<8x128xf32>
    %108 = vector.extract_strided_slice %96 {offsets = [0, 128], sizes = [8, 128], strides = [1, 1]} : vector<8x384xf32> to vector<8x128xf32>
    %109 = arith.addf %107, %108 : vector<8x128xf32>
    %cst_70 = arith.constant 5.000000e-01 : f32
    %110 = vector.broadcast %cst_70 : f32 to vector<8x128xf32>
    %111 = arith.mulf %110, %109 : vector<8x128xf32>
    %112 = math.tanh %111 : vector<8x128xf32>
    %cst_71 = arith.constant 1.000000e+00 : f32
    %113 = vector.broadcast %cst_71 : f32 to vector<8x128xf32>
    %114 = arith.addf %112, %113 : vector<8x128xf32>
    %cst_72 = arith.constant 5.000000e-01 : f32
    %115 = vector.broadcast %cst_72 : f32 to vector<8x128xf32>
    %116 = arith.mulf %115, %114 : vector<8x128xf32>
    %117 = vector.extract_strided_slice %93 {offsets = [0, 256], sizes = [8, 128], strides = [1, 1]} : vector<8x384xf32> to vector<8x128xf32>
    %118 = vector.extract_strided_slice %96 {offsets = [0, 256], sizes = [8, 128], strides = [1, 1]} : vector<8x384xf32> to vector<8x128xf32>
    %119 = arith.addf %118, %49 : vector<8x128xf32>
    %120 = arith.mulf %106, %119 : vector<8x128xf32>
    %121 = arith.addf %117, %120 : vector<8x128xf32>
    %122 = math.tanh %121 : vector<8x128xf32>
    %cst_73 = arith.constant 1.000000e+00 : f32
    %123 = vector.broadcast %cst_73 : f32 to vector<8x128xf32>
    %124 = arith.subf %123, %116 : vector<8x128xf32>
    %125 = arith.mulf %124, %122 : vector<8x128xf32>
    %126 = arith.mulf %116, %53 : vector<8x128xf32>
    %127 = arith.addf %125, %126 : vector<8x128xf32>
    %c0_74 = arith.constant 0 : index
    %c0_75 = arith.constant 0 : index
    %c0_76 = arith.constant 0 : index
    %128 = vector.load %arg8[%c0_74, %c0_75, %c0_76] : memref<10x8x128xf32, #tpu.memory_space<vmem>>, vector<1x8x128xf32>
    %129 = vector.shape_cast %128 : vector<1x8x128xf32> to vector<8x128xf32>
    %130 = vector.shape_cast %127 : vector<8x128xf32> to vector<1x8x128xf32>
    tpu.vector_store %arg8[%c0_74, %c0_75, %c0_76], %130 {strides = array<i32>} : memref<10x8x128xf32, #tpu.memory_space<vmem>>, vector<1x8x128xf32>,
    %c1_77 = arith.constant 1 : index
    %c0_78 = arith.constant 0 : index
    %c0_79 = arith.constant 0 : index
    %131 = vector.load %arg7[%c1_77, %c0_78, %c0_79] : memref<10x8x384xf32, #tpu.memory_space<vmem>>, vector<1x8x384xf32>
    %132 = vector.shape_cast %131 : vector<1x8x384xf32> to vector<8x384xf32>
    %c0_80 = arith.constant 0 : index
    %c1_81 = arith.constant 1 : index
    %c0_82 = arith.constant 0 : index
    %c0_83 = arith.constant 0 : index
    %133 = vector.load %arg2[%c0_80, %c1_81, %c0_82, %c0_83] : memref<2x2x128x384xf32, #tpu.memory_space<vmem>>, vector<1x1x128x384xf32>
    %134 = vector.shape_cast %133 : vector<1x1x128x384xf32> to vector<128x384xf32>
    %cst_84 = arith.constant dense<0.000000e+00> : vector<8x384xf32>
    %135 = tpu.matmul %89, %134, %cst_84 {dimension_numbers = #tpu.dot_dimension_numbers<[1], [0], [0], [1], [0, 0, 1, 1], [], []>} : vector<8x128xf32>, vector<128x384xf32>, vector<8x384xf32> -> vector<8x384xf32>
    %136 = vector.extract_strided_slice %132 {offsets = [0, 0], sizes = [8, 128], strides = [1, 1]} : vector<8x384xf32> to vector<8x128xf32>
    %137 = vector.extract_strided_slice %135 {offsets = [0, 0], sizes = [8, 128], strides = [1, 1]} : vector<8x384xf32> to vector<8x128xf32>
    %138 = arith.addf %136, %137 : vector<8x128xf32>
    %cst_85 = arith.constant 5.000000e-01 : f32
    %139 = vector.broadcast %cst_85 : f32 to vector<8x128xf32>
    %140 = arith.mulf %139, %138 : vector<8x128xf32>
    %141 = math.tanh %140 : vector<8x128xf32>
    %cst_86 = arith.constant 1.000000e+00 : f32
    %142 = vector.broadcast %cst_86 : f32 to vector<8x128xf32>
    %143 = arith.addf %141, %142 : vector<8x128xf32>
    %cst_87 = arith.constant 5.000000e-01 : f32
    %144 = vector.broadcast %cst_87 : f32 to vector<8x128xf32>
    %145 = arith.mulf %144, %143 : vector<8x128xf32>
    %146 = vector.extract_strided_slice %132 {offsets = [0, 128], sizes = [8, 128], strides = [1, 1]} : vector<8x384xf32> to vector<8x128xf32>
    %147 = vector.extract_strided_slice %135 {offsets = [0, 128], sizes = [8, 128], strides = [1, 1]} : vector<8x384xf32> to vector<8x128xf32>
    %148 = arith.addf %146, %147 : vector<8x128xf32>
    %cst_88 = arith.constant 5.000000e-01 : f32
    %149 = vector.broadcast %cst_88 : f32 to vector<8x128xf32>
    %150 = arith.mulf %149, %148 : vector<8x128xf32>
    %151 = math.tanh %150 : vector<8x128xf32>
    %cst_89 = arith.constant 1.000000e+00 : f32
    %152 = vector.broadcast %cst_89 : f32 to vector<8x128xf32>
    %153 = arith.addf %151, %152 : vector<8x128xf32>
    %cst_90 = arith.constant 5.000000e-01 : f32
    %154 = vector.broadcast %cst_90 : f32 to vector<8x128xf32>
    %155 = arith.mulf %154, %153 : vector<8x128xf32>
    %156 = vector.extract_strided_slice %132 {offsets = [0, 256], sizes = [8, 128], strides = [1, 1]} : vector<8x384xf32> to vector<8x128xf32>
    %157 = vector.extract_strided_slice %135 {offsets = [0, 256], sizes = [8, 128], strides = [1, 1]} : vector<8x384xf32> to vector<8x128xf32>
    %158 = arith.addf %157, %47 : vector<8x128xf32>
    %159 = arith.mulf %145, %158 : vector<8x128xf32>
    %160 = arith.addf %156, %159 : vector<8x128xf32>
    %161 = math.tanh %160 : vector<8x128xf32>
    %cst_91 = arith.constant 1.000000e+00 : f32
    %162 = vector.broadcast %cst_91 : f32 to vector<8x128xf32>
    %163 = arith.subf %162, %155 : vector<8x128xf32>
    %164 = arith.mulf %163, %161 : vector<8x128xf32>
    %165 = arith.mulf %155, %89 : vector<8x128xf32>
    %166 = arith.addf %164, %165 : vector<8x128xf32>
    %c1_92 = arith.constant 1 : index
    %c0_93 = arith.constant 0 : index
    %c0_94 = arith.constant 0 : index
    %c0_95 = arith.constant 0 : index
    %167 = vector.load %arg2[%c1_92, %c0_93, %c0_94, %c0_95] : memref<2x2x128x384xf32, #tpu.memory_space<vmem>>, vector<1x1x128x384xf32>
    %168 = vector.shape_cast %167 : vector<1x1x128x384xf32> to vector<128x384xf32>
    %cst_96 = arith.constant dense<0.000000e+00> : vector<8x384xf32>
    %169 = tpu.matmul %166, %168, %cst_96 {dimension_numbers = #tpu.dot_dimension_numbers<[1], [0], [0], [1], [0, 0, 1, 1], [], []>} : vector<8x128xf32>, vector<128x384xf32>, vector<8x384xf32> -> vector<8x384xf32>
    %170 = arith.addf %169, %51 : vector<8x384xf32>
    %c1_97 = arith.constant 1 : index
    %c1_98 = arith.constant 1 : index
    %c0_99 = arith.constant 0 : index
    %c0_100 = arith.constant 0 : index
    %171 = vector.load %arg2[%c1_97, %c1_98, %c0_99, %c0_100] : memref<2x2x128x384xf32, #tpu.memory_space<vmem>>, vector<1x1x128x384xf32>
    %172 = vector.shape_cast %171 : vector<1x1x128x384xf32> to vector<128x384xf32>
    %cst_101 = arith.constant dense<0.000000e+00> : vector<8x384xf32>
    %173 = tpu.matmul %127, %172, %cst_101 {dimension_numbers = #tpu.dot_dimension_numbers<[1], [0], [0], [1], [0, 0, 1, 1], [], []>} : vector<8x128xf32>, vector<128x384xf32>, vector<8x384xf32> -> vector<8x384xf32>
    %174 = vector.extract_strided_slice %170 {offsets = [0, 0], sizes = [8, 128], strides = [1, 1]} : vector<8x384xf32> to vector<8x128xf32>
    %175 = vector.extract_strided_slice %173 {offsets = [0, 0], sizes = [8, 128], strides = [1, 1]} : vector<8x384xf32> to vector<8x128xf32>
    %176 = arith.addf %174, %175 : vector<8x128xf32>
    %cst_102 = arith.constant 5.000000e-01 : f32
    %177 = vector.broadcast %cst_102 : f32 to vector<8x128xf32>
    %178 = arith.mulf %177, %176 : vector<8x128xf32>
    %179 = math.tanh %178 : vector<8x128xf32>
    %cst_103 = arith.constant 1.000000e+00 : f32
    %180 = vector.broadcast %cst_103 : f32 to vector<8x128xf32>
    %181 = arith.addf %179, %180 : vector<8x128xf32>
    %cst_104 = arith.constant 5.000000e-01 : f32
    %182 = vector.broadcast %cst_104 : f32 to vector<8x128xf32>
    %183 = arith.mulf %182, %181 : vector<8x128xf32>
    %184 = vector.extract_strided_slice %170 {offsets = [0, 128], sizes = [8, 128], strides = [1, 1]} : vector<8x384xf32> to vector<8x128xf32>
    %185 = vector.extract_strided_slice %173 {offsets = [0, 128], sizes = [8, 128], strides = [1, 1]} : vector<8x384xf32> to vector<8x128xf32>
    %186 = arith.addf %184, %185 : vector<8x128xf32>
    %cst_105 = arith.constant 5.000000e-01 : f32
    %187 = vector.broadcast %cst_105 : f32 to vector<8x128xf32>
    %188 = arith.mulf %187, %186 : vector<8x128xf32>
    %189 = math.tanh %188 : vector<8x128xf32>
    %cst_106 = arith.constant 1.000000e+00 : f32
    %190 = vector.broadcast %cst_106 : f32 to vector<8x128xf32>
    %191 = arith.addf %189, %190 : vector<8x128xf32>
    %cst_107 = arith.constant 5.000000e-01 : f32
    %192 = vector.broadcast %cst_107 : f32 to vector<8x128xf32>
    %193 = arith.mulf %192, %191 : vector<8x128xf32>
    %194 = vector.extract_strided_slice %170 {offsets = [0, 256], sizes = [8, 128], strides = [1, 1]} : vector<8x384xf32> to vector<8x128xf32>
    %195 = vector.extract_strided_slice %173 {offsets = [0, 256], sizes = [8, 128], strides = [1, 1]} : vector<8x384xf32> to vector<8x128xf32>
    %196 = arith.addf %195, %49 : vector<8x128xf32>
    %197 = arith.mulf %183, %196 : vector<8x128xf32>
    %198 = arith.addf %194, %197 : vector<8x128xf32>
    %199 = math.tanh %198 : vector<8x128xf32>
    %cst_108 = arith.constant 1.000000e+00 : f32
    %200 = vector.broadcast %cst_108 : f32 to vector<8x128xf32>
    %201 = arith.subf %200, %193 : vector<8x128xf32>
    %202 = arith.mulf %201, %199 : vector<8x128xf32>
    %203 = arith.mulf %193, %127 : vector<8x128xf32>
    %204 = arith.addf %202, %203 : vector<8x128xf32>
    %c1_109 = arith.constant 1 : index
    %c0_110 = arith.constant 0 : index
    %c0_111 = arith.constant 0 : index
    %205 = vector.load %arg8[%c1_109, %c0_110, %c0_111] : memref<10x8x128xf32, #tpu.memory_space<vmem>>, vector<1x8x128xf32>
    %206 = vector.shape_cast %205 : vector<1x8x128xf32> to vector<8x128xf32>
    %207 = vector.shape_cast %204 : vector<8x128xf32> to vector<1x8x128xf32>
    tpu.vector_store %arg8[%c1_109, %c0_110, %c0_111], %207 {strides = array<i32>} : memref<10x8x128xf32, #tpu.memory_space<vmem>>, vector<1x8x128xf32>,
    %c2 = arith.constant 2 : index
    %c0_112 = arith.constant 0 : index
    %c0_113 = arith.constant 0 : index
    %208 = vector.load %arg7[%c2, %c0_112, %c0_113] : memref<10x8x384xf32, #tpu.memory_space<vmem>>, vector<1x8x384xf32>
    %209 = vector.shape_cast %208 : vector<1x8x384xf32> to vector<8x384xf32>
    %c0_114 = arith.constant 0 : index
    %c1_115 = arith.constant 1 : index
    %c0_116 = arith.constant 0 : index
    %c0_117 = arith.constant 0 : index
    %210 = vector.load %arg2[%c0_114, %c1_115, %c0_116, %c0_117] : memref<2x2x128x384xf32, #tpu.memory_space<vmem>>, vector<1x1x128x384xf32>
    %211 = vector.shape_cast %210 : vector<1x1x128x384xf32> to vector<128x384xf32>
    %cst_118 = arith.constant dense<0.000000e+00> : vector<8x384xf32>
    %212 = tpu.matmul %166, %211, %cst_118 {dimension_numbers = #tpu.dot_dimension_numbers<[1], [0], [0], [1], [0, 0, 1, 1], [], []>} : vector<8x128xf32>, vector<128x384xf32>, vector<8x384xf32> -> vector<8x384xf32>
    %213 = vector.extract_strided_slice %209 {offsets = [0, 0], sizes = [8, 128], strides = [1, 1]} : vector<8x384xf32> to vector<8x128xf32>
    %214 = vector.extract_strided_slice %212 {offsets = [0, 0], sizes = [8, 128], strides = [1, 1]} : vector<8x384xf32> to vector<8x128xf32>
    %215 = arith.addf %213, %214 : vector<8x128xf32>
    %cst_119 = arith.constant 5.000000e-01 : f32
    %216 = vector.broadcast %cst_119 : f32 to vector<8x128xf32>
    %217 = arith.mulf %216, %215 : vector<8x128xf32>
    %218 = math.tanh %217 : vector<8x128xf32>
    %cst_120 = arith.constant 1.000000e+00 : f32
    %219 = vector.broadcast %cst_120 : f32 to vector<8x128xf32>
    %220 = arith.addf %218, %219 : vector<8x128xf32>
    %cst_121 = arith.constant 5.000000e-01 : f32
    %221 = vector.broadcast %cst_121 : f32 to vector<8x128xf32>
    %222 = arith.mulf %221, %220 : vector<8x128xf32>
    %223 = vector.extract_strided_slice %209 {offsets = [0, 128], sizes = [8, 128], strides = [1, 1]} : vector<8x384xf32> to vector<8x128xf32>
    %224 = vector.extract_strided_slice %212 {offsets = [0, 128], sizes = [8, 128], strides = [1, 1]} : vector<8x384xf32> to vector<8x128xf32>
    %225 = arith.addf %223, %224 : vector<8x128xf32>
    %cst_122 = arith.constant 5.000000e-01 : f32
    %226 = vector.broadcast %cst_122 : f32 to vector<8x128xf32>
    %227 = arith.mulf %226, %225 : vector<8x128xf32>
    %228 = math.tanh %227 : vector<8x128xf32>
    %cst_123 = arith.constant 1.000000e+00 : f32
    %229 = vector.broadcast %cst_123 : f32 to vector<8x128xf32>
    %230 = arith.addf %228, %229 : vector<8x128xf32>
    %cst_124 = arith.constant 5.000000e-01 : f32
    %231 = vector.broadcast %cst_124 : f32 to vector<8x128xf32>
    %232 = arith.mulf %231, %230 : vector<8x128xf32>
    %233 = vector.extract_strided_slice %209 {offsets = [0, 256], sizes = [8, 128], strides = [1, 1]} : vector<8x384xf32> to vector<8x128xf32>
    %234 = vector.extract_strided_slice %212 {offsets = [0, 256], sizes = [8, 128], strides = [1, 1]} : vector<8x384xf32> to vector<8x128xf32>
    %235 = arith.addf %234, %47 : vector<8x128xf32>
    %236 = arith.mulf %222, %235 : vector<8x128xf32>
    %237 = arith.addf %233, %236 : vector<8x128xf32>
    %238 = math.tanh %237 : vector<8x128xf32>
    %cst_125 = arith.constant 1.000000e+00 : f32
    %239 = vector.broadcast %cst_125 : f32 to vector<8x128xf32>
    %240 = arith.subf %239, %232 : vector<8x128xf32>
    %241 = arith.mulf %240, %238 : vector<8x128xf32>
    %242 = arith.mulf %232, %166 : vector<8x128xf32>
    %243 = arith.addf %241, %242 : vector<8x128xf32>
    %c1_126 = arith.constant 1 : index
    %c0_127 = arith.constant 0 : index
    %c0_128 = arith.constant 0 : index
    %c0_129 = arith.constant 0 : index
    %244 = vector.load %arg2[%c1_126, %c0_127, %c0_128, %c0_129] : memref<2x2x128x384xf32, #tpu.memory_space<vmem>>, vector<1x1x128x384xf32>
    %245 = vector.shape_cast %244 : vector<1x1x128x384xf32> to vector<128x384xf32>
    %cst_130 = arith.constant dense<0.000000e+00> : vector<8x384xf32>
    %246 = tpu.matmul %243, %245, %cst_130 {dimension_numbers = #tpu.dot_dimension_numbers<[1], [0], [0], [1], [0, 0, 1, 1], [], []>} : vector<8x128xf32>, vector<128x384xf32>, vector<8x384xf32> -> vector<8x384xf32>
    %247 = arith.addf %246, %51 : vector<8x384xf32>
    %c1_131 = arith.constant 1 : index
    %c1_132 = arith.constant 1 : index
    %c0_133 = arith.constant 0 : index
    %c0_134 = arith.constant 0 : index
    %248 = vector.load %arg2[%c1_131, %c1_132, %c0_133, %c0_134] : memref<2x2x128x384xf32, #tpu.memory_space<vmem>>, vector<1x1x128x384xf32>
    %249 = vector.shape_cast %248 : vector<1x1x128x384xf32> to vector<128x384xf32>
    %cst_135 = arith.constant dense<0.000000e+00> : vector<8x384xf32>
    %250 = tpu.matmul %204, %249, %cst_135 {dimension_numbers = #tpu.dot_dimension_numbers<[1], [0], [0], [1], [0, 0, 1, 1], [], []>} : vector<8x128xf32>, vector<128x384xf32>, vector<8x384xf32> -> vector<8x384xf32>
    %251 = vector.extract_strided_slice %247 {offsets = [0, 0], sizes = [8, 128], strides = [1, 1]} : vector<8x384xf32> to vector<8x128xf32>
    %252 = vector.extract_strided_slice %250 {offsets = [0, 0], sizes = [8, 128], strides = [1, 1]} : vector<8x384xf32> to vector<8x128xf32>
    %253 = arith.addf %251, %252 : vector<8x128xf32>
    %cst_136 = arith.constant 5.000000e-01 : f32
    %254 = vector.broadcast %cst_136 : f32 to vector<8x128xf32>
    %255 = arith.mulf %254, %253 : vector<8x128xf32>
    %256 = math.tanh %255 : vector<8x128xf32>
    %cst_137 = arith.constant 1.000000e+00 : f32
    %257 = vector.broadcast %cst_137 : f32 to vector<8x128xf32>
    %258 = arith.addf %256, %257 : vector<8x128xf32>
    %cst_138 = arith.constant 5.000000e-01 : f32
    %259 = vector.broadcast %cst_138 : f32 to vector<8x128xf32>
    %260 = arith.mulf %259, %258 : vector<8x128xf32>
    %261 = vector.extract_strided_slice %247 {offsets = [0, 128], sizes = [8, 128], strides = [1, 1]} : vector<8x384xf32> to vector<8x128xf32>
    %262 = vector.extract_strided_slice %250 {offsets = [0, 128], sizes = [8, 128], strides = [1, 1]} : vector<8x384xf32> to vector<8x128xf32>
    %263 = arith.addf %261, %262 : vector<8x128xf32>
    %cst_139 = arith.constant 5.000000e-01 : f32
    %264 = vector.broadcast %cst_139 : f32 to vector<8x128xf32>
    %265 = arith.mulf %264, %263 : vector<8x128xf32>
    %266 = math.tanh %265 : vector<8x128xf32>
    %cst_140 = arith.constant 1.000000e+00 : f32
    %267 = vector.broadcast %cst_140 : f32 to vector<8x128xf32>
    %268 = arith.addf %266, %267 : vector<8x128xf32>
    %cst_141 = arith.constant 5.000000e-01 : f32
    %269 = vector.broadcast %cst_141 : f32 to vector<8x128xf32>
    %270 = arith.mulf %269, %268 : vector<8x128xf32>
    %271 = vector.extract_strided_slice %247 {offsets = [0, 256], sizes = [8, 128], strides = [1, 1]} : vector<8x384xf32> to vector<8x128xf32>
    %272 = vector.extract_strided_slice %250 {offsets = [0, 256], sizes = [8, 128], strides = [1, 1]} : vector<8x384xf32> to vector<8x128xf32>
    %273 = arith.addf %272, %49 : vector<8x128xf32>
    %274 = arith.mulf %260, %273 : vector<8x128xf32>
    %275 = arith.addf %271, %274 : vector<8x128xf32>
    %276 = math.tanh %275 : vector<8x128xf32>
    %cst_142 = arith.constant 1.000000e+00 : f32
    %277 = vector.broadcast %cst_142 : f32 to vector<8x128xf32>
    %278 = arith.subf %277, %270 : vector<8x128xf32>
    %279 = arith.mulf %278, %276 : vector<8x128xf32>
    %280 = arith.mulf %270, %204 : vector<8x128xf32>
    %281 = arith.addf %279, %280 : vector<8x128xf32>
    %c2_143 = arith.constant 2 : index
    %c0_144 = arith.constant 0 : index
    %c0_145 = arith.constant 0 : index
    %282 = vector.load %arg8[%c2_143, %c0_144, %c0_145] : memref<10x8x128xf32, #tpu.memory_space<vmem>>, vector<1x8x128xf32>
    %283 = vector.shape_cast %282 : vector<1x8x128xf32> to vector<8x128xf32>
    %284 = vector.shape_cast %281 : vector<8x128xf32> to vector<1x8x128xf32>
    tpu.vector_store %arg8[%c2_143, %c0_144, %c0_145], %284 {strides = array<i32>} : memref<10x8x128xf32, #tpu.memory_space<vmem>>, vector<1x8x128xf32>,
    %c3 = arith.constant 3 : index
    %c0_146 = arith.constant 0 : index
    %c0_147 = arith.constant 0 : index
    %285 = vector.load %arg7[%c3, %c0_146, %c0_147] : memref<10x8x384xf32, #tpu.memory_space<vmem>>, vector<1x8x384xf32>
    %286 = vector.shape_cast %285 : vector<1x8x384xf32> to vector<8x384xf32>
    %c0_148 = arith.constant 0 : index
    %c1_149 = arith.constant 1 : index
    %c0_150 = arith.constant 0 : index
    %c0_151 = arith.constant 0 : index
    %287 = vector.load %arg2[%c0_148, %c1_149, %c0_150, %c0_151] : memref<2x2x128x384xf32, #tpu.memory_space<vmem>>, vector<1x1x128x384xf32>
    %288 = vector.shape_cast %287 : vector<1x1x128x384xf32> to vector<128x384xf32>
    %cst_152 = arith.constant dense<0.000000e+00> : vector<8x384xf32>
    %289 = tpu.matmul %243, %288, %cst_152 {dimension_numbers = #tpu.dot_dimension_numbers<[1], [0], [0], [1], [0, 0, 1, 1], [], []>} : vector<8x128xf32>, vector<128x384xf32>, vector<8x384xf32> -> vector<8x384xf32>
    %290 = vector.extract_strided_slice %286 {offsets = [0, 0], sizes = [8, 128], strides = [1, 1]} : vector<8x384xf32> to vector<8x128xf32>
    %291 = vector.extract_strided_slice %289 {offsets = [0, 0], sizes = [8, 128], strides = [1, 1]} : vector<8x384xf32> to vector<8x128xf32>
    %292 = arith.addf %290, %291 : vector<8x128xf32>
    %cst_153 = arith.constant 5.000000e-01 : f32
    %293 = vector.broadcast %cst_153 : f32 to vector<8x128xf32>
    %294 = arith.mulf %293, %292 : vector<8x128xf32>
    %295 = math.tanh %294 : vector<8x128xf32>
    %cst_154 = arith.constant 1.000000e+00 : f32
    %296 = vector.broadcast %cst_154 : f32 to vector<8x128xf32>
    %297 = arith.addf %295, %296 : vector<8x128xf32>
    %cst_155 = arith.constant 5.000000e-01 : f32
    %298 = vector.broadcast %cst_155 : f32 to vector<8x128xf32>
    %299 = arith.mulf %298, %297 : vector<8x128xf32>
    %300 = vector.extract_strided_slice %286 {offsets = [0, 128], sizes = [8, 128], strides = [1, 1]} : vector<8x384xf32> to vector<8x128xf32>
    %301 = vector.extract_strided_slice %289 {offsets = [0, 128], sizes = [8, 128], strides = [1, 1]} : vector<8x384xf32> to vector<8x128xf32>
    %302 = arith.addf %300, %301 : vector<8x128xf32>
    %cst_156 = arith.constant 5.000000e-01 : f32
    %303 = vector.broadcast %cst_156 : f32 to vector<8x128xf32>
    %304 = arith.mulf %303, %302 : vector<8x128xf32>
    %305 = math.tanh %304 : vector<8x128xf32>
    %cst_157 = arith.constant 1.000000e+00 : f32
    %306 = vector.broadcast %cst_157 : f32 to vector<8x128xf32>
    %307 = arith.addf %305, %306 : vector<8x128xf32>
    %cst_158 = arith.constant 5.000000e-01 : f32
    %308 = vector.broadcast %cst_158 : f32 to vector<8x128xf32>
    %309 = arith.mulf %308, %307 : vector<8x128xf32>
    %310 = vector.extract_strided_slice %286 {offsets = [0, 256], sizes = [8, 128], strides = [1, 1]} : vector<8x384xf32> to vector<8x128xf32>
    %311 = vector.extract_strided_slice %289 {offsets = [0, 256], sizes = [8, 128], strides = [1, 1]} : vector<8x384xf32> to vector<8x128xf32>
    %312 = arith.addf %311, %47 : vector<8x128xf32>
    %313 = arith.mulf %299, %312 : vector<8x128xf32>
    %314 = arith.addf %310, %313 : vector<8x128xf32>
    %315 = math.tanh %314 : vector<8x128xf32>
    %cst_159 = arith.constant 1.000000e+00 : f32
    %316 = vector.broadcast %cst_159 : f32 to vector<8x128xf32>
    %317 = arith.subf %316, %309 : vector<8x128xf32>
    %318 = arith.mulf %317, %315 : vector<8x128xf32>
    %319 = arith.mulf %309, %243 : vector<8x128xf32>
    %320 = arith.addf %318, %319 : vector<8x128xf32>
    %c1_160 = arith.constant 1 : index
    %c0_161 = arith.constant 0 : index
    %c0_162 = arith.constant 0 : index
    %c0_163 = arith.constant 0 : index
    %321 = vector.load %arg2[%c1_160, %c0_161, %c0_162, %c0_163] : memref<2x2x128x384xf32, #tpu.memory_space<vmem>>, vector<1x1x128x384xf32>
    %322 = vector.shape_cast %321 : vector<1x1x128x384xf32> to vector<128x384xf32>
    %cst_164 = arith.constant dense<0.000000e+00> : vector<8x384xf32>
    %323 = tpu.matmul %320, %322, %cst_164 {dimension_numbers = #tpu.dot_dimension_numbers<[1], [0], [0], [1], [0, 0, 1, 1], [], []>} : vector<8x128xf32>, vector<128x384xf32>, vector<8x384xf32> -> vector<8x384xf32>
    %324 = arith.addf %323, %51 : vector<8x384xf32>
    %c1_165 = arith.constant 1 : index
    %c1_166 = arith.constant 1 : index
    %c0_167 = arith.constant 0 : index
    %c0_168 = arith.constant 0 : index
    %325 = vector.load %arg2[%c1_165, %c1_166, %c0_167, %c0_168] : memref<2x2x128x384xf32, #tpu.memory_space<vmem>>, vector<1x1x128x384xf32>
    %326 = vector.shape_cast %325 : vector<1x1x128x384xf32> to vector<128x384xf32>
    %cst_169 = arith.constant dense<0.000000e+00> : vector<8x384xf32>
    %327 = tpu.matmul %281, %326, %cst_169 {dimension_numbers = #tpu.dot_dimension_numbers<[1], [0], [0], [1], [0, 0, 1, 1], [], []>} : vector<8x128xf32>, vector<128x384xf32>, vector<8x384xf32> -> vector<8x384xf32>
    %328 = vector.extract_strided_slice %324 {offsets = [0, 0], sizes = [8, 128], strides = [1, 1]} : vector<8x384xf32> to vector<8x128xf32>
    %329 = vector.extract_strided_slice %327 {offsets = [0, 0], sizes = [8, 128], strides = [1, 1]} : vector<8x384xf32> to vector<8x128xf32>
    %330 = arith.addf %328, %329 : vector<8x128xf32>
    %cst_170 = arith.constant 5.000000e-01 : f32
    %331 = vector.broadcast %cst_170 : f32 to vector<8x128xf32>
    %332 = arith.mulf %331, %330 : vector<8x128xf32>
    %333 = math.tanh %332 : vector<8x128xf32>
    %cst_171 = arith.constant 1.000000e+00 : f32
    %334 = vector.broadcast %cst_171 : f32 to vector<8x128xf32>
    %335 = arith.addf %333, %334 : vector<8x128xf32>
    %cst_172 = arith.constant 5.000000e-01 : f32
    %336 = vector.broadcast %cst_172 : f32 to vector<8x128xf32>
    %337 = arith.mulf %336, %335 : vector<8x128xf32>
    %338 = vector.extract_strided_slice %324 {offsets = [0, 128], sizes = [8, 128], strides = [1, 1]} : vector<8x384xf32> to vector<8x128xf32>
    %339 = vector.extract_strided_slice %327 {offsets = [0, 128], sizes = [8, 128], strides = [1, 1]} : vector<8x384xf32> to vector<8x128xf32>
    %340 = arith.addf %338, %339 : vector<8x128xf32>
    %cst_173 = arith.constant 5.000000e-01 : f32
    %341 = vector.broadcast %cst_173 : f32 to vector<8x128xf32>
    %342 = arith.mulf %341, %340 : vector<8x128xf32>
    %343 = math.tanh %342 : vector<8x128xf32>
    %cst_174 = arith.constant 1.000000e+00 : f32
    %344 = vector.broadcast %cst_174 : f32 to vector<8x128xf32>
    %345 = arith.addf %343, %344 : vector<8x128xf32>
    %cst_175 = arith.constant 5.000000e-01 : f32
    %346 = vector.broadcast %cst_175 : f32 to vector<8x128xf32>
    %347 = arith.mulf %346, %345 : vector<8x128xf32>
    %348 = vector.extract_strided_slice %324 {offsets = [0, 256], sizes = [8, 128], strides = [1, 1]} : vector<8x384xf32> to vector<8x128xf32>
    %349 = vector.extract_strided_slice %327 {offsets = [0, 256], sizes = [8, 128], strides = [1, 1]} : vector<8x384xf32> to vector<8x128xf32>
    %350 = arith.addf %349, %49 : vector<8x128xf32>
    %351 = arith.mulf %337, %350 : vector<8x128xf32>
    %352 = arith.addf %348, %351 : vector<8x128xf32>
    %353 = math.tanh %352 : vector<8x128xf32>
    %cst_176 = arith.constant 1.000000e+00 : f32
    %354 = vector.broadcast %cst_176 : f32 to vector<8x128xf32>
    %355 = arith.subf %354, %347 : vector<8x128xf32>
    %356 = arith.mulf %355, %353 : vector<8x128xf32>
    %357 = arith.mulf %347, %281 : vector<8x128xf32>
    %358 = arith.addf %356, %357 : vector<8x128xf32>
    %c3_177 = arith.constant 3 : index
    %c0_178 = arith.constant 0 : index
    %c0_179 = arith.constant 0 : index
    %359 = vector.load %arg8[%c3_177, %c0_178, %c0_179] : memref<10x8x128xf32, #tpu.memory_space<vmem>>, vector<1x8x128xf32>
    %360 = vector.shape_cast %359 : vector<1x8x128xf32> to vector<8x128xf32>
    %361 = vector.shape_cast %358 : vector<8x128xf32> to vector<1x8x128xf32>
    tpu.vector_store %arg8[%c3_177, %c0_178, %c0_179], %361 {strides = array<i32>} : memref<10x8x128xf32, #tpu.memory_space<vmem>>, vector<1x8x128xf32>,
    %c4 = arith.constant 4 : index
    %c0_180 = arith.constant 0 : index
    %c0_181 = arith.constant 0 : index
    %362 = vector.load %arg7[%c4, %c0_180, %c0_181] : memref<10x8x384xf32, #tpu.memory_space<vmem>>, vector<1x8x384xf32>
    %363 = vector.shape_cast %362 : vector<1x8x384xf32> to vector<8x384xf32>
    %c0_182 = arith.constant 0 : index
    %c1_183 = arith.constant 1 : index
    %c0_184 = arith.constant 0 : index
    %c0_185 = arith.constant 0 : index
    %364 = vector.load %arg2[%c0_182, %c1_183, %c0_184, %c0_185] : memref<2x2x128x384xf32, #tpu.memory_space<vmem>>, vector<1x1x128x384xf32>
    %365 = vector.shape_cast %364 : vector<1x1x128x384xf32> to vector<128x384xf32>
    %cst_186 = arith.constant dense<0.000000e+00> : vector<8x384xf32>
    %366 = tpu.matmul %320, %365, %cst_186 {dimension_numbers = #tpu.dot_dimension_numbers<[1], [0], [0], [1], [0, 0, 1, 1], [], []>} : vector<8x128xf32>, vector<128x384xf32>, vector<8x384xf32> -> vector<8x384xf32>
    %367 = vector.extract_strided_slice %363 {offsets = [0, 0], sizes = [8, 128], strides = [1, 1]} : vector<8x384xf32> to vector<8x128xf32>
    %368 = vector.extract_strided_slice %366 {offsets = [0, 0], sizes = [8, 128], strides = [1, 1]} : vector<8x384xf32> to vector<8x128xf32>
    %369 = arith.addf %367, %368 : vector<8x128xf32>
    %cst_187 = arith.constant 5.000000e-01 : f32
    %370 = vector.broadcast %cst_187 : f32 to vector<8x128xf32>
    %371 = arith.mulf %370, %369 : vector<8x128xf32>
    %372 = math.tanh %371 : vector<8x128xf32>
    %cst_188 = arith.constant 1.000000e+00 : f32
    %373 = vector.broadcast %cst_188 : f32 to vector<8x128xf32>
    %374 = arith.addf %372, %373 : vector<8x128xf32>
    %cst_189 = arith.constant 5.000000e-01 : f32
    %375 = vector.broadcast %cst_189 : f32 to vector<8x128xf32>
    %376 = arith.mulf %375, %374 : vector<8x128xf32>
    %377 = vector.extract_strided_slice %363 {offsets = [0, 128], sizes = [8, 128], strides = [1, 1]} : vector<8x384xf32> to vector<8x128xf32>
    %378 = vector.extract_strided_slice %366 {offsets = [0, 128], sizes = [8, 128], strides = [1, 1]} : vector<8x384xf32> to vector<8x128xf32>
    %379 = arith.addf %377, %378 : vector<8x128xf32>
    %cst_190 = arith.constant 5.000000e-01 : f32
    %380 = vector.broadcast %cst_190 : f32 to vector<8x128xf32>
    %381 = arith.mulf %380, %379 : vector<8x128xf32>
    %382 = math.tanh %381 : vector<8x128xf32>
    %cst_191 = arith.constant 1.000000e+00 : f32
    %383 = vector.broadcast %cst_191 : f32 to vector<8x128xf32>
    %384 = arith.addf %382, %383 : vector<8x128xf32>
    %cst_192 = arith.constant 5.000000e-01 : f32
    %385 = vector.broadcast %cst_192 : f32 to vector<8x128xf32>
    %386 = arith.mulf %385, %384 : vector<8x128xf32>
    %387 = vector.extract_strided_slice %363 {offsets = [0, 256], sizes = [8, 128], strides = [1, 1]} : vector<8x384xf32> to vector<8x128xf32>
    %388 = vector.extract_strided_slice %366 {offsets = [0, 256], sizes = [8, 128], strides = [1, 1]} : vector<8x384xf32> to vector<8x128xf32>
    %389 = arith.addf %388, %47 : vector<8x128xf32>
    %390 = arith.mulf %376, %389 : vector<8x128xf32>
    %391 = arith.addf %387, %390 : vector<8x128xf32>
    %392 = math.tanh %391 : vector<8x128xf32>
    %cst_193 = arith.constant 1.000000e+00 : f32
    %393 = vector.broadcast %cst_193 : f32 to vector<8x128xf32>
    %394 = arith.subf %393, %386 : vector<8x128xf32>
    %395 = arith.mulf %394, %392 : vector<8x128xf32>
    %396 = arith.mulf %386, %320 : vector<8x128xf32>
    %397 = arith.addf %395, %396 : vector<8x128xf32>
    %c1_194 = arith.constant 1 : index
    %c0_195 = arith.constant 0 : index
    %c0_196 = arith.constant 0 : index
    %c0_197 = arith.constant 0 : index
    %398 = vector.load %arg2[%c1_194, %c0_195, %c0_196, %c0_197] : memref<2x2x128x384xf32, #tpu.memory_space<vmem>>, vector<1x1x128x384xf32>
    %399 = vector.shape_cast %398 : vector<1x1x128x384xf32> to vector<128x384xf32>
    %cst_198 = arith.constant dense<0.000000e+00> : vector<8x384xf32>
    %400 = tpu.matmul %397, %399, %cst_198 {dimension_numbers = #tpu.dot_dimension_numbers<[1], [0], [0], [1], [0, 0, 1, 1], [], []>} : vector<8x128xf32>, vector<128x384xf32>, vector<8x384xf32> -> vector<8x384xf32>
    %401 = arith.addf %400, %51 : vector<8x384xf32>
    %c1_199 = arith.constant 1 : index
    %c1_200 = arith.constant 1 : index
    %c0_201 = arith.constant 0 : index
    %c0_202 = arith.constant 0 : index
    %402 = vector.load %arg2[%c1_199, %c1_200, %c0_201, %c0_202] : memref<2x2x128x384xf32, #tpu.memory_space<vmem>>, vector<1x1x128x384xf32>
    %403 = vector.shape_cast %402 : vector<1x1x128x384xf32> to vector<128x384xf32>
    %cst_203 = arith.constant dense<0.000000e+00> : vector<8x384xf32>
    %404 = tpu.matmul %358, %403, %cst_203 {dimension_numbers = #tpu.dot_dimension_numbers<[1], [0], [0], [1], [0, 0, 1, 1], [], []>} : vector<8x128xf32>, vector<128x384xf32>, vector<8x384xf32> -> vector<8x384xf32>
    %405 = vector.extract_strided_slice %401 {offsets = [0, 0], sizes = [8, 128], strides = [1, 1]} : vector<8x384xf32> to vector<8x128xf32>
    %406 = vector.extract_strided_slice %404 {offsets = [0, 0], sizes = [8, 128], strides = [1, 1]} : vector<8x384xf32> to vector<8x128xf32>
    %407 = arith.addf %405, %406 : vector<8x128xf32>
    %cst_204 = arith.constant 5.000000e-01 : f32
    %408 = vector.broadcast %cst_204 : f32 to vector<8x128xf32>
    %409 = arith.mulf %408, %407 : vector<8x128xf32>
    %410 = math.tanh %409 : vector<8x128xf32>
    %cst_205 = arith.constant 1.000000e+00 : f32
    %411 = vector.broadcast %cst_205 : f32 to vector<8x128xf32>
    %412 = arith.addf %410, %411 : vector<8x128xf32>
    %cst_206 = arith.constant 5.000000e-01 : f32
    %413 = vector.broadcast %cst_206 : f32 to vector<8x128xf32>
    %414 = arith.mulf %413, %412 : vector<8x128xf32>
    %415 = vector.extract_strided_slice %401 {offsets = [0, 128], sizes = [8, 128], strides = [1, 1]} : vector<8x384xf32> to vector<8x128xf32>
    %416 = vector.extract_strided_slice %404 {offsets = [0, 128], sizes = [8, 128], strides = [1, 1]} : vector<8x384xf32> to vector<8x128xf32>
    %417 = arith.addf %415, %416 : vector<8x128xf32>
    %cst_207 = arith.constant 5.000000e-01 : f32
    %418 = vector.broadcast %cst_207 : f32 to vector<8x128xf32>
    %419 = arith.mulf %418, %417 : vector<8x128xf32>
    %420 = math.tanh %419 : vector<8x128xf32>
    %cst_208 = arith.constant 1.000000e+00 : f32
    %421 = vector.broadcast %cst_208 : f32 to vector<8x128xf32>
    %422 = arith.addf %420, %421 : vector<8x128xf32>
    %cst_209 = arith.constant 5.000000e-01 : f32
    %423 = vector.broadcast %cst_209 : f32 to vector<8x128xf32>
    %424 = arith.mulf %423, %422 : vector<8x128xf32>
    %425 = vector.extract_strided_slice %401 {offsets = [0, 256], sizes = [8, 128], strides = [1, 1]} : vector<8x384xf32> to vector<8x128xf32>
    %426 = vector.extract_strided_slice %404 {offsets = [0, 256], sizes = [8, 128], strides = [1, 1]} : vector<8x384xf32> to vector<8x128xf32>
    %427 = arith.addf %426, %49 : vector<8x128xf32>
    %428 = arith.mulf %414, %427 : vector<8x128xf32>
    %429 = arith.addf %425, %428 : vector<8x128xf32>
    %430 = math.tanh %429 : vector<8x128xf32>
    %cst_210 = arith.constant 1.000000e+00 : f32
    %431 = vector.broadcast %cst_210 : f32 to vector<8x128xf32>
    %432 = arith.subf %431, %424 : vector<8x128xf32>
    %433 = arith.mulf %432, %430 : vector<8x128xf32>
    %434 = arith.mulf %424, %358 : vector<8x128xf32>
    %435 = arith.addf %433, %434 : vector<8x128xf32>
    %c4_211 = arith.constant 4 : index
    %c0_212 = arith.constant 0 : index
    %c0_213 = arith.constant 0 : index
    %436 = vector.load %arg8[%c4_211, %c0_212, %c0_213] : memref<10x8x128xf32, #tpu.memory_space<vmem>>, vector<1x8x128xf32>
    %437 = vector.shape_cast %436 : vector<1x8x128xf32> to vector<8x128xf32>
    %438 = vector.shape_cast %435 : vector<8x128xf32> to vector<1x8x128xf32>
    tpu.vector_store %arg8[%c4_211, %c0_212, %c0_213], %438 {strides = array<i32>} : memref<10x8x128xf32, #tpu.memory_space<vmem>>, vector<1x8x128xf32>,
    %c5 = arith.constant 5 : index
    %c0_214 = arith.constant 0 : index
    %c0_215 = arith.constant 0 : index
    %439 = vector.load %arg7[%c5, %c0_214, %c0_215] : memref<10x8x384xf32, #tpu.memory_space<vmem>>, vector<1x8x384xf32>
    %440 = vector.shape_cast %439 : vector<1x8x384xf32> to vector<8x384xf32>
    %c0_216 = arith.constant 0 : index
    %c1_217 = arith.constant 1 : index
    %c0_218 = arith.constant 0 : index
    %c0_219 = arith.constant 0 : index
    %441 = vector.load %arg2[%c0_216, %c1_217, %c0_218, %c0_219] : memref<2x2x128x384xf32, #tpu.memory_space<vmem>>, vector<1x1x128x384xf32>
    %442 = vector.shape_cast %441 : vector<1x1x128x384xf32> to vector<128x384xf32>
    %cst_220 = arith.constant dense<0.000000e+00> : vector<8x384xf32>
    %443 = tpu.matmul %397, %442, %cst_220 {dimension_numbers = #tpu.dot_dimension_numbers<[1], [0], [0], [1], [0, 0, 1, 1], [], []>} : vector<8x128xf32>, vector<128x384xf32>, vector<8x384xf32> -> vector<8x384xf32>
    %444 = vector.extract_strided_slice %440 {offsets = [0, 0], sizes = [8, 128], strides = [1, 1]} : vector<8x384xf32> to vector<8x128xf32>
    %445 = vector.extract_strided_slice %443 {offsets = [0, 0], sizes = [8, 128], strides = [1, 1]} : vector<8x384xf32> to vector<8x128xf32>
    %446 = arith.addf %444, %445 : vector<8x128xf32>
    %cst_221 = arith.constant 5.000000e-01 : f32
    %447 = vector.broadcast %cst_221 : f32 to vector<8x128xf32>
    %448 = arith.mulf %447, %446 : vector<8x128xf32>
    %449 = math.tanh %448 : vector<8x128xf32>
    %cst_222 = arith.constant 1.000000e+00 : f32
    %450 = vector.broadcast %cst_222 : f32 to vector<8x128xf32>
    %451 = arith.addf %449, %450 : vector<8x128xf32>
    %cst_223 = arith.constant 5.000000e-01 : f32
    %452 = vector.broadcast %cst_223 : f32 to vector<8x128xf32>
    %453 = arith.mulf %452, %451 : vector<8x128xf32>
    %454 = vector.extract_strided_slice %440 {offsets = [0, 128], sizes = [8, 128], strides = [1, 1]} : vector<8x384xf32> to vector<8x128xf32>
    %455 = vector.extract_strided_slice %443 {offsets = [0, 128], sizes = [8, 128], strides = [1, 1]} : vector<8x384xf32> to vector<8x128xf32>
    %456 = arith.addf %454, %455 : vector<8x128xf32>
    %cst_224 = arith.constant 5.000000e-01 : f32
    %457 = vector.broadcast %cst_224 : f32 to vector<8x128xf32>
    %458 = arith.mulf %457, %456 : vector<8x128xf32>
    %459 = math.tanh %458 : vector<8x128xf32>
    %cst_225 = arith.constant 1.000000e+00 : f32
    %460 = vector.broadcast %cst_225 : f32 to vector<8x128xf32>
    %461 = arith.addf %459, %460 : vector<8x128xf32>
    %cst_226 = arith.constant 5.000000e-01 : f32
    %462 = vector.broadcast %cst_226 : f32 to vector<8x128xf32>
    %463 = arith.mulf %462, %461 : vector<8x128xf32>
    %464 = vector.extract_strided_slice %440 {offsets = [0, 256], sizes = [8, 128], strides = [1, 1]} : vector<8x384xf32> to vector<8x128xf32>
    %465 = vector.extract_strided_slice %443 {offsets = [0, 256], sizes = [8, 128], strides = [1, 1]} : vector<8x384xf32> to vector<8x128xf32>
    %466 = arith.addf %465, %47 : vector<8x128xf32>
    %467 = arith.mulf %453, %466 : vector<8x128xf32>
    %468 = arith.addf %464, %467 : vector<8x128xf32>
    %469 = math.tanh %468 : vector<8x128xf32>
    %cst_227 = arith.constant 1.000000e+00 : f32
    %470 = vector.broadcast %cst_227 : f32 to vector<8x128xf32>
    %471 = arith.subf %470, %463 : vector<8x128xf32>
    %472 = arith.mulf %471, %469 : vector<8x128xf32>
    %473 = arith.mulf %463, %397 : vector<8x128xf32>
    %474 = arith.addf %472, %473 : vector<8x128xf32>
    %c1_228 = arith.constant 1 : index
    %c0_229 = arith.constant 0 : index
    %c0_230 = arith.constant 0 : index
    %c0_231 = arith.constant 0 : index
    %475 = vector.load %arg2[%c1_228, %c0_229, %c0_230, %c0_231] : memref<2x2x128x384xf32, #tpu.memory_space<vmem>>, vector<1x1x128x384xf32>
    %476 = vector.shape_cast %475 : vector<1x1x128x384xf32> to vector<128x384xf32>
    %cst_232 = arith.constant dense<0.000000e+00> : vector<8x384xf32>
    %477 = tpu.matmul %474, %476, %cst_232 {dimension_numbers = #tpu.dot_dimension_numbers<[1], [0], [0], [1], [0, 0, 1, 1], [], []>} : vector<8x128xf32>, vector<128x384xf32>, vector<8x384xf32> -> vector<8x384xf32>
    %478 = arith.addf %477, %51 : vector<8x384xf32>
    %c1_233 = arith.constant 1 : index
    %c1_234 = arith.constant 1 : index
    %c0_235 = arith.constant 0 : index
    %c0_236 = arith.constant 0 : index
    %479 = vector.load %arg2[%c1_233, %c1_234, %c0_235, %c0_236] : memref<2x2x128x384xf32, #tpu.memory_space<vmem>>, vector<1x1x128x384xf32>
    %480 = vector.shape_cast %479 : vector<1x1x128x384xf32> to vector<128x384xf32>
    %cst_237 = arith.constant dense<0.000000e+00> : vector<8x384xf32>
    %481 = tpu.matmul %435, %480, %cst_237 {dimension_numbers = #tpu.dot_dimension_numbers<[1], [0], [0], [1], [0, 0, 1, 1], [], []>} : vector<8x128xf32>, vector<128x384xf32>, vector<8x384xf32> -> vector<8x384xf32>
    %482 = vector.extract_strided_slice %478 {offsets = [0, 0], sizes = [8, 128], strides = [1, 1]} : vector<8x384xf32> to vector<8x128xf32>
    %483 = vector.extract_strided_slice %481 {offsets = [0, 0], sizes = [8, 128], strides = [1, 1]} : vector<8x384xf32> to vector<8x128xf32>
    %484 = arith.addf %482, %483 : vector<8x128xf32>
    %cst_238 = arith.constant 5.000000e-01 : f32
    %485 = vector.broadcast %cst_238 : f32 to vector<8x128xf32>
    %486 = arith.mulf %485, %484 : vector<8x128xf32>
    %487 = math.tanh %486 : vector<8x128xf32>
    %cst_239 = arith.constant 1.000000e+00 : f32
    %488 = vector.broadcast %cst_239 : f32 to vector<8x128xf32>
    %489 = arith.addf %487, %488 : vector<8x128xf32>
    %cst_240 = arith.constant 5.000000e-01 : f32
    %490 = vector.broadcast %cst_240 : f32 to vector<8x128xf32>
    %491 = arith.mulf %490, %489 : vector<8x128xf32>
    %492 = vector.extract_strided_slice %478 {offsets = [0, 128], sizes = [8, 128], strides = [1, 1]} : vector<8x384xf32> to vector<8x128xf32>
    %493 = vector.extract_strided_slice %481 {offsets = [0, 128], sizes = [8, 128], strides = [1, 1]} : vector<8x384xf32> to vector<8x128xf32>
    %494 = arith.addf %492, %493 : vector<8x128xf32>
    %cst_241 = arith.constant 5.000000e-01 : f32
    %495 = vector.broadcast %cst_241 : f32 to vector<8x128xf32>
    %496 = arith.mulf %495, %494 : vector<8x128xf32>
    %497 = math.tanh %496 : vector<8x128xf32>
    %cst_242 = arith.constant 1.000000e+00 : f32
    %498 = vector.broadcast %cst_242 : f32 to vector<8x128xf32>
    %499 = arith.addf %497, %498 : vector<8x128xf32>
    %cst_243 = arith.constant 5.000000e-01 : f32
    %500 = vector.broadcast %cst_243 : f32 to vector<8x128xf32>
    %501 = arith.mulf %500, %499 : vector<8x128xf32>
    %502 = vector.extract_strided_slice %478 {offsets = [0, 256], sizes = [8, 128], strides = [1, 1]} : vector<8x384xf32> to vector<8x128xf32>
    %503 = vector.extract_strided_slice %481 {offsets = [0, 256], sizes = [8, 128], strides = [1, 1]} : vector<8x384xf32> to vector<8x128xf32>
    %504 = arith.addf %503, %49 : vector<8x128xf32>
    %505 = arith.mulf %491, %504 : vector<8x128xf32>
    %506 = arith.addf %502, %505 : vector<8x128xf32>
    %507 = math.tanh %506 : vector<8x128xf32>
    %cst_244 = arith.constant 1.000000e+00 : f32
    %508 = vector.broadcast %cst_244 : f32 to vector<8x128xf32>
    %509 = arith.subf %508, %501 : vector<8x128xf32>
    %510 = arith.mulf %509, %507 : vector<8x128xf32>
    %511 = arith.mulf %501, %435 : vector<8x128xf32>
    %512 = arith.addf %510, %511 : vector<8x128xf32>
    %c5_245 = arith.constant 5 : index
    %c0_246 = arith.constant 0 : index
    %c0_247 = arith.constant 0 : index
    %513 = vector.load %arg8[%c5_245, %c0_246, %c0_247] : memref<10x8x128xf32, #tpu.memory_space<vmem>>, vector<1x8x128xf32>
    %514 = vector.shape_cast %513 : vector<1x8x128xf32> to vector<8x128xf32>
    %515 = vector.shape_cast %512 : vector<8x128xf32> to vector<1x8x128xf32>
    tpu.vector_store %arg8[%c5_245, %c0_246, %c0_247], %515 {strides = array<i32>} : memref<10x8x128xf32, #tpu.memory_space<vmem>>, vector<1x8x128xf32>,
    %c6 = arith.constant 6 : index
    %c0_248 = arith.constant 0 : index
    %c0_249 = arith.constant 0 : index
    %516 = vector.load %arg7[%c6, %c0_248, %c0_249] : memref<10x8x384xf32, #tpu.memory_space<vmem>>, vector<1x8x384xf32>
    %517 = vector.shape_cast %516 : vector<1x8x384xf32> to vector<8x384xf32>
    %c0_250 = arith.constant 0 : index
    %c1_251 = arith.constant 1 : index
    %c0_252 = arith.constant 0 : index
    %c0_253 = arith.constant 0 : index
    %518 = vector.load %arg2[%c0_250, %c1_251, %c0_252, %c0_253] : memref<2x2x128x384xf32, #tpu.memory_space<vmem>>, vector<1x1x128x384xf32>
    %519 = vector.shape_cast %518 : vector<1x1x128x384xf32> to vector<128x384xf32>
    %cst_254 = arith.constant dense<0.000000e+00> : vector<8x384xf32>
    %520 = tpu.matmul %474, %519, %cst_254 {dimension_numbers = #tpu.dot_dimension_numbers<[1], [0], [0], [1], [0, 0, 1, 1], [], []>} : vector<8x128xf32>, vector<128x384xf32>, vector<8x384xf32> -> vector<8x384xf32>
    %521 = vector.extract_strided_slice %517 {offsets = [0, 0], sizes = [8, 128], strides = [1, 1]} : vector<8x384xf32> to vector<8x128xf32>
    %522 = vector.extract_strided_slice %520 {offsets = [0, 0], sizes = [8, 128], strides = [1, 1]} : vector<8x384xf32> to vector<8x128xf32>
    %523 = arith.addf %521, %522 : vector<8x128xf32>
    %cst_255 = arith.constant 5.000000e-01 : f32
    %524 = vector.broadcast %cst_255 : f32 to vector<8x128xf32>
    %525 = arith.mulf %524, %523 : vector<8x128xf32>
    %526 = math.tanh %525 : vector<8x128xf32>
    %cst_256 = arith.constant 1.000000e+00 : f32
    %527 = vector.broadcast %cst_256 : f32 to vector<8x128xf32>
    %528 = arith.addf %526, %527 : vector<8x128xf32>
    %cst_257 = arith.constant 5.000000e-01 : f32
    %529 = vector.broadcast %cst_257 : f32 to vector<8x128xf32>
    %530 = arith.mulf %529, %528 : vector<8x128xf32>
    %531 = vector.extract_strided_slice %517 {offsets = [0, 128], sizes = [8, 128], strides = [1, 1]} : vector<8x384xf32> to vector<8x128xf32>
    %532 = vector.extract_strided_slice %520 {offsets = [0, 128], sizes = [8, 128], strides = [1, 1]} : vector<8x384xf32> to vector<8x128xf32>
    %533 = arith.addf %531, %532 : vector<8x128xf32>
    %cst_258 = arith.constant 5.000000e-01 : f32
    %534 = vector.broadcast %cst_258 : f32 to vector<8x128xf32>
    %535 = arith.mulf %534, %533 : vector<8x128xf32>
    %536 = math.tanh %535 : vector<8x128xf32>
    %cst_259 = arith.constant 1.000000e+00 : f32
    %537 = vector.broadcast %cst_259 : f32 to vector<8x128xf32>
    %538 = arith.addf %536, %537 : vector<8x128xf32>
    %cst_260 = arith.constant 5.000000e-01 : f32
    %539 = vector.broadcast %cst_260 : f32 to vector<8x128xf32>
    %540 = arith.mulf %539, %538 : vector<8x128xf32>
    %541 = vector.extract_strided_slice %517 {offsets = [0, 256], sizes = [8, 128], strides = [1, 1]} : vector<8x384xf32> to vector<8x128xf32>
    %542 = vector.extract_strided_slice %520 {offsets = [0, 256], sizes = [8, 128], strides = [1, 1]} : vector<8x384xf32> to vector<8x128xf32>
    %543 = arith.addf %542, %47 : vector<8x128xf32>
    %544 = arith.mulf %530, %543 : vector<8x128xf32>
    %545 = arith.addf %541, %544 : vector<8x128xf32>
    %546 = math.tanh %545 : vector<8x128xf32>
    %cst_261 = arith.constant 1.000000e+00 : f32
    %547 = vector.broadcast %cst_261 : f32 to vector<8x128xf32>
    %548 = arith.subf %547, %540 : vector<8x128xf32>
    %549 = arith.mulf %548, %546 : vector<8x128xf32>
    %550 = arith.mulf %540, %474 : vector<8x128xf32>
    %551 = arith.addf %549, %550 : vector<8x128xf32>
    %c1_262 = arith.constant 1 : index
    %c0_263 = arith.constant 0 : index
    %c0_264 = arith.constant 0 : index
    %c0_265 = arith.constant 0 : index
    %552 = vector.load %arg2[%c1_262, %c0_263, %c0_264, %c0_265] : memref<2x2x128x384xf32, #tpu.memory_space<vmem>>, vector<1x1x128x384xf32>
    %553 = vector.shape_cast %552 : vector<1x1x128x384xf32> to vector<128x384xf32>
    %cst_266 = arith.constant dense<0.000000e+00> : vector<8x384xf32>
    %554 = tpu.matmul %551, %553, %cst_266 {dimension_numbers = #tpu.dot_dimension_numbers<[1], [0], [0], [1], [0, 0, 1, 1], [], []>} : vector<8x128xf32>, vector<128x384xf32>, vector<8x384xf32> -> vector<8x384xf32>
    %555 = arith.addf %554, %51 : vector<8x384xf32>
    %c1_267 = arith.constant 1 : index
    %c1_268 = arith.constant 1 : index
    %c0_269 = arith.constant 0 : index
    %c0_270 = arith.constant 0 : index
    %556 = vector.load %arg2[%c1_267, %c1_268, %c0_269, %c0_270] : memref<2x2x128x384xf32, #tpu.memory_space<vmem>>, vector<1x1x128x384xf32>
    %557 = vector.shape_cast %556 : vector<1x1x128x384xf32> to vector<128x384xf32>
    %cst_271 = arith.constant dense<0.000000e+00> : vector<8x384xf32>
    %558 = tpu.matmul %512, %557, %cst_271 {dimension_numbers = #tpu.dot_dimension_numbers<[1], [0], [0], [1], [0, 0, 1, 1], [], []>} : vector<8x128xf32>, vector<128x384xf32>, vector<8x384xf32> -> vector<8x384xf32>
    %559 = vector.extract_strided_slice %555 {offsets = [0, 0], sizes = [8, 128], strides = [1, 1]} : vector<8x384xf32> to vector<8x128xf32>
    %560 = vector.extract_strided_slice %558 {offsets = [0, 0], sizes = [8, 128], strides = [1, 1]} : vector<8x384xf32> to vector<8x128xf32>
    %561 = arith.addf %559, %560 : vector<8x128xf32>
    %cst_272 = arith.constant 5.000000e-01 : f32
    %562 = vector.broadcast %cst_272 : f32 to vector<8x128xf32>
    %563 = arith.mulf %562, %561 : vector<8x128xf32>
    %564 = math.tanh %563 : vector<8x128xf32>
    %cst_273 = arith.constant 1.000000e+00 : f32
    %565 = vector.broadcast %cst_273 : f32 to vector<8x128xf32>
    %566 = arith.addf %564, %565 : vector<8x128xf32>
    %cst_274 = arith.constant 5.000000e-01 : f32
    %567 = vector.broadcast %cst_274 : f32 to vector<8x128xf32>
    %568 = arith.mulf %567, %566 : vector<8x128xf32>
    %569 = vector.extract_strided_slice %555 {offsets = [0, 128], sizes = [8, 128], strides = [1, 1]} : vector<8x384xf32> to vector<8x128xf32>
    %570 = vector.extract_strided_slice %558 {offsets = [0, 128], sizes = [8, 128], strides = [1, 1]} : vector<8x384xf32> to vector<8x128xf32>
    %571 = arith.addf %569, %570 : vector<8x128xf32>
    %cst_275 = arith.constant 5.000000e-01 : f32
    %572 = vector.broadcast %cst_275 : f32 to vector<8x128xf32>
    %573 = arith.mulf %572, %571 : vector<8x128xf32>
    %574 = math.tanh %573 : vector<8x128xf32>
    %cst_276 = arith.constant 1.000000e+00 : f32
    %575 = vector.broadcast %cst_276 : f32 to vector<8x128xf32>
    %576 = arith.addf %574, %575 : vector<8x128xf32>
    %cst_277 = arith.constant 5.000000e-01 : f32
    %577 = vector.broadcast %cst_277 : f32 to vector<8x128xf32>
    %578 = arith.mulf %577, %576 : vector<8x128xf32>
    %579 = vector.extract_strided_slice %555 {offsets = [0, 256], sizes = [8, 128], strides = [1, 1]} : vector<8x384xf32> to vector<8x128xf32>
    %580 = vector.extract_strided_slice %558 {offsets = [0, 256], sizes = [8, 128], strides = [1, 1]} : vector<8x384xf32> to vector<8x128xf32>
    %581 = arith.addf %580, %49 : vector<8x128xf32>
    %582 = arith.mulf %568, %581 : vector<8x128xf32>
    %583 = arith.addf %579, %582 : vector<8x128xf32>
    %584 = math.tanh %583 : vector<8x128xf32>
    %cst_278 = arith.constant 1.000000e+00 : f32
    %585 = vector.broadcast %cst_278 : f32 to vector<8x128xf32>
    %586 = arith.subf %585, %578 : vector<8x128xf32>
    %587 = arith.mulf %586, %584 : vector<8x128xf32>
    %588 = arith.mulf %578, %512 : vector<8x128xf32>
    %589 = arith.addf %587, %588 : vector<8x128xf32>
    %c6_279 = arith.constant 6 : index
    %c0_280 = arith.constant 0 : index
    %c0_281 = arith.constant 0 : index
    %590 = vector.load %arg8[%c6_279, %c0_280, %c0_281] : memref<10x8x128xf32, #tpu.memory_space<vmem>>, vector<1x8x128xf32>
    %591 = vector.shape_cast %590 : vector<1x8x128xf32> to vector<8x128xf32>
    %592 = vector.shape_cast %589 : vector<8x128xf32> to vector<1x8x128xf32>
    tpu.vector_store %arg8[%c6_279, %c0_280, %c0_281], %592 {strides = array<i32>} : memref<10x8x128xf32, #tpu.memory_space<vmem>>, vector<1x8x128xf32>,
    %c7 = arith.constant 7 : index
    %c0_282 = arith.constant 0 : index
    %c0_283 = arith.constant 0 : index
    %593 = vector.load %arg7[%c7, %c0_282, %c0_283] : memref<10x8x384xf32, #tpu.memory_space<vmem>>, vector<1x8x384xf32>
    %594 = vector.shape_cast %593 : vector<1x8x384xf32> to vector<8x384xf32>
    %c0_284 = arith.constant 0 : index
    %c1_285 = arith.constant 1 : index
    %c0_286 = arith.constant 0 : index
    %c0_287 = arith.constant 0 : index
    %595 = vector.load %arg2[%c0_284, %c1_285, %c0_286, %c0_287] : memref<2x2x128x384xf32, #tpu.memory_space<vmem>>, vector<1x1x128x384xf32>
    %596 = vector.shape_cast %595 : vector<1x1x128x384xf32> to vector<128x384xf32>
    %cst_288 = arith.constant dense<0.000000e+00> : vector<8x384xf32>
    %597 = tpu.matmul %551, %596, %cst_288 {dimension_numbers = #tpu.dot_dimension_numbers<[1], [0], [0], [1], [0, 0, 1, 1], [], []>} : vector<8x128xf32>, vector<128x384xf32>, vector<8x384xf32> -> vector<8x384xf32>
    %598 = vector.extract_strided_slice %594 {offsets = [0, 0], sizes = [8, 128], strides = [1, 1]} : vector<8x384xf32> to vector<8x128xf32>
    %599 = vector.extract_strided_slice %597 {offsets = [0, 0], sizes = [8, 128], strides = [1, 1]} : vector<8x384xf32> to vector<8x128xf32>
    %600 = arith.addf %598, %599 : vector<8x128xf32>
    %cst_289 = arith.constant 5.000000e-01 : f32
    %601 = vector.broadcast %cst_289 : f32 to vector<8x128xf32>
    %602 = arith.mulf %601, %600 : vector<8x128xf32>
    %603 = math.tanh %602 : vector<8x128xf32>
    %cst_290 = arith.constant 1.000000e+00 : f32
    %604 = vector.broadcast %cst_290 : f32 to vector<8x128xf32>
    %605 = arith.addf %603, %604 : vector<8x128xf32>
    %cst_291 = arith.constant 5.000000e-01 : f32
    %606 = vector.broadcast %cst_291 : f32 to vector<8x128xf32>
    %607 = arith.mulf %606, %605 : vector<8x128xf32>
    %608 = vector.extract_strided_slice %594 {offsets = [0, 128], sizes = [8, 128], strides = [1, 1]} : vector<8x384xf32> to vector<8x128xf32>
    %609 = vector.extract_strided_slice %597 {offsets = [0, 128], sizes = [8, 128], strides = [1, 1]} : vector<8x384xf32> to vector<8x128xf32>
    %610 = arith.addf %608, %609 : vector<8x128xf32>
    %cst_292 = arith.constant 5.000000e-01 : f32
    %611 = vector.broadcast %cst_292 : f32 to vector<8x128xf32>
    %612 = arith.mulf %611, %610 : vector<8x128xf32>
    %613 = math.tanh %612 : vector<8x128xf32>
    %cst_293 = arith.constant 1.000000e+00 : f32
    %614 = vector.broadcast %cst_293 : f32 to vector<8x128xf32>
    %615 = arith.addf %613, %614 : vector<8x128xf32>
    %cst_294 = arith.constant 5.000000e-01 : f32
    %616 = vector.broadcast %cst_294 : f32 to vector<8x128xf32>
    %617 = arith.mulf %616, %615 : vector<8x128xf32>
    %618 = vector.extract_strided_slice %594 {offsets = [0, 256], sizes = [8, 128], strides = [1, 1]} : vector<8x384xf32> to vector<8x128xf32>
    %619 = vector.extract_strided_slice %597 {offsets = [0, 256], sizes = [8, 128], strides = [1, 1]} : vector<8x384xf32> to vector<8x128xf32>
    %620 = arith.addf %619, %47 : vector<8x128xf32>
    %621 = arith.mulf %607, %620 : vector<8x128xf32>
    %622 = arith.addf %618, %621 : vector<8x128xf32>
    %623 = math.tanh %622 : vector<8x128xf32>
    %cst_295 = arith.constant 1.000000e+00 : f32
    %624 = vector.broadcast %cst_295 : f32 to vector<8x128xf32>
    %625 = arith.subf %624, %617 : vector<8x128xf32>
    %626 = arith.mulf %625, %623 : vector<8x128xf32>
    %627 = arith.mulf %617, %551 : vector<8x128xf32>
    %628 = arith.addf %626, %627 : vector<8x128xf32>
    %c1_296 = arith.constant 1 : index
    %c0_297 = arith.constant 0 : index
    %c0_298 = arith.constant 0 : index
    %c0_299 = arith.constant 0 : index
    %629 = vector.load %arg2[%c1_296, %c0_297, %c0_298, %c0_299] : memref<2x2x128x384xf32, #tpu.memory_space<vmem>>, vector<1x1x128x384xf32>
    %630 = vector.shape_cast %629 : vector<1x1x128x384xf32> to vector<128x384xf32>
    %cst_300 = arith.constant dense<0.000000e+00> : vector<8x384xf32>
    %631 = tpu.matmul %628, %630, %cst_300 {dimension_numbers = #tpu.dot_dimension_numbers<[1], [0], [0], [1], [0, 0, 1, 1], [], []>} : vector<8x128xf32>, vector<128x384xf32>, vector<8x384xf32> -> vector<8x384xf32>
    %632 = arith.addf %631, %51 : vector<8x384xf32>
    %c1_301 = arith.constant 1 : index
    %c1_302 = arith.constant 1 : index
    %c0_303 = arith.constant 0 : index
    %c0_304 = arith.constant 0 : index
    %633 = vector.load %arg2[%c1_301, %c1_302, %c0_303, %c0_304] : memref<2x2x128x384xf32, #tpu.memory_space<vmem>>, vector<1x1x128x384xf32>
    %634 = vector.shape_cast %633 : vector<1x1x128x384xf32> to vector<128x384xf32>
    %cst_305 = arith.constant dense<0.000000e+00> : vector<8x384xf32>
    %635 = tpu.matmul %589, %634, %cst_305 {dimension_numbers = #tpu.dot_dimension_numbers<[1], [0], [0], [1], [0, 0, 1, 1], [], []>} : vector<8x128xf32>, vector<128x384xf32>, vector<8x384xf32> -> vector<8x384xf32>
    %636 = vector.extract_strided_slice %632 {offsets = [0, 0], sizes = [8, 128], strides = [1, 1]} : vector<8x384xf32> to vector<8x128xf32>
    %637 = vector.extract_strided_slice %635 {offsets = [0, 0], sizes = [8, 128], strides = [1, 1]} : vector<8x384xf32> to vector<8x128xf32>
    %638 = arith.addf %636, %637 : vector<8x128xf32>
    %cst_306 = arith.constant 5.000000e-01 : f32
    %639 = vector.broadcast %cst_306 : f32 to vector<8x128xf32>
    %640 = arith.mulf %639, %638 : vector<8x128xf32>
    %641 = math.tanh %640 : vector<8x128xf32>
    %cst_307 = arith.constant 1.000000e+00 : f32
    %642 = vector.broadcast %cst_307 : f32 to vector<8x128xf32>
    %643 = arith.addf %641, %642 : vector<8x128xf32>
    %cst_308 = arith.constant 5.000000e-01 : f32
    %644 = vector.broadcast %cst_308 : f32 to vector<8x128xf32>
    %645 = arith.mulf %644, %643 : vector<8x128xf32>
    %646 = vector.extract_strided_slice %632 {offsets = [0, 128], sizes = [8, 128], strides = [1, 1]} : vector<8x384xf32> to vector<8x128xf32>
    %647 = vector.extract_strided_slice %635 {offsets = [0, 128], sizes = [8, 128], strides = [1, 1]} : vector<8x384xf32> to vector<8x128xf32>
    %648 = arith.addf %646, %647 : vector<8x128xf32>
    %cst_309 = arith.constant 5.000000e-01 : f32
    %649 = vector.broadcast %cst_309 : f32 to vector<8x128xf32>
    %650 = arith.mulf %649, %648 : vector<8x128xf32>
    %651 = math.tanh %650 : vector<8x128xf32>
    %cst_310 = arith.constant 1.000000e+00 : f32
    %652 = vector.broadcast %cst_310 : f32 to vector<8x128xf32>
    %653 = arith.addf %651, %652 : vector<8x128xf32>
    %cst_311 = arith.constant 5.000000e-01 : f32
    %654 = vector.broadcast %cst_311 : f32 to vector<8x128xf32>
    %655 = arith.mulf %654, %653 : vector<8x128xf32>
    %656 = vector.extract_strided_slice %632 {offsets = [0, 256], sizes = [8, 128], strides = [1, 1]} : vector<8x384xf32> to vector<8x128xf32>
    %657 = vector.extract_strided_slice %635 {offsets = [0, 256], sizes = [8, 128], strides = [1, 1]} : vector<8x384xf32> to vector<8x128xf32>
    %658 = arith.addf %657, %49 : vector<8x128xf32>
    %659 = arith.mulf %645, %658 : vector<8x128xf32>
    %660 = arith.addf %656, %659 : vector<8x128xf32>
    %661 = math.tanh %660 : vector<8x128xf32>
    %cst_312 = arith.constant 1.000000e+00 : f32
    %662 = vector.broadcast %cst_312 : f32 to vector<8x128xf32>
    %663 = arith.subf %662, %655 : vector<8x128xf32>
    %664 = arith.mulf %663, %661 : vector<8x128xf32>
    %665 = arith.mulf %655, %589 : vector<8x128xf32>
    %666 = arith.addf %664, %665 : vector<8x128xf32>
    %c7_313 = arith.constant 7 : index
    %c0_314 = arith.constant 0 : index
    %c0_315 = arith.constant 0 : index
    %667 = vector.load %arg8[%c7_313, %c0_314, %c0_315] : memref<10x8x128xf32, #tpu.memory_space<vmem>>, vector<1x8x128xf32>
    %668 = vector.shape_cast %667 : vector<1x8x128xf32> to vector<8x128xf32>
    %669 = vector.shape_cast %666 : vector<8x128xf32> to vector<1x8x128xf32>
    tpu.vector_store %arg8[%c7_313, %c0_314, %c0_315], %669 {strides = array<i32>} : memref<10x8x128xf32, #tpu.memory_space<vmem>>, vector<1x8x128xf32>,
    %c8 = arith.constant 8 : index
    %c0_316 = arith.constant 0 : index
    %c0_317 = arith.constant 0 : index
    %670 = vector.load %arg7[%c8, %c0_316, %c0_317] : memref<10x8x384xf32, #tpu.memory_space<vmem>>, vector<1x8x384xf32>
    %671 = vector.shape_cast %670 : vector<1x8x384xf32> to vector<8x384xf32>
    %c0_318 = arith.constant 0 : index
    %c1_319 = arith.constant 1 : index
    %c0_320 = arith.constant 0 : index
    %c0_321 = arith.constant 0 : index
    %672 = vector.load %arg2[%c0_318, %c1_319, %c0_320, %c0_321] : memref<2x2x128x384xf32, #tpu.memory_space<vmem>>, vector<1x1x128x384xf32>
    %673 = vector.shape_cast %672 : vector<1x1x128x384xf32> to vector<128x384xf32>
    %cst_322 = arith.constant dense<0.000000e+00> : vector<8x384xf32>
    %674 = tpu.matmul %628, %673, %cst_322 {dimension_numbers = #tpu.dot_dimension_numbers<[1], [0], [0], [1], [0, 0, 1, 1], [], []>} : vector<8x128xf32>, vector<128x384xf32>, vector<8x384xf32> -> vector<8x384xf32>
    %675 = vector.extract_strided_slice %671 {offsets = [0, 0], sizes = [8, 128], strides = [1, 1]} : vector<8x384xf32> to vector<8x128xf32>
    %676 = vector.extract_strided_slice %674 {offsets = [0, 0], sizes = [8, 128], strides = [1, 1]} : vector<8x384xf32> to vector<8x128xf32>
    %677 = arith.addf %675, %676 : vector<8x128xf32>
    %cst_323 = arith.constant 5.000000e-01 : f32
    %678 = vector.broadcast %cst_323 : f32 to vector<8x128xf32>
    %679 = arith.mulf %678, %677 : vector<8x128xf32>
    %680 = math.tanh %679 : vector<8x128xf32>
    %cst_324 = arith.constant 1.000000e+00 : f32
    %681 = vector.broadcast %cst_324 : f32 to vector<8x128xf32>
    %682 = arith.addf %680, %681 : vector<8x128xf32>
    %cst_325 = arith.constant 5.000000e-01 : f32
    %683 = vector.broadcast %cst_325 : f32 to vector<8x128xf32>
    %684 = arith.mulf %683, %682 : vector<8x128xf32>
    %685 = vector.extract_strided_slice %671 {offsets = [0, 128], sizes = [8, 128], strides = [1, 1]} : vector<8x384xf32> to vector<8x128xf32>
    %686 = vector.extract_strided_slice %674 {offsets = [0, 128], sizes = [8, 128], strides = [1, 1]} : vector<8x384xf32> to vector<8x128xf32>
    %687 = arith.addf %685, %686 : vector<8x128xf32>
    %cst_326 = arith.constant 5.000000e-01 : f32
    %688 = vector.broadcast %cst_326 : f32 to vector<8x128xf32>
    %689 = arith.mulf %688, %687 : vector<8x128xf32>
    %690 = math.tanh %689 : vector<8x128xf32>
    %cst_327 = arith.constant 1.000000e+00 : f32
    %691 = vector.broadcast %cst_327 : f32 to vector<8x128xf32>
    %692 = arith.addf %690, %691 : vector<8x128xf32>
    %cst_328 = arith.constant 5.000000e-01 : f32
    %693 = vector.broadcast %cst_328 : f32 to vector<8x128xf32>
    %694 = arith.mulf %693, %692 : vector<8x128xf32>
    %695 = vector.extract_strided_slice %671 {offsets = [0, 256], sizes = [8, 128], strides = [1, 1]} : vector<8x384xf32> to vector<8x128xf32>
    %696 = vector.extract_strided_slice %674 {offsets = [0, 256], sizes = [8, 128], strides = [1, 1]} : vector<8x384xf32> to vector<8x128xf32>
    %697 = arith.addf %696, %47 : vector<8x128xf32>
    %698 = arith.mulf %684, %697 : vector<8x128xf32>
    %699 = arith.addf %695, %698 : vector<8x128xf32>
    %700 = math.tanh %699 : vector<8x128xf32>
    %cst_329 = arith.constant 1.000000e+00 : f32
    %701 = vector.broadcast %cst_329 : f32 to vector<8x128xf32>
    %702 = arith.subf %701, %694 : vector<8x128xf32>
    %703 = arith.mulf %702, %700 : vector<8x128xf32>
    %704 = arith.mulf %694, %628 : vector<8x128xf32>
    %705 = arith.addf %703, %704 : vector<8x128xf32>
    %c1_330 = arith.constant 1 : index
    %c0_331 = arith.constant 0 : index
    %c0_332 = arith.constant 0 : index
    %c0_333 = arith.constant 0 : index
    %706 = vector.load %arg2[%c1_330, %c0_331, %c0_332, %c0_333] : memref<2x2x128x384xf32, #tpu.memory_space<vmem>>, vector<1x1x128x384xf32>
    %707 = vector.shape_cast %706 : vector<1x1x128x384xf32> to vector<128x384xf32>
    %cst_334 = arith.constant dense<0.000000e+00> : vector<8x384xf32>
    %708 = tpu.matmul %705, %707, %cst_334 {dimension_numbers = #tpu.dot_dimension_numbers<[1], [0], [0], [1], [0, 0, 1, 1], [], []>} : vector<8x128xf32>, vector<128x384xf32>, vector<8x384xf32> -> vector<8x384xf32>
    %709 = arith.addf %708, %51 : vector<8x384xf32>
    %c1_335 = arith.constant 1 : index
    %c1_336 = arith.constant 1 : index
    %c0_337 = arith.constant 0 : index
    %c0_338 = arith.constant 0 : index
    %710 = vector.load %arg2[%c1_335, %c1_336, %c0_337, %c0_338] : memref<2x2x128x384xf32, #tpu.memory_space<vmem>>, vector<1x1x128x384xf32>
    %711 = vector.shape_cast %710 : vector<1x1x128x384xf32> to vector<128x384xf32>
    %cst_339 = arith.constant dense<0.000000e+00> : vector<8x384xf32>
    %712 = tpu.matmul %666, %711, %cst_339 {dimension_numbers = #tpu.dot_dimension_numbers<[1], [0], [0], [1], [0, 0, 1, 1], [], []>} : vector<8x128xf32>, vector<128x384xf32>, vector<8x384xf32> -> vector<8x384xf32>
    %713 = vector.extract_strided_slice %709 {offsets = [0, 0], sizes = [8, 128], strides = [1, 1]} : vector<8x384xf32> to vector<8x128xf32>
    %714 = vector.extract_strided_slice %712 {offsets = [0, 0], sizes = [8, 128], strides = [1, 1]} : vector<8x384xf32> to vector<8x128xf32>
    %715 = arith.addf %713, %714 : vector<8x128xf32>
    %cst_340 = arith.constant 5.000000e-01 : f32
    %716 = vector.broadcast %cst_340 : f32 to vector<8x128xf32>
    %717 = arith.mulf %716, %715 : vector<8x128xf32>
    %718 = math.tanh %717 : vector<8x128xf32>
    %cst_341 = arith.constant 1.000000e+00 : f32
    %719 = vector.broadcast %cst_341 : f32 to vector<8x128xf32>
    %720 = arith.addf %718, %719 : vector<8x128xf32>
    %cst_342 = arith.constant 5.000000e-01 : f32
    %721 = vector.broadcast %cst_342 : f32 to vector<8x128xf32>
    %722 = arith.mulf %721, %720 : vector<8x128xf32>
    %723 = vector.extract_strided_slice %709 {offsets = [0, 128], sizes = [8, 128], strides = [1, 1]} : vector<8x384xf32> to vector<8x128xf32>
    %724 = vector.extract_strided_slice %712 {offsets = [0, 128], sizes = [8, 128], strides = [1, 1]} : vector<8x384xf32> to vector<8x128xf32>
    %725 = arith.addf %723, %724 : vector<8x128xf32>
    %cst_343 = arith.constant 5.000000e-01 : f32
    %726 = vector.broadcast %cst_343 : f32 to vector<8x128xf32>
    %727 = arith.mulf %726, %725 : vector<8x128xf32>
    %728 = math.tanh %727 : vector<8x128xf32>
    %cst_344 = arith.constant 1.000000e+00 : f32
    %729 = vector.broadcast %cst_344 : f32 to vector<8x128xf32>
    %730 = arith.addf %728, %729 : vector<8x128xf32>
    %cst_345 = arith.constant 5.000000e-01 : f32
    %731 = vector.broadcast %cst_345 : f32 to vector<8x128xf32>
    %732 = arith.mulf %731, %730 : vector<8x128xf32>
    %733 = vector.extract_strided_slice %709 {offsets = [0, 256], sizes = [8, 128], strides = [1, 1]} : vector<8x384xf32> to vector<8x128xf32>
    %734 = vector.extract_strided_slice %712 {offsets = [0, 256], sizes = [8, 128], strides = [1, 1]} : vector<8x384xf32> to vector<8x128xf32>
    %735 = arith.addf %734, %49 : vector<8x128xf32>
    %736 = arith.mulf %722, %735 : vector<8x128xf32>
    %737 = arith.addf %733, %736 : vector<8x128xf32>
    %738 = math.tanh %737 : vector<8x128xf32>
    %cst_346 = arith.constant 1.000000e+00 : f32
    %739 = vector.broadcast %cst_346 : f32 to vector<8x128xf32>
    %740 = arith.subf %739, %732 : vector<8x128xf32>
    %741 = arith.mulf %740, %738 : vector<8x128xf32>
    %742 = arith.mulf %732, %666 : vector<8x128xf32>
    %743 = arith.addf %741, %742 : vector<8x128xf32>
    %c8_347 = arith.constant 8 : index
    %c0_348 = arith.constant 0 : index
    %c0_349 = arith.constant 0 : index
    %744 = vector.load %arg8[%c8_347, %c0_348, %c0_349] : memref<10x8x128xf32, #tpu.memory_space<vmem>>, vector<1x8x128xf32>
    %745 = vector.shape_cast %744 : vector<1x8x128xf32> to vector<8x128xf32>
    %746 = vector.shape_cast %743 : vector<8x128xf32> to vector<1x8x128xf32>
    tpu.vector_store %arg8[%c8_347, %c0_348, %c0_349], %746 {strides = array<i32>} : memref<10x8x128xf32, #tpu.memory_space<vmem>>, vector<1x8x128xf32>,
    %c9 = arith.constant 9 : index
    %c0_350 = arith.constant 0 : index
    %c0_351 = arith.constant 0 : index
    %747 = vector.load %arg7[%c9, %c0_350, %c0_351] : memref<10x8x384xf32, #tpu.memory_space<vmem>>, vector<1x8x384xf32>
    %748 = vector.shape_cast %747 : vector<1x8x384xf32> to vector<8x384xf32>
    %c0_352 = arith.constant 0 : index
    %c1_353 = arith.constant 1 : index
    %c0_354 = arith.constant 0 : index
    %c0_355 = arith.constant 0 : index
    %749 = vector.load %arg2[%c0_352, %c1_353, %c0_354, %c0_355] : memref<2x2x128x384xf32, #tpu.memory_space<vmem>>, vector<1x1x128x384xf32>
    %750 = vector.shape_cast %749 : vector<1x1x128x384xf32> to vector<128x384xf32>
    %cst_356 = arith.constant dense<0.000000e+00> : vector<8x384xf32>
    %751 = tpu.matmul %705, %750, %cst_356 {dimension_numbers = #tpu.dot_dimension_numbers<[1], [0], [0], [1], [0, 0, 1, 1], [], []>} : vector<8x128xf32>, vector<128x384xf32>, vector<8x384xf32> -> vector<8x384xf32>
    %752 = vector.extract_strided_slice %748 {offsets = [0, 0], sizes = [8, 128], strides = [1, 1]} : vector<8x384xf32> to vector<8x128xf32>
    %753 = vector.extract_strided_slice %751 {offsets = [0, 0], sizes = [8, 128], strides = [1, 1]} : vector<8x384xf32> to vector<8x128xf32>
    %754 = arith.addf %752, %753 : vector<8x128xf32>
    %cst_357 = arith.constant 5.000000e-01 : f32
    %755 = vector.broadcast %cst_357 : f32 to vector<8x128xf32>
    %756 = arith.mulf %755, %754 : vector<8x128xf32>
    %757 = math.tanh %756 : vector<8x128xf32>
    %cst_358 = arith.constant 1.000000e+00 : f32
    %758 = vector.broadcast %cst_358 : f32 to vector<8x128xf32>
    %759 = arith.addf %757, %758 : vector<8x128xf32>
    %cst_359 = arith.constant 5.000000e-01 : f32
    %760 = vector.broadcast %cst_359 : f32 to vector<8x128xf32>
    %761 = arith.mulf %760, %759 : vector<8x128xf32>
    %762 = vector.extract_strided_slice %748 {offsets = [0, 128], sizes = [8, 128], strides = [1, 1]} : vector<8x384xf32> to vector<8x128xf32>
    %763 = vector.extract_strided_slice %751 {offsets = [0, 128], sizes = [8, 128], strides = [1, 1]} : vector<8x384xf32> to vector<8x128xf32>
    %764 = arith.addf %762, %763 : vector<8x128xf32>
    %cst_360 = arith.constant 5.000000e-01 : f32
    %765 = vector.broadcast %cst_360 : f32 to vector<8x128xf32>
    %766 = arith.mulf %765, %764 : vector<8x128xf32>
    %767 = math.tanh %766 : vector<8x128xf32>
    %cst_361 = arith.constant 1.000000e+00 : f32
    %768 = vector.broadcast %cst_361 : f32 to vector<8x128xf32>
    %769 = arith.addf %767, %768 : vector<8x128xf32>
    %cst_362 = arith.constant 5.000000e-01 : f32
    %770 = vector.broadcast %cst_362 : f32 to vector<8x128xf32>
    %771 = arith.mulf %770, %769 : vector<8x128xf32>
    %772 = vector.extract_strided_slice %748 {offsets = [0, 256], sizes = [8, 128], strides = [1, 1]} : vector<8x384xf32> to vector<8x128xf32>
    %773 = vector.extract_strided_slice %751 {offsets = [0, 256], sizes = [8, 128], strides = [1, 1]} : vector<8x384xf32> to vector<8x128xf32>
    %774 = arith.addf %773, %47 : vector<8x128xf32>
    %775 = arith.mulf %761, %774 : vector<8x128xf32>
    %776 = arith.addf %772, %775 : vector<8x128xf32>
    %777 = math.tanh %776 : vector<8x128xf32>
    %cst_363 = arith.constant 1.000000e+00 : f32
    %778 = vector.broadcast %cst_363 : f32 to vector<8x128xf32>
    %779 = arith.subf %778, %771 : vector<8x128xf32>
    %780 = arith.mulf %779, %777 : vector<8x128xf32>
    %781 = arith.mulf %771, %705 : vector<8x128xf32>
    %782 = arith.addf %780, %781 : vector<8x128xf32>
    %c1_364 = arith.constant 1 : index
    %c0_365 = arith.constant 0 : index
    %c0_366 = arith.constant 0 : index
    %c0_367 = arith.constant 0 : index
    %783 = vector.load %arg2[%c1_364, %c0_365, %c0_366, %c0_367] : memref<2x2x128x384xf32, #tpu.memory_space<vmem>>, vector<1x1x128x384xf32>
    %784 = vector.shape_cast %783 : vector<1x1x128x384xf32> to vector<128x384xf32>
    %cst_368 = arith.constant dense<0.000000e+00> : vector<8x384xf32>
    %785 = tpu.matmul %782, %784, %cst_368 {dimension_numbers = #tpu.dot_dimension_numbers<[1], [0], [0], [1], [0, 0, 1, 1], [], []>} : vector<8x128xf32>, vector<128x384xf32>, vector<8x384xf32> -> vector<8x384xf32>
    %786 = arith.addf %785, %51 : vector<8x384xf32>
    %c1_369 = arith.constant 1 : index
    %c1_370 = arith.constant 1 : index
    %c0_371 = arith.constant 0 : index
    %c0_372 = arith.constant 0 : index
    %787 = vector.load %arg2[%c1_369, %c1_370, %c0_371, %c0_372] : memref<2x2x128x384xf32, #tpu.memory_space<vmem>>, vector<1x1x128x384xf32>
    %788 = vector.shape_cast %787 : vector<1x1x128x384xf32> to vector<128x384xf32>
    %cst_373 = arith.constant dense<0.000000e+00> : vector<8x384xf32>
    %789 = tpu.matmul %743, %788, %cst_373 {dimension_numbers = #tpu.dot_dimension_numbers<[1], [0], [0], [1], [0, 0, 1, 1], [], []>} : vector<8x128xf32>, vector<128x384xf32>, vector<8x384xf32> -> vector<8x384xf32>
    %790 = vector.extract_strided_slice %786 {offsets = [0, 0], sizes = [8, 128], strides = [1, 1]} : vector<8x384xf32> to vector<8x128xf32>
    %791 = vector.extract_strided_slice %789 {offsets = [0, 0], sizes = [8, 128], strides = [1, 1]} : vector<8x384xf32> to vector<8x128xf32>
    %792 = arith.addf %790, %791 : vector<8x128xf32>
    %cst_374 = arith.constant 5.000000e-01 : f32
    %793 = vector.broadcast %cst_374 : f32 to vector<8x128xf32>
    %794 = arith.mulf %793, %792 : vector<8x128xf32>
    %795 = math.tanh %794 : vector<8x128xf32>
    %cst_375 = arith.constant 1.000000e+00 : f32
    %796 = vector.broadcast %cst_375 : f32 to vector<8x128xf32>
    %797 = arith.addf %795, %796 : vector<8x128xf32>
    %cst_376 = arith.constant 5.000000e-01 : f32
    %798 = vector.broadcast %cst_376 : f32 to vector<8x128xf32>
    %799 = arith.mulf %798, %797 : vector<8x128xf32>
    %800 = vector.extract_strided_slice %786 {offsets = [0, 128], sizes = [8, 128], strides = [1, 1]} : vector<8x384xf32> to vector<8x128xf32>
    %801 = vector.extract_strided_slice %789 {offsets = [0, 128], sizes = [8, 128], strides = [1, 1]} : vector<8x384xf32> to vector<8x128xf32>
    %802 = arith.addf %800, %801 : vector<8x128xf32>
    %cst_377 = arith.constant 5.000000e-01 : f32
    %803 = vector.broadcast %cst_377 : f32 to vector<8x128xf32>
    %804 = arith.mulf %803, %802 : vector<8x128xf32>
    %805 = math.tanh %804 : vector<8x128xf32>
    %cst_378 = arith.constant 1.000000e+00 : f32
    %806 = vector.broadcast %cst_378 : f32 to vector<8x128xf32>
    %807 = arith.addf %805, %806 : vector<8x128xf32>
    %cst_379 = arith.constant 5.000000e-01 : f32
    %808 = vector.broadcast %cst_379 : f32 to vector<8x128xf32>
    %809 = arith.mulf %808, %807 : vector<8x128xf32>
    %810 = vector.extract_strided_slice %786 {offsets = [0, 256], sizes = [8, 128], strides = [1, 1]} : vector<8x384xf32> to vector<8x128xf32>
    %811 = vector.extract_strided_slice %789 {offsets = [0, 256], sizes = [8, 128], strides = [1, 1]} : vector<8x384xf32> to vector<8x128xf32>
    %812 = arith.addf %811, %49 : vector<8x128xf32>
    %813 = arith.mulf %799, %812 : vector<8x128xf32>
    %814 = arith.addf %810, %813 : vector<8x128xf32>
    %815 = math.tanh %814 : vector<8x128xf32>
    %cst_380 = arith.constant 1.000000e+00 : f32
    %816 = vector.broadcast %cst_380 : f32 to vector<8x128xf32>
    %817 = arith.subf %816, %809 : vector<8x128xf32>
    %818 = arith.mulf %817, %815 : vector<8x128xf32>
    %819 = arith.mulf %809, %743 : vector<8x128xf32>
    %820 = arith.addf %818, %819 : vector<8x128xf32>
    %c9_381 = arith.constant 9 : index
    %c0_382 = arith.constant 0 : index
    %c0_383 = arith.constant 0 : index
    %821 = vector.load %arg8[%c9_381, %c0_382, %c0_383] : memref<10x8x128xf32, #tpu.memory_space<vmem>>, vector<1x8x128xf32>
    %822 = vector.shape_cast %821 : vector<1x8x128xf32> to vector<8x128xf32>
    %823 = vector.shape_cast %820 : vector<8x128xf32> to vector<1x8x128xf32>
    tpu.vector_store %arg8[%c9_381, %c0_382, %c0_383], %823 {strides = array<i32>} : memref<10x8x128xf32, #tpu.memory_space<vmem>>, vector<1x8x128xf32>,
    %c0_384 = arith.constant 0 : index
    %c0_385 = arith.constant 0 : index
    %c0_386 = arith.constant 0 : index
    %824 = vector.load %arg8[%c0_384, %c0_385, %c0_386] : memref<10x8x128xf32, #tpu.memory_space<vmem>>, vector<10x8x128xf32>
    %825 = vector.shape_cast %824 : vector<10x8x128xf32> to vector<80x128xf32>
    %c0_387 = arith.constant 0 : index
    %c0_388 = arith.constant 0 : index
    %c0_389 = arith.constant 0 : index
    %826 = vector.load %arg4[%c0_387, %c0_388, %c0_389] : memref<4x128x128xf32, #tpu.memory_space<vmem>>, vector<1x128x128xf32>
    %827 = vector.shape_cast %826 : vector<1x128x128xf32> to vector<128x128xf32>
    %cst_390 = arith.constant dense<0.000000e+00> : vector<80x128xf32>
    %828 = tpu.matmul %825, %827, %cst_390 {dimension_numbers = #tpu.dot_dimension_numbers<[1], [0], [0], [1], [0, 0, 1, 1], [], []>} : vector<80x128xf32>, vector<128x128xf32>, vector<80x128xf32> -> vector<80x128xf32>
    %c0_391 = arith.constant 0 : index
    %c0_392 = arith.constant 0 : index
    %c0_393 = arith.constant 0 : index
    %829 = vector.load %arg5[%c0_391, %c0_392, %c0_393] : memref<4x8x128xf32, #tpu.memory_space<vmem>>, vector<1x1x128xf32>
    %830 = vector.shape_cast %829 : vector<1x1x128xf32> to vector<1x128xf32>
    %831 = vector.broadcast %830 : vector<1x128xf32> to vector<80x128xf32>
    %832 = arith.addf %828, %831 : vector<80x128xf32>
    %cst_394 = arith.constant 5.000000e-01 : f32
    %833 = vector.broadcast %cst_394 : f32 to vector<80x128xf32>
    %834 = arith.mulf %833, %832 : vector<80x128xf32>
    %cst_395 = arith.constant 0.707106769 : f32
    %835 = vector.broadcast %cst_395 : f32 to vector<80x128xf32>
    %836 = arith.mulf %832, %835 : vector<80x128xf32>
    %cst_396 = arith.constant 0.000000e+00 : f32
    %837 = vector.broadcast %cst_396 : f32 to vector<80x128xf32>
    %838 = arith.cmpf oge, %836, %837 : vector<80x128xf32>
    %cst_397 = arith.constant 1.000000e+00 : f32
    %cst_398 = arith.constant -1.000000e+00 : f32
    %839 = vector.broadcast %cst_397 : f32 to vector<80x128xf32>
    %840 = vector.broadcast %cst_398 : f32 to vector<80x128xf32>
    %841 = arith.select %838, %839, %840 : vector<80x128xi1>, vector<80x128xf32>
    %842 = math.absf %836 : vector<80x128xf32>
    %cst_399 = arith.constant 0.327591091 : f32
    %843 = vector.broadcast %cst_399 : f32 to vector<80x128xf32>
    %844 = arith.mulf %843, %842 : vector<80x128xf32>
    %cst_400 = arith.constant 1.000000e+00 : f32
    %845 = vector.broadcast %cst_400 : f32 to vector<80x128xf32>
    %846 = arith.addf %845, %844 : vector<80x128xf32>
    %cst_401 = arith.constant 1.000000e+00 : f32
    %847 = vector.broadcast %cst_401 : f32 to vector<80x128xf32>
    %848 = arith.divf %847, %846 : vector<80x128xf32>
    %cst_402 = arith.constant 1.06140542 : f32
    %849 = vector.broadcast %cst_402 : f32 to vector<80x128xf32>
    %850 = arith.mulf %849, %848 : vector<80x128xf32>
    %cst_403 = arith.constant -1.45315206 : f32
    %851 = vector.broadcast %cst_403 : f32 to vector<80x128xf32>
    %852 = arith.addf %850, %851 : vector<80x128xf32>
    %853 = arith.mulf %852, %848 : vector<80x128xf32>
    %cst_404 = arith.constant 1.42141378 : f32
    %854 = vector.broadcast %cst_404 : f32 to vector<80x128xf32>
    %855 = arith.addf %853, %854 : vector<80x128xf32>
    %856 = arith.mulf %855, %848 : vector<80x128xf32>
    %cst_405 = arith.constant -0.284496725 : f32
    %857 = vector.broadcast %cst_405 : f32 to vector<80x128xf32>
    %858 = arith.addf %856, %857 : vector<80x128xf32>
    %859 = arith.mulf %858, %848 : vector<80x128xf32>
    %cst_406 = arith.constant 0.254829586 : f32
    %860 = vector.broadcast %cst_406 : f32 to vector<80x128xf32>
    %861 = arith.addf %859, %860 : vector<80x128xf32>
    %862 = arith.mulf %861, %848 : vector<80x128xf32>
    %cst_407 = arith.constant 0.000000e+00 : f32
    %863 = vector.broadcast %cst_407 : f32 to vector<80x128xf32>
    %864 = arith.subf %863, %842 : vector<80x128xf32>
    %865 = arith.mulf %864, %842 : vector<80x128xf32>
    %866 = math.exp %865 : vector<80x128xf32>
    %867 = arith.mulf %862, %866 : vector<80x128xf32>
    %cst_408 = arith.constant 1.000000e+00 : f32
    %868 = vector.broadcast %cst_408 : f32 to vector<80x128xf32>
    %869 = arith.subf %868, %867 : vector<80x128xf32>
    %870 = arith.mulf %841, %869 : vector<80x128xf32>
    %cst_409 = arith.constant 1.000000e+00 : f32
    %871 = vector.broadcast %cst_409 : f32 to vector<80x128xf32>
    %872 = arith.addf %871, %870 : vector<80x128xf32>
    %873 = arith.mulf %834, %872 : vector<80x128xf32>
    %c1_410 = arith.constant 1 : index
    %c0_411 = arith.constant 0 : index
    %c0_412 = arith.constant 0 : index
    %874 = vector.load %arg4[%c1_410, %c0_411, %c0_412] : memref<4x128x128xf32, #tpu.memory_space<vmem>>, vector<1x128x128xf32>
    %875 = vector.shape_cast %874 : vector<1x128x128xf32> to vector<128x128xf32>
    %cst_413 = arith.constant dense<0.000000e+00> : vector<80x128xf32>
    %876 = tpu.matmul %873, %875, %cst_413 {dimension_numbers = #tpu.dot_dimension_numbers<[1], [0], [0], [1], [0, 0, 1, 1], [], []>} : vector<80x128xf32>, vector<128x128xf32>, vector<80x128xf32> -> vector<80x128xf32>
    %c1_414 = arith.constant 1 : index
    %c0_415 = arith.constant 0 : index
    %c0_416 = arith.constant 0 : index
    %877 = vector.load %arg5[%c1_414, %c0_415, %c0_416] : memref<4x8x128xf32, #tpu.memory_space<vmem>>, vector<1x1x128xf32>
    %878 = vector.shape_cast %877 : vector<1x1x128xf32> to vector<1x128xf32>
    %879 = vector.broadcast %878 : vector<1x128xf32> to vector<80x128xf32>
    %880 = arith.addf %876, %879 : vector<80x128xf32>
    %cst_417 = arith.constant 5.000000e-01 : f32
    %881 = vector.broadcast %cst_417 : f32 to vector<80x128xf32>
    %882 = arith.mulf %881, %880 : vector<80x128xf32>
    %cst_418 = arith.constant 0.707106769 : f32
    %883 = vector.broadcast %cst_418 : f32 to vector<80x128xf32>
    %884 = arith.mulf %880, %883 : vector<80x128xf32>
    %cst_419 = arith.constant 0.000000e+00 : f32
    %885 = vector.broadcast %cst_419 : f32 to vector<80x128xf32>
    %886 = arith.cmpf oge, %884, %885 : vector<80x128xf32>
    %cst_420 = arith.constant 1.000000e+00 : f32
    %cst_421 = arith.constant -1.000000e+00 : f32
    %887 = vector.broadcast %cst_420 : f32 to vector<80x128xf32>
    %888 = vector.broadcast %cst_421 : f32 to vector<80x128xf32>
    %889 = arith.select %886, %887, %888 : vector<80x128xi1>, vector<80x128xf32>
    %890 = math.absf %884 : vector<80x128xf32>
    %cst_422 = arith.constant 0.327591091 : f32
    %891 = vector.broadcast %cst_422 : f32 to vector<80x128xf32>
    %892 = arith.mulf %891, %890 : vector<80x128xf32>
    %cst_423 = arith.constant 1.000000e+00 : f32
    %893 = vector.broadcast %cst_423 : f32 to vector<80x128xf32>
    %894 = arith.addf %893, %892 : vector<80x128xf32>
    %cst_424 = arith.constant 1.000000e+00 : f32
    %895 = vector.broadcast %cst_424 : f32 to vector<80x128xf32>
    %896 = arith.divf %895, %894 : vector<80x128xf32>
    %cst_425 = arith.constant 1.06140542 : f32
    %897 = vector.broadcast %cst_425 : f32 to vector<80x128xf32>
    %898 = arith.mulf %897, %896 : vector<80x128xf32>
    %cst_426 = arith.constant -1.45315206 : f32
    %899 = vector.broadcast %cst_426 : f32 to vector<80x128xf32>
    %900 = arith.addf %898, %899 : vector<80x128xf32>
    %901 = arith.mulf %900, %896 : vector<80x128xf32>
    %cst_427 = arith.constant 1.42141378 : f32
    %902 = vector.broadcast %cst_427 : f32 to vector<80x128xf32>
    %903 = arith.addf %901, %902 : vector<80x128xf32>
    %904 = arith.mulf %903, %896 : vector<80x128xf32>
    %cst_428 = arith.constant -0.284496725 : f32
    %905 = vector.broadcast %cst_428 : f32 to vector<80x128xf32>
    %906 = arith.addf %904, %905 : vector<80x128xf32>
    %907 = arith.mulf %906, %896 : vector<80x128xf32>
    %cst_429 = arith.constant 0.254829586 : f32
    %908 = vector.broadcast %cst_429 : f32 to vector<80x128xf32>
    %909 = arith.addf %907, %908 : vector<80x128xf32>
    %910 = arith.mulf %909, %896 : vector<80x128xf32>
    %cst_430 = arith.constant 0.000000e+00 : f32
    %911 = vector.broadcast %cst_430 : f32 to vector<80x128xf32>
    %912 = arith.subf %911, %890 : vector<80x128xf32>
    %913 = arith.mulf %912, %890 : vector<80x128xf32>
    %914 = math.exp %913 : vector<80x128xf32>
    %915 = arith.mulf %910, %914 : vector<80x128xf32>
    %cst_431 = arith.constant 1.000000e+00 : f32
    %916 = vector.broadcast %cst_431 : f32 to vector<80x128xf32>
    %917 = arith.subf %916, %915 : vector<80x128xf32>
    %918 = arith.mulf %889, %917 : vector<80x128xf32>
    %cst_432 = arith.constant 1.000000e+00 : f32
    %919 = vector.broadcast %cst_432 : f32 to vector<80x128xf32>
    %920 = arith.addf %919, %918 : vector<80x128xf32>
    %921 = arith.mulf %882, %920 : vector<80x128xf32>
    %c2_433 = arith.constant 2 : index
    %c0_434 = arith.constant 0 : index
    %c0_435 = arith.constant 0 : index
    %922 = vector.load %arg4[%c2_433, %c0_434, %c0_435] : memref<4x128x128xf32, #tpu.memory_space<vmem>>, vector<1x128x128xf32>
    %923 = vector.shape_cast %922 : vector<1x128x128xf32> to vector<128x128xf32>
    %cst_436 = arith.constant dense<0.000000e+00> : vector<80x128xf32>
    %924 = tpu.matmul %921, %923, %cst_436 {dimension_numbers = #tpu.dot_dimension_numbers<[1], [0], [0], [1], [0, 0, 1, 1], [], []>} : vector<80x128xf32>, vector<128x128xf32>, vector<80x128xf32> -> vector<80x128xf32>
    %c2_437 = arith.constant 2 : index
    %c0_438 = arith.constant 0 : index
    %c0_439 = arith.constant 0 : index
    %925 = vector.load %arg5[%c2_437, %c0_438, %c0_439] : memref<4x8x128xf32, #tpu.memory_space<vmem>>, vector<1x1x128xf32>
    %926 = vector.shape_cast %925 : vector<1x1x128xf32> to vector<1x128xf32>
    %927 = vector.broadcast %926 : vector<1x128xf32> to vector<80x128xf32>
    %928 = arith.addf %924, %927 : vector<80x128xf32>
    %cst_440 = arith.constant 5.000000e-01 : f32
    %929 = vector.broadcast %cst_440 : f32 to vector<80x128xf32>
    %930 = arith.mulf %929, %928 : vector<80x128xf32>
    %cst_441 = arith.constant 0.707106769 : f32
    %931 = vector.broadcast %cst_441 : f32 to vector<80x128xf32>
    %932 = arith.mulf %928, %931 : vector<80x128xf32>
    %cst_442 = arith.constant 0.000000e+00 : f32
    %933 = vector.broadcast %cst_442 : f32 to vector<80x128xf32>
    %934 = arith.cmpf oge, %932, %933 : vector<80x128xf32>
    %cst_443 = arith.constant 1.000000e+00 : f32
    %cst_444 = arith.constant -1.000000e+00 : f32
    %935 = vector.broadcast %cst_443 : f32 to vector<80x128xf32>
    %936 = vector.broadcast %cst_444 : f32 to vector<80x128xf32>
    %937 = arith.select %934, %935, %936 : vector<80x128xi1>, vector<80x128xf32>
    %938 = math.absf %932 : vector<80x128xf32>
    %cst_445 = arith.constant 0.327591091 : f32
    %939 = vector.broadcast %cst_445 : f32 to vector<80x128xf32>
    %940 = arith.mulf %939, %938 : vector<80x128xf32>
    %cst_446 = arith.constant 1.000000e+00 : f32
    %941 = vector.broadcast %cst_446 : f32 to vector<80x128xf32>
    %942 = arith.addf %941, %940 : vector<80x128xf32>
    %cst_447 = arith.constant 1.000000e+00 : f32
    %943 = vector.broadcast %cst_447 : f32 to vector<80x128xf32>
    %944 = arith.divf %943, %942 : vector<80x128xf32>
    %cst_448 = arith.constant 1.06140542 : f32
    %945 = vector.broadcast %cst_448 : f32 to vector<80x128xf32>
    %946 = arith.mulf %945, %944 : vector<80x128xf32>
    %cst_449 = arith.constant -1.45315206 : f32
    %947 = vector.broadcast %cst_449 : f32 to vector<80x128xf32>
    %948 = arith.addf %946, %947 : vector<80x128xf32>
    %949 = arith.mulf %948, %944 : vector<80x128xf32>
    %cst_450 = arith.constant 1.42141378 : f32
    %950 = vector.broadcast %cst_450 : f32 to vector<80x128xf32>
    %951 = arith.addf %949, %950 : vector<80x128xf32>
    %952 = arith.mulf %951, %944 : vector<80x128xf32>
    %cst_451 = arith.constant -0.284496725 : f32
    %953 = vector.broadcast %cst_451 : f32 to vector<80x128xf32>
    %954 = arith.addf %952, %953 : vector<80x128xf32>
    %955 = arith.mulf %954, %944 : vector<80x128xf32>
    %cst_452 = arith.constant 0.254829586 : f32
    %956 = vector.broadcast %cst_452 : f32 to vector<80x128xf32>
    %957 = arith.addf %955, %956 : vector<80x128xf32>
    %958 = arith.mulf %957, %944 : vector<80x128xf32>
    %cst_453 = arith.constant 0.000000e+00 : f32
    %959 = vector.broadcast %cst_453 : f32 to vector<80x128xf32>
    %960 = arith.subf %959, %938 : vector<80x128xf32>
    %961 = arith.mulf %960, %938 : vector<80x128xf32>
    %962 = math.exp %961 : vector<80x128xf32>
    %963 = arith.mulf %958, %962 : vector<80x128xf32>
    %cst_454 = arith.constant 1.000000e+00 : f32
    %964 = vector.broadcast %cst_454 : f32 to vector<80x128xf32>
    %965 = arith.subf %964, %963 : vector<80x128xf32>
    %966 = arith.mulf %937, %965 : vector<80x128xf32>
    %cst_455 = arith.constant 1.000000e+00 : f32
    %967 = vector.broadcast %cst_455 : f32 to vector<80x128xf32>
    %968 = arith.addf %967, %966 : vector<80x128xf32>
    %969 = arith.mulf %930, %968 : vector<80x128xf32>
    %c3_456 = arith.constant 3 : index
    %c0_457 = arith.constant 0 : index
    %c0_458 = arith.constant 0 : index
    %970 = vector.load %arg4[%c3_456, %c0_457, %c0_458] : memref<4x128x128xf32, #tpu.memory_space<vmem>>, vector<1x128x128xf32>
    %971 = vector.shape_cast %970 : vector<1x128x128xf32> to vector<128x128xf32>
    %cst_459 = arith.constant dense<0.000000e+00> : vector<80x128xf32>
    %972 = tpu.matmul %969, %971, %cst_459 {dimension_numbers = #tpu.dot_dimension_numbers<[1], [0], [0], [1], [0, 0, 1, 1], [], []>} : vector<80x128xf32>, vector<128x128xf32>, vector<80x128xf32> -> vector<80x128xf32>
    %c3_460 = arith.constant 3 : index
    %c0_461 = arith.constant 0 : index
    %c0_462 = arith.constant 0 : index
    %973 = vector.load %arg5[%c3_460, %c0_461, %c0_462] : memref<4x8x128xf32, #tpu.memory_space<vmem>>, vector<1x1x128xf32>
    %974 = vector.shape_cast %973 : vector<1x1x128xf32> to vector<1x128xf32>
    %975 = vector.broadcast %974 : vector<1x128xf32> to vector<80x128xf32>
    %976 = arith.addf %972, %975 : vector<80x128xf32>
    %cst_463 = arith.constant 5.000000e-01 : f32
    %977 = vector.broadcast %cst_463 : f32 to vector<80x128xf32>
    %978 = arith.mulf %977, %976 : vector<80x128xf32>
    %cst_464 = arith.constant 0.707106769 : f32
    %979 = vector.broadcast %cst_464 : f32 to vector<80x128xf32>
    %980 = arith.mulf %976, %979 : vector<80x128xf32>
    %cst_465 = arith.constant 0.000000e+00 : f32
    %981 = vector.broadcast %cst_465 : f32 to vector<80x128xf32>
    %982 = arith.cmpf oge, %980, %981 : vector<80x128xf32>
    %cst_466 = arith.constant 1.000000e+00 : f32
    %cst_467 = arith.constant -1.000000e+00 : f32
    %983 = vector.broadcast %cst_466 : f32 to vector<80x128xf32>
    %984 = vector.broadcast %cst_467 : f32 to vector<80x128xf32>
    %985 = arith.select %982, %983, %984 : vector<80x128xi1>, vector<80x128xf32>
    %986 = math.absf %980 : vector<80x128xf32>
    %cst_468 = arith.constant 0.327591091 : f32
    %987 = vector.broadcast %cst_468 : f32 to vector<80x128xf32>
    %988 = arith.mulf %987, %986 : vector<80x128xf32>
    %cst_469 = arith.constant 1.000000e+00 : f32
    %989 = vector.broadcast %cst_469 : f32 to vector<80x128xf32>
    %990 = arith.addf %989, %988 : vector<80x128xf32>
    %cst_470 = arith.constant 1.000000e+00 : f32
    %991 = vector.broadcast %cst_470 : f32 to vector<80x128xf32>
    %992 = arith.divf %991, %990 : vector<80x128xf32>
    %cst_471 = arith.constant 1.06140542 : f32
    %993 = vector.broadcast %cst_471 : f32 to vector<80x128xf32>
    %994 = arith.mulf %993, %992 : vector<80x128xf32>
    %cst_472 = arith.constant -1.45315206 : f32
    %995 = vector.broadcast %cst_472 : f32 to vector<80x128xf32>
    %996 = arith.addf %994, %995 : vector<80x128xf32>
    %997 = arith.mulf %996, %992 : vector<80x128xf32>
    %cst_473 = arith.constant 1.42141378 : f32
    %998 = vector.broadcast %cst_473 : f32 to vector<80x128xf32>
    %999 = arith.addf %997, %998 : vector<80x128xf32>
    %1000 = arith.mulf %999, %992 : vector<80x128xf32>
    %cst_474 = arith.constant -0.284496725 : f32
    %1001 = vector.broadcast %cst_474 : f32 to vector<80x128xf32>
    %1002 = arith.addf %1000, %1001 : vector<80x128xf32>
    %1003 = arith.mulf %1002, %992 : vector<80x128xf32>
    %cst_475 = arith.constant 0.254829586 : f32
    %1004 = vector.broadcast %cst_475 : f32 to vector<80x128xf32>
    %1005 = arith.addf %1003, %1004 : vector<80x128xf32>
    %1006 = arith.mulf %1005, %992 : vector<80x128xf32>
    %cst_476 = arith.constant 0.000000e+00 : f32
    %1007 = vector.broadcast %cst_476 : f32 to vector<80x128xf32>
    %1008 = arith.subf %1007, %986 : vector<80x128xf32>
    %1009 = arith.mulf %1008, %986 : vector<80x128xf32>
    %1010 = math.exp %1009 : vector<80x128xf32>
    %1011 = arith.mulf %1006, %1010 : vector<80x128xf32>
    %cst_477 = arith.constant 1.000000e+00 : f32
    %1012 = vector.broadcast %cst_477 : f32 to vector<80x128xf32>
    %1013 = arith.subf %1012, %1011 : vector<80x128xf32>
    %1014 = arith.mulf %985, %1013 : vector<80x128xf32>
    %cst_478 = arith.constant 1.000000e+00 : f32
    %1015 = vector.broadcast %cst_478 : f32 to vector<80x128xf32>
    %1016 = arith.addf %1015, %1014 : vector<80x128xf32>
    %1017 = arith.mulf %978, %1016 : vector<80x128xf32>
    %1018 = vector.shape_cast %1017 : vector<80x128xf32> to vector<10x8x128xf32>
    %c0_479 = arith.constant 0 : index
    %c0_480 = arith.constant 0 : index
    %c0_481 = arith.constant 0 : index
    %1019 = vector.load %arg6[%c0_479, %c0_480, %c0_481] : memref<10x8x128xf32, #tpu.memory_space<vmem>>, vector<10x8x128xf32>
    tpu.vector_store %arg6[%c0_479, %c0_480, %c0_481], %1018 {strides = array<i32>} : memref<10x8x128xf32, #tpu.memory_space<vmem>>, vector<10x8x128xf32>,
    return
  }
}

</mosaic_0001>

<llo_original>
// kernel: _lambda_.1
$region0: #{_lambda_.1}
  #allocation0 [shape = 'u32[]', space=smem, size = 0x4, offset = 0x4, fixed_abs, tag = 'smem constant byte address 0x4 - core index']
  #allocation1 [shape = 'u32[72,128]{1,0:T(1,128)}', space=vmem, size = 0x9000, scoped, tag = 'internal scratch']
  #allocation2 [shape = 'f32[10,8,384]{2,1,0:T(8,128)}', space=vmem, size = 0x1e000, scoped, tag = 'scratch operand']
  #allocation3 [shape = 'f32[10,8,128]{2,1,0:T(8,128)}', space=vmem, size = 0xa000, scoped, tag = 'scratch operand']
  %s0 = inlined_call_operand.vmem [shape: f32[10,8,128], index: 0, kind: input, shape index: {}]
  %s1 = inlined_call_operand.vmem [shape: f32[2,10,8,128], index: 1, kind: input, shape index: {}]
  %s2 = inlined_call_operand.hbm [shape: f32[2,2,128,384], index: 2, kind: input, shape index: {}]
  %s3 = inlined_call_operand.vmem [shape: f32[2,2,8,384], index: 3, kind: input, shape index: {}]
  %s4 = inlined_call_operand.hbm [shape: f32[4,128,128], index: 4, kind: input, shape index: {}]
  %s5 = inlined_call_operand.vmem [shape: f32[4,8,128], index: 5, kind: input, shape index: {}]
  %s6 = inlined_call_operand.vmem [shape: f32[10,8,128], index: 6, kind: output, shape index: {}]
  %s7 = sld [smem:[#allocation0]]
  $region42: #{_lambda_.1} parent=0
    _
  %s9 = ssub.s32 1, %s7
  %s10 = scalar_select 0, %s9, %s7
  $region1: #{_lambda_.1} parent=0
    #allocation4 [shape = 'u8[786432]{0}', space=vmem, size = 0xc0000, scoped, tag = 'input window, operand 2, single buffered']
    #allocation5 [shape = 's32[1]{0}', space=sflag, size = 0x4, scoped, tag = 'scoped memory for _lambda_.1']
    #allocation6 [shape = 'u8[262144]{0}', space=vmem, size = 0x40000, scoped, tag = 'input window, operand 4, single buffered']
    #allocation7 [shape = 's32[1]{0}', space=sflag, size = 0x4, scoped, tag = 'scoped memory for _lambda_.1']
    %11 = vsyncpa [#allocation5], 0
    %12 = vsyncpa [#allocation7], 0
    // Predicated region
    $region2: #{_lambda_.1} parent=1 // pred_check
      _
    $region3: #{_lambda_.1} parent=1 // pred_check_branch
      %14 = sbr.rel (0) target = $region5
    $region4: #{_lambda_.1} parent=1 // pred_region
      _
    $region5: #{_lambda_.1} parent=1 // pred_fallthru
      _
    // Predicated region
    $region6: #{_lambda_.1} parent=1 // pred_check
      _
    $region7: #{_lambda_.1} parent=1 // pred_check_branch
      %16 = sbr.rel (0) target = $region9
    $region8: #{_lambda_.1} parent=1 // pred_region
      _
    $region9: #{_lambda_.1} parent=1 // pred_fallthru
      _
    // Predicated region
    $region10: #{_lambda_.1} parent=1 // pred_check
      _
    $region11: #{_lambda_.1} parent=1 // pred_check_branch
      %18 = sbr.rel (0) target = $region13
    $region12: #{_lambda_.1} parent=1 // pred_region
      %20 = vsyncadd [#allocation5], 0
      %s21 = sshll.u32 %s2, 4
      %s22 = int_to_ptr.hbm [resolvable:$true] %s21
      %s23 = sshll.u32 [#allocation4], 4
      %s24 = int_to_ptr.vmem [resolvable:$true] %s23
      %29 = dma.hbm_to_vmem [thread:$0]  %s22, 24576, %s24, [#allocation5], 384, 384, 24
    $region13: #{_lambda_.1} parent=1 // pred_fallthru
      _
    // Predicated region
    $region14: #{_lambda_.1} parent=1 // pred_check
      _
    $region15: #{_lambda_.1} parent=1 // pred_check_branch
      %31 = sbr.rel (0) target = $region17
    $region16: #{_lambda_.1} parent=1 // pred_region
      _
    $region17: #{_lambda_.1} parent=1 // pred_fallthru
      _
    // Predicated region
    $region18: #{_lambda_.1} parent=1 // pred_check
      _
    $region19: #{_lambda_.1} parent=1 // pred_check_branch
      %33 = sbr.rel (0) target = $region21
    $region20: #{_lambda_.1} parent=1 // pred_region
      %35 = vsyncadd [#allocation7], 0
      %s36 = sshll.u32 %s4, 4
      %s37 = int_to_ptr.hbm [resolvable:$true] %s36
      %s38 = sshll.u32 [#allocation6], 4
      %s39 = int_to_ptr.vmem [resolvable:$true] %s38
      %44 = dma.hbm_to_vmem [thread:$0]  %s37, 8192, %s39, [#allocation7], 128, 128, 8
    $region21: #{_lambda_.1} parent=1 // pred_fallthru
      _
    // Predicated region
    $region22: #{_lambda_.1} parent=1 // pred_check
      _
    $region23: #{_lambda_.1} parent=1 // pred_check_branch
      %46 = sbr.rel (0) target = $region25
    $region24: #{_lambda_.1} parent=1 // pred_region
      _
    $region25: #{_lambda_.1} parent=1 // pred_fallthru
      _
    // Predicated region
    $region26: #{_lambda_.1} parent=1 // pred_check
      _
    $region27: #{_lambda_.1} parent=1 // pred_check_branch
      %48 = sbr.rel (0) target = $region29
    $region28: #{_lambda_.1} parent=1 // pred_region
      %50 = dma.done [#allocation5], 24576
    $region29: #{_lambda_.1} parent=1 // pred_fallthru
      _
    // Predicated region
    $region30: #{_lambda_.1} parent=1 // pred_check
      _
    $region31: #{_lambda_.1} parent=1 // pred_check_branch
      %52 = sbr.rel (0) target = $region33
    $region32: #{_lambda_.1} parent=1 // pred_region
      %54 = dma.done [#allocation7], 8192
    $region33: #{_lambda_.1} parent=1 // pred_fallthru
      _
    %v55 = vld [vmem:[%s0] sm:$0xff]
    %v56 = vld [vmem:[%s0 + $0x8] sm:$0xff]
    %v57 = vld [vmem:[%s0 + $0x10] sm:$0xff]
    %v58 = vld [vmem:[%s0 + $0x18] sm:$0xff]
    %v59 = vld [vmem:[%s0 + $0x20] sm:$0xff]
    %v60 = vld [vmem:[%s0 + $0x28] sm:$0xff]
    %v61 = vld [vmem:[%s0 + $0x30] sm:$0xff]
    %v62 = vld [vmem:[%s0 + $0x38] sm:$0xff]
    %v63 = vld [vmem:[%s0 + $0x40] sm:$0xff]
    %v64 = vld [vmem:[%s0 + $0x48] sm:$0xff]
    %v65 = vlaneseq
    %v66 = vshrl.u32 %v65, 7
    %v67 = vlaneseq
    %v68 = vand.u32 %v67, 127
    %vm69 = vcmp.lt.s32.totalorder %v66, 2
    %vm70 = vcmp.lt.s32.totalorder %v68, 48
    %vm71 = vmand %vm69, %vm70
    %72 = vadd.xlane.f32.xlu0 %v55
    %v73 = vpop.xlane.xlu0 %72
    %74 = vadd.xlane.f32.xlu0 %v56
    %v75 = vpop.xlane.xlu0 %74
    %76 = vadd.xlane.f32.xlu0 %v57
    %v77 = vpop.xlane.xlu0 %76
    %78 = vadd.xlane.f32.xlu0 %v58
    %v79 = vpop.xlane.xlu0 %78
    %80 = vadd.xlane.f32.xlu0 %v59
    %v81 = vpop.xlane.xlu0 %80
    %82 = vadd.xlane.f32.xlu0 %v60
    %v83 = vpop.xlane.xlu0 %82
    %84 = vadd.xlane.f32.xlu0 %v61
    %v85 = vpop.xlane.xlu0 %84
    %86 = vadd.xlane.f32.xlu0 %v62
    %v87 = vpop.xlane.xlu0 %86
    %88 = vadd.xlane.f32.xlu0 %v63
    %v89 = vpop.xlane.xlu0 %88
    %90 = vadd.xlane.f32.xlu0 %v64
    %v91 = vpop.xlane.xlu0 %90
    %v92 = vrot.slane %v73, 4
    %v93 = vadd.f32 %v73, %v92
    %v94 = vrot.slane %v93, 2
    %v95 = vadd.f32 %v93, %v94
    %v96 = vrot.slane %v95, 1
    %v97 = vadd.f32 %v95, %v96
    %v98 = vrot.slane %v75, 4
    %v99 = vadd.f32 %v75, %v98
    %v100 = vrot.slane %v99, 2
    %v101 = vadd.f32 %v99, %v100
    %v102 = vrot.slane %v101, 1
    %v103 = vadd.f32 %v101, %v102
    %v104 = vrot.slane %v77, 4
    %v105 = vadd.f32 %v77, %v104
    %v106 = vrot.slane %v105, 2
    %v107 = vadd.f32 %v105, %v106
    %v108 = vrot.slane %v107, 1
    %v109 = vadd.f32 %v107, %v108
    %v110 = vrot.slane %v79, 4
    %v111 = vadd.f32 %v79, %v110
    %v112 = vrot.slane %v111, 2
    %v113 = vadd.f32 %v111, %v112
    %v114 = vrot.slane %v113, 1
    %v115 = vadd.f32 %v113, %v114
    %v116 = vrot.slane %v81, 4
    %v117 = vadd.f32 %v81, %v116
    %v118 = vrot.slane %v117, 2
    %v119 = vadd.f32 %v117, %v118
    %v120 = vrot.slane %v119, 1
    %v121 = vadd.f32 %v119, %v120
    %v122 = vrot.slane %v83, 4
    %v123 = vadd.f32 %v83, %v122
    %v124 = vrot.slane %v123, 2
    %v125 = vadd.f32 %v123, %v124
    %v126 = vrot.slane %v125, 1
    %v127 = vadd.f32 %v125, %v126
    %v128 = vrot.slane %v85, 4
    %v129 = vadd.f32 %v85, %v128
    %v130 = vrot.slane %v129, 2
    %v131 = vadd.f32 %v129, %v130
    %v132 = vrot.slane %v131, 1
    %v133 = vadd.f32 %v131, %v132
    %v134 = vrot.slane %v87, 4
    %v135 = vadd.f32 %v87, %v134
    %v136 = vrot.slane %v135, 2
    %v137 = vadd.f32 %v135, %v136
    %v138 = vrot.slane %v137, 1
    %v139 = vadd.f32 %v137, %v138
    %v140 = vrot.slane %v89, 4
    %v141 = vadd.f32 %v89, %v140
    %v142 = vrot.slane %v141, 2
    %v143 = vadd.f32 %v141, %v142
    %v144 = vrot.slane %v143, 1
    %v145 = vadd.f32 %v143, %v144
    %v146 = vrot.slane %v91, 4
    %v147 = vadd.f32 %v91, %v146
    %v148 = vrot.slane %v147, 2
    %v149 = vadd.f32 %v147, %v148
    %v150 = vrot.slane %v149, 1
    %v151 = vadd.f32 %v149, %v150
    %v152 = vmul.f32 %v97, 0.010416667
    %v153 = vmul.f32 %v103, 0.010416667
    %v154 = vmul.f32 %v109, 0.010416667
    %v155 = vmul.f32 %v115, 0.010416667
    %v156 = vmul.f32 %v121, 0.010416667
    %v157 = vmul.f32 %v127, 0.010416667
    %v158 = vmul.f32 %v133, 0.010416667
    %v159 = vmul.f32 %v139, 0.010416667
    %v160 = vmul.f32 %v145, 0.010416667
    %v161 = vmul.f32 %v151, 0.010416667
    %v162 = vsub.f32 %v55, %v152
    %v163 = vsub.f32 %v56, %v153
    %v164 = vsub.f32 %v57, %v154
    %v165 = vsub.f32 %v58, %v155
    %v166 = vsub.f32 %v59, %v156
    %v167 = vsub.f32 %v60, %v157
    %v168 = vsub.f32 %v61, %v158
    %v169 = vsub.f32 %v62, %v159
    %v170 = vsub.f32 %v63, %v160
    %v171 = vsub.f32 %v64, %v161
    %v172 = vsel %vm71, %v162, 0.0
    %v173 = vsel %vm71, %v163, 0.0
    %v174 = vsel %vm71, %v164, 0.0
    %v175 = vsel %vm71, %v165, 0.0
    %v176 = vsel %vm71, %v166, 0.0
    %v177 = vsel %vm71, %v167, 0.0
    %v178 = vsel %vm71, %v168, 0.0
    %v179 = vsel %vm71, %v169, 0.0
    %v180 = vsel %vm71, %v170, 0.0
    %v181 = vsel %vm71, %v171, 0.0
    %v182 = vmul.f32 %v172, %v172
    %v183 = vmul.f32 %v173, %v173
    %v184 = vmul.f32 %v174, %v174
    %v185 = vmul.f32 %v175, %v175
    %v186 = vmul.f32 %v176, %v176
    %v187 = vmul.f32 %v177, %v177
    %v188 = vmul.f32 %v178, %v178
    %v189 = vmul.f32 %v179, %v179
    %v190 = vmul.f32 %v180, %v180
    %v191 = vmul.f32 %v181, %v181
    %192 = vadd.xlane.f32.xlu0 %v182
    %v193 = vpop.xlane.xlu0 %192
    %194 = vadd.xlane.f32.xlu0 %v183
    %v195 = vpop.xlane.xlu0 %194
    %196 = vadd.xlane.f32.xlu0 %v184
    %v197 = vpop.xlane.xlu0 %196
    %198 = vadd.xlane.f32.xlu0 %v185
    %v199 = vpop.xlane.xlu0 %198
    %200 = vadd.xlane.f32.xlu0 %v186
    %v201 = vpop.xlane.xlu0 %200
    %202 = vadd.xlane.f32.xlu0 %v187
    %v203 = vpop.xlane.xlu0 %202
    %204 = vadd.xlane.f32.xlu0 %v188
    %v205 = vpop.xlane.xlu0 %204
    %206 = vadd.xlane.f32.xlu0 %v189
    %v207 = vpop.xlane.xlu0 %206
    %208 = vadd.xlane.f32.xlu0 %v190
    %v209 = vpop.xlane.xlu0 %208
    %210 = vadd.xlane.f32.xlu0 %v191
    %v211 = vpop.xlane.xlu0 %210
    %v212 = vrot.slane %v193, 4
    %v213 = vadd.f32 %v193, %v212
    %v214 = vrot.slane %v213, 2
    %v215 = vadd.f32 %v213, %v214
    %v216 = vrot.slane %v215, 1
    %v217 = vadd.f32 %v215, %v216
    %v218 = vrot.slane %v195, 4
    %v219 = vadd.f32 %v195, %v218
    %v220 = vrot.slane %v219, 2
    %v221 = vadd.f32 %v219, %v220
    %v222 = vrot.slane %v221, 1
    %v223 = vadd.f32 %v221, %v222
    %v224 = vrot.slane %v197, 4
    %v225 = vadd.f32 %v197, %v224
    %v226 = vrot.slane %v225, 2
    %v227 = vadd.f32 %v225, %v226
    %v228 = vrot.slane %v227, 1
    %v229 = vadd.f32 %v227, %v228
    %v230 = vrot.slane %v199, 4
    %v231 = vadd.f32 %v199, %v230
    %v232 = vrot.slane %v231, 2
    %v233 = vadd.f32 %v231, %v232
    %v234 = vrot.slane %v233, 1
    %v235 = vadd.f32 %v233, %v234
    %v236 = vrot.slane %v201, 4
    %v237 = vadd.f32 %v201, %v236
    %v238 = vrot.slane %v237, 2
    %v239 = vadd.f32 %v237, %v238
    %v240 = vrot.slane %v239, 1
    %v241 = vadd.f32 %v239, %v240
    %v242 = vrot.slane %v203, 4
    %v243 = vadd.f32 %v203, %v242
    %v244 = vrot.slane %v243, 2
    %v245 = vadd.f32 %v243, %v244
    %v246 = vrot.slane %v245, 1
    %v247 = vadd.f32 %v245, %v246
    %v248 = vrot.slane %v205, 4
    %v249 = vadd.f32 %v205, %v248
    %v250 = vrot.slane %v249, 2
    %v251 = vadd.f32 %v249, %v250
    %v252 = vrot.slane %v251, 1
    %v253 = vadd.f32 %v251, %v252
    %v254 = vrot.slane %v207, 4
    %v255 = vadd.f32 %v207, %v254
    %v256 = vrot.slane %v255, 2
    %v257 = vadd.f32 %v255, %v256
    %v258 = vrot.slane %v257, 1
    %v259 = vadd.f32 %v257, %v258
    %v260 = vrot.slane %v209, 4
    %v261 = vadd.f32 %v209, %v260
    %v262 = vrot.slane %v261, 2
    %v263 = vadd.f32 %v261, %v262
    %v264 = vrot.slane %v263, 1
    %v265 = vadd.f32 %v263, %v264
    %v266 = vrot.slane %v211, 4
    %v267 = vadd.f32 %v211, %v266
    %v268 = vrot.slane %v267, 2
    %v269 = vadd.f32 %v267, %v268
    %v270 = vrot.slane %v269, 1
    %v271 = vadd.f32 %v269, %v270
    %v272 = vmul.f32 %v217, 0.010416667
    %v273 = vmul.f32 %v223, 0.010416667
    %v274 = vmul.f32 %v229, 0.010416667
    %v275 = vmul.f32 %v235, 0.010416667
    %v276 = vmul.f32 %v241, 0.010416667
    %v277 = vmul.f32 %v247, 0.010416667
    %v278 = vmul.f32 %v253, 0.010416667
    %v279 = vmul.f32 %v259, 0.010416667
    %v280 = vmul.f32 %v265, 0.010416667
    %v281 = vmul.f32 %v271, 0.010416667
    %v282 = vadd.f32 %v272, 1e-05
    %v283 = vadd.f32 %v273, 1e-05
    %v284 = vadd.f32 %v274, 1e-05
    %v285 = vadd.f32 %v275, 1e-05
    %v286 = vadd.f32 %v276, 1e-05
    %v287 = vadd.f32 %v277, 1e-05
    %v288 = vadd.f32 %v278, 1e-05
    %v289 = vadd.f32 %v279, 1e-05
    %v290 = vadd.f32 %v280, 1e-05
    %v291 = vadd.f32 %v281, 1e-05
    %v292 = vrsqrt.pop %v282
    %v293 = vmul.f32 %v292, %v282
    %v294 = vmul.f32 %v293, %v292
    %v295 = vmul.f32 0.5, %v294
    %v296 = vsub.f32 1.5, %v295
    %v297 = vmul.f32 %v292, %v296
    %vm298 = vweird.f32 %v282
    %vm299 = vweird.f32 %v292
    %vm300 = vmor %vm298, %vm299
    %v301 = vsel %vm300, %v292, %v297
    %v302 = vrsqrt.pop %v283
    %v303 = vmul.f32 %v302, %v283
    %v304 = vmul.f32 %v303, %v302
    %v305 = vmul.f32 0.5, %v304
    %v306 = vsub.f32 1.5, %v305
    %v307 = vmul.f32 %v302, %v306
    %vm308 = vweird.f32 %v283
    %vm309 = vweird.f32 %v302
    %vm310 = vmor %vm308, %vm309
    %v311 = vsel %vm310, %v302, %v307
    %v312 = vrsqrt.pop %v284
    %v313 = vmul.f32 %v312, %v284
    %v314 = vmul.f32 %v313, %v312
    %v315 = vmul.f32 0.5, %v314
    %v316 = vsub.f32 1.5, %v315
    %v317 = vmul.f32 %v312, %v316
    %vm318 = vweird.f32 %v284
    %vm319 = vweird.f32 %v312
    %vm320 = vmor %vm318, %vm319
    %v321 = vsel %vm320, %v312, %v317
    %v322 = vrsqrt.pop %v285
    %v323 = vmul.f32 %v322, %v285
    %v324 = vmul.f32 %v323, %v322
    %v325 = vmul.f32 0.5, %v324
    %v326 = vsub.f32 1.5, %v325
    %v327 = vmul.f32 %v322, %v326
    %vm328 = vweird.f32 %v285
    %vm329 = vweird.f32 %v322
    %vm330 = vmor %vm328, %vm329
    %v331 = vsel %vm330, %v322, %v327
    %v332 = vrsqrt.pop %v286
    %v333 = vmul.f32 %v332, %v286
    %v334 = vmul.f32 %v333, %v332
    %v335 = vmul.f32 0.5, %v334
    %v336 = vsub.f32 1.5, %v335
    %v337 = vmul.f32 %v332, %v336
    %vm338 = vweird.f32 %v286
    %vm339 = vweird.f32 %v332
    %vm340 = vmor %vm338, %vm339
    %v341 = vsel %vm340, %v332, %v337
    %v342 = vrsqrt.pop %v287
    %v343 = vmul.f32 %v342, %v287
    %v344 = vmul.f32 %v343, %v342
    %v345 = vmul.f32 0.5, %v344
    %v346 = vsub.f32 1.5, %v345
    %v347 = vmul.f32 %v342, %v346
    %vm348 = vweird.f32 %v287
    %vm349 = vweird.f32 %v342
    %vm350 = vmor %vm348, %vm349
    %v351 = vsel %vm350, %v342, %v347
    %v352 = vrsqrt.pop %v288
    %v353 = vmul.f32 %v352, %v288
    %v354 = vmul.f32 %v353, %v352
    %v355 = vmul.f32 0.5, %v354
    %v356 = vsub.f32 1.5, %v355
    %v357 = vmul.f32 %v352, %v356
    %vm358 = vweird.f32 %v288
    %vm359 = vweird.f32 %v352
    %vm360 = vmor %vm358, %vm359
    %v361 = vsel %vm360, %v352, %v357
    %v362 = vrsqrt.pop %v289
    %v363 = vmul.f32 %v362, %v289
    %v364 = vmul.f32 %v363, %v362
    %v365 = vmul.f32 0.5, %v364
    %v366 = vsub.f32 1.5, %v365
    %v367 = vmul.f32 %v362, %v366
    %vm368 = vweird.f32 %v289
    %vm369 = vweird.f32 %v362
    %vm370 = vmor %vm368, %vm369
    %v371 = vsel %vm370, %v362, %v367
    %v372 = vrsqrt.pop %v290
    %v373 = vmul.f32 %v372, %v290
    %v374 = vmul.f32 %v373, %v372
    %v375 = vmul.f32 0.5, %v374
    %v376 = vsub.f32 1.5, %v375
    %v377 = vmul.f32 %v372, %v376
    %vm378 = vweird.f32 %v290
    %vm379 = vweird.f32 %v372
    %vm380 = vmor %vm378, %vm379
    %v381 = vsel %vm380, %v372, %v377
    %v382 = vrsqrt.pop %v291
    %v383 = vmul.f32 %v382, %v291
    %v384 = vmul.f32 %v383, %v382
    %v385 = vmul.f32 0.5, %v384
    %v386 = vsub.f32 1.5, %v385
    %v387 = vmul.f32 %v382, %v386
    %vm388 = vweird.f32 %v291
    %vm389 = vweird.f32 %v382
    %vm390 = vmor %vm388, %vm389
    %v391 = vsel %vm390, %v382, %v387
    %v392 = vmul.f32 %v162, %v301
    %v393 = vmul.f32 %v163, %v311
    %v394 = vmul.f32 %v164, %v321
    %v395 = vmul.f32 %v165, %v331
    %v396 = vmul.f32 %v166, %v341
    %v397 = vmul.f32 %v167, %v351
    %v398 = vmul.f32 %v168, %v361
    %v399 = vmul.f32 %v169, %v371
    %v400 = vmul.f32 %v170, %v381
    %v401 = vmul.f32 %v171, %v391
    %v402 = vld [vmem:[%s1] sm:$0xff]
    %v403 = vld [vmem:[%s1 + $0x8] sm:$0xff]
    %v404 = vld [vmem:[%s1 + $0x10] sm:$0xff]
    %v405 = vld [vmem:[%s1 + $0x18] sm:$0xff]
    %v406 = vld [vmem:[%s1 + $0x20] sm:$0xff]
    %v407 = vld [vmem:[%s1 + $0x28] sm:$0xff]
    %v408 = vld [vmem:[%s1 + $0x30] sm:$0xff]
    %v409 = vld [vmem:[%s1 + $0x38] sm:$0xff]
    %v410 = vld [vmem:[%s1 + $0x40] sm:$0xff]
    %v411 = vld [vmem:[%s1 + $0x48] sm:$0xff]
    %v412 = vmul.f32 %v392, %v402
    %v413 = vmul.f32 %v393, %v403
    %v414 = vmul.f32 %v394, %v404
    %v415 = vmul.f32 %v395, %v405
    %v416 = vmul.f32 %v396, %v406
    %v417 = vmul.f32 %v397, %v407
    %v418 = vmul.f32 %v398, %v408
    %v419 = vmul.f32 %v399, %v409
    %v420 = vmul.f32 %v400, %v410
    %v421 = vmul.f32 %v401, %v411
    %s422 = scalar_lea.vmem %s1, 80
    %v423 = vld [vmem:[%s422] sm:$0xff]
    %v424 = vld [vmem:[%s422 + $0x8] sm:$0xff]
    %v425 = vld [vmem:[%s422 + $0x10] sm:$0xff]
    %v426 = vld [vmem:[%s422 + $0x18] sm:$0xff]
    %v427 = vld [vmem:[%s422 + $0x20] sm:$0xff]
    %v428 = vld [vmem:[%s422 + $0x28] sm:$0xff]
    %v429 = vld [vmem:[%s422 + $0x30] sm:$0xff]
    %v430 = vld [vmem:[%s422 + $0x38] sm:$0xff]
    %v431 = vld [vmem:[%s422 + $0x40] sm:$0xff]
    %v432 = vld [vmem:[%s422 + $0x48] sm:$0xff]
    %v433 = vadd.f32 %v412, %v423
    %v434 = vadd.f32 %v413, %v424
    %v435 = vadd.f32 %v414, %v425
    %v436 = vadd.f32 %v415, %v426
    %v437 = vadd.f32 %v416, %v427
    %v438 = vadd.f32 %v417, %v428
    %v439 = vadd.f32 %v418, %v429
    %v440 = vadd.f32 %v419, %v430
    %v441 = vadd.f32 %v420, %v431
    %v442 = vadd.f32 %v421, %v432
    %v443 = vld [vmem:[#allocation4] sm:$0xff]
    %v444 = vld [vmem:[#allocation4 + $0x8] sm:$0xff]
    %v445 = vld [vmem:[#allocation4 + $0x10] sm:$0xff]
    %v446 = vld [vmem:[#allocation4 + $0x18] sm:$0xff]
    %v447 = vld [vmem:[#allocation4 + $0x20] sm:$0xff]
    %v448 = vld [vmem:[#allocation4 + $0x28] sm:$0xff]
    %v449 = vld [vmem:[#allocation4 + $0x30] sm:$0xff]
    %v450 = vld [vmem:[#allocation4 + $0x38] sm:$0xff]
    %v451 = vld [vmem:[#allocation4 + $0x40] sm:$0xff]
    %v452 = vld [vmem:[#allocation4 + $0x48] sm:$0xff]
    %v453 = vld [vmem:[#allocation4 + $0x50] sm:$0xff]
    %v454 = vld [vmem:[#allocation4 + $0x58] sm:$0xff]
    %v455 = vld [vmem:[#allocation4 + $0x60] sm:$0xff]
    %v456 = vld [vmem:[#allocation4 + $0x68] sm:$0xff]
    %v457 = vld [vmem:[#allocation4 + $0x70] sm:$0xff]
    %v458 = vld [vmem:[#allocation4 + $0x78] sm:$0xff]
    %v459 = vld [vmem:[#allocation4 + $0x80] sm:$0xff]
    %v460 = vld [vmem:[#allocation4 + $0x88] sm:$0xff]
    %v461 = vld [vmem:[#allocation4 + $0x90] sm:$0xff]
    %v462 = vld [vmem:[#allocation4 + $0x98] sm:$0xff]
    %v463 = vld [vmem:[#allocation4 + $0xa0] sm:$0xff]
    %v464 = vld [vmem:[#allocation4 + $0xa8] sm:$0xff]
    %v465 = vld [vmem:[#allocation4 + $0xb0] sm:$0xff]
    %v466 = vld [vmem:[#allocation4 + $0xb8] sm:$0xff]
    %v467 = vld [vmem:[#allocation4 + $0xc0] sm:$0xff]
    %v468 = vld [vmem:[#allocation4 + $0xc8] sm:$0xff]
    %v469 = vld [vmem:[#allocation4 + $0xd0] sm:$0xff]
    %v470 = vld [vmem:[#allocation4 + $0xd8] sm:$0xff]
    %v471 = vld [vmem:[#allocation4 + $0xe0] sm:$0xff]
    %v472 = vld [vmem:[#allocation4 + $0xe8] sm:$0xff]
    %v473 = vld [vmem:[#allocation4 + $0xf0] sm:$0xff]
    %v474 = vld [vmem:[#allocation4 + $0xf8] sm:$0xff]
    %v475 = vld [vmem:[#allocation4 + $0x100] sm:$0xff]
    %v476 = vld [vmem:[#allocation4 + $0x108] sm:$0xff]
    %v477 = vld [vmem:[#allocation4 + $0x110] sm:$0xff]
    %v478 = vld [vmem:[#allocation4 + $0x118] sm:$0xff]
    %v479 = vld [vmem:[#allocation4 + $0x120] sm:$0xff]
    %v480 = vld [vmem:[#allocation4 + $0x128] sm:$0xff]
    %v481 = vld [vmem:[#allocation4 + $0x130] sm:$0xff]
    %v482 = vld [vmem:[#allocation4 + $0x138] sm:$0xff]
    %v483 = vld [vmem:[#allocation4 + $0x140] sm:$0xff]
    %v484 = vld [vmem:[#allocation4 + $0x148] sm:$0xff]
    %v485 = vld [vmem:[#allocation4 + $0x150] sm:$0xff]
    %v486 = vld [vmem:[#allocation4 + $0x158] sm:$0xff]
    %v487 = vld [vmem:[#allocation4 + $0x160] sm:$0xff]
    %v488 = vld [vmem:[#allocation4 + $0x168] sm:$0xff]
    %v489 = vld [vmem:[#allocation4 + $0x170] sm:$0xff]
    %v490 = vld [vmem:[#allocation4 + $0x178] sm:$0xff]
    %v491 = vld [vmem:[%s3] ss:$8 sm:$0x7]
    %v493 = vperm.slane %v491, 0
    %v494 = vperm.slane %v491, 1
    %v495 = vperm.slane %v491, 2
    %499 = vmatpush.msra.mxu0 %v488
    %500 = vmatpush.msra.mxu0 %v485
    %501 = vmatpush.msra.mxu0 %v482
    %502 = vmatpush.msra.mxu0 %v479
    %503 = vmatpush.msra.mxu0 %v476
    %504 = vmatpush.msra.mxu0 %v473
    %505 = vmatpush.msra.mxu0 %v470
    %506 = vmatpush.msra.mxu0 %v467
    %507 = vmatpush.msra.mxu0 %v464
    %508 = vmatpush.msra.mxu0 %v461
    %509 = vmatpush.msra.mxu0 %v458
    %510 = vmatpush.msra.mxu0 %v455
    %511 = vmatpush.msra.mxu0 %v452
    %512 = vmatpush.msra.mxu0 %v449
    %513 = vmatpush.msra.mxu0 %v446
    %514 = vmatpush.msra.mxu0 %v443
    %515 = vmatmul.f32.gmra.mxu0 %v433
    %v516 = vpop.f32.mrf.mxu0
    %v517 = vadd.f32 %v493, %v516
    %518 = vmatmul.f32.gmra.mxu0 %v434
    %v519 = vpop.f32.mrf.mxu0
    %v520 = vadd.f32 %v493, %v519
    %521 = vmatmul.f32.gmra.mxu0 %v435
    %v522 = vpop.f32.mrf.mxu0
    %v523 = vadd.f32 %v493, %v522
    %524 = vmatmul.f32.gmra.mxu0 %v436
    %v525 = vpop.f32.mrf.mxu0
    %v526 = vadd.f32 %v493, %v525
    %527 = vmatmul.f32.gmra.mxu0 %v437
    %v528 = vpop.f32.mrf.mxu0
    %v529 = vadd.f32 %v493, %v528
    %530 = vmatmul.f32.gmra.mxu0 %v438
    %v531 = vpop.f32.mrf.mxu0
    %v532 = vadd.f32 %v493, %v531
    %533 = vmatmul.f32.gmra.mxu0 %v439
    %v534 = vpop.f32.mrf.mxu0
    %v535 = vadd.f32 %v493, %v534
    %536 = vmatmul.f32.gmra.mxu0 %v440
    %v537 = vpop.f32.mrf.mxu0
    %v538 = vadd.f32 %v493, %v537
    %539 = vmatmul.f32.gmra.mxu0 %v441
    %v540 = vpop.f32.mrf.mxu0
    %v541 = vadd.f32 %v493, %v540
    %542 = vmatmul.f32.gmra.mxu0 %v442
    %v543 = vpop.f32.mrf.mxu0
    %v544 = vadd.f32 %v493, %v543
    %545 = vdwg.mxu0
    %546 = vmatpush.msra.mxu0 %v489
    %547 = vmatpush.msra.mxu0 %v486
    %548 = vmatpush.msra.mxu0 %v483
    %549 = vmatpush.msra.mxu0 %v480
    %550 = vmatpush.msra.mxu0 %v477
    %551 = vmatpush.msra.mxu0 %v474
    %552 = vmatpush.msra.mxu0 %v471
    %553 = vmatpush.msra.mxu0 %v468
    %554 = vmatpush.msra.mxu0 %v465
    %555 = vmatpush.msra.mxu0 %v462
    %556 = vmatpush.msra.mxu0 %v459
    %557 = vmatpush.msra.mxu0 %v456
    %558 = vmatpush.msra.mxu0 %v453
    %559 = vmatpush.msra.mxu0 %v450
    %560 = vmatpush.msra.mxu0 %v447
    %561 = vmatpush.msra.mxu0 %v444
    %562 = vmatmul.f32.gmra.mxu0 %v433
    %v563 = vpop.f32.mrf.mxu0
    %v564 = vadd.f32 %v494, %v563
    %565 = vmatmul.f32.gmra.mxu0 %v434
    %v566 = vpop.f32.mrf.mxu0
    %v567 = vadd.f32 %v494, %v566
    %568 = vmatmul.f32.gmra.mxu0 %v435
    %v569 = vpop.f32.mrf.mxu0
    %v570 = vadd.f32 %v494, %v569
    %571 = vmatmul.f32.gmra.mxu0 %v436
    %v572 = vpop.f32.mrf.mxu0
    %v573 = vadd.f32 %v494, %v572
    %574 = vmatmul.f32.gmra.mxu0 %v437
    %v575 = vpop.f32.mrf.mxu0
    %v576 = vadd.f32 %v494, %v575
    %577 = vmatmul.f32.gmra.mxu0 %v438
    %v578 = vpop.f32.mrf.mxu0
    %v579 = vadd.f32 %v494, %v578
    %580 = vmatmul.f32.gmra.mxu0 %v439
    %v581 = vpop.f32.mrf.mxu0
    %v582 = vadd.f32 %v494, %v581
    %583 = vmatmul.f32.gmra.mxu0 %v440
    %v584 = vpop.f32.mrf.mxu0
    %v585 = vadd.f32 %v494, %v584
    %586 = vmatmul.f32.gmra.mxu0 %v441
    %v587 = vpop.f32.mrf.mxu0
    %v588 = vadd.f32 %v494, %v587
    %589 = vmatmul.f32.gmra.mxu0 %v442
    %v590 = vpop.f32.mrf.mxu0
    %v591 = vadd.f32 %v494, %v590
    %592 = vdwg.mxu0
    %593 = vmatpush.msra.mxu0 %v490
    %594 = vmatpush.msra.mxu0 %v487
    %595 = vmatpush.msra.mxu0 %v484
    %596 = vmatpush.msra.mxu0 %v481
    %597 = vmatpush.msra.mxu0 %v478
    %598 = vmatpush.msra.mxu0 %v475
    %599 = vmatpush.msra.mxu0 %v472
    %600 = vmatpush.msra.mxu0 %v469
    %601 = vmatpush.msra.mxu0 %v466
    %602 = vmatpush.msra.mxu0 %v463
    %603 = vmatpush.msra.mxu0 %v460
    %604 = vmatpush.msra.mxu0 %v457
    %605 = vmatpush.msra.mxu0 %v454
    %606 = vmatpush.msra.mxu0 %v451
    %607 = vmatpush.msra.mxu0 %v448
    %608 = vmatpush.msra.mxu0 %v445
    %609 = vmatmul.f32.gmra.mxu0 %v433
    %v610 = vpop.f32.mrf.mxu0
    %v611 = vadd.f32 %v495, %v610
    %612 = vmatmul.f32.gmra.mxu0 %v434
    %v613 = vpop.f32.mrf.mxu0
    %v614 = vadd.f32 %v495, %v613
    %615 = vmatmul.f32.gmra.mxu0 %v435
    %v616 = vpop.f32.mrf.mxu0
    %v617 = vadd.f32 %v495, %v616
    %618 = vmatmul.f32.gmra.mxu0 %v436
    %v619 = vpop.f32.mrf.mxu0
    %v620 = vadd.f32 %v495, %v619
    %621 = vmatmul.f32.gmra.mxu0 %v437
    %v622 = vpop.f32.mrf.mxu0
    %v623 = vadd.f32 %v495, %v622
    %624 = vmatmul.f32.gmra.mxu0 %v438
    %v625 = vpop.f32.mrf.mxu0
    %v626 = vadd.f32 %v495, %v625
    %627 = vmatmul.f32.gmra.mxu0 %v439
    %v628 = vpop.f32.mrf.mxu0
    %v629 = vadd.f32 %v495, %v628
    %630 = vmatmul.f32.gmra.mxu0 %v440
    %v631 = vpop.f32.mrf.mxu0
    %v632 = vadd.f32 %v495, %v631
    %633 = vmatmul.f32.gmra.mxu0 %v441
    %v634 = vpop.f32.mrf.mxu0
    %v635 = vadd.f32 %v495, %v634
    %636 = vmatmul.f32.gmra.mxu0 %v442
    %v637 = vpop.f32.mrf.mxu0
    %v638 = vadd.f32 %v495, %v637
    %639 = vdwg.mxu0
    %640 = vst [vmem:[#allocation2] sm:$0xff] %v517
    %641 = vst [vmem:[#allocation2 + $0x8] sm:$0xff] %v564
    %642 = vst [vmem:[#allocation2 + $0x10] sm:$0xff] %v611
    %643 = vst [vmem:[#allocation2 + $0x18] sm:$0xff] %v520
    %644 = vst [vmem:[#allocation2 + $0x20] sm:$0xff] %v567
    %645 = vst [vmem:[#allocation2 + $0x28] sm:$0xff] %v614
    %646 = vst [vmem:[#allocation2 + $0x30] sm:$0xff] %v523
    %647 = vst [vmem:[#allocation2 + $0x38] sm:$0xff] %v570
    %648 = vst [vmem:[#allocation2 + $0x40] sm:$0xff] %v617
    %649 = vst [vmem:[#allocation2 + $0x48] sm:$0xff] %v526
    %650 = vst [vmem:[#allocation2 + $0x50] sm:$0xff] %v573
    %651 = vst [vmem:[#allocation2 + $0x58] sm:$0xff] %v620
    %652 = vst [vmem:[#allocation2 + $0x60] sm:$0xff] %v529
    %653 = vst [vmem:[#allocation2 + $0x68] sm:$0xff] %v576
    %654 = vst [vmem:[#allocation2 + $0x70] sm:$0xff] %v623
    %655 = vst [vmem:[#allocation2 + $0x78] sm:$0xff] %v532
    %656 = vst [vmem:[#allocation2 + $0x80] sm:$0xff] %v579
    %657 = vst [vmem:[#allocation2 + $0x88] sm:$0xff] %v626
    %658 = vst [vmem:[#allocation2 + $0x90] sm:$0xff] %v535
    %659 = vst [vmem:[#allocation2 + $0x98] sm:$0xff] %v582
    %660 = vst [vmem:[#allocation2 + $0xa0] sm:$0xff] %v629
    %661 = vst [vmem:[#allocation2 + $0xa8] sm:$0xff] %v538
    %662 = vst [vmem:[#allocation2 + $0xb0] sm:$0xff] %v585
    %663 = vst [vmem:[#allocation2 + $0xb8] sm:$0xff] %v632
    %664 = vst [vmem:[#allocation2 + $0xc0] sm:$0xff] %v541
    %665 = vst [vmem:[#allocation2 + $0xc8] sm:$0xff] %v588
    %666 = vst [vmem:[#allocation2 + $0xd0] sm:$0xff] %v635
    %667 = vst [vmem:[#allocation2 + $0xd8] sm:$0xff] %v544
    %668 = vst [vmem:[#allocation2 + $0xe0] sm:$0xff] %v591
    %669 = vst [vmem:[#allocation2 + $0xe8] sm:$0xff] %v638
    %s670 = scalar_lea.vmem %s3, 24
    %v671 = vld [vmem:[%s670] sm:$0xff]
    %s672 = scalar_lea.vmem %s3, 72
    %v673 = vld [vmem:[%s672] sm:$0xff]
    %s674 = scalar_lea.vmem %s3, 48
    %v675 = vld [vmem:[%s674] sm:$0xff]
    %v676 = vld [vmem:[%s674 + $0x8] sm:$0xff]
    %v677 = vld [vmem:[%s674 + $0x10] sm:$0xff]
    %v678 = vld [vmem:[#allocation2] sm:$0xff]
    %v679 = vld [vmem:[#allocation2 + $0x8] sm:$0xff]
    %v680 = vld [vmem:[#allocation2 + $0x10] sm:$0xff]
    %s681 = scalar_lea.vmem [#allocation4], 384
    %v682 = vld [vmem:[%s681] sm:$0xff]
    %v683 = vld [vmem:[%s681 + $0x8] sm:$0xff]
    %v684 = vld [vmem:[%s681 + $0x10] sm:$0xff]
    %v685 = vld [vmem:[%s681 + $0x18] sm:$0xff]
    %v686 = vld [vmem:[%s681 + $0x20] sm:$0xff]
    %v687 = vld [vmem:[%s681 + $0x28] sm:$0xff]
    %v688 = vld [vmem:[%s681 + $0x30] sm:$0xff]
    %v689 = vld [vmem:[%s681 + $0x38] sm:$0xff]
    %v690 = vld [vmem:[%s681 + $0x40] sm:$0xff]
    %v691 = vld [vmem:[%s681 + $0x48] sm:$0xff]
    %v692 = vld [vmem:[%s681 + $0x50] sm:$0xff]
    %v693 = vld [vmem:[%s681 + $0x58] sm:$0xff]
    %v694 = vld [vmem:[%s681 + $0x60] sm:$0xff]
    %v695 = vld [vmem:[%s681 + $0x68] sm:$0xff]
    %v696 = vld [vmem:[%s681 + $0x70] sm:$0xff]
    %v697 = vld [vmem:[%s681 + $0x78] sm:$0xff]
    %v698 = vld [vmem:[%s681 + $0x80] sm:$0xff]
    %v699 = vld [vmem:[%s681 + $0x88] sm:$0xff]
    %v700 = vld [vmem:[%s681 + $0x90] sm:$0xff]
    %v701 = vld [vmem:[%s681 + $0x98] sm:$0xff]
    %v702 = vld [vmem:[%s681 + $0xa0] sm:$0xff]
    %v703 = vld [vmem:[%s681 + $0xa8] sm:$0xff]
    %v704 = vld [vmem:[%s681 + $0xb0] sm:$0xff]
    %v705 = vld [vmem:[%s681 + $0xb8] sm:$0xff]
    %v706 = vld [vmem:[%s681 + $0xc0] sm:$0xff]
    %v707 = vld [vmem:[%s681 + $0xc8] sm:$0xff]
    %v708 = vld [vmem:[%s681 + $0xd0] sm:$0xff]
    %v709 = vld [vmem:[%s681 + $0xd8] sm:$0xff]
    %v710 = vld [vmem:[%s681 + $0xe0] sm:$0xff]
    %v711 = vld [vmem:[%s681 + $0xe8] sm:$0xff]
    %v712 = vld [vmem:[%s681 + $0xf0] sm:$0xff]
    %v713 = vld [vmem:[%s681 + $0xf8] sm:$0xff]
    %v714 = vld [vmem:[%s681 + $0x100] sm:$0xff]
    %v715 = vld [vmem:[%s681 + $0x108] sm:$0xff]
    %v716 = vld [vmem:[%s681 + $0x110] sm:$0xff]
    %v717 = vld [vmem:[%s681 + $0x118] sm:$0xff]
    %v718 = vld [vmem:[%s681 + $0x120] sm:$0xff]
    %v719 = vld [vmem:[%s681 + $0x128] sm:$0xff]
    %v720 = vld [vmem:[%s681 + $0x130] sm:$0xff]
    %v721 = vld [vmem:[%s681 + $0x138] sm:$0xff]
    %v722 = vld [vmem:[%s681 + $0x140] sm:$0xff]
    %v723 = vld [vmem:[%s681 + $0x148] sm:$0xff]
    %v724 = vld [vmem:[%s681 + $0x150] sm:$0xff]
    %v725 = vld [vmem:[%s681 + $0x158] sm:$0xff]
    %v726 = vld [vmem:[%s681 + $0x160] sm:$0xff]
    %v727 = vld [vmem:[%s681 + $0x168] sm:$0xff]
    %v728 = vld [vmem:[%s681 + $0x170] sm:$0xff]
    %v729 = vld [vmem:[%s681 + $0x178] sm:$0xff]
    %730 = vmatpush.msra.mxu0 %v727
    %731 = vmatpush.msra.mxu0 %v724
    %732 = vmatpush.msra.mxu0 %v721
    %733 = vmatpush.msra.mxu0 %v718
    %734 = vmatpush.msra.mxu0 %v715
    %735 = vmatpush.msra.mxu0 %v712
    %736 = vmatpush.msra.mxu0 %v709
    %737 = vmatpush.msra.mxu0 %v706
    %738 = vmatpush.msra.mxu0 %v703
    %739 = vmatpush.msra.mxu0 %v700
    %740 = vmatpush.msra.mxu0 %v697
    %741 = vmatpush.msra.mxu0 %v694
    %742 = vmatpush.msra.mxu0 %v691
    %743 = vmatpush.msra.mxu0 %v688
    %744 = vmatpush.msra.mxu0 %v685
    %745 = vmatpush.msra.mxu0 %v682
    %746 = vmatmul.f32.gmra.mxu0 0.0
    %v747 = vpop.f32.mrf.mxu0
    %v748 = vadd.f32 0.0, %v747
    %749 = vdwg.mxu0
    %750 = vmatpush.msra.mxu0 %v728
    %751 = vmatpush.msra.mxu0 %v725
    %752 = vmatpush.msra.mxu0 %v722
    %753 = vmatpush.msra.mxu0 %v719
    %754 = vmatpush.msra.mxu0 %v716
    %755 = vmatpush.msra.mxu0 %v713
    %756 = vmatpush.msra.mxu0 %v710
    %757 = vmatpush.msra.mxu0 %v707
    %758 = vmatpush.msra.mxu0 %v704
    %759 = vmatpush.msra.mxu0 %v701
    %760 = vmatpush.msra.mxu0 %v698
    %761 = vmatpush.msra.mxu0 %v695
    %762 = vmatpush.msra.mxu0 %v692
    %763 = vmatpush.msra.mxu0 %v689
    %764 = vmatpush.msra.mxu0 %v686
    %765 = vmatpush.msra.mxu0 %v683
    %766 = vmatmul.f32.gmra.mxu0 0.0
    %v767 = vpop.f32.mrf.mxu0
    %v768 = vadd.f32 0.0, %v767
    %769 = vdwg.mxu0
    %770 = vmatpush.msra.mxu0 %v729
    %771 = vmatpush.msra.mxu0 %v726
    %772 = vmatpush.msra.mxu0 %v723
    %773 = vmatpush.msra.mxu0 %v720
    %774 = vmatpush.msra.mxu0 %v717
    %775 = vmatpush.msra.mxu0 %v714
    %776 = vmatpush.msra.mxu0 %v711
    %777 = vmatpush.msra.mxu0 %v708
    %778 = vmatpush.msra.mxu0 %v705
    %779 = vmatpush.msra.mxu0 %v702
    %780 = vmatpush.msra.mxu0 %v699
    %781 = vmatpush.msra.mxu0 %v696
    %782 = vmatpush.msra.mxu0 %v693
    %783 = vmatpush.msra.mxu0 %v690
    %784 = vmatpush.msra.mxu0 %v687
    %785 = vmatpush.msra.mxu0 %v684
    %786 = vmatmul.f32.gmra.mxu0 0.0
    %v787 = vpop.f32.mrf.mxu0
    %v788 = vadd.f32 0.0, %v787
    %789 = vdwg.mxu0
    %v790 = vadd.f32 %v678, %v748
    %v791 = vmul.f32 %v790, 0.5
    %v792 = vtanh.pop %v791
    %v793 = vadd.f32 %v792, 1.0
    %v794 = vmul.f32 %v793, 0.5
    %v795 = vadd.f32 %v679, %v768
    %v796 = vmul.f32 %v795, 0.5
    %v797 = vtanh.pop %v796
    %v798 = vadd.f32 %v797, 1.0
    %v799 = vmul.f32 %v798, 0.5
    %v800 = vadd.f32 %v788, %v671
    %v801 = vmul.f32 %v794, %v800
    %v802 = vadd.f32 %v680, %v801
    %v803 = vtanh.pop %v802
    %v804 = vsub.f32 1.0, %v799
    %v805 = vmul.f32 %v804, %v803
    %v806 = vmul.f32 %v799, 0.0
    %v807 = vadd.f32 %v805, %v806
    %s808 = scalar_lea.vmem [#allocation4], 768
    %v809 = vld [vmem:[%s808] sm:$0xff]
    %v810 = vld [vmem:[%s808 + $0x8] sm:$0xff]
    %v811 = vld [vmem:[%s808 + $0x10] sm:$0xff]
    %v812 = vld [vmem:[%s808 + $0x18] sm:$0xff]
    %v813 = vld [vmem:[%s808 + $0x20] sm:$0xff]
    %v814 = vld [vmem:[%s808 + $0x28] sm:$0xff]
    %v815 = vld [vmem:[%s808 + $0x30] sm:$0xff]
    %v816 = vld [vmem:[%s808 + $0x38] sm:$0xff]
    %v817 = vld [vmem:[%s808 + $0x40] sm:$0xff]
    %v818 = vld [vmem:[%s808 + $0x48] sm:$0xff]
    %v819 = vld [vmem:[%s808 + $0x50] sm:$0xff]
    %v820 = vld [vmem:[%s808 + $0x58] sm:$0xff]
    %v821 = vld [vmem:[%s808 + $0x60] sm:$0xff]
    %v822 = vld [vmem:[%s808 + $0x68] sm:$0xff]
    %v823 = vld [vmem:[%s808 + $0x70] sm:$0xff]
    %v824 = vld [vmem:[%s808 + $0x78] sm:$0xff]
    %v825 = vld [vmem:[%s808 + $0x80] sm:$0xff]
    %v826 = vld [vmem:[%s808 + $0x88] sm:$0xff]
    %v827 = vld [vmem:[%s808 + $0x90] sm:$0xff]
    %v828 = vld [vmem:[%s808 + $0x98] sm:$0xff]
    %v829 = vld [vmem:[%s808 + $0xa0] sm:$0xff]
    %v830 = vld [vmem:[%s808 + $0xa8] sm:$0xff]
    %v831 = vld [vmem:[%s808 + $0xb0] sm:$0xff]
    %v832 = vld [vmem:[%s808 + $0xb8] sm:$0xff]
    %v833 = vld [vmem:[%s808 + $0xc0] sm:$0xff]
    %v834 = vld [vmem:[%s808 + $0xc8] sm:$0xff]
    %v835 = vld [vmem:[%s808 + $0xd0] sm:$0xff]
    %v836 = vld [vmem:[%s808 + $0xd8] sm:$0xff]
    %v837 = vld [vmem:[%s808 + $0xe0] sm:$0xff]
    %v838 = vld [vmem:[%s808 + $0xe8] sm:$0xff]
    %v839 = vld [vmem:[%s808 + $0xf0] sm:$0xff]
    %v840 = vld [vmem:[%s808 + $0xf8] sm:$0xff]
    %v841 = vld [vmem:[%s808 + $0x100] sm:$0xff]
    %v842 = vld [vmem:[%s808 + $0x108] sm:$0xff]
    %v843 = vld [vmem:[%s808 + $0x110] sm:$0xff]
    %v844 = vld [vmem:[%s808 + $0x118] sm:$0xff]
    %v845 = vld [vmem:[%s808 + $0x120] sm:$0xff]
    %v846 = vld [vmem:[%s808 + $0x128] sm:$0xff]
    %v847 = vld [vmem:[%s808 + $0x130] sm:$0xff]
    %v848 = vld [vmem:[%s808 + $0x138] sm:$0xff]
    %v849 = vld [vmem:[%s808 + $0x140] sm:$0xff]
    %v850 = vld [vmem:[%s808 + $0x148] sm:$0xff]
    %v851 = vld [vmem:[%s808 + $0x150] sm:$0xff]
    %v852 = vld [vmem:[%s808 + $0x158] sm:$0xff]
    %v853 = vld [vmem:[%s808 + $0x160] sm:$0xff]
    %v854 = vld [vmem:[%s808 + $0x168] sm:$0xff]
    %v855 = vld [vmem:[%s808 + $0x170] sm:$0xff]
    %v856 = vld [vmem:[%s808 + $0x178] sm:$0xff]
    %857 = vmatpush.msra.mxu0 %v854
    %858 = vmatpush.msra.mxu0 %v851
    %859 = vmatpush.msra.mxu0 %v848
    %860 = vmatpush.msra.mxu0 %v845
    %861 = vmatpush.msra.mxu0 %v842
    %862 = vmatpush.msra.mxu0 %v839
    %863 = vmatpush.msra.mxu0 %v836
    %864 = vmatpush.msra.mxu0 %v833
    %865 = vmatpush.msra.mxu0 %v830
    %866 = vmatpush.msra.mxu0 %v827
    %867 = vmatpush.msra.mxu0 %v824
    %868 = vmatpush.msra.mxu0 %v821
    %869 = vmatpush.msra.mxu0 %v818
    %870 = vmatpush.msra.mxu0 %v815
    %871 = vmatpush.msra.mxu0 %v812
    %872 = vmatpush.msra.mxu0 %v809
    %873 = vmatmul.f32.gmra.mxu0 %v807
    %v874 = vpop.f32.mrf.mxu0
    %v875 = vadd.f32 %v675, %v874
    %876 = vdwg.mxu0
    %877 = vmatpush.msra.mxu0 %v855
    %878 = vmatpush.msra.mxu0 %v852
    %879 = vmatpush.msra.mxu0 %v849
    %880 = vmatpush.msra.mxu0 %v846
    %881 = vmatpush.msra.mxu0 %v843
    %882 = vmatpush.msra.mxu0 %v840
    %883 = vmatpush.msra.mxu0 %v837
    %884 = vmatpush.msra.mxu0 %v834
    %885 = vmatpush.msra.mxu0 %v831
    %886 = vmatpush.msra.mxu0 %v828
    %887 = vmatpush.msra.mxu0 %v825
    %888 = vmatpush.msra.mxu0 %v822
    %889 = vmatpush.msra.mxu0 %v819
    %890 = vmatpush.msra.mxu0 %v816
    %891 = vmatpush.msra.mxu0 %v813
    %892 = vmatpush.msra.mxu0 %v810
    %893 = vmatmul.f32.gmra.mxu0 %v807
    %v894 = vpop.f32.mrf.mxu0
    %v895 = vadd.f32 %v676, %v894
    %896 = vdwg.mxu0
    %897 = vmatpush.msra.mxu0 %v856
    %898 = vmatpush.msra.mxu0 %v853
    %899 = vmatpush.msra.mxu0 %v850
    %900 = vmatpush.msra.mxu0 %v847
    %901 = vmatpush.msra.mxu0 %v844
    %902 = vmatpush.msra.mxu0 %v841
    %903 = vmatpush.msra.mxu0 %v838
    %904 = vmatpush.msra.mxu0 %v835
    %905 = vmatpush.msra.mxu0 %v832
    %906 = vmatpush.msra.mxu0 %v829
    %907 = vmatpush.msra.mxu0 %v826
    %908 = vmatpush.msra.mxu0 %v823
    %909 = vmatpush.msra.mxu0 %v820
    %910 = vmatpush.msra.mxu0 %v817
    %911 = vmatpush.msra.mxu0 %v814
    %912 = vmatpush.msra.mxu0 %v811
    %913 = vmatmul.f32.gmra.mxu0 %v807
    %v914 = vpop.f32.mrf.mxu0
    %v915 = vadd.f32 %v677, %v914
    %916 = vdwg.mxu0
    %s917 = scalar_lea.vmem [#allocation4], 1152
    %v918 = vld [vmem:[%s917] sm:$0xff]
    %v919 = vld [vmem:[%s917 + $0x8] sm:$0xff]
    %v920 = vld [vmem:[%s917 + $0x10] sm:$0xff]
    %v921 = vld [vmem:[%s917 + $0x18] sm:$0xff]
    %v922 = vld [vmem:[%s917 + $0x20] sm:$0xff]
    %v923 = vld [vmem:[%s917 + $0x28] sm:$0xff]
    %v924 = vld [vmem:[%s917 + $0x30] sm:$0xff]
    %v925 = vld [vmem:[%s917 + $0x38] sm:$0xff]
    %v926 = vld [vmem:[%s917 + $0x40] sm:$0xff]
    %v927 = vld [vmem:[%s917 + $0x48] sm:$0xff]
    %v928 = vld [vmem:[%s917 + $0x50] sm:$0xff]
    %v929 = vld [vmem:[%s917 + $0x58] sm:$0xff]
    %v930 = vld [vmem:[%s917 + $0x60] sm:$0xff]
    %v931 = vld [vmem:[%s917 + $0x68] sm:$0xff]
    %v932 = vld [vmem:[%s917 + $0x70] sm:$0xff]
    %v933 = vld [vmem:[%s917 + $0x78] sm:$0xff]
    %v934 = vld [vmem:[%s917 + $0x80] sm:$0xff]
    %v935 = vld [vmem:[%s917 + $0x88] sm:$0xff]
    %v936 = vld [vmem:[%s917 + $0x90] sm:$0xff]
    %v937 = vld [vmem:[%s917 + $0x98] sm:$0xff]
    %v938 = vld [vmem:[%s917 + $0xa0] sm:$0xff]
    %v939 = vld [vmem:[%s917 + $0xa8] sm:$0xff]
    %v940 = vld [vmem:[%s917 + $0xb0] sm:$0xff]
    %v941 = vld [vmem:[%s917 + $0xb8] sm:$0xff]
    %v942 = vld [vmem:[%s917 + $0xc0] sm:$0xff]
    %v943 = vld [vmem:[%s917 + $0xc8] sm:$0xff]
    %v944 = vld [vmem:[%s917 + $0xd0] sm:$0xff]
    %v945 = vld [vmem:[%s917 + $0xd8] sm:$0xff]
    %v946 = vld [vmem:[%s917 + $0xe0] sm:$0xff]
    %v947 = vld [vmem:[%s917 + $0xe8] sm:$0xff]
    %v948 = vld [vmem:[%s917 + $0xf0] sm:$0xff]
    %v949 = vld [vmem:[%s917 + $0xf8] sm:$0xff]
    %v950 = vld [vmem:[%s917 + $0x100] sm:$0xff]
    %v951 = vld [vmem:[%s917 + $0x108] sm:$0xff]
    %v952 = vld [vmem:[%s917 + $0x110] sm:$0xff]
    %v953 = vld [vmem:[%s917 + $0x118] sm:$0xff]
    %v954 = vld [vmem:[%s917 + $0x120] sm:$0xff]
    %v955 = vld [vmem:[%s917 + $0x128] sm:$0xff]
    %v956 = vld [vmem:[%s917 + $0x130] sm:$0xff]
    %v957 = vld [vmem:[%s917 + $0x138] sm:$0xff]
    %v958 = vld [vmem:[%s917 + $0x140] sm:$0xff]
    %v959 = vld [vmem:[%s917 + $0x148] sm:$0xff]
    %v960 = vld [vmem:[%s917 + $0x150] sm:$0xff]
    %v961 = vld [vmem:[%s917 + $0x158] sm:$0xff]
    %v962 = vld [vmem:[%s917 + $0x160] sm:$0xff]
    %v963 = vld [vmem:[%s917 + $0x168] sm:$0xff]
    %v964 = vld [vmem:[%s917 + $0x170] sm:$0xff]
    %v965 = vld [vmem:[%s917 + $0x178] sm:$0xff]
    %966 = vmatpush.msra.mxu0 %v963
    %967 = vmatpush.msra.mxu0 %v960
    %968 = vmatpush.msra.mxu0 %v957
    %969 = vmatpush.msra.mxu0 %v954
    %970 = vmatpush.msra.mxu0 %v951
    %971 = vmatpush.msra.mxu0 %v948
    %972 = vmatpush.msra.mxu0 %v945
    %973 = vmatpush.msra.mxu0 %v942
    %974 = vmatpush.msra.mxu0 %v939
    %975 = vmatpush.msra.mxu0 %v936
    %976 = vmatpush.msra.mxu0 %v933
    %977 = vmatpush.msra.mxu0 %v930
    %978 = vmatpush.msra.mxu0 %v927
    %979 = vmatpush.msra.mxu0 %v924
    %980 = vmatpush.msra.mxu0 %v921
    %981 = vmatpush.msra.mxu0 %v918
    %982 = vmatmul.f32.gmra.mxu0 0.0
    %v983 = vpop.f32.mrf.mxu0
    %v984 = vadd.f32 0.0, %v983
    %985 = vdwg.mxu0
    %986 = vmatpush.msra.mxu0 %v964
    %987 = vmatpush.msra.mxu0 %v961
    %988 = vmatpush.msra.mxu0 %v958
    %989 = vmatpush.msra.mxu0 %v955
    %990 = vmatpush.msra.mxu0 %v952
    %991 = vmatpush.msra.mxu0 %v949
    %992 = vmatpush.msra.mxu0 %v946
    %993 = vmatpush.msra.mxu0 %v943
    %994 = vmatpush.msra.mxu0 %v940
    %995 = vmatpush.msra.mxu0 %v937
    %996 = vmatpush.msra.mxu0 %v934
    %997 = vmatpush.msra.mxu0 %v931
    %998 = vmatpush.msra.mxu0 %v928
    %999 = vmatpush.msra.mxu0 %v925
    %1000 = vmatpush.msra.mxu0 %v922
    %1001 = vmatpush.msra.mxu0 %v919
    %1002 = vmatmul.f32.gmra.mxu0 0.0
    %v1003 = vpop.f32.mrf.mxu0
    %v1004 = vadd.f32 0.0, %v1003
    %1005 = vdwg.mxu0
    %1006 = vmatpush.msra.mxu0 %v965
    %1007 = vmatpush.msra.mxu0 %v962
    %1008 = vmatpush.msra.mxu0 %v959
    %1009 = vmatpush.msra.mxu0 %v956
    %1010 = vmatpush.msra.mxu0 %v953
    %1011 = vmatpush.msra.mxu0 %v950
    %1012 = vmatpush.msra.mxu0 %v947
    %1013 = vmatpush.msra.mxu0 %v944
    %1014 = vmatpush.msra.mxu0 %v941
    %1015 = vmatpush.msra.mxu0 %v938
    %1016 = vmatpush.msra.mxu0 %v935
    %1017 = vmatpush.msra.mxu0 %v932
    %1018 = vmatpush.msra.mxu0 %v929
    %1019 = vmatpush.msra.mxu0 %v926
    %1020 = vmatpush.msra.mxu0 %v923
    %1021 = vmatpush.msra.mxu0 %v920
    %1022 = vmatmul.f32.gmra.mxu0 0.0
    %v1023 = vpop.f32.mrf.mxu0
    %v1024 = vadd.f32 0.0, %v1023
    %1025 = vdwg.mxu0
    %v1026 = vadd.f32 %v875, %v984
    %v1027 = vmul.f32 %v1026, 0.5
    %v1028 = vtanh.pop %v1027
    %v1029 = vadd.f32 %v1028, 1.0
    %v1030 = vmul.f32 %v1029, 0.5
    %v1031 = vadd.f32 %v895, %v1004
    %v1032 = vmul.f32 %v1031, 0.5
    %v1033 = vtanh.pop %v1032
    %v1034 = vadd.f32 %v1033, 1.0
    %v1035 = vmul.f32 %v1034, 0.5
    %v1036 = vadd.f32 %v1024, %v673
    %v1037 = vmul.f32 %v1030, %v1036
    %v1038 = vadd.f32 %v915, %v1037
    %v1039 = vtanh.pop %v1038
    %v1040 = vsub.f32 1.0, %v1035
    %v1041 = vmul.f32 %v1040, %v1039
    %v1042 = vmul.f32 %v1035, 0.0
    %v1043 = vadd.f32 %v1041, %v1042
    %1044 = vst [vmem:[#allocation3] sm:$0xff] %v1043
    %s1045 = scalar_lea.vmem [#allocation2], 24
    %v1046 = vld [vmem:[%s1045] sm:$0xff]
    %v1047 = vld [vmem:[%s1045 + $0x8] sm:$0xff]
    %v1048 = vld [vmem:[%s1045 + $0x10] sm:$0xff]
    %v1049 = vld [vmem:[%s681] sm:$0xff]
    %v1050 = vld [vmem:[%s681 + $0x8] sm:$0xff]
    %v1051 = vld [vmem:[%s681 + $0x10] sm:$0xff]
    %v1052 = vld [vmem:[%s681 + $0x18] sm:$0xff]
    %v1053 = vld [vmem:[%s681 + $0x20] sm:$0xff]
    %v1054 = vld [vmem:[%s681 + $0x28] sm:$0xff]
    %v1055 = vld [vmem:[%s681 + $0x30] sm:$0xff]
    %v1056 = vld [vmem:[%s681 + $0x38] sm:$0xff]
    %v1057 = vld [vmem:[%s681 + $0x40] sm:$0xff]
    %v1058 = vld [vmem:[%s681 + $0x48] sm:$0xff]
    %v1059 = vld [vmem:[%s681 + $0x50] sm:$0xff]
    %v1060 = vld [vmem:[%s681 + $0x58] sm:$0xff]
    %v1061 = vld [vmem:[%s681 + $0x60] sm:$0xff]
    %v1062 = vld [vmem:[%s681 + $0x68] sm:$0xff]
    %v1063 = vld [vmem:[%s681 + $0x70] sm:$0xff]
    %v1064 = vld [vmem:[%s681 + $0x78] sm:$0xff]
    %v1065 = vld [vmem:[%s681 + $0x80] sm:$0xff]
    %v1066 = vld [vmem:[%s681 + $0x88] sm:$0xff]
    %v1067 = vld [vmem:[%s681 + $0x90] sm:$0xff]
    %v1068 = vld [vmem:[%s681 + $0x98] sm:$0xff]
    %v1069 = vld [vmem:[%s681 + $0xa0] sm:$0xff]
    %v1070 = vld [vmem:[%s681 + $0xa8] sm:$0xff]
    %v1071 = vld [vmem:[%s681 + $0xb0] sm:$0xff]
    %v1072 = vld [vmem:[%s681 + $0xb8] sm:$0xff]
    %v1073 = vld [vmem:[%s681 + $0xc0] sm:$0xff]
    %v1074 = vld [vmem:[%s681 + $0xc8] sm:$0xff]
    %v1075 = vld [vmem:[%s681 + $0xd0] sm:$0xff]
    %v1076 = vld [vmem:[%s681 + $0xd8] sm:$0xff]
    %v1077 = vld [vmem:[%s681 + $0xe0] sm:$0xff]
    %v1078 = vld [vmem:[%s681 + $0xe8] sm:$0xff]
    %v1079 = vld [vmem:[%s681 + $0xf0] sm:$0xff]
    %v1080 = vld [vmem:[%s681 + $0xf8] sm:$0xff]
    %v1081 = vld [vmem:[%s681 + $0x100] sm:$0xff]
    %v1082 = vld [vmem:[%s681 + $0x108] sm:$0xff]
    %v1083 = vld [vmem:[%s681 + $0x110] sm:$0xff]
    %v1084 = vld [vmem:[%s681 + $0x118] sm:$0xff]
    %v1085 = vld [vmem:[%s681 + $0x120] sm:$0xff]
    %v1086 = vld [vmem:[%s681 + $0x128] sm:$0xff]
    %v1087 = vld [vmem:[%s681 + $0x130] sm:$0xff]
    %v1088 = vld [vmem:[%s681 + $0x138] sm:$0xff]
    %v1089 = vld [vmem:[%s681 + $0x140] sm:$0xff]
    %v1090 = vld [vmem:[%s681 + $0x148] sm:$0xff]
    %v1091 = vld [vmem:[%s681 + $0x150] sm:$0xff]
    %v1092 = vld [vmem:[%s681 + $0x158] sm:$0xff]
    %v1093 = vld [vmem:[%s681 + $0x160] sm:$0xff]
    %v1094 = vld [vmem:[%s681 + $0x168] sm:$0xff]
    %v1095 = vld [vmem:[%s681 + $0x170] sm:$0xff]
    %v1096 = vld [vmem:[%s681 + $0x178] sm:$0xff]
    %1097 = vmatpush.msra.mxu0 %v1094
    %1098 = vmatpush.msra.mxu0 %v1091
    %1099 = vmatpush.msra.mxu0 %v1088
    %1100 = vmatpush.msra.mxu0 %v1085
    %1101 = vmatpush.msra.mxu0 %v1082
    %1102 = vmatpush.msra.mxu0 %v1079
    %1103 = vmatpush.msra.mxu0 %v1076
    %1104 = vmatpush.msra.mxu0 %v1073
    %1105 = vmatpush.msra.mxu0 %v1070
    %1106 = vmatpush.msra.mxu0 %v1067
    %1107 = vmatpush.msra.mxu0 %v1064
    %1108 = vmatpush.msra.mxu0 %v1061
    %1109 = vmatpush.msra.mxu0 %v1058
    %1110 = vmatpush.msra.mxu0 %v1055
    %1111 = vmatpush.msra.mxu0 %v1052
    %1112 = vmatpush.msra.mxu0 %v1049
    %1113 = vmatmul.f32.gmra.mxu0 %v807
    %v1114 = vpop.f32.mrf.mxu0
    %v1115 = vadd.f32 0.0, %v1114
    %1116 = vdwg.mxu0
    %1117 = vmatpush.msra.mxu0 %v1095
    %1118 = vmatpush.msra.mxu0 %v1092
    %1119 = vmatpush.msra.mxu0 %v1089
    %1120 = vmatpush.msra.mxu0 %v1086
    %1121 = vmatpush.msra.mxu0 %v1083
    %1122 = vmatpush.msra.mxu0 %v1080
    %1123 = vmatpush.msra.mxu0 %v1077
    %1124 = vmatpush.msra.mxu0 %v1074
    %1125 = vmatpush.msra.mxu0 %v1071
    %1126 = vmatpush.msra.mxu0 %v1068
    %1127 = vmatpush.msra.mxu0 %v1065
    %1128 = vmatpush.msra.mxu0 %v1062
    %1129 = vmatpush.msra.mxu0 %v1059
    %1130 = vmatpush.msra.mxu0 %v1056
    %1131 = vmatpush.msra.mxu0 %v1053
    %1132 = vmatpush.msra.mxu0 %v1050
    %1133 = vmatmul.f32.gmra.mxu0 %v807
    %v1134 = vpop.f32.mrf.mxu0
    %v1135 = vadd.f32 0.0, %v1134
    %1136 = vdwg.mxu0
    %1137 = vmatpush.msra.mxu0 %v1096
    %1138 = vmatpush.msra.mxu0 %v1093
    %1139 = vmatpush.msra.mxu0 %v1090
    %1140 = vmatpush.msra.mxu0 %v1087
    %1141 = vmatpush.msra.mxu0 %v1084
    %1142 = vmatpush.msra.mxu0 %v1081
    %1143 = vmatpush.msra.mxu0 %v1078
    %1144 = vmatpush.msra.mxu0 %v1075
    %1145 = vmatpush.msra.mxu0 %v1072
    %1146 = vmatpush.msra.mxu0 %v1069
    %1147 = vmatpush.msra.mxu0 %v1066
    %1148 = vmatpush.msra.mxu0 %v1063
    %1149 = vmatpush.msra.mxu0 %v1060
    %1150 = vmatpush.msra.mxu0 %v1057
    %1151 = vmatpush.msra.mxu0 %v1054
    %1152 = vmatpush.msra.mxu0 %v1051
    %1153 = vmatmul.f32.gmra.mxu0 %v807
    %v1154 = vpop.f32.mrf.mxu0
    %v1155 = vadd.f32 0.0, %v1154
    %1156 = vdwg.mxu0
    %v1157 = vadd.f32 %v1046, %v1115
    %v1158 = vmul.f32 %v1157, 0.5
    %v1159 = vtanh.pop %v1158
    %v1160 = vadd.f32 %v1159, 1.0
    %v1161 = vmul.f32 %v1160, 0.5
    %v1162 = vadd.f32 %v1047, %v1135
    %v1163 = vmul.f32 %v1162, 0.5
    %v1164 = vtanh.pop %v1163
    %v1165 = vadd.f32 %v1164, 1.0
    %v1166 = vmul.f32 %v1165, 0.5
    %v1167 = vadd.f32 %v1155, %v671
    %v1168 = vmul.f32 %v1161, %v1167
    %v1169 = vadd.f32 %v1048, %v1168
    %v1170 = vtanh.pop %v1169
    %v1171 = vsub.f32 1.0, %v1166
    %v1172 = vmul.f32 %v1171, %v1170
    %v1173 = vmul.f32 %v1166, %v807
    %v1174 = vadd.f32 %v1172, %v1173
    %v1175 = vld [vmem:[%s808] sm:$0xff]
    %v1176 = vld [vmem:[%s808 + $0x8] sm:$0xff]
    %v1177 = vld [vmem:[%s808 + $0x10] sm:$0xff]
    %v1178 = vld [vmem:[%s808 + $0x18] sm:$0xff]
    %v1179 = vld [vmem:[%s808 + $0x20] sm:$0xff]
    %v1180 = vld [vmem:[%s808 + $0x28] sm:$0xff]
    %v1181 = vld [vmem:[%s808 + $0x30] sm:$0xff]
    %v1182 = vld [vmem:[%s808 + $0x38] sm:$0xff]
    %v1183 = vld [vmem:[%s808 + $0x40] sm:$0xff]
    %v1184 = vld [vmem:[%s808 + $0x48] sm:$0xff]
    %v1185 = vld [vmem:[%s808 + $0x50] sm:$0xff]
    %v1186 = vld [vmem:[%s808 + $0x58] sm:$0xff]
    %v1187 = vld [vmem:[%s808 + $0x60] sm:$0xff]
    %v1188 = vld [vmem:[%s808 + $0x68] sm:$0xff]
    %v1189 = vld [vmem:[%s808 + $0x70] sm:$0xff]
    %v1190 = vld [vmem:[%s808 + $0x78] sm:$0xff]
    %v1191 = vld [vmem:[%s808 + $0x80] sm:$0xff]
    %v1192 = vld [vmem:[%s808 + $0x88] sm:$0xff]
    %v1193 = vld [vmem:[%s808 + $0x90] sm:$0xff]
    %v1194 = vld [vmem:[%s808 + $0x98] sm:$0xff]
    %v1195 = vld [vmem:[%s808 + $0xa0] sm:$0xff]
    %v1196 = vld [vmem:[%s808 + $0xa8] sm:$0xff]
    %v1197 = vld [vmem:[%s808 + $0xb0] sm:$0xff]
    %v1198 = vld [vmem:[%s808 + $0xb8] sm:$0xff]
    %v1199 = vld [vmem:[%s808 + $0xc0] sm:$0xff]
    %v1200 = vld [vmem:[%s808 + $0xc8] sm:$0xff]
    %v1201 = vld [vmem:[%s808 + $0xd0] sm:$0xff]
    %v1202 = vld [vmem:[%s808 + $0xd8] sm:$0xff]
    %v1203 = vld [vmem:[%s808 + $0xe0] sm:$0xff]
    %v1204 = vld [vmem:[%s808 + $0xe8] sm:$0xff]
    %v1205 = vld [vmem:[%s808 + $0xf0] sm:$0xff]
    %v1206 = vld [vmem:[%s808 + $0xf8] sm:$0xff]
    %v1207 = vld [vmem:[%s808 + $0x100] sm:$0xff]
    %v1208 = vld [vmem:[%s808 + $0x108] sm:$0xff]
    %v1209 = vld [vmem:[%s808 + $0x110] sm:$0xff]
    %v1210 = vld [vmem:[%s808 + $0x118] sm:$0xff]
    %v1211 = vld [vmem:[%s808 + $0x120] sm:$0xff]
    %v1212 = vld [vmem:[%s808 + $0x128] sm:$0xff]
    %v1213 = vld [vmem:[%s808 + $0x130] sm:$0xff]
    %v1214 = vld [vmem:[%s808 + $0x138] sm:$0xff]
    %v1215 = vld [vmem:[%s808 + $0x140] sm:$0xff]
    %v1216 = vld [vmem:[%s808 + $0x148] sm:$0xff]
    %v1217 = vld [vmem:[%s808 + $0x150] sm:$0xff]
    %v1218 = vld [vmem:[%s808 + $0x158] sm:$0xff]
    %v1219 = vld [vmem:[%s808 + $0x160] sm:$0xff]
    %v1220 = vld [vmem:[%s808 + $0x168] sm:$0xff]
    %v1221 = vld [vmem:[%s808 + $0x170] sm:$0xff]
    %v1222 = vld [vmem:[%s808 + $0x178] sm:$0xff]
    %1223 = vmatpush.msra.mxu0 %v1220
    %1224 = vmatpush.msra.mxu0 %v1217
    %1225 = vmatpush.msra.mxu0 %v1214
    %1226 = vmatpush.msra.mxu0 %v1211
    %1227 = vmatpush.msra.mxu0 %v1208
    %1228 = vmatpush.msra.mxu0 %v1205
    %1229 = vmatpush.msra.mxu0 %v1202
    %1230 = vmatpush.msra.mxu0 %v1199
    %1231 = vmatpush.msra.mxu0 %v1196
    %1232 = vmatpush.msra.mxu0 %v1193
    %1233 = vmatpush.msra.mxu0 %v1190
    %1234 = vmatpush.msra.mxu0 %v1187
    %1235 = vmatpush.msra.mxu0 %v1184
    %1236 = vmatpush.msra.mxu0 %v1181
    %1237 = vmatpush.msra.mxu0 %v1178
    %1238 = vmatpush.msra.mxu0 %v1175
    %1239 = vmatmul.f32.gmra.mxu0 %v1174
    %v1240 = vpop.f32.mrf.mxu0
    %v1241 = vadd.f32 %v675, %v1240
    %1242 = vdwg.mxu0
    %1243 = vmatpush.msra.mxu0 %v1221
    %1244 = vmatpush.msra.mxu0 %v1218
    %1245 = vmatpush.msra.mxu0 %v1215
    %1246 = vmatpush.msra.mxu0 %v1212
    %1247 = vmatpush.msra.mxu0 %v1209
    %1248 = vmatpush.msra.mxu0 %v1206
    %1249 = vmatpush.msra.mxu0 %v1203
    %1250 = vmatpush.msra.mxu0 %v1200
    %1251 = vmatpush.msra.mxu0 %v1197
    %1252 = vmatpush.msra.mxu0 %v1194
    %1253 = vmatpush.msra.mxu0 %v1191
    %1254 = vmatpush.msra.mxu0 %v1188
    %1255 = vmatpush.msra.mxu0 %v1185
    %1256 = vmatpush.msra.mxu0 %v1182
    %1257 = vmatpush.msra.mxu0 %v1179
    %1258 = vmatpush.msra.mxu0 %v1176
    %1259 = vmatmul.f32.gmra.mxu0 %v1174
    %v1260 = vpop.f32.mrf.mxu0
    %v1261 = vadd.f32 %v676, %v1260
    %1262 = vdwg.mxu0
    %1263 = vmatpush.msra.mxu0 %v1222
    %1264 = vmatpush.msra.mxu0 %v1219
    %1265 = vmatpush.msra.mxu0 %v1216
    %1266 = vmatpush.msra.mxu0 %v1213
    %1267 = vmatpush.msra.mxu0 %v1210
    %1268 = vmatpush.msra.mxu0 %v1207
    %1269 = vmatpush.msra.mxu0 %v1204
    %1270 = vmatpush.msra.mxu0 %v1201
    %1271 = vmatpush.msra.mxu0 %v1198
    %1272 = vmatpush.msra.mxu0 %v1195
    %1273 = vmatpush.msra.mxu0 %v1192
    %1274 = vmatpush.msra.mxu0 %v1189
    %1275 = vmatpush.msra.mxu0 %v1186
    %1276 = vmatpush.msra.mxu0 %v1183
    %1277 = vmatpush.msra.mxu0 %v1180
    %1278 = vmatpush.msra.mxu0 %v1177
    %1279 = vmatmul.f32.gmra.mxu0 %v1174
    %v1280 = vpop.f32.mrf.mxu0
    %v1281 = vadd.f32 %v677, %v1280
    %1282 = vdwg.mxu0
    %v1283 = vld [vmem:[%s917] sm:$0xff]
    %v1284 = vld [vmem:[%s917 + $0x8] sm:$0xff]
    %v1285 = vld [vmem:[%s917 + $0x10] sm:$0xff]
    %v1286 = vld [vmem:[%s917 + $0x18] sm:$0xff]
    %v1287 = vld [vmem:[%s917 + $0x20] sm:$0xff]
    %v1288 = vld [vmem:[%s917 + $0x28] sm:$0xff]
    %v1289 = vld [vmem:[%s917 + $0x30] sm:$0xff]
    %v1290 = vld [vmem:[%s917 + $0x38] sm:$0xff]
    %v1291 = vld [vmem:[%s917 + $0x40] sm:$0xff]
    %v1292 = vld [vmem:[%s917 + $0x48] sm:$0xff]
    %v1293 = vld [vmem:[%s917 + $0x50] sm:$0xff]
    %v1294 = vld [vmem:[%s917 + $0x58] sm:$0xff]
    %v1295 = vld [vmem:[%s917 + $0x60] sm:$0xff]
    %v1296 = vld [vmem:[%s917 + $0x68] sm:$0xff]
    %v1297 = vld [vmem:[%s917 + $0x70] sm:$0xff]
    %v1298 = vld [vmem:[%s917 + $0x78] sm:$0xff]
    %v1299 = vld [vmem:[%s917 + $0x80] sm:$0xff]
    %v1300 = vld [vmem:[%s917 + $0x88] sm:$0xff]
    %v1301 = vld [vmem:[%s917 + $0x90] sm:$0xff]
    %v1302 = vld [vmem:[%s917 + $0x98] sm:$0xff]
    %v1303 = vld [vmem:[%s917 + $0xa0] sm:$0xff]
    %v1304 = vld [vmem:[%s917 + $0xa8] sm:$0xff]
    %v1305 = vld [vmem:[%s917 + $0xb0] sm:$0xff]
    %v1306 = vld [vmem:[%s917 + $0xb8] sm:$0xff]
    %v1307 = vld [vmem:[%s917 + $0xc0] sm:$0xff]
    %v1308 = vld [vmem:[%s917 + $0xc8] sm:$0xff]
    %v1309 = vld [vmem:[%s917 + $0xd0] sm:$0xff]
    %v1310 = vld [vmem:[%s917 + $0xd8] sm:$0xff]
    %v1311 = vld [vmem:[%s917 + $0xe0] sm:$0xff]
    %v1312 = vld [vmem:[%s917 + $0xe8] sm:$0xff]
    %v1313 = vld [vmem:[%s917 + $0xf0] sm:$0xff]
    %v1314 = vld [vmem:[%s917 + $0xf8] sm:$0xff]
    %v1315 = vld [vmem:[%s917 + $0x100] sm:$0xff]
    %v1316 = vld [vmem:[%s917 + $0x108] sm:$0xff]
    %v1317 = vld [vmem:[%s917 + $0x110] sm:$0xff]
    %v1318 = vld [vmem:[%s917 + $0x118] sm:$0xff]
    %v1319 = vld [vmem:[%s917 + $0x120] sm:$0xff]
    %v1320 = vld [vmem:[%s917 + $0x128] sm:$0xff]
    %v1321 = vld [vmem:[%s917 + $0x130] sm:$0xff]
    %v1322 = vld [vmem:[%s917 + $0x138] sm:$0xff]
    %v1323 = vld [vmem:[%s917 + $0x140] sm:$0xff]
    %v1324 = vld [vmem:[%s917 + $0x148] sm:$0xff]
    %v1325 = vld [vmem:[%s917 + $0x150] sm:$0xff]
    %v1326 = vld [vmem:[%s917 + $0x158] sm:$0xff]
    %v1327 = vld [vmem:[%s917 + $0x160] sm:$0xff]
    %v1328 = vld [vmem:[%s917 + $0x168] sm:$0xff]
    %v1329 = vld [vmem:[%s917 + $0x170] sm:$0xff]
    %v1330 = vld [vmem:[%s917 + $0x178] sm:$0xff]
    %1331 = vmatpush.msra.mxu0 %v1328
    %1332 = vmatpush.msra.mxu0 %v1325
    %1333 = vmatpush.msra.mxu0 %v1322
    %1334 = vmatpush.msra.mxu0 %v1319
    %1335 = vmatpush.msra.mxu0 %v1316
    %1336 = vmatpush.msra.mxu0 %v1313
    %1337 = vmatpush.msra.mxu0 %v1310
    %1338 = vmatpush.msra.mxu0 %v1307
    %1339 = vmatpush.msra.mxu0 %v1304
    %1340 = vmatpush.msra.mxu0 %v1301
    %1341 = vmatpush.msra.mxu0 %v1298
    %1342 = vmatpush.msra.mxu0 %v1295
    %1343 = vmatpush.msra.mxu0 %v1292
    %1344 = vmatpush.msra.mxu0 %v1289
    %1345 = vmatpush.msra.mxu0 %v1286
    %1346 = vmatpush.msra.mxu0 %v1283
    %1347 = vmatmul.f32.gmra.mxu0 %v1043
    %v1348 = vpop.f32.mrf.mxu0
    %v1349 = vadd.f32 0.0, %v1348
    %1350 = vdwg.mxu0
    %1351 = vmatpush.msra.mxu0 %v1329
    %1352 = vmatpush.msra.mxu0 %v1326
    %1353 = vmatpush.msra.mxu0 %v1323
    %1354 = vmatpush.msra.mxu0 %v1320
    %1355 = vmatpush.msra.mxu0 %v1317
    %1356 = vmatpush.msra.mxu0 %v1314
    %1357 = vmatpush.msra.mxu0 %v1311
    %1358 = vmatpush.msra.mxu0 %v1308
    %1359 = vmatpush.msra.mxu0 %v1305
    %1360 = vmatpush.msra.mxu0 %v1302
    %1361 = vmatpush.msra.mxu0 %v1299
    %1362 = vmatpush.msra.mxu0 %v1296
    %1363 = vmatpush.msra.mxu0 %v1293
    %1364 = vmatpush.msra.mxu0 %v1290
    %1365 = vmatpush.msra.mxu0 %v1287
    %1366 = vmatpush.msra.mxu0 %v1284
    %1367 = vmatmul.f32.gmra.mxu0 %v1043
    %v1368 = vpop.f32.mrf.mxu0
    %v1369 = vadd.f32 0.0, %v1368
    %1370 = vdwg.mxu0
    %1371 = vmatpush.msra.mxu0 %v1330
    %1372 = vmatpush.msra.mxu0 %v1327
    %1373 = vmatpush.msra.mxu0 %v1324
    %1374 = vmatpush.msra.mxu0 %v1321
    %1375 = vmatpush.msra.mxu0 %v1318
    %1376 = vmatpush.msra.mxu0 %v1315
    %1377 = vmatpush.msra.mxu0 %v1312
    %1378 = vmatpush.msra.mxu0 %v1309
    %1379 = vmatpush.msra.mxu0 %v1306
    %1380 = vmatpush.msra.mxu0 %v1303
    %1381 = vmatpush.msra.mxu0 %v1300
    %1382 = vmatpush.msra.mxu0 %v1297
    %1383 = vmatpush.msra.mxu0 %v1294
    %1384 = vmatpush.msra.mxu0 %v1291
    %1385 = vmatpush.msra.mxu0 %v1288
    %1386 = vmatpush.msra.mxu0 %v1285
    %1387 = vmatmul.f32.gmra.mxu0 %v1043
    %v1388 = vpop.f32.mrf.mxu0
    %v1389 = vadd.f32 0.0, %v1388
    %1390 = vdwg.mxu0
    %v1391 = vadd.f32 %v1241, %v1349
    %v1392 = vmul.f32 %v1391, 0.5
    %v1393 = vtanh.pop %v1392
    %v1394 = vadd.f32 %v1393, 1.0
    %v1395 = vmul.f32 %v1394, 0.5
    %v1396 = vadd.f32 %v1261, %v1369
    %v1397 = vmul.f32 %v1396, 0.5
    %v1398 = vtanh.pop %v1397
    %v1399 = vadd.f32 %v1398, 1.0
    %v1400 = vmul.f32 %v1399, 0.5
    %v1401 = vadd.f32 %v1389, %v673
    %v1402 = vmul.f32 %v1395, %v1401
    %v1403 = vadd.f32 %v1281, %v1402
    %v1404 = vtanh.pop %v1403
    %v1405 = vsub.f32 1.0, %v1400
    %v1406 = vmul.f32 %v1405, %v1404
    %v1407 = vmul.f32 %v1400, %v1043
    %v1408 = vadd.f32 %v1406, %v1407
    %s1409 = scalar_lea.vmem [#allocation3], 8
    %1410 = vst [vmem:[%s1409] sm:$0xff] %v1408
    %s1411 = scalar_lea.vmem [#allocation2], 48
    %v1412 = vld [vmem:[%s1411] sm:$0xff]
    %v1413 = vld [vmem:[%s1411 + $0x8] sm:$0xff]
    %v1414 = vld [vmem:[%s1411 + $0x10] sm:$0xff]
    %v1415 = vld [vmem:[%s681] sm:$0xff]
    %v1416 = vld [vmem:[%s681 + $0x8] sm:$0xff]
    %v1417 = vld [vmem:[%s681 + $0x10] sm:$0xff]
    %v1418 = vld [vmem:[%s681 + $0x18] sm:$0xff]
    %v1419 = vld [vmem:[%s681 + $0x20] sm:$0xff]
    %v1420 = vld [vmem:[%s681 + $0x28] sm:$0xff]
    %v1421 = vld [vmem:[%s681 + $0x30] sm:$0xff]
    %v1422 = vld [vmem:[%s681 + $0x38] sm:$0xff]
    %v1423 = vld [vmem:[%s681 + $0x40] sm:$0xff]
    %v1424 = vld [vmem:[%s681 + $0x48] sm:$0xff]
    %v1425 = vld [vmem:[%s681 + $0x50] sm:$0xff]
    %v1426 = vld [vmem:[%s681 + $0x58] sm:$0xff]
    %v1427 = vld [vmem:[%s681 + $0x60] sm:$0xff]
    %v1428 = vld [vmem:[%s681 + $0x68] sm:$0xff]
    %v1429 = vld [vmem:[%s681 + $0x70] sm:$0xff]
    %v1430 = vld [vmem:[%s681 + $0x78] sm:$0xff]
    %v1431 = vld [vmem:[%s681 + $0x80] sm:$0xff]
    %v1432 = vld [vmem:[%s681 + $0x88] sm:$0xff]
    %v1433 = vld [vmem:[%s681 + $0x90] sm:$0xff]
    %v1434 = vld [vmem:[%s681 + $0x98] sm:$0xff]
    %v1435 = vld [vmem:[%s681 + $0xa0] sm:$0xff]
    %v1436 = vld [vmem:[%s681 + $0xa8] sm:$0xff]
    %v1437 = vld [vmem:[%s681 + $0xb0] sm:$0xff]
    %v1438 = vld [vmem:[%s681 + $0xb8] sm:$0xff]
    %v1439 = vld [vmem:[%s681 + $0xc0] sm:$0xff]
    %v1440 = vld [vmem:[%s681 + $0xc8] sm:$0xff]
    %v1441 = vld [vmem:[%s681 + $0xd0] sm:$0xff]
    %v1442 = vld [vmem:[%s681 + $0xd8] sm:$0xff]
    %v1443 = vld [vmem:[%s681 + $0xe0] sm:$0xff]
    %v1444 = vld [vmem:[%s681 + $0xe8] sm:$0xff]
    %v1445 = vld [vmem:[%s681 + $0xf0] sm:$0xff]
    %v1446 = vld [vmem:[%s681 + $0xf8] sm:$0xff]
    %v1447 = vld [vmem:[%s681 + $0x100] sm:$0xff]
    %v1448 = vld [vmem:[%s681 + $0x108] sm:$0xff]
    %v1449 = vld [vmem:[%s681 + $0x110] sm:$0xff]
    %v1450 = vld [vmem:[%s681 + $0x118] sm:$0xff]
    %v1451 = vld [vmem:[%s681 + $0x120] sm:$0xff]
    %v1452 = vld [vmem:[%s681 + $0x128] sm:$0xff]
    %v1453 = vld [vmem:[%s681 + $0x130] sm:$0xff]
    %v1454 = vld [vmem:[%s681 + $0x138] sm:$0xff]
    %v1455 = vld [vmem:[%s681 + $0x140] sm:$0xff]
    %v1456 = vld [vmem:[%s681 + $0x148] sm:$0xff]
    %v1457 = vld [vmem:[%s681 + $0x150] sm:$0xff]
    %v1458 = vld [vmem:[%s681 + $0x158] sm:$0xff]
    %v1459 = vld [vmem:[%s681 + $0x160] sm:$0xff]
    %v1460 = vld [vmem:[%s681 + $0x168] sm:$0xff]
    %v1461 = vld [vmem:[%s681 + $0x170] sm:$0xff]
    %v1462 = vld [vmem:[%s681 + $0x178] sm:$0xff]
    %1463 = vmatpush.msra.mxu0 %v1460
    %1464 = vmatpush.msra.mxu0 %v1457
    %1465 = vmatpush.msra.mxu0 %v1454
    %1466 = vmatpush.msra.mxu0 %v1451
    %1467 = vmatpush.msra.mxu0 %v1448
    %1468 = vmatpush.msra.mxu0 %v1445
    %1469 = vmatpush.msra.mxu0 %v1442
    %1470 = vmatpush.msra.mxu0 %v1439
    %1471 = vmatpush.msra.mxu0 %v1436
    %1472 = vmatpush.msra.mxu0 %v1433
    %1473 = vmatpush.msra.mxu0 %v1430
    %1474 = vmatpush.msra.mxu0 %v1427
    %1475 = vmatpush.msra.mxu0 %v1424
    %1476 = vmatpush.msra.mxu0 %v1421
    %1477 = vmatpush.msra.mxu0 %v1418
    %1478 = vmatpush.msra.mxu0 %v1415
    %1479 = vmatmul.f32.gmra.mxu0 %v1174
    %v1480 = vpop.f32.mrf.mxu0
    %v1481 = vadd.f32 0.0, %v1480
    %1482 = vdwg.mxu0
    %1483 = vmatpush.msra.mxu0 %v1461
    %1484 = vmatpush.msra.mxu0 %v1458
    %1485 = vmatpush.msra.mxu0 %v1455
    %1486 = vmatpush.msra.mxu0 %v1452
    %1487 = vmatpush.msra.mxu0 %v1449
    %1488 = vmatpush.msra.mxu0 %v1446
    %1489 = vmatpush.msra.mxu0 %v1443
    %1490 = vmatpush.msra.mxu0 %v1440
    %1491 = vmatpush.msra.mxu0 %v1437
    %1492 = vmatpush.msra.mxu0 %v1434
    %1493 = vmatpush.msra.mxu0 %v1431
    %1494 = vmatpush.msra.mxu0 %v1428
    %1495 = vmatpush.msra.mxu0 %v1425
    %1496 = vmatpush.msra.mxu0 %v1422
    %1497 = vmatpush.msra.mxu0 %v1419
    %1498 = vmatpush.msra.mxu0 %v1416
    %1499 = vmatmul.f32.gmra.mxu0 %v1174
    %v1500 = vpop.f32.mrf.mxu0
    %v1501 = vadd.f32 0.0, %v1500
    %1502 = vdwg.mxu0
    %1503 = vmatpush.msra.mxu0 %v1462
    %1504 = vmatpush.msra.mxu0 %v1459
    %1505 = vmatpush.msra.mxu0 %v1456
    %1506 = vmatpush.msra.mxu0 %v1453
    %1507 = vmatpush.msra.mxu0 %v1450
    %1508 = vmatpush.msra.mxu0 %v1447
    %1509 = vmatpush.msra.mxu0 %v1444
    %1510 = vmatpush.msra.mxu0 %v1441
    %1511 = vmatpush.msra.mxu0 %v1438
    %1512 = vmatpush.msra.mxu0 %v1435
    %1513 = vmatpush.msra.mxu0 %v1432
    %1514 = vmatpush.msra.mxu0 %v1429
    %1515 = vmatpush.msra.mxu0 %v1426
    %1516 = vmatpush.msra.mxu0 %v1423
    %1517 = vmatpush.msra.mxu0 %v1420
    %1518 = vmatpush.msra.mxu0 %v1417
    %1519 = vmatmul.f32.gmra.mxu0 %v1174
    %v1520 = vpop.f32.mrf.mxu0
    %v1521 = vadd.f32 0.0, %v1520
    %1522 = vdwg.mxu0
    %v1523 = vadd.f32 %v1412, %v1481
    %v1524 = vmul.f32 %v1523, 0.5
    %v1525 = vtanh.pop %v1524
    %v1526 = vadd.f32 %v1525, 1.0
    %v1527 = vmul.f32 %v1526, 0.5
    %v1528 = vadd.f32 %v1413, %v1501
    %v1529 = vmul.f32 %v1528, 0.5
    %v1530 = vtanh.pop %v1529
    %v1531 = vadd.f32 %v1530, 1.0
    %v1532 = vmul.f32 %v1531, 0.5
    %v1533 = vadd.f32 %v1521, %v671
    %v1534 = vmul.f32 %v1527, %v1533
    %v1535 = vadd.f32 %v1414, %v1534
    %v1536 = vtanh.pop %v1535
    %v1537 = vsub.f32 1.0, %v1532
    %v1538 = vmul.f32 %v1537, %v1536
    %v1539 = vmul.f32 %v1532, %v1174
    %v1540 = vadd.f32 %v1538, %v1539
    %v1541 = vld [vmem:[%s808] sm:$0xff]
    %v1542 = vld [vmem:[%s808 + $0x8] sm:$0xff]
    %v1543 = vld [vmem:[%s808 + $0x10] sm:$0xff]
    %v1544 = vld [vmem:[%s808 + $0x18] sm:$0xff]
    %v1545 = vld [vmem:[%s808 + $0x20] sm:$0xff]
    %v1546 = vld [vmem:[%s808 + $0x28] sm:$0xff]
    %v1547 = vld [vmem:[%s808 + $0x30] sm:$0xff]
    %v1548 = vld [vmem:[%s808 + $0x38] sm:$0xff]
    %v1549 = vld [vmem:[%s808 + $0x40] sm:$0xff]
    %v1550 = vld [vmem:[%s808 + $0x48] sm:$0xff]
    %v1551 = vld [vmem:[%s808 + $0x50] sm:$0xff]
    %v1552 = vld [vmem:[%s808 + $0x58] sm:$0xff]
    %v1553 = vld [vmem:[%s808 + $0x60] sm:$0xff]
    %v1554 = vld [vmem:[%s808 + $0x68] sm:$0xff]
    %v1555 = vld [vmem:[%s808 + $0x70] sm:$0xff]
    %v1556 = vld [vmem:[%s808 + $0x78] sm:$0xff]
    %v1557 = vld [vmem:[%s808 + $0x80] sm:$0xff]
    %v1558 = vld [vmem:[%s808 + $0x88] sm:$0xff]
    %v1559 = vld [vmem:[%s808 + $0x90] sm:$0xff]
    %v1560 = vld [vmem:[%s808 + $0x98] sm:$0xff]
    %v1561 = vld [vmem:[%s808 + $0xa0] sm:$0xff]
    %v1562 = vld [vmem:[%s808 + $0xa8] sm:$0xff]
    %v1563 = vld [vmem:[%s808 + $0xb0] sm:$0xff]
    %v1564 = vld [vmem:[%s808 + $0xb8] sm:$0xff]
    %v1565 = vld [vmem:[%s808 + $0xc0] sm:$0xff]
    %v1566 = vld [vmem:[%s808 + $0xc8] sm:$0xff]
    %v1567 = vld [vmem:[%s808 + $0xd0] sm:$0xff]
    %v1568 = vld [vmem:[%s808 + $0xd8] sm:$0xff]
    %v1569 = vld [vmem:[%s808 + $0xe0] sm:$0xff]
    %v1570 = vld [vmem:[%s808 + $0xe8] sm:$0xff]
    %v1571 = vld [vmem:[%s808 + $0xf0] sm:$0xff]
    %v1572 = vld [vmem:[%s808 + $0xf8] sm:$0xff]
    %v1573 = vld [vmem:[%s808 + $0x100] sm:$0xff]
    %v1574 = vld [vmem:[%s808 + $0x108] sm:$0xff]
    %v1575 = vld [vmem:[%s808 + $0x110] sm:$0xff]
    %v1576 = vld [vmem:[%s808 + $0x118] sm:$0xff]
    %v1577 = vld [vmem:[%s808 + $0x120] sm:$0xff]
    %v1578 = vld [vmem:[%s808 + $0x128] sm:$0xff]
    %v1579 = vld [vmem:[%s808 + $0x130] sm:$0xff]
    %v1580 = vld [vmem:[%s808 + $0x138] sm:$0xff]
    %v1581 = vld [vmem:[%s808 + $0x140] sm:$0xff]
    %v1582 = vld [vmem:[%s808 + $0x148] sm:$0xff]
    %v1583 = vld [vmem:[%s808 + $0x150] sm:$0xff]
    %v1584 = vld [vmem:[%s808 + $0x158] sm:$0xff]
    %v1585 = vld [vmem:[%s808 + $0x160] sm:$0xff]
    %v1586 = vld [vmem:[%s808 + $0x168] sm:$0xff]
    %v1587 = vld [vmem:[%s808 + $0x170] sm:$0xff]
    %v1588 = vld [vmem:[%s808 + $0x178] sm:$0xff]
    %1589 = vmatpush.msra.mxu0 %v1586
    %1590 = vmatpush.msra.mxu0 %v1583
    %1591 = vmatpush.msra.mxu0 %v1580
    %1592 = vmatpush.msra.mxu0 %v1577
    %1593 = vmatpush.msra.mxu0 %v1574
    %1594 = vmatpush.msra.mxu0 %v1571
    %1595 = vmatpush.msra.mxu0 %v1568
    %1596 = vmatpush.msra.mxu0 %v1565
    %1597 = vmatpush.msra.mxu0 %v1562
    %1598 = vmatpush.msra.mxu0 %v1559
    %1599 = vmatpush.msra.mxu0 %v1556
    %1600 = vmatpush.msra.mxu0 %v1553
    %1601 = vmatpush.msra.mxu0 %v1550
    %1602 = vmatpush.msra.mxu0 %v1547
    %1603 = vmatpush.msra.mxu0 %v1544
    %1604 = vmatpush.msra.mxu0 %v1541
    %1605 = vmatmul.f32.gmra.mxu0 %v1540
    %v1606 = vpop.f32.mrf.mxu0
    %v1607 = vadd.f32 %v675, %v1606
    %1608 = vdwg.mxu0
    %1609 = vmatpush.msra.mxu0 %v1587
    %1610 = vmatpush.msra.mxu0 %v1584
    %1611 = vmatpush.msra.mxu0 %v1581
    %1612 = vmatpush.msra.mxu0 %v1578
    %1613 = vmatpush.msra.mxu0 %v1575
    %1614 = vmatpush.msra.mxu0 %v1572
    %1615 = vmatpush.msra.mxu0 %v1569
    %1616 = vmatpush.msra.mxu0 %v1566
    %1617 = vmatpush.msra.mxu0 %v1563
    %1618 = vmatpush.msra.mxu0 %v1560
    %1619 = vmatpush.msra.mxu0 %v1557
    %1620 = vmatpush.msra.mxu0 %v1554
    %1621 = vmatpush.msra.mxu0 %v1551
    %1622 = vmatpush.msra.mxu0 %v1548
    %1623 = vmatpush.msra.mxu0 %v1545
    %1624 = vmatpush.msra.mxu0 %v1542
    %1625 = vmatmul.f32.gmra.mxu0 %v1540
    %v1626 = vpop.f32.mrf.mxu0
    %v1627 = vadd.f32 %v676, %v1626
    %1628 = vdwg.mxu0
    %1629 = vmatpush.msra.mxu0 %v1588
    %1630 = vmatpush.msra.mxu0 %v1585
    %1631 = vmatpush.msra.mxu0 %v1582
    %1632 = vmatpush.msra.mxu0 %v1579
    %1633 = vmatpush.msra.mxu0 %v1576
    %1634 = vmatpush.msra.mxu0 %v1573
    %1635 = vmatpush.msra.mxu0 %v1570
    %1636 = vmatpush.msra.mxu0 %v1567
    %1637 = vmatpush.msra.mxu0 %v1564
    %1638 = vmatpush.msra.mxu0 %v1561
    %1639 = vmatpush.msra.mxu0 %v1558
    %1640 = vmatpush.msra.mxu0 %v1555
    %1641 = vmatpush.msra.mxu0 %v1552
    %1642 = vmatpush.msra.mxu0 %v1549
    %1643 = vmatpush.msra.mxu0 %v1546
    %1644 = vmatpush.msra.mxu0 %v1543
    %1645 = vmatmul.f32.gmra.mxu0 %v1540
    %v1646 = vpop.f32.mrf.mxu0
    %v1647 = vadd.f32 %v677, %v1646
    %1648 = vdwg.mxu0
    %v1649 = vld [vmem:[%s917] sm:$0xff]
    %v1650 = vld [vmem:[%s917 + $0x8] sm:$0xff]
    %v1651 = vld [vmem:[%s917 + $0x10] sm:$0xff]
    %v1652 = vld [vmem:[%s917 + $0x18] sm:$0xff]
    %v1653 = vld [vmem:[%s917 + $0x20] sm:$0xff]
    %v1654 = vld [vmem:[%s917 + $0x28] sm:$0xff]
    %v1655 = vld [vmem:[%s917 + $0x30] sm:$0xff]
    %v1656 = vld [vmem:[%s917 + $0x38] sm:$0xff]
    %v1657 = vld [vmem:[%s917 + $0x40] sm:$0xff]
    %v1658 = vld [vmem:[%s917 + $0x48] sm:$0xff]
    %v1659 = vld [vmem:[%s917 + $0x50] sm:$0xff]
    %v1660 = vld [vmem:[%s917 + $0x58] sm:$0xff]
    %v1661 = vld [vmem:[%s917 + $0x60] sm:$0xff]
    %v1662 = vld [vmem:[%s917 + $0x68] sm:$0xff]
    %v1663 = vld [vmem:[%s917 + $0x70] sm:$0xff]
    %v1664 = vld [vmem:[%s917 + $0x78] sm:$0xff]
    %v1665 = vld [vmem:[%s917 + $0x80] sm:$0xff]
    %v1666 = vld [vmem:[%s917 + $0x88] sm:$0xff]
    %v1667 = vld [vmem:[%s917 + $0x90] sm:$0xff]
    %v1668 = vld [vmem:[%s917 + $0x98] sm:$0xff]
    %v1669 = vld [vmem:[%s917 + $0xa0] sm:$0xff]
    %v1670 = vld [vmem:[%s917 + $0xa8] sm:$0xff]
    %v1671 = vld [vmem:[%s917 + $0xb0] sm:$0xff]
    %v1672 = vld [vmem:[%s917 + $0xb8] sm:$0xff]
    %v1673 = vld [vmem:[%s917 + $0xc0] sm:$0xff]
    %v1674 = vld [vmem:[%s917 + $0xc8] sm:$0xff]
    %v1675 = vld [vmem:[%s917 + $0xd0] sm:$0xff]
    %v1676 = vld [vmem:[%s917 + $0xd8] sm:$0xff]
    %v1677 = vld [vmem:[%s917 + $0xe0] sm:$0xff]
    %v1678 = vld [vmem:[%s917 + $0xe8] sm:$0xff]
    %v1679 = vld [vmem:[%s917 + $0xf0] sm:$0xff]
    %v1680 = vld [vmem:[%s917 + $0xf8] sm:$0xff]
    %v1681 = vld [vmem:[%s917 + $0x100] sm:$0xff]
    %v1682 = vld [vmem:[%s917 + $0x108] sm:$0xff]
    %v1683 = vld [vmem:[%s917 + $0x110] sm:$0xff]
    %v1684 = vld [vmem:[%s917 + $0x118] sm:$0xff]
    %v1685 = vld [vmem:[%s917 + $0x120] sm:$0xff]
    %v1686 = vld [vmem:[%s917 + $0x128] sm:$0xff]
    %v1687 = vld [vmem:[%s917 + $0x130] sm:$0xff]
    %v1688 = vld [vmem:[%s917 + $0x138] sm:$0xff]
    %v1689 = vld [vmem:[%s917 + $0x140] sm:$0xff]
    %v1690 = vld [vmem:[%s917 + $0x148] sm:$0xff]
    %v1691 = vld [vmem:[%s917 + $0x150] sm:$0xff]
    %v1692 = vld [vmem:[%s917 + $0x158] sm:$0xff]
    %v1693 = vld [vmem:[%s917 + $0x160] sm:$0xff]
    %v1694 = vld [vmem:[%s917 + $0x168] sm:$0xff]
    %v1695 = vld [vmem:[%s917 + $0x170] sm:$0xff]
    %v1696 = vld [vmem:[%s917 + $0x178] sm:$0xff]
    %1697 = vmatpush.msra.mxu0 %v1694
    %1698 = vmatpush.msra.mxu0 %v1691
    %1699 = vmatpush.msra.mxu0 %v1688
    %1700 = vmatpush.msra.mxu0 %v1685
    %1701 = vmatpush.msra.mxu0 %v1682
    %1702 = vmatpush.msra.mxu0 %v1679
    %1703 = vmatpush.msra.mxu0 %v1676
    %1704 = vmatpush.msra.mxu0 %v1673
    %1705 = vmatpush.msra.mxu0 %v1670
    %1706 = vmatpush.msra.mxu0 %v1667
    %1707 = vmatpush.msra.mxu0 %v1664
    %1708 = vmatpush.msra.mxu0 %v1661
    %1709 = vmatpush.msra.mxu0 %v1658
    %1710 = vmatpush.msra.mxu0 %v1655
    %1711 = vmatpush.msra.mxu0 %v1652
    %1712 = vmatpush.msra.mxu0 %v1649
    %1713 = vmatmul.f32.gmra.mxu0 %v1408
    %v1714 = vpop.f32.mrf.mxu0
    %v1715 = vadd.f32 0.0, %v1714
    %1716 = vdwg.mxu0
    %1717 = vmatpush.msra.mxu0 %v1695
    %1718 = vmatpush.msra.mxu0 %v1692
    %1719 = vmatpush.msra.mxu0 %v1689
    %1720 = vmatpush.msra.mxu0 %v1686
    %1721 = vmatpush.msra.mxu0 %v1683
    %1722 = vmatpush.msra.mxu0 %v1680
    %1723 = vmatpush.msra.mxu0 %v1677
    %1724 = vmatpush.msra.mxu0 %v1674
    %1725 = vmatpush.msra.mxu0 %v1671
    %1726 = vmatpush.msra.mxu0 %v1668
    %1727 = vmatpush.msra.mxu0 %v1665
    %1728 = vmatpush.msra.mxu0 %v1662
    %1729 = vmatpush.msra.mxu0 %v1659
    %1730 = vmatpush.msra.mxu0 %v1656
    %1731 = vmatpush.msra.mxu0 %v1653
    %1732 = vmatpush.msra.mxu0 %v1650
    %1733 = vmatmul.f32.gmra.mxu0 %v1408
    %v1734 = vpop.f32.mrf.mxu0
    %v1735 = vadd.f32 0.0, %v1734
    %1736 = vdwg.mxu0
    %1737 = vmatpush.msra.mxu0 %v1696
    %1738 = vmatpush.msra.mxu0 %v1693
    %1739 = vmatpush.msra.mxu0 %v1690
    %1740 = vmatpush.msra.mxu0 %v1687
    %1741 = vmatpush.msra.mxu0 %v1684
    %1742 = vmatpush.msra.mxu0 %v1681
    %1743 = vmatpush.msra.mxu0 %v1678
    %1744 = vmatpush.msra.mxu0 %v1675
    %1745 = vmatpush.msra.mxu0 %v1672
    %1746 = vmatpush.msra.mxu0 %v1669
    %1747 = vmatpush.msra.mxu0 %v1666
    %1748 = vmatpush.msra.mxu0 %v1663
    %1749 = vmatpush.msra.mxu0 %v1660
    %1750 = vmatpush.msra.mxu0 %v1657
    %1751 = vmatpush.msra.mxu0 %v1654
    %1752 = vmatpush.msra.mxu0 %v1651
    %1753 = vmatmul.f32.gmra.mxu0 %v1408
    %v1754 = vpop.f32.mrf.mxu0
    %v1755 = vadd.f32 0.0, %v1754
    %1756 = vdwg.mxu0
    %v1757 = vadd.f32 %v1607, %v1715
    %v1758 = vmul.f32 %v1757, 0.5
    %v1759 = vtanh.pop %v1758
    %v1760 = vadd.f32 %v1759, 1.0
    %v1761 = vmul.f32 %v1760, 0.5
    %v1762 = vadd.f32 %v1627, %v1735
    %v1763 = vmul.f32 %v1762, 0.5
    %v1764 = vtanh.pop %v1763
    %v1765 = vadd.f32 %v1764, 1.0
    %v1766 = vmul.f32 %v1765, 0.5
    %v1767 = vadd.f32 %v1755, %v673
    %v1768 = vmul.f32 %v1761, %v1767
    %v1769 = vadd.f32 %v1647, %v1768
    %v1770 = vtanh.pop %v1769
    %v1771 = vsub.f32 1.0, %v1766
    %v1772 = vmul.f32 %v1771, %v1770
    %v1773 = vmul.f32 %v1766, %v1408
    %v1774 = vadd.f32 %v1772, %v1773
    %s1775 = scalar_lea.vmem [#allocation3], 16
    %1776 = vst [vmem:[%s1775] sm:$0xff] %v1774
    %s1777 = scalar_lea.vmem [#allocation2], 72
    %v1778 = vld [vmem:[%s1777] sm:$0xff]
    %v1779 = vld [vmem:[%s1777 + $0x8] sm:$0xff]
    %v1780 = vld [vmem:[%s1777 + $0x10] sm:$0xff]
    %v1781 = vld [vmem:[%s681] sm:$0xff]
    %v1782 = vld [vmem:[%s681 + $0x8] sm:$0xff]
    %v1783 = vld [vmem:[%s681 + $0x10] sm:$0xff]
    %v1784 = vld [vmem:[%s681 + $0x18] sm:$0xff]
    %v1785 = vld [vmem:[%s681 + $0x20] sm:$0xff]
    %v1786 = vld [vmem:[%s681 + $0x28] sm:$0xff]
    %v1787 = vld [vmem:[%s681 + $0x30] sm:$0xff]
    %v1788 = vld [vmem:[%s681 + $0x38] sm:$0xff]
    %v1789 = vld [vmem:[%s681 + $0x40] sm:$0xff]
    %v1790 = vld [vmem:[%s681 + $0x48] sm:$0xff]
    %v1791 = vld [vmem:[%s681 + $0x50] sm:$0xff]
    %v1792 = vld [vmem:[%s681 + $0x58] sm:$0xff]
    %v1793 = vld [vmem:[%s681 + $0x60] sm:$0xff]
    %v1794 = vld [vmem:[%s681 + $0x68] sm:$0xff]
    %v1795 = vld [vmem:[%s681 + $0x70] sm:$0xff]
    %v1796 = vld [vmem:[%s681 + $0x78] sm:$0xff]
    %v1797 = vld [vmem:[%s681 + $0x80] sm:$0xff]
    %v1798 = vld [vmem:[%s681 + $0x88] sm:$0xff]
    %v1799 = vld [vmem:[%s681 + $0x90] sm:$0xff]
    %v1800 = vld [vmem:[%s681 + $0x98] sm:$0xff]
    %v1801 = vld [vmem:[%s681 + $0xa0] sm:$0xff]
    %v1802 = vld [vmem:[%s681 + $0xa8] sm:$0xff]
    %v1803 = vld [vmem:[%s681 + $0xb0] sm:$0xff]
    %v1804 = vld [vmem:[%s681 + $0xb8] sm:$0xff]
    %v1805 = vld [vmem:[%s681 + $0xc0] sm:$0xff]
    %v1806 = vld [vmem:[%s681 + $0xc8] sm:$0xff]
    %v1807 = vld [vmem:[%s681 + $0xd0] sm:$0xff]
    %v1808 = vld [vmem:[%s681 + $0xd8] sm:$0xff]
    %v1809 = vld [vmem:[%s681 + $0xe0] sm:$0xff]
    %v1810 = vld [vmem:[%s681 + $0xe8] sm:$0xff]
    %v1811 = vld [vmem:[%s681 + $0xf0] sm:$0xff]
    %v1812 = vld [vmem:[%s681 + $0xf8] sm:$0xff]
    %v1813 = vld [vmem:[%s681 + $0x100] sm:$0xff]
    %v1814 = vld [vmem:[%s681 + $0x108] sm:$0xff]
    %v1815 = vld [vmem:[%s681 + $0x110] sm:$0xff]
    %v1816 = vld [vmem:[%s681 + $0x118] sm:$0xff]
    %v1817 = vld [vmem:[%s681 + $0x120] sm:$0xff]
    %v1818 = vld [vmem:[%s681 + $0x128] sm:$0xff]
    %v1819 = vld [vmem:[%s681 + $0x130] sm:$0xff]
    %v1820 = vld [vmem:[%s681 + $0x138] sm:$0xff]
    %v1821 = vld [vmem:[%s681 + $0x140] sm:$0xff]
    %v1822 = vld [vmem:[%s681 + $0x148] sm:$0xff]
    %v1823 = vld [vmem:[%s681 + $0x150] sm:$0xff]
    %v1824 = vld [vmem:[%s681 + $0x158] sm:$0xff]
    %v1825 = vld [vmem:[%s681 + $0x160] sm:$0xff]
    %v1826 = vld [vmem:[%s681 + $0x168] sm:$0xff]
    %v1827 = vld [vmem:[%s681 + $0x170] sm:$0xff]
    %v1828 = vld [vmem:[%s681 + $0x178] sm:$0xff]
    %1829 = vmatpush.msra.mxu0 %v1826
    %1830 = vmatpush.msra.mxu0 %v1823
    %1831 = vmatpush.msra.mxu0 %v1820
    %1832 = vmatpush.msra.mxu0 %v1817
    %1833 = vmatpush.msra.mxu0 %v1814
    %1834 = vmatpush.msra.mxu0 %v1811
    %1835 = vmatpush.msra.mxu0 %v1808
    %1836 = vmatpush.msra.mxu0 %v1805
    %1837 = vmatpush.msra.mxu0 %v1802
    %1838 = vmatpush.msra.mxu0 %v1799
    %1839 = vmatpush.msra.mxu0 %v1796
    %1840 = vmatpush.msra.mxu0 %v1793
    %1841 = vmatpush.msra.mxu0 %v1790
    %1842 = vmatpush.msra.mxu0 %v1787
    %1843 = vmatpush.msra.mxu0 %v1784
    %1844 = vmatpush.msra.mxu0 %v1781
    %1845 = vmatmul.f32.gmra.mxu0 %v1540
    %v1846 = vpop.f32.mrf.mxu0
    %v1847 = vadd.f32 0.0, %v1846
    %1848 = vdwg.mxu0
    %1849 = vmatpush.msra.mxu0 %v1827
    %1850 = vmatpush.msra.mxu0 %v1824
    %1851 = vmatpush.msra.mxu0 %v1821
    %1852 = vmatpush.msra.mxu0 %v1818
    %1853 = vmatpush.msra.mxu0 %v1815
    %1854 = vmatpush.msra.mxu0 %v1812
    %1855 = vmatpush.msra.mxu0 %v1809
    %1856 = vmatpush.msra.mxu0 %v1806
    %1857 = vmatpush.msra.mxu0 %v1803
    %1858 = vmatpush.msra.mxu0 %v1800
    %1859 = vmatpush.msra.mxu0 %v1797
    %1860 = vmatpush.msra.mxu0 %v1794
    %1861 = vmatpush.msra.mxu0 %v1791
    %1862 = vmatpush.msra.mxu0 %v1788
    %1863 = vmatpush.msra.mxu0 %v1785
    %1864 = vmatpush.msra.mxu0 %v1782
    %1865 = vmatmul.f32.gmra.mxu0 %v1540
    %v1866 = vpop.f32.mrf.mxu0
    %v1867 = vadd.f32 0.0, %v1866
    %1868 = vdwg.mxu0
    %1869 = vmatpush.msra.mxu0 %v1828
    %1870 = vmatpush.msra.mxu0 %v1825
    %1871 = vmatpush.msra.mxu0 %v1822
    %1872 = vmatpush.msra.mxu0 %v1819
    %1873 = vmatpush.msra.mxu0 %v1816
    %1874 = vmatpush.msra.mxu0 %v1813
    %1875 = vmatpush.msra.mxu0 %v1810
    %1876 = vmatpush.msra.mxu0 %v1807
    %1877 = vmatpush.msra.mxu0 %v1804
    %1878 = vmatpush.msra.mxu0 %v1801
    %1879 = vmatpush.msra.mxu0 %v1798
    %1880 = vmatpush.msra.mxu0 %v1795
    %1881 = vmatpush.msra.mxu0 %v1792
    %1882 = vmatpush.msra.mxu0 %v1789
    %1883 = vmatpush.msra.mxu0 %v1786
    %1884 = vmatpush.msra.mxu0 %v1783
    %1885 = vmatmul.f32.gmra.mxu0 %v1540
    %v1886 = vpop.f32.mrf.mxu0
    %v1887 = vadd.f32 0.0, %v1886
    %1888 = vdwg.mxu0
    %v1889 = vadd.f32 %v1778, %v1847
    %v1890 = vmul.f32 %v1889, 0.5
    %v1891 = vtanh.pop %v1890
    %v1892 = vadd.f32 %v1891, 1.0
    %v1893 = vmul.f32 %v1892, 0.5
    %v1894 = vadd.f32 %v1779, %v1867
    %v1895 = vmul.f32 %v1894, 0.5
    %v1896 = vtanh.pop %v1895
    %v1897 = vadd.f32 %v1896, 1.0
    %v1898 = vmul.f32 %v1897, 0.5
    %v1899 = vadd.f32 %v1887, %v671
    %v1900 = vmul.f32 %v1893, %v1899
    %v1901 = vadd.f32 %v1780, %v1900
    %v1902 = vtanh.pop %v1901
    %v1903 = vsub.f32 1.0, %v1898
    %v1904 = vmul.f32 %v1903, %v1902
    %v1905 = vmul.f32 %v1898, %v1540
    %v1906 = vadd.f32 %v1904, %v1905
    %v1907 = vld [vmem:[%s808] sm:$0xff]
    %v1908 = vld [vmem:[%s808 + $0x8] sm:$0xff]
    %v1909 = vld [vmem:[%s808 + $0x10] sm:$0xff]
    %v1910 = vld [vmem:[%s808 + $0x18] sm:$0xff]
    %v1911 = vld [vmem:[%s808 + $0x20] sm:$0xff]
    %v1912 = vld [vmem:[%s808 + $0x28] sm:$0xff]
    %v1913 = vld [vmem:[%s808 + $0x30] sm:$0xff]
    %v1914 = vld [vmem:[%s808 + $0x38] sm:$0xff]
    %v1915 = vld [vmem:[%s808 + $0x40] sm:$0xff]
    %v1916 = vld [vmem:[%s808 + $0x48] sm:$0xff]
    %v1917 = vld [vmem:[%s808 + $0x50] sm:$0xff]
    %v1918 = vld [vmem:[%s808 + $0x58] sm:$0xff]
    %v1919 = vld [vmem:[%s808 + $0x60] sm:$0xff]
    %v1920 = vld [vmem:[%s808 + $0x68] sm:$0xff]
    %v1921 = vld [vmem:[%s808 + $0x70] sm:$0xff]
    %v1922 = vld [vmem:[%s808 + $0x78] sm:$0xff]
    %v1923 = vld [vmem:[%s808 + $0x80] sm:$0xff]
    %v1924 = vld [vmem:[%s808 + $0x88] sm:$0xff]
    %v1925 = vld [vmem:[%s808 + $0x90] sm:$0xff]
    %v1926 = vld [vmem:[%s808 + $0x98] sm:$0xff]
    %v1927 = vld [vmem:[%s808 + $0xa0] sm:$0xff]
    %v1928 = vld [vmem:[%s808 + $0xa8] sm:$0xff]
    %v1929 = vld [vmem:[%s808 + $0xb0] sm:$0xff]
    %v1930 = vld [vmem:[%s808 + $0xb8] sm:$0xff]
    %v1931 = vld [vmem:[%s808 + $0xc0] sm:$0xff]
    %v1932 = vld [vmem:[%s808 + $0xc8] sm:$0xff]
    %v1933 = vld [vmem:[%s808 + $0xd0] sm:$0xff]
    %v1934 = vld [vmem:[%s808 + $0xd8] sm:$0xff]
    %v1935 = vld [vmem:[%s808 + $0xe0] sm:$0xff]
    %v1936 = vld [vmem:[%s808 + $0xe8] sm:$0xff]
    %v1937 = vld [vmem:[%s808 + $0xf0] sm:$0xff]
    %v1938 = vld [vmem:[%s808 + $0xf8] sm:$0xff]
    %v1939 = vld [vmem:[%s808 + $0x100] sm:$0xff]
    %v1940 = vld [vmem:[%s808 + $0x108] sm:$0xff]
    %v1941 = vld [vmem:[%s808 + $0x110] sm:$0xff]
    %v1942 = vld [vmem:[%s808 + $0x118] sm:$0xff]
    %v1943 = vld [vmem:[%s808 + $0x120] sm:$0xff]
    %v1944 = vld [vmem:[%s808 + $0x128] sm:$0xff]
    %v1945 = vld [vmem:[%s808 + $0x130] sm:$0xff]
    %v1946 = vld [vmem:[%s808 + $0x138] sm:$0xff]
    %v1947 = vld [vmem:[%s808 + $0x140] sm:$0xff]
    %v1948 = vld [vmem:[%s808 + $0x148] sm:$0xff]
    %v1949 = vld [vmem:[%s808 + $0x150] sm:$0xff]
    %v1950 = vld [vmem:[%s808 + $0x158] sm:$0xff]
    %v1951 = vld [vmem:[%s808 + $0x160] sm:$0xff]
    %v1952 = vld [vmem:[%s808 + $0x168] sm:$0xff]
    %v1953 = vld [vmem:[%s808 + $0x170] sm:$0xff]
    %v1954 = vld [vmem:[%s808 + $0x178] sm:$0xff]
    %1955 = vmatpush.msra.mxu0 %v1952
    %1956 = vmatpush.msra.mxu0 %v1949
    %1957 = vmatpush.msra.mxu0 %v1946
    %1958 = vmatpush.msra.mxu0 %v1943
    %1959 = vmatpush.msra.mxu0 %v1940
    %1960 = vmatpush.msra.mxu0 %v1937
    %1961 = vmatpush.msra.mxu0 %v1934
    %1962 = vmatpush.msra.mxu0 %v1931
    %1963 = vmatpush.msra.mxu0 %v1928
    %1964 = vmatpush.msra.mxu0 %v1925
    %1965 = vmatpush.msra.mxu0 %v1922
    %1966 = vmatpush.msra.mxu0 %v1919
    %1967 = vmatpush.msra.mxu0 %v1916
    %1968 = vmatpush.msra.mxu0 %v1913
    %1969 = vmatpush.msra.mxu0 %v1910
    %1970 = vmatpush.msra.mxu0 %v1907
    %1971 = vmatmul.f32.gmra.mxu0 %v1906
    %v1972 = vpop.f32.mrf.mxu0
    %v1973 = vadd.f32 %v675, %v1972
    %1974 = vdwg.mxu0
    %1975 = vmatpush.msra.mxu0 %v1953
    %1976 = vmatpush.msra.mxu0 %v1950
    %1977 = vmatpush.msra.mxu0 %v1947
    %1978 = vmatpush.msra.mxu0 %v1944
    %1979 = vmatpush.msra.mxu0 %v1941
    %1980 = vmatpush.msra.mxu0 %v1938
    %1981 = vmatpush.msra.mxu0 %v1935
    %1982 = vmatpush.msra.mxu0 %v1932
    %1983 = vmatpush.msra.mxu0 %v1929
    %1984 = vmatpush.msra.mxu0 %v1926
    %1985 = vmatpush.msra.mxu0 %v1923
    %1986 = vmatpush.msra.mxu0 %v1920
    %1987 = vmatpush.msra.mxu0 %v1917
    %1988 = vmatpush.msra.mxu0 %v1914
    %1989 = vmatpush.msra.mxu0 %v1911
    %1990 = vmatpush.msra.mxu0 %v1908
    %1991 = vmatmul.f32.gmra.mxu0 %v1906
    %v1992 = vpop.f32.mrf.mxu0
    %v1993 = vadd.f32 %v676, %v1992
    %1994 = vdwg.mxu0
    %1995 = vmatpush.msra.mxu0 %v1954
    %1996 = vmatpush.msra.mxu0 %v1951
    %1997 = vmatpush.msra.mxu0 %v1948
    %1998 = vmatpush.msra.mxu0 %v1945
    %1999 = vmatpush.msra.mxu0 %v1942
    %2000 = vmatpush.msra.mxu0 %v1939
    %2001 = vmatpush.msra.mxu0 %v1936
    %2002 = vmatpush.msra.mxu0 %v1933
    %2003 = vmatpush.msra.mxu0 %v1930
    %2004 = vmatpush.msra.mxu0 %v1927
    %2005 = vmatpush.msra.mxu0 %v1924
    %2006 = vmatpush.msra.mxu0 %v1921
    %2007 = vmatpush.msra.mxu0 %v1918
    %2008 = vmatpush.msra.mxu0 %v1915
    %2009 = vmatpush.msra.mxu0 %v1912
    %2010 = vmatpush.msra.mxu0 %v1909
    %2011 = vmatmul.f32.gmra.mxu0 %v1906
    %v2012 = vpop.f32.mrf.mxu0
    %v2013 = vadd.f32 %v677, %v2012
    %2014 = vdwg.mxu0
    %v2015 = vld [vmem:[%s917] sm:$0xff]
    %v2016 = vld [vmem:[%s917 + $0x8] sm:$0xff]
    %v2017 = vld [vmem:[%s917 + $0x10] sm:$0xff]
    %v2018 = vld [vmem:[%s917 + $0x18] sm:$0xff]
    %v2019 = vld [vmem:[%s917 + $0x20] sm:$0xff]
    %v2020 = vld [vmem:[%s917 + $0x28] sm:$0xff]
    %v2021 = vld [vmem:[%s917 + $0x30] sm:$0xff]
    %v2022 = vld [vmem:[%s917 + $0x38] sm:$0xff]
    %v2023 = vld [vmem:[%s917 + $0x40] sm:$0xff]
    %v2024 = vld [vmem:[%s917 + $0x48] sm:$0xff]
    %v2025 = vld [vmem:[%s917 + $0x50] sm:$0xff]
    %v2026 = vld [vmem:[%s917 + $0x58] sm:$0xff]
    %v2027 = vld [vmem:[%s917 + $0x60] sm:$0xff]
    %v2028 = vld [vmem:[%s917 + $0x68] sm:$0xff]
    %v2029 = vld [vmem:[%s917 + $0x70] sm:$0xff]
    %v2030 = vld [vmem:[%s917 + $0x78] sm:$0xff]
    %v2031 = vld [vmem:[%s917 + $0x80] sm:$0xff]
    %v2032 = vld [vmem:[%s917 + $0x88] sm:$0xff]
    %v2033 = vld [vmem:[%s917 + $0x90] sm:$0xff]
    %v2034 = vld [vmem:[%s917 + $0x98] sm:$0xff]
    %v2035 = vld [vmem:[%s917 + $0xa0] sm:$0xff]
    %v2036 = vld [vmem:[%s917 + $0xa8] sm:$0xff]
    %v2037 = vld [vmem:[%s917 + $0xb0] sm:$0xff]
    %v2038 = vld [vmem:[%s917 + $0xb8] sm:$0xff]
    %v2039 = vld [vmem:[%s917 + $0xc0] sm:$0xff]
    %v2040 = vld [vmem:[%s917 + $0xc8] sm:$0xff]
    %v2041 = vld [vmem:[%s917 + $0xd0] sm:$0xff]
    %v2042 = vld [vmem:[%s917 + $0xd8] sm:$0xff]
    %v2043 = vld [vmem:[%s917 + $0xe0] sm:$0xff]
    %v2044 = vld [vmem:[%s917 + $0xe8] sm:$0xff]
    %v2045 = vld [vmem:[%s917 + $0xf0] sm:$0xff]
    %v2046 = vld [vmem:[%s917 + $0xf8] sm:$0xff]
    %v2047 = vld [vmem:[%s917 + $0x100] sm:$0xff]
    %v2048 = vld [vmem:[%s917 + $0x108] sm:$0xff]
    %v2049 = vld [vmem:[%s917 + $0x110] sm:$0xff]
    %v2050 = vld [vmem:[%s917 + $0x118] sm:$0xff]
    %v2051 = vld [vmem:[%s917 + $0x120] sm:$0xff]
    %v2052 = vld [vmem:[%s917 + $0x128] sm:$0xff]
    %v2053 = vld [vmem:[%s917 + $0x130] sm:$0xff]
    %v2054 = vld [vmem:[%s917 + $0x138] sm:$0xff]
    %v2055 = vld [vmem:[%s917 + $0x140] sm:$0xff]
    %v2056 = vld [vmem:[%s917 + $0x148] sm:$0xff]
    %v2057 = vld [vmem:[%s917 + $0x150] sm:$0xff]
    %v2058 = vld [vmem:[%s917 + $0x158] sm:$0xff]
    %v2059 = vld [vmem:[%s917 + $0x160] sm:$0xff]
    %v2060 = vld [vmem:[%s917 + $0x168] sm:$0xff]
    %v2061 = vld [vmem:[%s917 + $0x170] sm:$0xff]
    %v2062 = vld [vmem:[%s917 + $0x178] sm:$0xff]
    %2063 = vmatpush.msra.mxu0 %v2060
    %2064 = vmatpush.msra.mxu0 %v2057
    %2065 = vmatpush.msra.mxu0 %v2054
    %2066 = vmatpush.msra.mxu0 %v2051
    %2067 = vmatpush.msra.mxu0 %v2048
    %2068 = vmatpush.msra.mxu0 %v2045
    %2069 = vmatpush.msra.mxu0 %v2042
    %2070 = vmatpush.msra.mxu0 %v2039
    %2071 = vmatpush.msra.mxu0 %v2036
    %2072 = vmatpush.msra.mxu0 %v2033
    %2073 = vmatpush.msra.mxu0 %v2030
    %2074 = vmatpush.msra.mxu0 %v2027
    %2075 = vmatpush.msra.mxu0 %v2024
    %2076 = vmatpush.msra.mxu0 %v2021
    %2077 = vmatpush.msra.mxu0 %v2018
    %2078 = vmatpush.msra.mxu0 %v2015
    %2079 = vmatmul.f32.gmra.mxu0 %v1774
    %v2080 = vpop.f32.mrf.mxu0
    %v2081 = vadd.f32 0.0, %v2080
    %2082 = vdwg.mxu0
    %2083 = vmatpush.msra.mxu0 %v2061
    %2084 = vmatpush.msra.mxu0 %v2058
    %2085 = vmatpush.msra.mxu0 %v2055
    %2086 = vmatpush.msra.mxu0 %v2052
    %2087 = vmatpush.msra.mxu0 %v2049
    %2088 = vmatpush.msra.mxu0 %v2046
    %2089 = vmatpush.msra.mxu0 %v2043
    %2090 = vmatpush.msra.mxu0 %v2040
    %2091 = vmatpush.msra.mxu0 %v2037
    %2092 = vmatpush.msra.mxu0 %v2034
    %2093 = vmatpush.msra.mxu0 %v2031
    %2094 = vmatpush.msra.mxu0 %v2028
    %2095 = vmatpush.msra.mxu0 %v2025
    %2096 = vmatpush.msra.mxu0 %v2022
    %2097 = vmatpush.msra.mxu0 %v2019
    %2098 = vmatpush.msra.mxu0 %v2016
    %2099 = vmatmul.f32.gmra.mxu0 %v1774
    %v2100 = vpop.f32.mrf.mxu0
    %v2101 = vadd.f32 0.0, %v2100
    %2102 = vdwg.mxu0
    %2103 = vmatpush.msra.mxu0 %v2062
    %2104 = vmatpush.msra.mxu0 %v2059
    %2105 = vmatpush.msra.mxu0 %v2056
    %2106 = vmatpush.msra.mxu0 %v2053
    %2107 = vmatpush.msra.mxu0 %v2050
    %2108 = vmatpush.msra.mxu0 %v2047
    %2109 = vmatpush.msra.mxu0 %v2044
    %2110 = vmatpush.msra.mxu0 %v2041
    %2111 = vmatpush.msra.mxu0 %v2038
    %2112 = vmatpush.msra.mxu0 %v2035
    %2113 = vmatpush.msra.mxu0 %v2032
    %2114 = vmatpush.msra.mxu0 %v2029
    %2115 = vmatpush.msra.mxu0 %v2026
    %2116 = vmatpush.msra.mxu0 %v2023
    %2117 = vmatpush.msra.mxu0 %v2020
    %2118 = vmatpush.msra.mxu0 %v2017
    %2119 = vmatmul.f32.gmra.mxu0 %v1774
    %v2120 = vpop.f32.mrf.mxu0
    %v2121 = vadd.f32 0.0, %v2120
    %2122 = vdwg.mxu0
    %v2123 = vadd.f32 %v1973, %v2081
    %v2124 = vmul.f32 %v2123, 0.5
    %v2125 = vtanh.pop %v2124
    %v2126 = vadd.f32 %v2125, 1.0
    %v2127 = vmul.f32 %v2126, 0.5
    %v2128 = vadd.f32 %v1993, %v2101
    %v2129 = vmul.f32 %v2128, 0.5
    %v2130 = vtanh.pop %v2129
    %v2131 = vadd.f32 %v2130, 1.0
    %v2132 = vmul.f32 %v2131, 0.5
    %v2133 = vadd.f32 %v2121, %v673
    %v2134 = vmul.f32 %v2127, %v2133
    %v2135 = vadd.f32 %v2013, %v2134
    %v2136 = vtanh.pop %v2135
    %v2137 = vsub.f32 1.0, %v2132
    %v2138 = vmul.f32 %v2137, %v2136
    %v2139 = vmul.f32 %v2132, %v1774
    %v2140 = vadd.f32 %v2138, %v2139
    %s2141 = scalar_lea.vmem [#allocation3], 24
    %2142 = vst [vmem:[%s2141] sm:$0xff] %v2140
    %s2143 = scalar_lea.vmem [#allocation2], 96
    %v2144 = vld [vmem:[%s2143] sm:$0xff]
    %v2145 = vld [vmem:[%s2143 + $0x8] sm:$0xff]
    %v2146 = vld [vmem:[%s2143 + $0x10] sm:$0xff]
    %v2147 = vld [vmem:[%s681] sm:$0xff]
    %v2148 = vld [vmem:[%s681 + $0x8] sm:$0xff]
    %v2149 = vld [vmem:[%s681 + $0x10] sm:$0xff]
    %v2150 = vld [vmem:[%s681 + $0x18] sm:$0xff]
    %v2151 = vld [vmem:[%s681 + $0x20] sm:$0xff]
    %v2152 = vld [vmem:[%s681 + $0x28] sm:$0xff]
    %v2153 = vld [vmem:[%s681 + $0x30] sm:$0xff]
    %v2154 = vld [vmem:[%s681 + $0x38] sm:$0xff]
    %v2155 = vld [vmem:[%s681 + $0x40] sm:$0xff]
    %v2156 = vld [vmem:[%s681 + $0x48] sm:$0xff]
    %v2157 = vld [vmem:[%s681 + $0x50] sm:$0xff]
    %v2158 = vld [vmem:[%s681 + $0x58] sm:$0xff]
    %v2159 = vld [vmem:[%s681 + $0x60] sm:$0xff]
    %v2160 = vld [vmem:[%s681 + $0x68] sm:$0xff]
    %v2161 = vld [vmem:[%s681 + $0x70] sm:$0xff]
    %v2162 = vld [vmem:[%s681 + $0x78] sm:$0xff]
    %v2163 = vld [vmem:[%s681 + $0x80] sm:$0xff]
    %v2164 = vld [vmem:[%s681 + $0x88] sm:$0xff]
    %v2165 = vld [vmem:[%s681 + $0x90] sm:$0xff]
    %v2166 = vld [vmem:[%s681 + $0x98] sm:$0xff]
    %v2167 = vld [vmem:[%s681 + $0xa0] sm:$0xff]
    %v2168 = vld [vmem:[%s681 + $0xa8] sm:$0xff]
    %v2169 = vld [vmem:[%s681 + $0xb0] sm:$0xff]
    %v2170 = vld [vmem:[%s681 + $0xb8] sm:$0xff]
    %v2171 = vld [vmem:[%s681 + $0xc0] sm:$0xff]
    %v2172 = vld [vmem:[%s681 + $0xc8] sm:$0xff]
    %v2173 = vld [vmem:[%s681 + $0xd0] sm:$0xff]
    %v2174 = vld [vmem:[%s681 + $0xd8] sm:$0xff]
    %v2175 = vld [vmem:[%s681 + $0xe0] sm:$0xff]
    %v2176 = vld [vmem:[%s681 + $0xe8] sm:$0xff]
    %v2177 = vld [vmem:[%s681 + $0xf0] sm:$0xff]
    %v2178 = vld [vmem:[%s681 + $0xf8] sm:$0xff]
    %v2179 = vld [vmem:[%s681 + $0x100] sm:$0xff]
    %v2180 = vld [vmem:[%s681 + $0x108] sm:$0xff]
    %v2181 = vld [vmem:[%s681 + $0x110] sm:$0xff]
    %v2182 = vld [vmem:[%s681 + $0x118] sm:$0xff]
    %v2183 = vld [vmem:[%s681 + $0x120] sm:$0xff]
    %v2184 = vld [vmem:[%s681 + $0x128] sm:$0xff]
    %v2185 = vld [vmem:[%s681 + $0x130] sm:$0xff]
    %v2186 = vld [vmem:[%s681 + $0x138] sm:$0xff]
    %v2187 = vld [vmem:[%s681 + $0x140] sm:$0xff]
    %v2188 = vld [vmem:[%s681 + $0x148] sm:$0xff]
    %v2189 = vld [vmem:[%s681 + $0x150] sm:$0xff]
    %v2190 = vld [vmem:[%s681 + $0x158] sm:$0xff]
    %v2191 = vld [vmem:[%s681 + $0x160] sm:$0xff]
    %v2192 = vld [vmem:[%s681 + $0x168] sm:$0xff]
    %v2193 = vld [vmem:[%s681 + $0x170] sm:$0xff]
    %v2194 = vld [vmem:[%s681 + $0x178] sm:$0xff]
    %2195 = vmatpush.msra.mxu0 %v2192
    %2196 = vmatpush.msra.mxu0 %v2189
    %2197 = vmatpush.msra.mxu0 %v2186
    %2198 = vmatpush.msra.mxu0 %v2183
    %2199 = vmatpush.msra.mxu0 %v2180
    %2200 = vmatpush.msra.mxu0 %v2177
    %2201 = vmatpush.msra.mxu0 %v2174
    %2202 = vmatpush.msra.mxu0 %v2171
    %2203 = vmatpush.msra.mxu0 %v2168
    %2204 = vmatpush.msra.mxu0 %v2165
    %2205 = vmatpush.msra.mxu0 %v2162
    %2206 = vmatpush.msra.mxu0 %v2159
    %2207 = vmatpush.msra.mxu0 %v2156
    %2208 = vmatpush.msra.mxu0 %v2153
    %2209 = vmatpush.msra.mxu0 %v2150
    %2210 = vmatpush.msra.mxu0 %v2147
    %2211 = vmatmul.f32.gmra.mxu0 %v1906
    %v2212 = vpop.f32.mrf.mxu0
    %v2213 = vadd.f32 0.0, %v2212
    %2214 = vdwg.mxu0
    %2215 = vmatpush.msra.mxu0 %v2193
    %2216 = vmatpush.msra.mxu0 %v2190
    %2217 = vmatpush.msra.mxu0 %v2187
    %2218 = vmatpush.msra.mxu0 %v2184
    %2219 = vmatpush.msra.mxu0 %v2181
    %2220 = vmatpush.msra.mxu0 %v2178
    %2221 = vmatpush.msra.mxu0 %v2175
    %2222 = vmatpush.msra.mxu0 %v2172
    %2223 = vmatpush.msra.mxu0 %v2169
    %2224 = vmatpush.msra.mxu0 %v2166
    %2225 = vmatpush.msra.mxu0 %v2163
    %2226 = vmatpush.msra.mxu0 %v2160
    %2227 = vmatpush.msra.mxu0 %v2157
    %2228 = vmatpush.msra.mxu0 %v2154
    %2229 = vmatpush.msra.mxu0 %v2151
    %2230 = vmatpush.msra.mxu0 %v2148
    %2231 = vmatmul.f32.gmra.mxu0 %v1906
    %v2232 = vpop.f32.mrf.mxu0
    %v2233 = vadd.f32 0.0, %v2232
    %2234 = vdwg.mxu0
    %2235 = vmatpush.msra.mxu0 %v2194
    %2236 = vmatpush.msra.mxu0 %v2191
    %2237 = vmatpush.msra.mxu0 %v2188
    %2238 = vmatpush.msra.mxu0 %v2185
    %2239 = vmatpush.msra.mxu0 %v2182
    %2240 = vmatpush.msra.mxu0 %v2179
    %2241 = vmatpush.msra.mxu0 %v2176
    %2242 = vmatpush.msra.mxu0 %v2173
    %2243 = vmatpush.msra.mxu0 %v2170
    %2244 = vmatpush.msra.mxu0 %v2167
    %2245 = vmatpush.msra.mxu0 %v2164
    %2246 = vmatpush.msra.mxu0 %v2161
    %2247 = vmatpush.msra.mxu0 %v2158
    %2248 = vmatpush.msra.mxu0 %v2155
    %2249 = vmatpush.msra.mxu0 %v2152
    %2250 = vmatpush.msra.mxu0 %v2149
    %2251 = vmatmul.f32.gmra.mxu0 %v1906
    %v2252 = vpop.f32.mrf.mxu0
    %v2253 = vadd.f32 0.0, %v2252
    %2254 = vdwg.mxu0
    %v2255 = vadd.f32 %v2144, %v2213
    %v2256 = vmul.f32 %v2255, 0.5
    %v2257 = vtanh.pop %v2256
    %v2258 = vadd.f32 %v2257, 1.0
    %v2259 = vmul.f32 %v2258, 0.5
    %v2260 = vadd.f32 %v2145, %v2233
    %v2261 = vmul.f32 %v2260, 0.5
    %v2262 = vtanh.pop %v2261
    %v2263 = vadd.f32 %v2262, 1.0
    %v2264 = vmul.f32 %v2263, 0.5
    %v2265 = vadd.f32 %v2253, %v671
    %v2266 = vmul.f32 %v2259, %v2265
    %v2267 = vadd.f32 %v2146, %v2266
    %v2268 = vtanh.pop %v2267
    %v2269 = vsub.f32 1.0, %v2264
    %v2270 = vmul.f32 %v2269, %v2268
    %v2271 = vmul.f32 %v2264, %v1906
    %v2272 = vadd.f32 %v2270, %v2271
    %v2273 = vld [vmem:[%s808] sm:$0xff]
    %v2274 = vld [vmem:[%s808 + $0x8] sm:$0xff]
    %v2275 = vld [vmem:[%s808 + $0x10] sm:$0xff]
    %v2276 = vld [vmem:[%s808 + $0x18] sm:$0xff]
    %v2277 = vld [vmem:[%s808 + $0x20] sm:$0xff]
    %v2278 = vld [vmem:[%s808 + $0x28] sm:$0xff]
    %v2279 = vld [vmem:[%s808 + $0x30] sm:$0xff]
    %v2280 = vld [vmem:[%s808 + $0x38] sm:$0xff]
    %v2281 = vld [vmem:[%s808 + $0x40] sm:$0xff]
    %v2282 = vld [vmem:[%s808 + $0x48] sm:$0xff]
    %v2283 = vld [vmem:[%s808 + $0x50] sm:$0xff]
    %v2284 = vld [vmem:[%s808 + $0x58] sm:$0xff]
    %v2285 = vld [vmem:[%s808 + $0x60] sm:$0xff]
    %v2286 = vld [vmem:[%s808 + $0x68] sm:$0xff]
    %v2287 = vld [vmem:[%s808 + $0x70] sm:$0xff]
    %v2288 = vld [vmem:[%s808 + $0x78] sm:$0xff]
    %v2289 = vld [vmem:[%s808 + $0x80] sm:$0xff]
    %v2290 = vld [vmem:[%s808 + $0x88] sm:$0xff]
    %v2291 = vld [vmem:[%s808 + $0x90] sm:$0xff]
    %v2292 = vld [vmem:[%s808 + $0x98] sm:$0xff]
    %v2293 = vld [vmem:[%s808 + $0xa0] sm:$0xff]
    %v2294 = vld [vmem:[%s808 + $0xa8] sm:$0xff]
    %v2295 = vld [vmem:[%s808 + $0xb0] sm:$0xff]
    %v2296 = vld [vmem:[%s808 + $0xb8] sm:$0xff]
    %v2297 = vld [vmem:[%s808 + $0xc0] sm:$0xff]
    %v2298 = vld [vmem:[%s808 + $0xc8] sm:$0xff]
    %v2299 = vld [vmem:[%s808 + $0xd0] sm:$0xff]
    %v2300 = vld [vmem:[%s808 + $0xd8] sm:$0xff]
    %v2301 = vld [vmem:[%s808 + $0xe0] sm:$0xff]
    %v2302 = vld [vmem:[%s808 + $0xe8] sm:$0xff]
    %v2303 = vld [vmem:[%s808 + $0xf0] sm:$0xff]
    %v2304 = vld [vmem:[%s808 + $0xf8] sm:$0xff]
    %v2305 = vld [vmem:[%s808 + $0x100] sm:$0xff]
    %v2306 = vld [vmem:[%s808 + $0x108] sm:$0xff]
    %v2307 = vld [vmem:[%s808 + $0x110] sm:$0xff]
    %v2308 = vld [vmem:[%s808 + $0x118] sm:$0xff]
    %v2309 = vld [vmem:[%s808 + $0x120] sm:$0xff]
    %v2310 = vld [vmem:[%s808 + $0x128] sm:$0xff]
    %v2311 = vld [vmem:[%s808 + $0x130] sm:$0xff]
    %v2312 = vld [vmem:[%s808 + $0x138] sm:$0xff]
    %v2313 = vld [vmem:[%s808 + $0x140] sm:$0xff]
    %v2314 = vld [vmem:[%s808 + $0x148] sm:$0xff]
    %v2315 = vld [vmem:[%s808 + $0x150] sm:$0xff]
    %v2316 = vld [vmem:[%s808 + $0x158] sm:$0xff]
    %v2317 = vld [vmem:[%s808 + $0x160] sm:$0xff]
    %v2318 = vld [vmem:[%s808 + $0x168] sm:$0xff]
    %v2319 = vld [vmem:[%s808 + $0x170] sm:$0xff]
    %v2320 = vld [vmem:[%s808 + $0x178] sm:$0xff]
    %2321 = vmatpush.msra.mxu0 %v2318
    %2322 = vmatpush.msra.mxu0 %v2315
    %2323 = vmatpush.msra.mxu0 %v2312
    %2324 = vmatpush.msra.mxu0 %v2309
    %2325 = vmatpush.msra.mxu0 %v2306
    %2326 = vmatpush.msra.mxu0 %v2303
    %2327 = vmatpush.msra.mxu0 %v2300
    %2328 = vmatpush.msra.mxu0 %v2297
    %2329 = vmatpush.msra.mxu0 %v2294
    %2330 = vmatpush.msra.mxu0 %v2291
    %2331 = vmatpush.msra.mxu0 %v2288
    %2332 = vmatpush.msra.mxu0 %v2285
    %2333 = vmatpush.msra.mxu0 %v2282
    %2334 = vmatpush.msra.mxu0 %v2279
    %2335 = vmatpush.msra.mxu0 %v2276
    %2336 = vmatpush.msra.mxu0 %v2273
    %2337 = vmatmul.f32.gmra.mxu0 %v2272
    %v2338 = vpop.f32.mrf.mxu0
    %v2339 = vadd.f32 %v675, %v2338
    %2340 = vdwg.mxu0
    %2341 = vmatpush.msra.mxu0 %v2319
    %2342 = vmatpush.msra.mxu0 %v2316
    %2343 = vmatpush.msra.mxu0 %v2313
    %2344 = vmatpush.msra.mxu0 %v2310
    %2345 = vmatpush.msra.mxu0 %v2307
    %2346 = vmatpush.msra.mxu0 %v2304
    %2347 = vmatpush.msra.mxu0 %v2301
    %2348 = vmatpush.msra.mxu0 %v2298
    %2349 = vmatpush.msra.mxu0 %v2295
    %2350 = vmatpush.msra.mxu0 %v2292
    %2351 = vmatpush.msra.mxu0 %v2289
    %2352 = vmatpush.msra.mxu0 %v2286
    %2353 = vmatpush.msra.mxu0 %v2283
    %2354 = vmatpush.msra.mxu0 %v2280
    %2355 = vmatpush.msra.mxu0 %v2277
    %2356 = vmatpush.msra.mxu0 %v2274
    %2357 = vmatmul.f32.gmra.mxu0 %v2272
    %v2358 = vpop.f32.mrf.mxu0
    %v2359 = vadd.f32 %v676, %v2358
    %2360 = vdwg.mxu0
    %2361 = vmatpush.msra.mxu0 %v2320
    %2362 = vmatpush.msra.mxu0 %v2317
    %2363 = vmatpush.msra.mxu0 %v2314
    %2364 = vmatpush.msra.mxu0 %v2311
    %2365 = vmatpush.msra.mxu0 %v2308
    %2366 = vmatpush.msra.mxu0 %v2305
    %2367 = vmatpush.msra.mxu0 %v2302
    %2368 = vmatpush.msra.mxu0 %v2299
    %2369 = vmatpush.msra.mxu0 %v2296
    %2370 = vmatpush.msra.mxu0 %v2293
    %2371 = vmatpush.msra.mxu0 %v2290
    %2372 = vmatpush.msra.mxu0 %v2287
    %2373 = vmatpush.msra.mxu0 %v2284
    %2374 = vmatpush.msra.mxu0 %v2281
    %2375 = vmatpush.msra.mxu0 %v2278
    %2376 = vmatpush.msra.mxu0 %v2275
    %2377 = vmatmul.f32.gmra.mxu0 %v2272
    %v2378 = vpop.f32.mrf.mxu0
    %v2379 = vadd.f32 %v677, %v2378
    %2380 = vdwg.mxu0
    %v2381 = vld [vmem:[%s917] sm:$0xff]
    %v2382 = vld [vmem:[%s917 + $0x8] sm:$0xff]
    %v2383 = vld [vmem:[%s917 + $0x10] sm:$0xff]
    %v2384 = vld [vmem:[%s917 + $0x18] sm:$0xff]
    %v2385 = vld [vmem:[%s917 + $0x20] sm:$0xff]
    %v2386 = vld [vmem:[%s917 + $0x28] sm:$0xff]
    %v2387 = vld [vmem:[%s917 + $0x30] sm:$0xff]
    %v2388 = vld [vmem:[%s917 + $0x38] sm:$0xff]
    %v2389 = vld [vmem:[%s917 + $0x40] sm:$0xff]
    %v2390 = vld [vmem:[%s917 + $0x48] sm:$0xff]
    %v2391 = vld [vmem:[%s917 + $0x50] sm:$0xff]
    %v2392 = vld [vmem:[%s917 + $0x58] sm:$0xff]
    %v2393 = vld [vmem:[%s917 + $0x60] sm:$0xff]
    %v2394 = vld [vmem:[%s917 + $0x68] sm:$0xff]
    %v2395 = vld [vmem:[%s917 + $0x70] sm:$0xff]
    %v2396 = vld [vmem:[%s917 + $0x78] sm:$0xff]
    %v2397 = vld [vmem:[%s917 + $0x80] sm:$0xff]
    %v2398 = vld [vmem:[%s917 + $0x88] sm:$0xff]
    %v2399 = vld [vmem:[%s917 + $0x90] sm:$0xff]
    %v2400 = vld [vmem:[%s917 + $0x98] sm:$0xff]
    %v2401 = vld [vmem:[%s917 + $0xa0] sm:$0xff]
    %v2402 = vld [vmem:[%s917 + $0xa8] sm:$0xff]
    %v2403 = vld [vmem:[%s917 + $0xb0] sm:$0xff]
    %v2404 = vld [vmem:[%s917 + $0xb8] sm:$0xff]
    %v2405 = vld [vmem:[%s917 + $0xc0] sm:$0xff]
    %v2406 = vld [vmem:[%s917 + $0xc8] sm:$0xff]
    %v2407 = vld [vmem:[%s917 + $0xd0] sm:$0xff]
    %v2408 = vld [vmem:[%s917 + $0xd8] sm:$0xff]
    %v2409 = vld [vmem:[%s917 + $0xe0] sm:$0xff]
    %v2410 = vld [vmem:[%s917 + $0xe8] sm:$0xff]
    %v2411 = vld [vmem:[%s917 + $0xf0] sm:$0xff]
    %v2412 = vld [vmem:[%s917 + $0xf8] sm:$0xff]
    %v2413 = vld [vmem:[%s917 + $0x100] sm:$0xff]
    %v2414 = vld [vmem:[%s917 + $0x108] sm:$0xff]
    %v2415 = vld [vmem:[%s917 + $0x110] sm:$0xff]
    %v2416 = vld [vmem:[%s917 + $0x118] sm:$0xff]
    %v2417 = vld [vmem:[%s917 + $0x120] sm:$0xff]
    %v2418 = vld [vmem:[%s917 + $0x128] sm:$0xff]
    %v2419 = vld [vmem:[%s917 + $0x130] sm:$0xff]
    %v2420 = vld [vmem:[%s917 + $0x138] sm:$0xff]
    %v2421 = vld [vmem:[%s917 + $0x140] sm:$0xff]
    %v2422 = vld [vmem:[%s917 + $0x148] sm:$0xff]
    %v2423 = vld [vmem:[%s917 + $0x150] sm:$0xff]
    %v2424 = vld [vmem:[%s917 + $0x158] sm:$0xff]
    %v2425 = vld [vmem:[%s917 + $0x160] sm:$0xff]
    %v2426 = vld [vmem:[%s917 + $0x168] sm:$0xff]
    %v2427 = vld [vmem:[%s917 + $0x170] sm:$0xff]
    %v2428 = vld [vmem:[%s917 + $0x178] sm:$0xff]
    %2429 = vmatpush.msra.mxu0 %v2426
    %2430 = vmatpush.msra.mxu0 %v2423
    %2431 = vmatpush.msra.mxu0 %v2420
    %2432 = vmatpush.msra.mxu0 %v2417
    %2433 = vmatpush.msra.mxu0 %v2414
    %2434 = vmatpush.msra.mxu0 %v2411
    %2435 = vmatpush.msra.mxu0 %v2408
    %2436 = vmatpush.msra.mxu0 %v2405
    %2437 = vmatpush.msra.mxu0 %v2402
    %2438 = vmatpush.msra.mxu0 %v2399
    %2439 = vmatpush.msra.mxu0 %v2396
    %2440 = vmatpush.msra.mxu0 %v2393
    %2441 = vmatpush.msra.mxu0 %v2390
    %2442 = vmatpush.msra.mxu0 %v2387
    %2443 = vmatpush.msra.mxu0 %v2384
    %2444 = vmatpush.msra.mxu0 %v2381
    %2445 = vmatmul.f32.gmra.mxu0 %v2140
    %v2446 = vpop.f32.mrf.mxu0
    %v2447 = vadd.f32 0.0, %v2446
    %2448 = vdwg.mxu0
    %2449 = vmatpush.msra.mxu0 %v2427
    %2450 = vmatpush.msra.mxu0 %v2424
    %2451 = vmatpush.msra.mxu0 %v2421
    %2452 = vmatpush.msra.mxu0 %v2418
    %2453 = vmatpush.msra.mxu0 %v2415
    %2454 = vmatpush.msra.mxu0 %v2412
    %2455 = vmatpush.msra.mxu0 %v2409
    %2456 = vmatpush.msra.mxu0 %v2406
    %2457 = vmatpush.msra.mxu0 %v2403
    %2458 = vmatpush.msra.mxu0 %v2400
    %2459 = vmatpush.msra.mxu0 %v2397
    %2460 = vmatpush.msra.mxu0 %v2394
    %2461 = vmatpush.msra.mxu0 %v2391
    %2462 = vmatpush.msra.mxu0 %v2388
    %2463 = vmatpush.msra.mxu0 %v2385
    %2464 = vmatpush.msra.mxu0 %v2382
    %2465 = vmatmul.f32.gmra.mxu0 %v2140
    %v2466 = vpop.f32.mrf.mxu0
    %v2467 = vadd.f32 0.0, %v2466
    %2468 = vdwg.mxu0
    %2469 = vmatpush.msra.mxu0 %v2428
    %2470 = vmatpush.msra.mxu0 %v2425
    %2471 = vmatpush.msra.mxu0 %v2422
    %2472 = vmatpush.msra.mxu0 %v2419
    %2473 = vmatpush.msra.mxu0 %v2416
    %2474 = vmatpush.msra.mxu0 %v2413
    %2475 = vmatpush.msra.mxu0 %v2410
    %2476 = vmatpush.msra.mxu0 %v2407
    %2477 = vmatpush.msra.mxu0 %v2404
    %2478 = vmatpush.msra.mxu0 %v2401
    %2479 = vmatpush.msra.mxu0 %v2398
    %2480 = vmatpush.msra.mxu0 %v2395
    %2481 = vmatpush.msra.mxu0 %v2392
    %2482 = vmatpush.msra.mxu0 %v2389
    %2483 = vmatpush.msra.mxu0 %v2386
    %2484 = vmatpush.msra.mxu0 %v2383
    %2485 = vmatmul.f32.gmra.mxu0 %v2140
    %v2486 = vpop.f32.mrf.mxu0
    %v2487 = vadd.f32 0.0, %v2486
    %2488 = vdwg.mxu0
    %v2489 = vadd.f32 %v2339, %v2447
    %v2490 = vmul.f32 %v2489, 0.5
    %v2491 = vtanh.pop %v2490
    %v2492 = vadd.f32 %v2491, 1.0
    %v2493 = vmul.f32 %v2492, 0.5
    %v2494 = vadd.f32 %v2359, %v2467
    %v2495 = vmul.f32 %v2494, 0.5
    %v2496 = vtanh.pop %v2495
    %v2497 = vadd.f32 %v2496, 1.0
    %v2498 = vmul.f32 %v2497, 0.5
    %v2499 = vadd.f32 %v2487, %v673
    %v2500 = vmul.f32 %v2493, %v2499
    %v2501 = vadd.f32 %v2379, %v2500
    %v2502 = vtanh.pop %v2501
    %v2503 = vsub.f32 1.0, %v2498
    %v2504 = vmul.f32 %v2503, %v2502
    %v2505 = vmul.f32 %v2498, %v2140
    %v2506 = vadd.f32 %v2504, %v2505
    %s2507 = scalar_lea.vmem [#allocation3], 32
    %2508 = vst [vmem:[%s2507] sm:$0xff] %v2506
    %s2509 = scalar_lea.vmem [#allocation2], 120
    %v2510 = vld [vmem:[%s2509] sm:$0xff]
    %v2511 = vld [vmem:[%s2509 + $0x8] sm:$0xff]
    %v2512 = vld [vmem:[%s2509 + $0x10] sm:$0xff]
    %v2513 = vld [vmem:[%s681] sm:$0xff]
    %v2514 = vld [vmem:[%s681 + $0x8] sm:$0xff]
    %v2515 = vld [vmem:[%s681 + $0x10] sm:$0xff]
    %v2516 = vld [vmem:[%s681 + $0x18] sm:$0xff]
    %v2517 = vld [vmem:[%s681 + $0x20] sm:$0xff]
    %v2518 = vld [vmem:[%s681 + $0x28] sm:$0xff]
    %v2519 = vld [vmem:[%s681 + $0x30] sm:$0xff]
    %v2520 = vld [vmem:[%s681 + $0x38] sm:$0xff]
    %v2521 = vld [vmem:[%s681 + $0x40] sm:$0xff]
    %v2522 = vld [vmem:[%s681 + $0x48] sm:$0xff]
    %v2523 = vld [vmem:[%s681 + $0x50] sm:$0xff]
    %v2524 = vld [vmem:[%s681 + $0x58] sm:$0xff]
    %v2525 = vld [vmem:[%s681 + $0x60] sm:$0xff]
    %v2526 = vld [vmem:[%s681 + $0x68] sm:$0xff]
    %v2527 = vld [vmem:[%s681 + $0x70] sm:$0xff]
    %v2528 = vld [vmem:[%s681 + $0x78] sm:$0xff]
    %v2529 = vld [vmem:[%s681 + $0x80] sm:$0xff]
    %v2530 = vld [vmem:[%s681 + $0x88] sm:$0xff]
    %v2531 = vld [vmem:[%s681 + $0x90] sm:$0xff]
    %v2532 = vld [vmem:[%s681 + $0x98] sm:$0xff]
    %v2533 = vld [vmem:[%s681 + $0xa0] sm:$0xff]
    %v2534 = vld [vmem:[%s681 + $0xa8] sm:$0xff]
    %v2535 = vld [vmem:[%s681 + $0xb0] sm:$0xff]
    %v2536 = vld [vmem:[%s681 + $0xb8] sm:$0xff]
    %v2537 = vld [vmem:[%s681 + $0xc0] sm:$0xff]
    %v2538 = vld [vmem:[%s681 + $0xc8] sm:$0xff]
    %v2539 = vld [vmem:[%s681 + $0xd0] sm:$0xff]
    %v2540 = vld [vmem:[%s681 + $0xd8] sm:$0xff]
    %v2541 = vld [vmem:[%s681 + $0xe0] sm:$0xff]
    %v2542 = vld [vmem:[%s681 + $0xe8] sm:$0xff]
    %v2543 = vld [vmem:[%s681 + $0xf0] sm:$0xff]
    %v2544 = vld [vmem:[%s681 + $0xf8] sm:$0xff]
    %v2545 = vld [vmem:[%s681 + $0x100] sm:$0xff]
    %v2546 = vld [vmem:[%s681 + $0x108] sm:$0xff]
    %v2547 = vld [vmem:[%s681 + $0x110] sm:$0xff]
    %v2548 = vld [vmem:[%s681 + $0x118] sm:$0xff]
    %v2549 = vld [vmem:[%s681 + $0x120] sm:$0xff]
    %v2550 = vld [vmem:[%s681 + $0x128] sm:$0xff]
    %v2551 = vld [vmem:[%s681 + $0x130] sm:$0xff]
    %v2552 = vld [vmem:[%s681 + $0x138] sm:$0xff]
    %v2553 = vld [vmem:[%s681 + $0x140] sm:$0xff]
    %v2554 = vld [vmem:[%s681 + $0x148] sm:$0xff]
    %v2555 = vld [vmem:[%s681 + $0x150] sm:$0xff]
    %v2556 = vld [vmem:[%s681 + $0x158] sm:$0xff]
    %v2557 = vld [vmem:[%s681 + $0x160] sm:$0xff]
    %v2558 = vld [vmem:[%s681 + $0x168] sm:$0xff]
    %v2559 = vld [vmem:[%s681 + $0x170] sm:$0xff]
    %v2560 = vld [vmem:[%s681 + $0x178] sm:$0xff]
    %2561 = vmatpush.msra.mxu0 %v2558
    %2562 = vmatpush.msra.mxu0 %v2555
    %2563 = vmatpush.msra.mxu0 %v2552
    %2564 = vmatpush.msra.mxu0 %v2549
    %2565 = vmatpush.msra.mxu0 %v2546
    %2566 = vmatpush.msra.mxu0 %v2543
    %2567 = vmatpush.msra.mxu0 %v2540
    %2568 = vmatpush.msra.mxu0 %v2537
    %2569 = vmatpush.msra.mxu0 %v2534
    %2570 = vmatpush.msra.mxu0 %v2531
    %2571 = vmatpush.msra.mxu0 %v2528
    %2572 = vmatpush.msra.mxu0 %v2525
    %2573 = vmatpush.msra.mxu0 %v2522
    %2574 = vmatpush.msra.mxu0 %v2519
    %2575 = vmatpush.msra.mxu0 %v2516
    %2576 = vmatpush.msra.mxu0 %v2513
    %2577 = vmatmul.f32.gmra.mxu0 %v2272
    %v2578 = vpop.f32.mrf.mxu0
    %v2579 = vadd.f32 0.0, %v2578
    %2580 = vdwg.mxu0
    %2581 = vmatpush.msra.mxu0 %v2559
    %2582 = vmatpush.msra.mxu0 %v2556
    %2583 = vmatpush.msra.mxu0 %v2553
    %2584 = vmatpush.msra.mxu0 %v2550
    %2585 = vmatpush.msra.mxu0 %v2547
    %2586 = vmatpush.msra.mxu0 %v2544
    %2587 = vmatpush.msra.mxu0 %v2541
    %2588 = vmatpush.msra.mxu0 %v2538
    %2589 = vmatpush.msra.mxu0 %v2535
    %2590 = vmatpush.msra.mxu0 %v2532
    %2591 = vmatpush.msra.mxu0 %v2529
    %2592 = vmatpush.msra.mxu0 %v2526
    %2593 = vmatpush.msra.mxu0 %v2523
    %2594 = vmatpush.msra.mxu0 %v2520
    %2595 = vmatpush.msra.mxu0 %v2517
    %2596 = vmatpush.msra.mxu0 %v2514
    %2597 = vmatmul.f32.gmra.mxu0 %v2272
    %v2598 = vpop.f32.mrf.mxu0
    %v2599 = vadd.f32 0.0, %v2598
    %2600 = vdwg.mxu0
    %2601 = vmatpush.msra.mxu0 %v2560
    %2602 = vmatpush.msra.mxu0 %v2557
    %2603 = vmatpush.msra.mxu0 %v2554
    %2604 = vmatpush.msra.mxu0 %v2551
    %2605 = vmatpush.msra.mxu0 %v2548
    %2606 = vmatpush.msra.mxu0 %v2545
    %2607 = vmatpush.msra.mxu0 %v2542
    %2608 = vmatpush.msra.mxu0 %v2539
    %2609 = vmatpush.msra.mxu0 %v2536
    %2610 = vmatpush.msra.mxu0 %v2533
    %2611 = vmatpush.msra.mxu0 %v2530
    %2612 = vmatpush.msra.mxu0 %v2527
    %2613 = vmatpush.msra.mxu0 %v2524
    %2614 = vmatpush.msra.mxu0 %v2521
    %2615 = vmatpush.msra.mxu0 %v2518
    %2616 = vmatpush.msra.mxu0 %v2515
    %2617 = vmatmul.f32.gmra.mxu0 %v2272
    %v2618 = vpop.f32.mrf.mxu0
    %v2619 = vadd.f32 0.0, %v2618
    %2620 = vdwg.mxu0
    %v2621 = vadd.f32 %v2510, %v2579
    %v2622 = vmul.f32 %v2621, 0.5
    %v2623 = vtanh.pop %v2622
    %v2624 = vadd.f32 %v2623, 1.0
    %v2625 = vmul.f32 %v2624, 0.5
    %v2626 = vadd.f32 %v2511, %v2599
    %v2627 = vmul.f32 %v2626, 0.5
    %v2628 = vtanh.pop %v2627
    %v2629 = vadd.f32 %v2628, 1.0
    %v2630 = vmul.f32 %v2629, 0.5
    %v2631 = vadd.f32 %v2619, %v671
    %v2632 = vmul.f32 %v2625, %v2631
    %v2633 = vadd.f32 %v2512, %v2632
    %v2634 = vtanh.pop %v2633
    %v2635 = vsub.f32 1.0, %v2630
    %v2636 = vmul.f32 %v2635, %v2634
    %v2637 = vmul.f32 %v2630, %v2272
    %v2638 = vadd.f32 %v2636, %v2637
    %v2639 = vld [vmem:[%s808] sm:$0xff]
    %v2640 = vld [vmem:[%s808 + $0x8] sm:$0xff]
    %v2641 = vld [vmem:[%s808 + $0x10] sm:$0xff]
    %v2642 = vld [vmem:[%s808 + $0x18] sm:$0xff]
    %v2643 = vld [vmem:[%s808 + $0x20] sm:$0xff]
    %v2644 = vld [vmem:[%s808 + $0x28] sm:$0xff]
    %v2645 = vld [vmem:[%s808 + $0x30] sm:$0xff]
    %v2646 = vld [vmem:[%s808 + $0x38] sm:$0xff]
    %v2647 = vld [vmem:[%s808 + $0x40] sm:$0xff]
    %v2648 = vld [vmem:[%s808 + $0x48] sm:$0xff]
    %v2649 = vld [vmem:[%s808 + $0x50] sm:$0xff]
    %v2650 = vld [vmem:[%s808 + $0x58] sm:$0xff]
    %v2651 = vld [vmem:[%s808 + $0x60] sm:$0xff]
    %v2652 = vld [vmem:[%s808 + $0x68] sm:$0xff]
    %v2653 = vld [vmem:[%s808 + $0x70] sm:$0xff]
    %v2654 = vld [vmem:[%s808 + $0x78] sm:$0xff]
    %v2655 = vld [vmem:[%s808 + $0x80] sm:$0xff]
    %v2656 = vld [vmem:[%s808 + $0x88] sm:$0xff]
    %v2657 = vld [vmem:[%s808 + $0x90] sm:$0xff]
    %v2658 = vld [vmem:[%s808 + $0x98] sm:$0xff]
    %v2659 = vld [vmem:[%s808 + $0xa0] sm:$0xff]
    %v2660 = vld [vmem:[%s808 + $0xa8] sm:$0xff]
    %v2661 = vld [vmem:[%s808 + $0xb0] sm:$0xff]
    %v2662 = vld [vmem:[%s808 + $0xb8] sm:$0xff]
    %v2663 = vld [vmem:[%s808 + $0xc0] sm:$0xff]
    %v2664 = vld [vmem:[%s808 + $0xc8] sm:$0xff]
    %v2665 = vld [vmem:[%s808 + $0xd0] sm:$0xff]
    %v2666 = vld [vmem:[%s808 + $0xd8] sm:$0xff]
    %v2667 = vld [vmem:[%s808 + $0xe0] sm:$0xff]
    %v2668 = vld [vmem:[%s808 + $0xe8] sm:$0xff]
    %v2669 = vld [vmem:[%s808 + $0xf0] sm:$0xff]
    %v2670 = vld [vmem:[%s808 + $0xf8] sm:$0xff]
    %v2671 = vld [vmem:[%s808 + $0x100] sm:$0xff]
    %v2672 = vld [vmem:[%s808 + $0x108] sm:$0xff]
    %v2673 = vld [vmem:[%s808 + $0x110] sm:$0xff]
    %v2674 = vld [vmem:[%s808 + $0x118] sm:$0xff]
    %v2675 = vld [vmem:[%s808 + $0x120] sm:$0xff]
    %v2676 = vld [vmem:[%s808 + $0x128] sm:$0xff]
    %v2677 = vld [vmem:[%s808 + $0x130] sm:$0xff]
    %v2678 = vld [vmem:[%s808 + $0x138] sm:$0xff]
    %v2679 = vld [vmem:[%s808 + $0x140] sm:$0xff]
    %v2680 = vld [vmem:[%s808 + $0x148] sm:$0xff]
    %v2681 = vld [vmem:[%s808 + $0x150] sm:$0xff]
    %v2682 = vld [vmem:[%s808 + $0x158] sm:$0xff]
    %v2683 = vld [vmem:[%s808 + $0x160] sm:$0xff]
    %v2684 = vld [vmem:[%s808 + $0x168] sm:$0xff]
    %v2685 = vld [vmem:[%s808 + $0x170] sm:$0xff]
    %v2686 = vld [vmem:[%s808 + $0x178] sm:$0xff]
    %2687 = vmatpush.msra.mxu0 %v2684
    %2688 = vmatpush.msra.mxu0 %v2681
    %2689 = vmatpush.msra.mxu0 %v2678
    %2690 = vmatpush.msra.mxu0 %v2675
    %2691 = vmatpush.msra.mxu0 %v2672
    %2692 = vmatpush.msra.mxu0 %v2669
    %2693 = vmatpush.msra.mxu0 %v2666
    %2694 = vmatpush.msra.mxu0 %v2663
    %2695 = vmatpush.msra.mxu0 %v2660
    %2696 = vmatpush.msra.mxu0 %v2657
    %2697 = vmatpush.msra.mxu0 %v2654
    %2698 = vmatpush.msra.mxu0 %v2651
    %2699 = vmatpush.msra.mxu0 %v2648
    %2700 = vmatpush.msra.mxu0 %v2645
    %2701 = vmatpush.msra.mxu0 %v2642
    %2702 = vmatpush.msra.mxu0 %v2639
    %2703 = vmatmul.f32.gmra.mxu0 %v2638
    %v2704 = vpop.f32.mrf.mxu0
    %v2705 = vadd.f32 %v675, %v2704
    %2706 = vdwg.mxu0
    %2707 = vmatpush.msra.mxu0 %v2685
    %2708 = vmatpush.msra.mxu0 %v2682
    %2709 = vmatpush.msra.mxu0 %v2679
    %2710 = vmatpush.msra.mxu0 %v2676
    %2711 = vmatpush.msra.mxu0 %v2673
    %2712 = vmatpush.msra.mxu0 %v2670
    %2713 = vmatpush.msra.mxu0 %v2667
    %2714 = vmatpush.msra.mxu0 %v2664
    %2715 = vmatpush.msra.mxu0 %v2661
    %2716 = vmatpush.msra.mxu0 %v2658
    %2717 = vmatpush.msra.mxu0 %v2655
    %2718 = vmatpush.msra.mxu0 %v2652
    %2719 = vmatpush.msra.mxu0 %v2649
    %2720 = vmatpush.msra.mxu0 %v2646
    %2721 = vmatpush.msra.mxu0 %v2643
    %2722 = vmatpush.msra.mxu0 %v2640
    %2723 = vmatmul.f32.gmra.mxu0 %v2638
    %v2724 = vpop.f32.mrf.mxu0
    %v2725 = vadd.f32 %v676, %v2724
    %2726 = vdwg.mxu0
    %2727 = vmatpush.msra.mxu0 %v2686
    %2728 = vmatpush.msra.mxu0 %v2683
    %2729 = vmatpush.msra.mxu0 %v2680
    %2730 = vmatpush.msra.mxu0 %v2677
    %2731 = vmatpush.msra.mxu0 %v2674
    %2732 = vmatpush.msra.mxu0 %v2671
    %2733 = vmatpush.msra.mxu0 %v2668
    %2734 = vmatpush.msra.mxu0 %v2665
    %2735 = vmatpush.msra.mxu0 %v2662
    %2736 = vmatpush.msra.mxu0 %v2659
    %2737 = vmatpush.msra.mxu0 %v2656
    %2738 = vmatpush.msra.mxu0 %v2653
    %2739 = vmatpush.msra.mxu0 %v2650
    %2740 = vmatpush.msra.mxu0 %v2647
    %2741 = vmatpush.msra.mxu0 %v2644
    %2742 = vmatpush.msra.mxu0 %v2641
    %2743 = vmatmul.f32.gmra.mxu0 %v2638
    %v2744 = vpop.f32.mrf.mxu0
    %v2745 = vadd.f32 %v677, %v2744
    %2746 = vdwg.mxu0
    %v2747 = vld [vmem:[%s917] sm:$0xff]
    %v2748 = vld [vmem:[%s917 + $0x8] sm:$0xff]
    %v2749 = vld [vmem:[%s917 + $0x10] sm:$0xff]
    %v2750 = vld [vmem:[%s917 + $0x18] sm:$0xff]
    %v2751 = vld [vmem:[%s917 + $0x20] sm:$0xff]
    %v2752 = vld [vmem:[%s917 + $0x28] sm:$0xff]
    %v2753 = vld [vmem:[%s917 + $0x30] sm:$0xff]
    %v2754 = vld [vmem:[%s917 + $0x38] sm:$0xff]
    %v2755 = vld [vmem:[%s917 + $0x40] sm:$0xff]
    %v2756 = vld [vmem:[%s917 + $0x48] sm:$0xff]
    %v2757 = vld [vmem:[%s917 + $0x50] sm:$0xff]
    %v2758 = vld [vmem:[%s917 + $0x58] sm:$0xff]
    %v2759 = vld [vmem:[%s917 + $0x60] sm:$0xff]
    %v2760 = vld [vmem:[%s917 + $0x68] sm:$0xff]
    %v2761 = vld [vmem:[%s917 + $0x70] sm:$0xff]
    %v2762 = vld [vmem:[%s917 + $0x78] sm:$0xff]
    %v2763 = vld [vmem:[%s917 + $0x80] sm:$0xff]
    %v2764 = vld [vmem:[%s917 + $0x88] sm:$0xff]
    %v2765 = vld [vmem:[%s917 + $0x90] sm:$0xff]
    %v2766 = vld [vmem:[%s917 + $0x98] sm:$0xff]
    %v2767 = vld [vmem:[%s917 + $0xa0] sm:$0xff]
    %v2768 = vld [vmem:[%s917 + $0xa8] sm:$0xff]
    %v2769 = vld [vmem:[%s917 + $0xb0] sm:$0xff]
    %v2770 = vld [vmem:[%s917 + $0xb8] sm:$0xff]
    %v2771 = vld [vmem:[%s917 + $0xc0] sm:$0xff]
    %v2772 = vld [vmem:[%s917 + $0xc8] sm:$0xff]
    %v2773 = vld [vmem:[%s917 + $0xd0] sm:$0xff]
    %v2774 = vld [vmem:[%s917 + $0xd8] sm:$0xff]
    %v2775 = vld [vmem:[%s917 + $0xe0] sm:$0xff]
    %v2776 = vld [vmem:[%s917 + $0xe8] sm:$0xff]
    %v2777 = vld [vmem:[%s917 + $0xf0] sm:$0xff]
    %v2778 = vld [vmem:[%s917 + $0xf8] sm:$0xff]
    %v2779 = vld [vmem:[%s917 + $0x100] sm:$0xff]
    %v2780 = vld [vmem:[%s917 + $0x108] sm:$0xff]
    %v2781 = vld [vmem:[%s917 + $0x110] sm:$0xff]
    %v2782 = vld [vmem:[%s917 + $0x118] sm:$0xff]
    %v2783 = vld [vmem:[%s917 + $0x120] sm:$0xff]
    %v2784 = vld [vmem:[%s917 + $0x128] sm:$0xff]
    %v2785 = vld [vmem:[%s917 + $0x130] sm:$0xff]
    %v2786 = vld [vmem:[%s917 + $0x138] sm:$0xff]
    %v2787 = vld [vmem:[%s917 + $0x140] sm:$0xff]
    %v2788 = vld [vmem:[%s917 + $0x148] sm:$0xff]
    %v2789 = vld [vmem:[%s917 + $0x150] sm:$0xff]
    %v2790 = vld [vmem:[%s917 + $0x158] sm:$0xff]
    %v2791 = vld [vmem:[%s917 + $0x160] sm:$0xff]
    %v2792 = vld [vmem:[%s917 + $0x168] sm:$0xff]
    %v2793 = vld [vmem:[%s917 + $0x170] sm:$0xff]
    %v2794 = vld [vmem:[%s917 + $0x178] sm:$0xff]
    %2795 = vmatpush.msra.mxu0 %v2792
    %2796 = vmatpush.msra.mxu0 %v2789
    %2797 = vmatpush.msra.mxu0 %v2786
    %2798 = vmatpush.msra.mxu0 %v2783
    %2799 = vmatpush.msra.mxu0 %v2780
    %2800 = vmatpush.msra.mxu0 %v2777
    %2801 = vmatpush.msra.mxu0 %v2774
    %2802 = vmatpush.msra.mxu0 %v2771
    %2803 = vmatpush.msra.mxu0 %v2768
    %2804 = vmatpush.msra.mxu0 %v2765
    %2805 = vmatpush.msra.mxu0 %v2762
    %2806 = vmatpush.msra.mxu0 %v2759
    %2807 = vmatpush.msra.mxu0 %v2756
    %2808 = vmatpush.msra.mxu0 %v2753
    %2809 = vmatpush.msra.mxu0 %v2750
    %2810 = vmatpush.msra.mxu0 %v2747
    %2811 = vmatmul.f32.gmra.mxu0 %v2506
    %v2812 = vpop.f32.mrf.mxu0
    %v2813 = vadd.f32 0.0, %v2812
    %2814 = vdwg.mxu0
    %2815 = vmatpush.msra.mxu0 %v2793
    %2816 = vmatpush.msra.mxu0 %v2790
    %2817 = vmatpush.msra.mxu0 %v2787
    %2818 = vmatpush.msra.mxu0 %v2784
    %2819 = vmatpush.msra.mxu0 %v2781
    %2820 = vmatpush.msra.mxu0 %v2778
    %2821 = vmatpush.msra.mxu0 %v2775
    %2822 = vmatpush.msra.mxu0 %v2772
    %2823 = vmatpush.msra.mxu0 %v2769
    %2824 = vmatpush.msra.mxu0 %v2766
    %2825 = vmatpush.msra.mxu0 %v2763
    %2826 = vmatpush.msra.mxu0 %v2760
    %2827 = vmatpush.msra.mxu0 %v2757
    %2828 = vmatpush.msra.mxu0 %v2754
    %2829 = vmatpush.msra.mxu0 %v2751
    %2830 = vmatpush.msra.mxu0 %v2748
    %2831 = vmatmul.f32.gmra.mxu0 %v2506
    %v2832 = vpop.f32.mrf.mxu0
    %v2833 = vadd.f32 0.0, %v2832
    %2834 = vdwg.mxu0
    %2835 = vmatpush.msra.mxu0 %v2794
    %2836 = vmatpush.msra.mxu0 %v2791
    %2837 = vmatpush.msra.mxu0 %v2788
    %2838 = vmatpush.msra.mxu0 %v2785
    %2839 = vmatpush.msra.mxu0 %v2782
    %2840 = vmatpush.msra.mxu0 %v2779
    %2841 = vmatpush.msra.mxu0 %v2776
    %2842 = vmatpush.msra.mxu0 %v2773
    %2843 = vmatpush.msra.mxu0 %v2770
    %2844 = vmatpush.msra.mxu0 %v2767
    %2845 = vmatpush.msra.mxu0 %v2764
    %2846 = vmatpush.msra.mxu0 %v2761
    %2847 = vmatpush.msra.mxu0 %v2758
    %2848 = vmatpush.msra.mxu0 %v2755
    %2849 = vmatpush.msra.mxu0 %v2752
    %2850 = vmatpush.msra.mxu0 %v2749
    %2851 = vmatmul.f32.gmra.mxu0 %v2506
    %v2852 = vpop.f32.mrf.mxu0
    %v2853 = vadd.f32 0.0, %v2852
    %2854 = vdwg.mxu0
    %v2855 = vadd.f32 %v2705, %v2813
    %v2856 = vmul.f32 %v2855, 0.5
    %v2857 = vtanh.pop %v2856
    %v2858 = vadd.f32 %v2857, 1.0
    %v2859 = vmul.f32 %v2858, 0.5
    %v2860 = vadd.f32 %v2725, %v2833
    %v2861 = vmul.f32 %v2860, 0.5
    %v2862 = vtanh.pop %v2861
    %v2863 = vadd.f32 %v2862, 1.0
    %v2864 = vmul.f32 %v2863, 0.5
    %v2865 = vadd.f32 %v2853, %v673
    %v2866 = vmul.f32 %v2859, %v2865
    %v2867 = vadd.f32 %v2745, %v2866
    %v2868 = vtanh.pop %v2867
    %v2869 = vsub.f32 1.0, %v2864
    %v2870 = vmul.f32 %v2869, %v2868
    %v2871 = vmul.f32 %v2864, %v2506
    %v2872 = vadd.f32 %v2870, %v2871
    %s2873 = scalar_lea.vmem [#allocation3], 40
    %2874 = vst [vmem:[%s2873] sm:$0xff] %v2872
    %s2875 = scalar_lea.vmem [#allocation2], 144
    %v2876 = vld [vmem:[%s2875] sm:$0xff]
    %v2877 = vld [vmem:[%s2875 + $0x8] sm:$0xff]
    %v2878 = vld [vmem:[%s2875 + $0x10] sm:$0xff]
    %v2879 = vld [vmem:[%s681] sm:$0xff]
    %v2880 = vld [vmem:[%s681 + $0x8] sm:$0xff]
    %v2881 = vld [vmem:[%s681 + $0x10] sm:$0xff]
    %v2882 = vld [vmem:[%s681 + $0x18] sm:$0xff]
    %v2883 = vld [vmem:[%s681 + $0x20] sm:$0xff]
    %v2884 = vld [vmem:[%s681 + $0x28] sm:$0xff]
    %v2885 = vld [vmem:[%s681 + $0x30] sm:$0xff]
    %v2886 = vld [vmem:[%s681 + $0x38] sm:$0xff]
    %v2887 = vld [vmem:[%s681 + $0x40] sm:$0xff]
    %v2888 = vld [vmem:[%s681 + $0x48] sm:$0xff]
    %v2889 = vld [vmem:[%s681 + $0x50] sm:$0xff]
    %v2890 = vld [vmem:[%s681 + $0x58] sm:$0xff]
    %v2891 = vld [vmem:[%s681 + $0x60] sm:$0xff]
    %v2892 = vld [vmem:[%s681 + $0x68] sm:$0xff]
    %v2893 = vld [vmem:[%s681 + $0x70] sm:$0xff]
    %v2894 = vld [vmem:[%s681 + $0x78] sm:$0xff]
    %v2895 = vld [vmem:[%s681 + $0x80] sm:$0xff]
    %v2896 = vld [vmem:[%s681 + $0x88] sm:$0xff]
    %v2897 = vld [vmem:[%s681 + $0x90] sm:$0xff]
    %v2898 = vld [vmem:[%s681 + $0x98] sm:$0xff]
    %v2899 = vld [vmem:[%s681 + $0xa0] sm:$0xff]
    %v2900 = vld [vmem:[%s681 + $0xa8] sm:$0xff]
    %v2901 = vld [vmem:[%s681 + $0xb0] sm:$0xff]
    %v2902 = vld [vmem:[%s681 + $0xb8] sm:$0xff]
    %v2903 = vld [vmem:[%s681 + $0xc0] sm:$0xff]
    %v2904 = vld [vmem:[%s681 + $0xc8] sm:$0xff]
    %v2905 = vld [vmem:[%s681 + $0xd0] sm:$0xff]
    %v2906 = vld [vmem:[%s681 + $0xd8] sm:$0xff]
    %v2907 = vld [vmem:[%s681 + $0xe0] sm:$0xff]
    %v2908 = vld [vmem:[%s681 + $0xe8] sm:$0xff]
    %v2909 = vld [vmem:[%s681 + $0xf0] sm:$0xff]
    %v2910 = vld [vmem:[%s681 + $0xf8] sm:$0xff]
    %v2911 = vld [vmem:[%s681 + $0x100] sm:$0xff]
    %v2912 = vld [vmem:[%s681 + $0x108] sm:$0xff]
    %v2913 = vld [vmem:[%s681 + $0x110] sm:$0xff]
    %v2914 = vld [vmem:[%s681 + $0x118] sm:$0xff]
    %v2915 = vld [vmem:[%s681 + $0x120] sm:$0xff]
    %v2916 = vld [vmem:[%s681 + $0x128] sm:$0xff]
    %v2917 = vld [vmem:[%s681 + $0x130] sm:$0xff]
    %v2918 = vld [vmem:[%s681 + $0x138] sm:$0xff]
    %v2919 = vld [vmem:[%s681 + $0x140] sm:$0xff]
    %v2920 = vld [vmem:[%s681 + $0x148] sm:$0xff]
    %v2921 = vld [vmem:[%s681 + $0x150] sm:$0xff]
    %v2922 = vld [vmem:[%s681 + $0x158] sm:$0xff]
    %v2923 = vld [vmem:[%s681 + $0x160] sm:$0xff]
    %v2924 = vld [vmem:[%s681 + $0x168] sm:$0xff]
    %v2925 = vld [vmem:[%s681 + $0x170] sm:$0xff]
    %v2926 = vld [vmem:[%s681 + $0x178] sm:$0xff]
    %2927 = vmatpush.msra.mxu0 %v2924
    %2928 = vmatpush.msra.mxu0 %v2921
    %2929 = vmatpush.msra.mxu0 %v2918
    %2930 = vmatpush.msra.mxu0 %v2915
    %2931 = vmatpush.msra.mxu0 %v2912
    %2932 = vmatpush.msra.mxu0 %v2909
    %2933 = vmatpush.msra.mxu0 %v2906
    %2934 = vmatpush.msra.mxu0 %v2903
    %2935 = vmatpush.msra.mxu0 %v2900
    %2936 = vmatpush.msra.mxu0 %v2897
    %2937 = vmatpush.msra.mxu0 %v2894
    %2938 = vmatpush.msra.mxu0 %v2891
    %2939 = vmatpush.msra.mxu0 %v2888
    %2940 = vmatpush.msra.mxu0 %v2885
    %2941 = vmatpush.msra.mxu0 %v2882
    %2942 = vmatpush.msra.mxu0 %v2879
    %2943 = vmatmul.f32.gmra.mxu0 %v2638
    %v2944 = vpop.f32.mrf.mxu0
    %v2945 = vadd.f32 0.0, %v2944
    %2946 = vdwg.mxu0
    %2947 = vmatpush.msra.mxu0 %v2925
    %2948 = vmatpush.msra.mxu0 %v2922
    %2949 = vmatpush.msra.mxu0 %v2919
    %2950 = vmatpush.msra.mxu0 %v2916
    %2951 = vmatpush.msra.mxu0 %v2913
    %2952 = vmatpush.msra.mxu0 %v2910
    %2953 = vmatpush.msra.mxu0 %v2907
    %2954 = vmatpush.msra.mxu0 %v2904
    %2955 = vmatpush.msra.mxu0 %v2901
    %2956 = vmatpush.msra.mxu0 %v2898
    %2957 = vmatpush.msra.mxu0 %v2895
    %2958 = vmatpush.msra.mxu0 %v2892
    %2959 = vmatpush.msra.mxu0 %v2889
    %2960 = vmatpush.msra.mxu0 %v2886
    %2961 = vmatpush.msra.mxu0 %v2883
    %2962 = vmatpush.msra.mxu0 %v2880
    %2963 = vmatmul.f32.gmra.mxu0 %v2638
    %v2964 = vpop.f32.mrf.mxu0
    %v2965 = vadd.f32 0.0, %v2964
    %2966 = vdwg.mxu0
    %2967 = vmatpush.msra.mxu0 %v2926
    %2968 = vmatpush.msra.mxu0 %v2923
    %2969 = vmatpush.msra.mxu0 %v2920
    %2970 = vmatpush.msra.mxu0 %v2917
    %2971 = vmatpush.msra.mxu0 %v2914
    %2972 = vmatpush.msra.mxu0 %v2911
    %2973 = vmatpush.msra.mxu0 %v2908
    %2974 = vmatpush.msra.mxu0 %v2905
    %2975 = vmatpush.msra.mxu0 %v2902
    %2976 = vmatpush.msra.mxu0 %v2899
    %2977 = vmatpush.msra.mxu0 %v2896
    %2978 = vmatpush.msra.mxu0 %v2893
    %2979 = vmatpush.msra.mxu0 %v2890
    %2980 = vmatpush.msra.mxu0 %v2887
    %2981 = vmatpush.msra.mxu0 %v2884
    %2982 = vmatpush.msra.mxu0 %v2881
    %2983 = vmatmul.f32.gmra.mxu0 %v2638
    %v2984 = vpop.f32.mrf.mxu0
    %v2985 = vadd.f32 0.0, %v2984
    %2986 = vdwg.mxu0
    %v2987 = vadd.f32 %v2876, %v2945
    %v2988 = vmul.f32 %v2987, 0.5
    %v2989 = vtanh.pop %v2988
    %v2990 = vadd.f32 %v2989, 1.0
    %v2991 = vmul.f32 %v2990, 0.5
    %v2992 = vadd.f32 %v2877, %v2965
    %v2993 = vmul.f32 %v2992, 0.5
    %v2994 = vtanh.pop %v2993
    %v2995 = vadd.f32 %v2994, 1.0
    %v2996 = vmul.f32 %v2995, 0.5
    %v2997 = vadd.f32 %v2985, %v671
    %v2998 = vmul.f32 %v2991, %v2997
    %v2999 = vadd.f32 %v2878, %v2998
    %v3000 = vtanh.pop %v2999
    %v3001 = vsub.f32 1.0, %v2996
    %v3002 = vmul.f32 %v3001, %v3000
    %v3003 = vmul.f32 %v2996, %v2638
    %v3004 = vadd.f32 %v3002, %v3003
    %v3005 = vld [vmem:[%s808] sm:$0xff]
    %v3006 = vld [vmem:[%s808 + $0x8] sm:$0xff]
    %v3007 = vld [vmem:[%s808 + $0x10] sm:$0xff]
    %v3008 = vld [vmem:[%s808 + $0x18] sm:$0xff]
    %v3009 = vld [vmem:[%s808 + $0x20] sm:$0xff]
    %v3010 = vld [vmem:[%s808 + $0x28] sm:$0xff]
    %v3011 = vld [vmem:[%s808 + $0x30] sm:$0xff]
    %v3012 = vld [vmem:[%s808 + $0x38] sm:$0xff]
    %v3013 = vld [vmem:[%s808 + $0x40] sm:$0xff]
    %v3014 = vld [vmem:[%s808 + $0x48] sm:$0xff]
    %v3015 = vld [vmem:[%s808 + $0x50] sm:$0xff]
    %v3016 = vld [vmem:[%s808 + $0x58] sm:$0xff]
    %v3017 = vld [vmem:[%s808 + $0x60] sm:$0xff]
    %v3018 = vld [vmem:[%s808 + $0x68] sm:$0xff]
    %v3019 = vld [vmem:[%s808 + $0x70] sm:$0xff]
    %v3020 = vld [vmem:[%s808 + $0x78] sm:$0xff]
    %v3021 = vld [vmem:[%s808 + $0x80] sm:$0xff]
    %v3022 = vld [vmem:[%s808 + $0x88] sm:$0xff]
    %v3023 = vld [vmem:[%s808 + $0x90] sm:$0xff]
    %v3024 = vld [vmem:[%s808 + $0x98] sm:$0xff]
    %v3025 = vld [vmem:[%s808 + $0xa0] sm:$0xff]
    %v3026 = vld [vmem:[%s808 + $0xa8] sm:$0xff]
    %v3027 = vld [vmem:[%s808 + $0xb0] sm:$0xff]
    %v3028 = vld [vmem:[%s808 + $0xb8] sm:$0xff]
    %v3029 = vld [vmem:[%s808 + $0xc0] sm:$0xff]
    %v3030 = vld [vmem:[%s808 + $0xc8] sm:$0xff]
    %v3031 = vld [vmem:[%s808 + $0xd0] sm:$0xff]
    %v3032 = vld [vmem:[%s808 + $0xd8] sm:$0xff]
    %v3033 = vld [vmem:[%s808 + $0xe0] sm:$0xff]
    %v3034 = vld [vmem:[%s808 + $0xe8] sm:$0xff]
    %v3035 = vld [vmem:[%s808 + $0xf0] sm:$0xff]
    %v3036 = vld [vmem:[%s808 + $0xf8] sm:$0xff]
    %v3037 = vld [vmem:[%s808 + $0x100] sm:$0xff]
    %v3038 = vld [vmem:[%s808 + $0x108] sm:$0xff]
    %v3039 = vld [vmem:[%s808 + $0x110] sm:$0xff]
    %v3040 = vld [vmem:[%s808 + $0x118] sm:$0xff]
    %v3041 = vld [vmem:[%s808 + $0x120] sm:$0xff]
    %v3042 = vld [vmem:[%s808 + $0x128] sm:$0xff]
    %v3043 = vld [vmem:[%s808 + $0x130] sm:$0xff]
    %v3044 = vld [vmem:[%s808 + $0x138] sm:$0xff]
    %v3045 = vld [vmem:[%s808 + $0x140] sm:$0xff]
    %v3046 = vld [vmem:[%s808 + $0x148] sm:$0xff]
    %v3047 = vld [vmem:[%s808 + $0x150] sm:$0xff]
    %v3048 = vld [vmem:[%s808 + $0x158] sm:$0xff]
    %v3049 = vld [vmem:[%s808 + $0x160] sm:$0xff]
    %v3050 = vld [vmem:[%s808 + $0x168] sm:$0xff]
    %v3051 = vld [vmem:[%s808 + $0x170] sm:$0xff]
    %v3052 = vld [vmem:[%s808 + $0x178] sm:$0xff]
    %3053 = vmatpush.msra.mxu0 %v3050
    %3054 = vmatpush.msra.mxu0 %v3047
    %3055 = vmatpush.msra.mxu0 %v3044
    %3056 = vmatpush.msra.mxu0 %v3041
    %3057 = vmatpush.msra.mxu0 %v3038
    %3058 = vmatpush.msra.mxu0 %v3035
    %3059 = vmatpush.msra.mxu0 %v3032
    %3060 = vmatpush.msra.mxu0 %v3029
    %3061 = vmatpush.msra.mxu0 %v3026
    %3062 = vmatpush.msra.mxu0 %v3023
    %3063 = vmatpush.msra.mxu0 %v3020
    %3064 = vmatpush.msra.mxu0 %v3017
    %3065 = vmatpush.msra.mxu0 %v3014
    %3066 = vmatpush.msra.mxu0 %v3011
    %3067 = vmatpush.msra.mxu0 %v3008
    %3068 = vmatpush.msra.mxu0 %v3005
    %3069 = vmatmul.f32.gmra.mxu0 %v3004
    %v3070 = vpop.f32.mrf.mxu0
    %v3071 = vadd.f32 %v675, %v3070
    %3072 = vdwg.mxu0
    %3073 = vmatpush.msra.mxu0 %v3051
    %3074 = vmatpush.msra.mxu0 %v3048
    %3075 = vmatpush.msra.mxu0 %v3045
    %3076 = vmatpush.msra.mxu0 %v3042
    %3077 = vmatpush.msra.mxu0 %v3039
    %3078 = vmatpush.msra.mxu0 %v3036
    %3079 = vmatpush.msra.mxu0 %v3033
    %3080 = vmatpush.msra.mxu0 %v3030
    %3081 = vmatpush.msra.mxu0 %v3027
    %3082 = vmatpush.msra.mxu0 %v3024
    %3083 = vmatpush.msra.mxu0 %v3021
    %3084 = vmatpush.msra.mxu0 %v3018
    %3085 = vmatpush.msra.mxu0 %v3015
    %3086 = vmatpush.msra.mxu0 %v3012
    %3087 = vmatpush.msra.mxu0 %v3009
    %3088 = vmatpush.msra.mxu0 %v3006
    %3089 = vmatmul.f32.gmra.mxu0 %v3004
    %v3090 = vpop.f32.mrf.mxu0
    %v3091 = vadd.f32 %v676, %v3090
    %3092 = vdwg.mxu0
    %3093 = vmatpush.msra.mxu0 %v3052
    %3094 = vmatpush.msra.mxu0 %v3049
    %3095 = vmatpush.msra.mxu0 %v3046
    %3096 = vmatpush.msra.mxu0 %v3043
    %3097 = vmatpush.msra.mxu0 %v3040
    %3098 = vmatpush.msra.mxu0 %v3037
    %3099 = vmatpush.msra.mxu0 %v3034
    %3100 = vmatpush.msra.mxu0 %v3031
    %3101 = vmatpush.msra.mxu0 %v3028
    %3102 = vmatpush.msra.mxu0 %v3025
    %3103 = vmatpush.msra.mxu0 %v3022
    %3104 = vmatpush.msra.mxu0 %v3019
    %3105 = vmatpush.msra.mxu0 %v3016
    %3106 = vmatpush.msra.mxu0 %v3013
    %3107 = vmatpush.msra.mxu0 %v3010
    %3108 = vmatpush.msra.mxu0 %v3007
    %3109 = vmatmul.f32.gmra.mxu0 %v3004
    %v3110 = vpop.f32.mrf.mxu0
    %v3111 = vadd.f32 %v677, %v3110
    %3112 = vdwg.mxu0
    %v3113 = vld [vmem:[%s917] sm:$0xff]
    %v3114 = vld [vmem:[%s917 + $0x8] sm:$0xff]
    %v3115 = vld [vmem:[%s917 + $0x10] sm:$0xff]
    %v3116 = vld [vmem:[%s917 + $0x18] sm:$0xff]
    %v3117 = vld [vmem:[%s917 + $0x20] sm:$0xff]
    %v3118 = vld [vmem:[%s917 + $0x28] sm:$0xff]
    %v3119 = vld [vmem:[%s917 + $0x30] sm:$0xff]
    %v3120 = vld [vmem:[%s917 + $0x38] sm:$0xff]
    %v3121 = vld [vmem:[%s917 + $0x40] sm:$0xff]
    %v3122 = vld [vmem:[%s917 + $0x48] sm:$0xff]
    %v3123 = vld [vmem:[%s917 + $0x50] sm:$0xff]
    %v3124 = vld [vmem:[%s917 + $0x58] sm:$0xff]
    %v3125 = vld [vmem:[%s917 + $0x60] sm:$0xff]
    %v3126 = vld [vmem:[%s917 + $0x68] sm:$0xff]
    %v3127 = vld [vmem:[%s917 + $0x70] sm:$0xff]
    %v3128 = vld [vmem:[%s917 + $0x78] sm:$0xff]
    %v3129 = vld [vmem:[%s917 + $0x80] sm:$0xff]
    %v3130 = vld [vmem:[%s917 + $0x88] sm:$0xff]
    %v3131 = vld [vmem:[%s917 + $0x90] sm:$0xff]
    %v3132 = vld [vmem:[%s917 + $0x98] sm:$0xff]
    %v3133 = vld [vmem:[%s917 + $0xa0] sm:$0xff]
    %v3134 = vld [vmem:[%s917 + $0xa8] sm:$0xff]
    %v3135 = vld [vmem:[%s917 + $0xb0] sm:$0xff]
    %v3136 = vld [vmem:[%s917 + $0xb8] sm:$0xff]
    %v3137 = vld [vmem:[%s917 + $0xc0] sm:$0xff]
    %v3138 = vld [vmem:[%s917 + $0xc8] sm:$0xff]
    %v3139 = vld [vmem:[%s917 + $0xd0] sm:$0xff]
    %v3140 = vld [vmem:[%s917 + $0xd8] sm:$0xff]
    %v3141 = vld [vmem:[%s917 + $0xe0] sm:$0xff]
    %v3142 = vld [vmem:[%s917 + $0xe8] sm:$0xff]
    %v3143 = vld [vmem:[%s917 + $0xf0] sm:$0xff]
    %v3144 = vld [vmem:[%s917 + $0xf8] sm:$0xff]
    %v3145 = vld [vmem:[%s917 + $0x100] sm:$0xff]
    %v3146 = vld [vmem:[%s917 + $0x108] sm:$0xff]
    %v3147 = vld [vmem:[%s917 + $0x110] sm:$0xff]
    %v3148 = vld [vmem:[%s917 + $0x118] sm:$0xff]
    %v3149 = vld [vmem:[%s917 + $0x120] sm:$0xff]
    %v3150 = vld [vmem:[%s917 + $0x128] sm:$0xff]
    %v3151 = vld [vmem:[%s917 + $0x130] sm:$0xff]
    %v3152 = vld [vmem:[%s917 + $0x138] sm:$0xff]
    %v3153 = vld [vmem:[%s917 + $0x140] sm:$0xff]
    %v3154 = vld [vmem:[%s917 + $0x148] sm:$0xff]
    %v3155 = vld [vmem:[%s917 + $0x150] sm:$0xff]
    %v3156 = vld [vmem:[%s917 + $0x158] sm:$0xff]
    %v3157 = vld [vmem:[%s917 + $0x160] sm:$0xff]
    %v3158 = vld [vmem:[%s917 + $0x168] sm:$0xff]
    %v3159 = vld [vmem:[%s917 + $0x170] sm:$0xff]
    %v3160 = vld [vmem:[%s917 + $0x178] sm:$0xff]
    %3161 = vmatpush.msra.mxu0 %v3158
    %3162 = vmatpush.msra.mxu0 %v3155
    %3163 = vmatpush.msra.mxu0 %v3152
    %3164 = vmatpush.msra.mxu0 %v3149
    %3165 = vmatpush.msra.mxu0 %v3146
    %3166 = vmatpush.msra.mxu0 %v3143
    %3167 = vmatpush.msra.mxu0 %v3140
    %3168 = vmatpush.msra.mxu0 %v3137
    %3169 = vmatpush.msra.mxu0 %v3134
    %3170 = vmatpush.msra.mxu0 %v3131
    %3171 = vmatpush.msra.mxu0 %v3128
    %3172 = vmatpush.msra.mxu0 %v3125
    %3173 = vmatpush.msra.mxu0 %v3122
    %3174 = vmatpush.msra.mxu0 %v3119
    %3175 = vmatpush.msra.mxu0 %v3116
    %3176 = vmatpush.msra.mxu0 %v3113
    %3177 = vmatmul.f32.gmra.mxu0 %v2872
    %v3178 = vpop.f32.mrf.mxu0
    %v3179 = vadd.f32 0.0, %v3178
    %3180 = vdwg.mxu0
    %3181 = vmatpush.msra.mxu0 %v3159
    %3182 = vmatpush.msra.mxu0 %v3156
    %3183 = vmatpush.msra.mxu0 %v3153
    %3184 = vmatpush.msra.mxu0 %v3150
    %3185 = vmatpush.msra.mxu0 %v3147
    %3186 = vmatpush.msra.mxu0 %v3144
    %3187 = vmatpush.msra.mxu0 %v3141
    %3188 = vmatpush.msra.mxu0 %v3138
    %3189 = vmatpush.msra.mxu0 %v3135
    %3190 = vmatpush.msra.mxu0 %v3132
    %3191 = vmatpush.msra.mxu0 %v3129
    %3192 = vmatpush.msra.mxu0 %v3126
    %3193 = vmatpush.msra.mxu0 %v3123
    %3194 = vmatpush.msra.mxu0 %v3120
    %3195 = vmatpush.msra.mxu0 %v3117
    %3196 = vmatpush.msra.mxu0 %v3114
    %3197 = vmatmul.f32.gmra.mxu0 %v2872
    %v3198 = vpop.f32.mrf.mxu0
    %v3199 = vadd.f32 0.0, %v3198
    %3200 = vdwg.mxu0
    %3201 = vmatpush.msra.mxu0 %v3160
    %3202 = vmatpush.msra.mxu0 %v3157
    %3203 = vmatpush.msra.mxu0 %v3154
    %3204 = vmatpush.msra.mxu0 %v3151
    %3205 = vmatpush.msra.mxu0 %v3148
    %3206 = vmatpush.msra.mxu0 %v3145
    %3207 = vmatpush.msra.mxu0 %v3142
    %3208 = vmatpush.msra.mxu0 %v3139
    %3209 = vmatpush.msra.mxu0 %v3136
    %3210 = vmatpush.msra.mxu0 %v3133
    %3211 = vmatpush.msra.mxu0 %v3130
    %3212 = vmatpush.msra.mxu0 %v3127
    %3213 = vmatpush.msra.mxu0 %v3124
    %3214 = vmatpush.msra.mxu0 %v3121
    %3215 = vmatpush.msra.mxu0 %v3118
    %3216 = vmatpush.msra.mxu0 %v3115
    %3217 = vmatmul.f32.gmra.mxu0 %v2872
    %v3218 = vpop.f32.mrf.mxu0
    %v3219 = vadd.f32 0.0, %v3218
    %3220 = vdwg.mxu0
    %v3221 = vadd.f32 %v3071, %v3179
    %v3222 = vmul.f32 %v3221, 0.5
    %v3223 = vtanh.pop %v3222
    %v3224 = vadd.f32 %v3223, 1.0
    %v3225 = vmul.f32 %v3224, 0.5
    %v3226 = vadd.f32 %v3091, %v3199
    %v3227 = vmul.f32 %v3226, 0.5
    %v3228 = vtanh.pop %v3227
    %v3229 = vadd.f32 %v3228, 1.0
    %v3230 = vmul.f32 %v3229, 0.5
    %v3231 = vadd.f32 %v3219, %v673
    %v3232 = vmul.f32 %v3225, %v3231
    %v3233 = vadd.f32 %v3111, %v3232
    %v3234 = vtanh.pop %v3233
    %v3235 = vsub.f32 1.0, %v3230
    %v3236 = vmul.f32 %v3235, %v3234
    %v3237 = vmul.f32 %v3230, %v2872
    %v3238 = vadd.f32 %v3236, %v3237
    %s3239 = scalar_lea.vmem [#allocation3], 48
    %3240 = vst [vmem:[%s3239] sm:$0xff] %v3238
    %s3241 = scalar_lea.vmem [#allocation2], 168
    %v3242 = vld [vmem:[%s3241] sm:$0xff]
    %v3243 = vld [vmem:[%s3241 + $0x8] sm:$0xff]
    %v3244 = vld [vmem:[%s3241 + $0x10] sm:$0xff]
    %v3245 = vld [vmem:[%s681] sm:$0xff]
    %v3246 = vld [vmem:[%s681 + $0x8] sm:$0xff]
    %v3247 = vld [vmem:[%s681 + $0x10] sm:$0xff]
    %v3248 = vld [vmem:[%s681 + $0x18] sm:$0xff]
    %v3249 = vld [vmem:[%s681 + $0x20] sm:$0xff]
    %v3250 = vld [vmem:[%s681 + $0x28] sm:$0xff]
    %v3251 = vld [vmem:[%s681 + $0x30] sm:$0xff]
    %v3252 = vld [vmem:[%s681 + $0x38] sm:$0xff]
    %v3253 = vld [vmem:[%s681 + $0x40] sm:$0xff]
    %v3254 = vld [vmem:[%s681 + $0x48] sm:$0xff]
    %v3255 = vld [vmem:[%s681 + $0x50] sm:$0xff]
    %v3256 = vld [vmem:[%s681 + $0x58] sm:$0xff]
    %v3257 = vld [vmem:[%s681 + $0x60] sm:$0xff]
    %v3258 = vld [vmem:[%s681 + $0x68] sm:$0xff]
    %v3259 = vld [vmem:[%s681 + $0x70] sm:$0xff]
    %v3260 = vld [vmem:[%s681 + $0x78] sm:$0xff]
    %v3261 = vld [vmem:[%s681 + $0x80] sm:$0xff]
    %v3262 = vld [vmem:[%s681 + $0x88] sm:$0xff]
    %v3263 = vld [vmem:[%s681 + $0x90] sm:$0xff]
    %v3264 = vld [vmem:[%s681 + $0x98] sm:$0xff]
    %v3265 = vld [vmem:[%s681 + $0xa0] sm:$0xff]
    %v3266 = vld [vmem:[%s681 + $0xa8] sm:$0xff]
    %v3267 = vld [vmem:[%s681 + $0xb0] sm:$0xff]
    %v3268 = vld [vmem:[%s681 + $0xb8] sm:$0xff]
    %v3269 = vld [vmem:[%s681 + $0xc0] sm:$0xff]
    %v3270 = vld [vmem:[%s681 + $0xc8] sm:$0xff]
    %v3271 = vld [vmem:[%s681 + $0xd0] sm:$0xff]
    %v3272 = vld [vmem:[%s681 + $0xd8] sm:$0xff]
    %v3273 = vld [vmem:[%s681 + $0xe0] sm:$0xff]
    %v3274 = vld [vmem:[%s681 + $0xe8] sm:$0xff]
    %v3275 = vld [vmem:[%s681 + $0xf0] sm:$0xff]
    %v3276 = vld [vmem:[%s681 + $0xf8] sm:$0xff]
    %v3277 = vld [vmem:[%s681 + $0x100] sm:$0xff]
    %v3278 = vld [vmem:[%s681 + $0x108] sm:$0xff]
    %v3279 = vld [vmem:[%s681 + $0x110] sm:$0xff]
    %v3280 = vld [vmem:[%s681 + $0x118] sm:$0xff]
    %v3281 = vld [vmem:[%s681 + $0x120] sm:$0xff]
    %v3282 = vld [vmem:[%s681 + $0x128] sm:$0xff]
    %v3283 = vld [vmem:[%s681 + $0x130] sm:$0xff]
    %v3284 = vld [vmem:[%s681 + $0x138] sm:$0xff]
    %v3285 = vld [vmem:[%s681 + $0x140] sm:$0xff]
    %v3286 = vld [vmem:[%s681 + $0x148] sm:$0xff]
    %v3287 = vld [vmem:[%s681 + $0x150] sm:$0xff]
    %v3288 = vld [vmem:[%s681 + $0x158] sm:$0xff]
    %v3289 = vld [vmem:[%s681 + $0x160] sm:$0xff]
    %v3290 = vld [vmem:[%s681 + $0x168] sm:$0xff]
    %v3291 = vld [vmem:[%s681 + $0x170] sm:$0xff]
    %v3292 = vld [vmem:[%s681 + $0x178] sm:$0xff]
    %3293 = vmatpush.msra.mxu0 %v3290
    %3294 = vmatpush.msra.mxu0 %v3287
    %3295 = vmatpush.msra.mxu0 %v3284
    %3296 = vmatpush.msra.mxu0 %v3281
    %3297 = vmatpush.msra.mxu0 %v3278
    %3298 = vmatpush.msra.mxu0 %v3275
    %3299 = vmatpush.msra.mxu0 %v3272
    %3300 = vmatpush.msra.mxu0 %v3269
    %3301 = vmatpush.msra.mxu0 %v3266
    %3302 = vmatpush.msra.mxu0 %v3263
    %3303 = vmatpush.msra.mxu0 %v3260
    %3304 = vmatpush.msra.mxu0 %v3257
    %3305 = vmatpush.msra.mxu0 %v3254
    %3306 = vmatpush.msra.mxu0 %v3251
    %3307 = vmatpush.msra.mxu0 %v3248
    %3308 = vmatpush.msra.mxu0 %v3245
    %3309 = vmatmul.f32.gmra.mxu0 %v3004
    %v3310 = vpop.f32.mrf.mxu0
    %v3311 = vadd.f32 0.0, %v3310
    %3312 = vdwg.mxu0
    %3313 = vmatpush.msra.mxu0 %v3291
    %3314 = vmatpush.msra.mxu0 %v3288
    %3315 = vmatpush.msra.mxu0 %v3285
    %3316 = vmatpush.msra.mxu0 %v3282
    %3317 = vmatpush.msra.mxu0 %v3279
    %3318 = vmatpush.msra.mxu0 %v3276
    %3319 = vmatpush.msra.mxu0 %v3273
    %3320 = vmatpush.msra.mxu0 %v3270
    %3321 = vmatpush.msra.mxu0 %v3267
    %3322 = vmatpush.msra.mxu0 %v3264
    %3323 = vmatpush.msra.mxu0 %v3261
    %3324 = vmatpush.msra.mxu0 %v3258
    %3325 = vmatpush.msra.mxu0 %v3255
    %3326 = vmatpush.msra.mxu0 %v3252
    %3327 = vmatpush.msra.mxu0 %v3249
    %3328 = vmatpush.msra.mxu0 %v3246
    %3329 = vmatmul.f32.gmra.mxu0 %v3004
    %v3330 = vpop.f32.mrf.mxu0
    %v3331 = vadd.f32 0.0, %v3330
    %3332 = vdwg.mxu0
    %3333 = vmatpush.msra.mxu0 %v3292
    %3334 = vmatpush.msra.mxu0 %v3289
    %3335 = vmatpush.msra.mxu0 %v3286
    %3336 = vmatpush.msra.mxu0 %v3283
    %3337 = vmatpush.msra.mxu0 %v3280
    %3338 = vmatpush.msra.mxu0 %v3277
    %3339 = vmatpush.msra.mxu0 %v3274
    %3340 = vmatpush.msra.mxu0 %v3271
    %3341 = vmatpush.msra.mxu0 %v3268
    %3342 = vmatpush.msra.mxu0 %v3265
    %3343 = vmatpush.msra.mxu0 %v3262
    %3344 = vmatpush.msra.mxu0 %v3259
    %3345 = vmatpush.msra.mxu0 %v3256
    %3346 = vmatpush.msra.mxu0 %v3253
    %3347 = vmatpush.msra.mxu0 %v3250
    %3348 = vmatpush.msra.mxu0 %v3247
    %3349 = vmatmul.f32.gmra.mxu0 %v3004
    %v3350 = vpop.f32.mrf.mxu0
    %v3351 = vadd.f32 0.0, %v3350
    %3352 = vdwg.mxu0
    %v3353 = vadd.f32 %v3242, %v3311
    %v3354 = vmul.f32 %v3353, 0.5
    %v3355 = vtanh.pop %v3354
    %v3356 = vadd.f32 %v3355, 1.0
    %v3357 = vmul.f32 %v3356, 0.5
    %v3358 = vadd.f32 %v3243, %v3331
    %v3359 = vmul.f32 %v3358, 0.5
    %v3360 = vtanh.pop %v3359
    %v3361 = vadd.f32 %v3360, 1.0
    %v3362 = vmul.f32 %v3361, 0.5
    %v3363 = vadd.f32 %v3351, %v671
    %v3364 = vmul.f32 %v3357, %v3363
    %v3365 = vadd.f32 %v3244, %v3364
    %v3366 = vtanh.pop %v3365
    %v3367 = vsub.f32 1.0, %v3362
    %v3368 = vmul.f32 %v3367, %v3366
    %v3369 = vmul.f32 %v3362, %v3004
    %v3370 = vadd.f32 %v3368, %v3369
    %v3371 = vld [vmem:[%s808] sm:$0xff]
    %v3372 = vld [vmem:[%s808 + $0x8] sm:$0xff]
    %v3373 = vld [vmem:[%s808 + $0x10] sm:$0xff]
    %v3374 = vld [vmem:[%s808 + $0x18] sm:$0xff]
    %v3375 = vld [vmem:[%s808 + $0x20] sm:$0xff]
    %v3376 = vld [vmem:[%s808 + $0x28] sm:$0xff]
    %v3377 = vld [vmem:[%s808 + $0x30] sm:$0xff]
    %v3378 = vld [vmem:[%s808 + $0x38] sm:$0xff]
    %v3379 = vld [vmem:[%s808 + $0x40] sm:$0xff]
    %v3380 = vld [vmem:[%s808 + $0x48] sm:$0xff]
    %v3381 = vld [vmem:[%s808 + $0x50] sm:$0xff]
    %v3382 = vld [vmem:[%s808 + $0x58] sm:$0xff]
    %v3383 = vld [vmem:[%s808 + $0x60] sm:$0xff]
    %v3384 = vld [vmem:[%s808 + $0x68] sm:$0xff]
    %v3385 = vld [vmem:[%s808 + $0x70] sm:$0xff]
    %v3386 = vld [vmem:[%s808 + $0x78] sm:$0xff]
    %v3387 = vld [vmem:[%s808 + $0x80] sm:$0xff]
    %v3388 = vld [vmem:[%s808 + $0x88] sm:$0xff]
    %v3389 = vld [vmem:[%s808 + $0x90] sm:$0xff]
    %v3390 = vld [vmem:[%s808 + $0x98] sm:$0xff]
    %v3391 = vld [vmem:[%s808 + $0xa0] sm:$0xff]
    %v3392 = vld [vmem:[%s808 + $0xa8] sm:$0xff]
    %v3393 = vld [vmem:[%s808 + $0xb0] sm:$0xff]
    %v3394 = vld [vmem:[%s808 + $0xb8] sm:$0xff]
    %v3395 = vld [vmem:[%s808 + $0xc0] sm:$0xff]
    %v3396 = vld [vmem:[%s808 + $0xc8] sm:$0xff]
    %v3397 = vld [vmem:[%s808 + $0xd0] sm:$0xff]
    %v3398 = vld [vmem:[%s808 + $0xd8] sm:$0xff]
    %v3399 = vld [vmem:[%s808 + $0xe0] sm:$0xff]
    %v3400 = vld [vmem:[%s808 + $0xe8] sm:$0xff]
    %v3401 = vld [vmem:[%s808 + $0xf0] sm:$0xff]
    %v3402 = vld [vmem:[%s808 + $0xf8] sm:$0xff]
    %v3403 = vld [vmem:[%s808 + $0x100] sm:$0xff]
    %v3404 = vld [vmem:[%s808 + $0x108] sm:$0xff]
    %v3405 = vld [vmem:[%s808 + $0x110] sm:$0xff]
    %v3406 = vld [vmem:[%s808 + $0x118] sm:$0xff]
    %v3407 = vld [vmem:[%s808 + $0x120] sm:$0xff]
    %v3408 = vld [vmem:[%s808 + $0x128] sm:$0xff]
    %v3409 = vld [vmem:[%s808 + $0x130] sm:$0xff]
    %v3410 = vld [vmem:[%s808 + $0x138] sm:$0xff]
    %v3411 = vld [vmem:[%s808 + $0x140] sm:$0xff]
    %v3412 = vld [vmem:[%s808 + $0x148] sm:$0xff]
    %v3413 = vld [vmem:[%s808 + $0x150] sm:$0xff]
    %v3414 = vld [vmem:[%s808 + $0x158] sm:$0xff]
    %v3415 = vld [vmem:[%s808 + $0x160] sm:$0xff]
    %v3416 = vld [vmem:[%s808 + $0x168] sm:$0xff]
    %v3417 = vld [vmem:[%s808 + $0x170] sm:$0xff]
    %v3418 = vld [vmem:[%s808 + $0x178] sm:$0xff]
    %3419 = vmatpush.msra.mxu0 %v3416
    %3420 = vmatpush.msra.mxu0 %v3413
    %3421 = vmatpush.msra.mxu0 %v3410
    %3422 = vmatpush.msra.mxu0 %v3407
    %3423 = vmatpush.msra.mxu0 %v3404
    %3424 = vmatpush.msra.mxu0 %v3401
    %3425 = vmatpush.msra.mxu0 %v3398
    %3426 = vmatpush.msra.mxu0 %v3395
    %3427 = vmatpush.msra.mxu0 %v3392
    %3428 = vmatpush.msra.mxu0 %v3389
    %3429 = vmatpush.msra.mxu0 %v3386
    %3430 = vmatpush.msra.mxu0 %v3383
    %3431 = vmatpush.msra.mxu0 %v3380
    %3432 = vmatpush.msra.mxu0 %v3377
    %3433 = vmatpush.msra.mxu0 %v3374
    %3434 = vmatpush.msra.mxu0 %v3371
    %3435 = vmatmul.f32.gmra.mxu0 %v3370
    %v3436 = vpop.f32.mrf.mxu0
    %v3437 = vadd.f32 %v675, %v3436
    %3438 = vdwg.mxu0
    %3439 = vmatpush.msra.mxu0 %v3417
    %3440 = vmatpush.msra.mxu0 %v3414
    %3441 = vmatpush.msra.mxu0 %v3411
    %3442 = vmatpush.msra.mxu0 %v3408
    %3443 = vmatpush.msra.mxu0 %v3405
    %3444 = vmatpush.msra.mxu0 %v3402
    %3445 = vmatpush.msra.mxu0 %v3399
    %3446 = vmatpush.msra.mxu0 %v3396
    %3447 = vmatpush.msra.mxu0 %v3393
    %3448 = vmatpush.msra.mxu0 %v3390
    %3449 = vmatpush.msra.mxu0 %v3387
    %3450 = vmatpush.msra.mxu0 %v3384
    %3451 = vmatpush.msra.mxu0 %v3381
    %3452 = vmatpush.msra.mxu0 %v3378
    %3453 = vmatpush.msra.mxu0 %v3375
    %3454 = vmatpush.msra.mxu0 %v3372
    %3455 = vmatmul.f32.gmra.mxu0 %v3370
    %v3456 = vpop.f32.mrf.mxu0
    %v3457 = vadd.f32 %v676, %v3456
    %3458 = vdwg.mxu0
    %3459 = vmatpush.msra.mxu0 %v3418
    %3460 = vmatpush.msra.mxu0 %v3415
    %3461 = vmatpush.msra.mxu0 %v3412
    %3462 = vmatpush.msra.mxu0 %v3409
    %3463 = vmatpush.msra.mxu0 %v3406
    %3464 = vmatpush.msra.mxu0 %v3403
    %3465 = vmatpush.msra.mxu0 %v3400
    %3466 = vmatpush.msra.mxu0 %v3397
    %3467 = vmatpush.msra.mxu0 %v3394
    %3468 = vmatpush.msra.mxu0 %v3391
    %3469 = vmatpush.msra.mxu0 %v3388
    %3470 = vmatpush.msra.mxu0 %v3385
    %3471 = vmatpush.msra.mxu0 %v3382
    %3472 = vmatpush.msra.mxu0 %v3379
    %3473 = vmatpush.msra.mxu0 %v3376
    %3474 = vmatpush.msra.mxu0 %v3373
    %3475 = vmatmul.f32.gmra.mxu0 %v3370
    %v3476 = vpop.f32.mrf.mxu0
    %v3477 = vadd.f32 %v677, %v3476
    %3478 = vdwg.mxu0
    %v3479 = vld [vmem:[%s917] sm:$0xff]
    %v3480 = vld [vmem:[%s917 + $0x8] sm:$0xff]
    %v3481 = vld [vmem:[%s917 + $0x10] sm:$0xff]
    %v3482 = vld [vmem:[%s917 + $0x18] sm:$0xff]
    %v3483 = vld [vmem:[%s917 + $0x20] sm:$0xff]
    %v3484 = vld [vmem:[%s917 + $0x28] sm:$0xff]
    %v3485 = vld [vmem:[%s917 + $0x30] sm:$0xff]
    %v3486 = vld [vmem:[%s917 + $0x38] sm:$0xff]
    %v3487 = vld [vmem:[%s917 + $0x40] sm:$0xff]
    %v3488 = vld [vmem:[%s917 + $0x48] sm:$0xff]
    %v3489 = vld [vmem:[%s917 + $0x50] sm:$0xff]
    %v3490 = vld [vmem:[%s917 + $0x58] sm:$0xff]
    %v3491 = vld [vmem:[%s917 + $0x60] sm:$0xff]
    %v3492 = vld [vmem:[%s917 + $0x68] sm:$0xff]
    %v3493 = vld [vmem:[%s917 + $0x70] sm:$0xff]
    %v3494 = vld [vmem:[%s917 + $0x78] sm:$0xff]
    %v3495 = vld [vmem:[%s917 + $0x80] sm:$0xff]
    %v3496 = vld [vmem:[%s917 + $0x88] sm:$0xff]
    %v3497 = vld [vmem:[%s917 + $0x90] sm:$0xff]
    %v3498 = vld [vmem:[%s917 + $0x98] sm:$0xff]
    %v3499 = vld [vmem:[%s917 + $0xa0] sm:$0xff]
    %v3500 = vld [vmem:[%s917 + $0xa8] sm:$0xff]
    %v3501 = vld [vmem:[%s917 + $0xb0] sm:$0xff]
    %v3502 = vld [vmem:[%s917 + $0xb8] sm:$0xff]
    %v3503 = vld [vmem:[%s917 + $0xc0] sm:$0xff]
    %v3504 = vld [vmem:[%s917 + $0xc8] sm:$0xff]
    %v3505 = vld [vmem:[%s917 + $0xd0] sm:$0xff]
    %v3506 = vld [vmem:[%s917 + $0xd8] sm:$0xff]
    %v3507 = vld [vmem:[%s917 + $0xe0] sm:$0xff]
    %v3508 = vld [vmem:[%s917 + $0xe8] sm:$0xff]
    %v3509 = vld [vmem:[%s917 + $0xf0] sm:$0xff]
    %v3510 = vld [vmem:[%s917 + $0xf8] sm:$0xff]
    %v3511 = vld [vmem:[%s917 + $0x100] sm:$0xff]
    %v3512 = vld [vmem:[%s917 + $0x108] sm:$0xff]
    %v3513 = vld [vmem:[%s917 + $0x110] sm:$0xff]
    %v3514 = vld [vmem:[%s917 + $0x118] sm:$0xff]
    %v3515 = vld [vmem:[%s917 + $0x120] sm:$0xff]
    %v3516 = vld [vmem:[%s917 + $0x128] sm:$0xff]
    %v3517 = vld [vmem:[%s917 + $0x130] sm:$0xff]
    %v3518 = vld [vmem:[%s917 + $0x138] sm:$0xff]
    %v3519 = vld [vmem:[%s917 + $0x140] sm:$0xff]
    %v3520 = vld [vmem:[%s917 + $0x148] sm:$0xff]
    %v3521 = vld [vmem:[%s917 + $0x150] sm:$0xff]
    %v3522 = vld [vmem:[%s917 + $0x158] sm:$0xff]
    %v3523 = vld [vmem:[%s917 + $0x160] sm:$0xff]
    %v3524 = vld [vmem:[%s917 + $0x168] sm:$0xff]
    %v3525 = vld [vmem:[%s917 + $0x170] sm:$0xff]
    %v3526 = vld [vmem:[%s917 + $0x178] sm:$0xff]
    %3527 = vmatpush.msra.mxu0 %v3524
    %3528 = vmatpush.msra.mxu0 %v3521
    %3529 = vmatpush.msra.mxu0 %v3518
    %3530 = vmatpush.msra.mxu0 %v3515
    %3531 = vmatpush.msra.mxu0 %v3512
    %3532 = vmatpush.msra.mxu0 %v3509
    %3533 = vmatpush.msra.mxu0 %v3506
    %3534 = vmatpush.msra.mxu0 %v3503
    %3535 = vmatpush.msra.mxu0 %v3500
    %3536 = vmatpush.msra.mxu0 %v3497
    %3537 = vmatpush.msra.mxu0 %v3494
    %3538 = vmatpush.msra.mxu0 %v3491
    %3539 = vmatpush.msra.mxu0 %v3488
    %3540 = vmatpush.msra.mxu0 %v3485
    %3541 = vmatpush.msra.mxu0 %v3482
    %3542 = vmatpush.msra.mxu0 %v3479
    %3543 = vmatmul.f32.gmra.mxu0 %v3238
    %v3544 = vpop.f32.mrf.mxu0
    %v3545 = vadd.f32 0.0, %v3544
    %3546 = vdwg.mxu0
    %3547 = vmatpush.msra.mxu0 %v3525
    %3548 = vmatpush.msra.mxu0 %v3522
    %3549 = vmatpush.msra.mxu0 %v3519
    %3550 = vmatpush.msra.mxu0 %v3516
    %3551 = vmatpush.msra.mxu0 %v3513
    %3552 = vmatpush.msra.mxu0 %v3510
    %3553 = vmatpush.msra.mxu0 %v3507
    %3554 = vmatpush.msra.mxu0 %v3504
    %3555 = vmatpush.msra.mxu0 %v3501
    %3556 = vmatpush.msra.mxu0 %v3498
    %3557 = vmatpush.msra.mxu0 %v3495
    %3558 = vmatpush.msra.mxu0 %v3492
    %3559 = vmatpush.msra.mxu0 %v3489
    %3560 = vmatpush.msra.mxu0 %v3486
    %3561 = vmatpush.msra.mxu0 %v3483
    %3562 = vmatpush.msra.mxu0 %v3480
    %3563 = vmatmul.f32.gmra.mxu0 %v3238
    %v3564 = vpop.f32.mrf.mxu0
    %v3565 = vadd.f32 0.0, %v3564
    %3566 = vdwg.mxu0
    %3567 = vmatpush.msra.mxu0 %v3526
    %3568 = vmatpush.msra.mxu0 %v3523
    %3569 = vmatpush.msra.mxu0 %v3520
    %3570 = vmatpush.msra.mxu0 %v3517
    %3571 = vmatpush.msra.mxu0 %v3514
    %3572 = vmatpush.msra.mxu0 %v3511
    %3573 = vmatpush.msra.mxu0 %v3508
    %3574 = vmatpush.msra.mxu0 %v3505
    %3575 = vmatpush.msra.mxu0 %v3502
    %3576 = vmatpush.msra.mxu0 %v3499
    %3577 = vmatpush.msra.mxu0 %v3496
    %3578 = vmatpush.msra.mxu0 %v3493
    %3579 = vmatpush.msra.mxu0 %v3490
    %3580 = vmatpush.msra.mxu0 %v3487
    %3581 = vmatpush.msra.mxu0 %v3484
    %3582 = vmatpush.msra.mxu0 %v3481
    %3583 = vmatmul.f32.gmra.mxu0 %v3238
    %v3584 = vpop.f32.mrf.mxu0
    %v3585 = vadd.f32 0.0, %v3584
    %3586 = vdwg.mxu0
    %v3587 = vadd.f32 %v3437, %v3545
    %v3588 = vmul.f32 %v3587, 0.5
    %v3589 = vtanh.pop %v3588
    %v3590 = vadd.f32 %v3589, 1.0
    %v3591 = vmul.f32 %v3590, 0.5
    %v3592 = vadd.f32 %v3457, %v3565
    %v3593 = vmul.f32 %v3592, 0.5
    %v3594 = vtanh.pop %v3593
    %v3595 = vadd.f32 %v3594, 1.0
    %v3596 = vmul.f32 %v3595, 0.5
    %v3597 = vadd.f32 %v3585, %v673
    %v3598 = vmul.f32 %v3591, %v3597
    %v3599 = vadd.f32 %v3477, %v3598
    %v3600 = vtanh.pop %v3599
    %v3601 = vsub.f32 1.0, %v3596
    %v3602 = vmul.f32 %v3601, %v3600
    %v3603 = vmul.f32 %v3596, %v3238
    %v3604 = vadd.f32 %v3602, %v3603
    %s3605 = scalar_lea.vmem [#allocation3], 56
    %3606 = vst [vmem:[%s3605] sm:$0xff] %v3604
    %s3607 = scalar_lea.vmem [#allocation2], 192
    %v3608 = vld [vmem:[%s3607] sm:$0xff]
    %v3609 = vld [vmem:[%s3607 + $0x8] sm:$0xff]
    %v3610 = vld [vmem:[%s3607 + $0x10] sm:$0xff]
    %v3611 = vld [vmem:[%s681] sm:$0xff]
    %v3612 = vld [vmem:[%s681 + $0x8] sm:$0xff]
    %v3613 = vld [vmem:[%s681 + $0x10] sm:$0xff]
    %v3614 = vld [vmem:[%s681 + $0x18] sm:$0xff]
    %v3615 = vld [vmem:[%s681 + $0x20] sm:$0xff]
    %v3616 = vld [vmem:[%s681 + $0x28] sm:$0xff]
    %v3617 = vld [vmem:[%s681 + $0x30] sm:$0xff]
    %v3618 = vld [vmem:[%s681 + $0x38] sm:$0xff]
    %v3619 = vld [vmem:[%s681 + $0x40] sm:$0xff]
    %v3620 = vld [vmem:[%s681 + $0x48] sm:$0xff]
    %v3621 = vld [vmem:[%s681 + $0x50] sm:$0xff]
    %v3622 = vld [vmem:[%s681 + $0x58] sm:$0xff]
    %v3623 = vld [vmem:[%s681 + $0x60] sm:$0xff]
    %v3624 = vld [vmem:[%s681 + $0x68] sm:$0xff]
    %v3625 = vld [vmem:[%s681 + $0x70] sm:$0xff]
    %v3626 = vld [vmem:[%s681 + $0x78] sm:$0xff]
    %v3627 = vld [vmem:[%s681 + $0x80] sm:$0xff]
    %v3628 = vld [vmem:[%s681 + $0x88] sm:$0xff]
    %v3629 = vld [vmem:[%s681 + $0x90] sm:$0xff]
    %v3630 = vld [vmem:[%s681 + $0x98] sm:$0xff]
    %v3631 = vld [vmem:[%s681 + $0xa0] sm:$0xff]
    %v3632 = vld [vmem:[%s681 + $0xa8] sm:$0xff]
    %v3633 = vld [vmem:[%s681 + $0xb0] sm:$0xff]
    %v3634 = vld [vmem:[%s681 + $0xb8] sm:$0xff]
    %v3635 = vld [vmem:[%s681 + $0xc0] sm:$0xff]
    %v3636 = vld [vmem:[%s681 + $0xc8] sm:$0xff]
    %v3637 = vld [vmem:[%s681 + $0xd0] sm:$0xff]
    %v3638 = vld [vmem:[%s681 + $0xd8] sm:$0xff]
    %v3639 = vld [vmem:[%s681 + $0xe0] sm:$0xff]
    %v3640 = vld [vmem:[%s681 + $0xe8] sm:$0xff]
    %v3641 = vld [vmem:[%s681 + $0xf0] sm:$0xff]
    %v3642 = vld [vmem:[%s681 + $0xf8] sm:$0xff]
    %v3643 = vld [vmem:[%s681 + $0x100] sm:$0xff]
    %v3644 = vld [vmem:[%s681 + $0x108] sm:$0xff]
    %v3645 = vld [vmem:[%s681 + $0x110] sm:$0xff]
    %v3646 = vld [vmem:[%s681 + $0x118] sm:$0xff]
    %v3647 = vld [vmem:[%s681 + $0x120] sm:$0xff]
    %v3648 = vld [vmem:[%s681 + $0x128] sm:$0xff]
    %v3649 = vld [vmem:[%s681 + $0x130] sm:$0xff]
    %v3650 = vld [vmem:[%s681 + $0x138] sm:$0xff]
    %v3651 = vld [vmem:[%s681 + $0x140] sm:$0xff]
    %v3652 = vld [vmem:[%s681 + $0x148] sm:$0xff]
    %v3653 = vld [vmem:[%s681 + $0x150] sm:$0xff]
    %v3654 = vld [vmem:[%s681 + $0x158] sm:$0xff]
    %v3655 = vld [vmem:[%s681 + $0x160] sm:$0xff]
    %v3656 = vld [vmem:[%s681 + $0x168] sm:$0xff]
    %v3657 = vld [vmem:[%s681 + $0x170] sm:$0xff]
    %v3658 = vld [vmem:[%s681 + $0x178] sm:$0xff]
    %3659 = vmatpush.msra.mxu0 %v3656
    %3660 = vmatpush.msra.mxu0 %v3653
    %3661 = vmatpush.msra.mxu0 %v3650
    %3662 = vmatpush.msra.mxu0 %v3647
    %3663 = vmatpush.msra.mxu0 %v3644
    %3664 = vmatpush.msra.mxu0 %v3641
    %3665 = vmatpush.msra.mxu0 %v3638
    %3666 = vmatpush.msra.mxu0 %v3635
    %3667 = vmatpush.msra.mxu0 %v3632
    %3668 = vmatpush.msra.mxu0 %v3629
    %3669 = vmatpush.msra.mxu0 %v3626
    %3670 = vmatpush.msra.mxu0 %v3623
    %3671 = vmatpush.msra.mxu0 %v3620
    %3672 = vmatpush.msra.mxu0 %v3617
    %3673 = vmatpush.msra.mxu0 %v3614
    %3674 = vmatpush.msra.mxu0 %v3611
    %3675 = vmatmul.f32.gmra.mxu0 %v3370
    %v3676 = vpop.f32.mrf.mxu0
    %v3677 = vadd.f32 0.0, %v3676
    %3678 = vdwg.mxu0
    %3679 = vmatpush.msra.mxu0 %v3657
    %3680 = vmatpush.msra.mxu0 %v3654
    %3681 = vmatpush.msra.mxu0 %v3651
    %3682 = vmatpush.msra.mxu0 %v3648
    %3683 = vmatpush.msra.mxu0 %v3645
    %3684 = vmatpush.msra.mxu0 %v3642
    %3685 = vmatpush.msra.mxu0 %v3639
    %3686 = vmatpush.msra.mxu0 %v3636
    %3687 = vmatpush.msra.mxu0 %v3633
    %3688 = vmatpush.msra.mxu0 %v3630
    %3689 = vmatpush.msra.mxu0 %v3627
    %3690 = vmatpush.msra.mxu0 %v3624
    %3691 = vmatpush.msra.mxu0 %v3621
    %3692 = vmatpush.msra.mxu0 %v3618
    %3693 = vmatpush.msra.mxu0 %v3615
    %3694 = vmatpush.msra.mxu0 %v3612
    %3695 = vmatmul.f32.gmra.mxu0 %v3370
    %v3696 = vpop.f32.mrf.mxu0
    %v3697 = vadd.f32 0.0, %v3696
    %3698 = vdwg.mxu0
    %3699 = vmatpush.msra.mxu0 %v3658
    %3700 = vmatpush.msra.mxu0 %v3655
    %3701 = vmatpush.msra.mxu0 %v3652
    %3702 = vmatpush.msra.mxu0 %v3649
    %3703 = vmatpush.msra.mxu0 %v3646
    %3704 = vmatpush.msra.mxu0 %v3643
    %3705 = vmatpush.msra.mxu0 %v3640
    %3706 = vmatpush.msra.mxu0 %v3637
    %3707 = vmatpush.msra.mxu0 %v3634
    %3708 = vmatpush.msra.mxu0 %v3631
    %3709 = vmatpush.msra.mxu0 %v3628
    %3710 = vmatpush.msra.mxu0 %v3625
    %3711 = vmatpush.msra.mxu0 %v3622
    %3712 = vmatpush.msra.mxu0 %v3619
    %3713 = vmatpush.msra.mxu0 %v3616
    %3714 = vmatpush.msra.mxu0 %v3613
    %3715 = vmatmul.f32.gmra.mxu0 %v3370
    %v3716 = vpop.f32.mrf.mxu0
    %v3717 = vadd.f32 0.0, %v3716
    %3718 = vdwg.mxu0
    %v3719 = vadd.f32 %v3608, %v3677
    %v3720 = vmul.f32 %v3719, 0.5
    %v3721 = vtanh.pop %v3720
    %v3722 = vadd.f32 %v3721, 1.0
    %v3723 = vmul.f32 %v3722, 0.5
    %v3724 = vadd.f32 %v3609, %v3697
    %v3725 = vmul.f32 %v3724, 0.5
    %v3726 = vtanh.pop %v3725
    %v3727 = vadd.f32 %v3726, 1.0
    %v3728 = vmul.f32 %v3727, 0.5
    %v3729 = vadd.f32 %v3717, %v671
    %v3730 = vmul.f32 %v3723, %v3729
    %v3731 = vadd.f32 %v3610, %v3730
    %v3732 = vtanh.pop %v3731
    %v3733 = vsub.f32 1.0, %v3728
    %v3734 = vmul.f32 %v3733, %v3732
    %v3735 = vmul.f32 %v3728, %v3370
    %v3736 = vadd.f32 %v3734, %v3735
    %v3737 = vld [vmem:[%s808] sm:$0xff]
    %v3738 = vld [vmem:[%s808 + $0x8] sm:$0xff]
    %v3739 = vld [vmem:[%s808 + $0x10] sm:$0xff]
    %v3740 = vld [vmem:[%s808 + $0x18] sm:$0xff]
    %v3741 = vld [vmem:[%s808 + $0x20] sm:$0xff]
    %v3742 = vld [vmem:[%s808 + $0x28] sm:$0xff]
    %v3743 = vld [vmem:[%s808 + $0x30] sm:$0xff]
    %v3744 = vld [vmem:[%s808 + $0x38] sm:$0xff]
    %v3745 = vld [vmem:[%s808 + $0x40] sm:$0xff]
    %v3746 = vld [vmem:[%s808 + $0x48] sm:$0xff]
    %v3747 = vld [vmem:[%s808 + $0x50] sm:$0xff]
    %v3748 = vld [vmem:[%s808 + $0x58] sm:$0xff]
    %v3749 = vld [vmem:[%s808 + $0x60] sm:$0xff]
    %v3750 = vld [vmem:[%s808 + $0x68] sm:$0xff]
    %v3751 = vld [vmem:[%s808 + $0x70] sm:$0xff]
    %v3752 = vld [vmem:[%s808 + $0x78] sm:$0xff]
    %v3753 = vld [vmem:[%s808 + $0x80] sm:$0xff]
    %v3754 = vld [vmem:[%s808 + $0x88] sm:$0xff]
    %v3755 = vld [vmem:[%s808 + $0x90] sm:$0xff]
    %v3756 = vld [vmem:[%s808 + $0x98] sm:$0xff]
    %v3757 = vld [vmem:[%s808 + $0xa0] sm:$0xff]
    %v3758 = vld [vmem:[%s808 + $0xa8] sm:$0xff]
    %v3759 = vld [vmem:[%s808 + $0xb0] sm:$0xff]
    %v3760 = vld [vmem:[%s808 + $0xb8] sm:$0xff]
    %v3761 = vld [vmem:[%s808 + $0xc0] sm:$0xff]
    %v3762 = vld [vmem:[%s808 + $0xc8] sm:$0xff]
    %v3763 = vld [vmem:[%s808 + $0xd0] sm:$0xff]
    %v3764 = vld [vmem:[%s808 + $0xd8] sm:$0xff]
    %v3765 = vld [vmem:[%s808 + $0xe0] sm:$0xff]
    %v3766 = vld [vmem:[%s808 + $0xe8] sm:$0xff]
    %v3767 = vld [vmem:[%s808 + $0xf0] sm:$0xff]
    %v3768 = vld [vmem:[%s808 + $0xf8] sm:$0xff]
    %v3769 = vld [vmem:[%s808 + $0x100] sm:$0xff]
    %v3770 = vld [vmem:[%s808 + $0x108] sm:$0xff]
    %v3771 = vld [vmem:[%s808 + $0x110] sm:$0xff]
    %v3772 = vld [vmem:[%s808 + $0x118] sm:$0xff]
    %v3773 = vld [vmem:[%s808 + $0x120] sm:$0xff]
    %v3774 = vld [vmem:[%s808 + $0x128] sm:$0xff]
    %v3775 = vld [vmem:[%s808 + $0x130] sm:$0xff]
    %v3776 = vld [vmem:[%s808 + $0x138] sm:$0xff]
    %v3777 = vld [vmem:[%s808 + $0x140] sm:$0xff]
    %v3778 = vld [vmem:[%s808 + $0x148] sm:$0xff]
    %v3779 = vld [vmem:[%s808 + $0x150] sm:$0xff]
    %v3780 = vld [vmem:[%s808 + $0x158] sm:$0xff]
    %v3781 = vld [vmem:[%s808 + $0x160] sm:$0xff]
    %v3782 = vld [vmem:[%s808 + $0x168] sm:$0xff]
    %v3783 = vld [vmem:[%s808 + $0x170] sm:$0xff]
    %v3784 = vld [vmem:[%s808 + $0x178] sm:$0xff]
    %3785 = vmatpush.msra.mxu0 %v3782
    %3786 = vmatpush.msra.mxu0 %v3779
    %3787 = vmatpush.msra.mxu0 %v3776
    %3788 = vmatpush.msra.mxu0 %v3773
    %3789 = vmatpush.msra.mxu0 %v3770
    %3790 = vmatpush.msra.mxu0 %v3767
    %3791 = vmatpush.msra.mxu0 %v3764
    %3792 = vmatpush.msra.mxu0 %v3761
    %3793 = vmatpush.msra.mxu0 %v3758
    %3794 = vmatpush.msra.mxu0 %v3755
    %3795 = vmatpush.msra.mxu0 %v3752
    %3796 = vmatpush.msra.mxu0 %v3749
    %3797 = vmatpush.msra.mxu0 %v3746
    %3798 = vmatpush.msra.mxu0 %v3743
    %3799 = vmatpush.msra.mxu0 %v3740
    %3800 = vmatpush.msra.mxu0 %v3737
    %3801 = vmatmul.f32.gmra.mxu0 %v3736
    %v3802 = vpop.f32.mrf.mxu0
    %v3803 = vadd.f32 %v675, %v3802
    %3804 = vdwg.mxu0
    %3805 = vmatpush.msra.mxu0 %v3783
    %3806 = vmatpush.msra.mxu0 %v3780
    %3807 = vmatpush.msra.mxu0 %v3777
    %3808 = vmatpush.msra.mxu0 %v3774
    %3809 = vmatpush.msra.mxu0 %v3771
    %3810 = vmatpush.msra.mxu0 %v3768
    %3811 = vmatpush.msra.mxu0 %v3765
    %3812 = vmatpush.msra.mxu0 %v3762
    %3813 = vmatpush.msra.mxu0 %v3759
    %3814 = vmatpush.msra.mxu0 %v3756
    %3815 = vmatpush.msra.mxu0 %v3753
    %3816 = vmatpush.msra.mxu0 %v3750
    %3817 = vmatpush.msra.mxu0 %v3747
    %3818 = vmatpush.msra.mxu0 %v3744
    %3819 = vmatpush.msra.mxu0 %v3741
    %3820 = vmatpush.msra.mxu0 %v3738
    %3821 = vmatmul.f32.gmra.mxu0 %v3736
    %v3822 = vpop.f32.mrf.mxu0
    %v3823 = vadd.f32 %v676, %v3822
    %3824 = vdwg.mxu0
    %3825 = vmatpush.msra.mxu0 %v3784
    %3826 = vmatpush.msra.mxu0 %v3781
    %3827 = vmatpush.msra.mxu0 %v3778
    %3828 = vmatpush.msra.mxu0 %v3775
    %3829 = vmatpush.msra.mxu0 %v3772
    %3830 = vmatpush.msra.mxu0 %v3769
    %3831 = vmatpush.msra.mxu0 %v3766
    %3832 = vmatpush.msra.mxu0 %v3763
    %3833 = vmatpush.msra.mxu0 %v3760
    %3834 = vmatpush.msra.mxu0 %v3757
    %3835 = vmatpush.msra.mxu0 %v3754
    %3836 = vmatpush.msra.mxu0 %v3751
    %3837 = vmatpush.msra.mxu0 %v3748
    %3838 = vmatpush.msra.mxu0 %v3745
    %3839 = vmatpush.msra.mxu0 %v3742
    %3840 = vmatpush.msra.mxu0 %v3739
    %3841 = vmatmul.f32.gmra.mxu0 %v3736
    %v3842 = vpop.f32.mrf.mxu0
    %v3843 = vadd.f32 %v677, %v3842
    %3844 = vdwg.mxu0
    %v3845 = vld [vmem:[%s917] sm:$0xff]
    %v3846 = vld [vmem:[%s917 + $0x8] sm:$0xff]
    %v3847 = vld [vmem:[%s917 + $0x10] sm:$0xff]
    %v3848 = vld [vmem:[%s917 + $0x18] sm:$0xff]
    %v3849 = vld [vmem:[%s917 + $0x20] sm:$0xff]
    %v3850 = vld [vmem:[%s917 + $0x28] sm:$0xff]
    %v3851 = vld [vmem:[%s917 + $0x30] sm:$0xff]
    %v3852 = vld [vmem:[%s917 + $0x38] sm:$0xff]
    %v3853 = vld [vmem:[%s917 + $0x40] sm:$0xff]
    %v3854 = vld [vmem:[%s917 + $0x48] sm:$0xff]
    %v3855 = vld [vmem:[%s917 + $0x50] sm:$0xff]
    %v3856 = vld [vmem:[%s917 + $0x58] sm:$0xff]
    %v3857 = vld [vmem:[%s917 + $0x60] sm:$0xff]
    %v3858 = vld [vmem:[%s917 + $0x68] sm:$0xff]
    %v3859 = vld [vmem:[%s917 + $0x70] sm:$0xff]
    %v3860 = vld [vmem:[%s917 + $0x78] sm:$0xff]
    %v3861 = vld [vmem:[%s917 + $0x80] sm:$0xff]
    %v3862 = vld [vmem:[%s917 + $0x88] sm:$0xff]
    %v3863 = vld [vmem:[%s917 + $0x90] sm:$0xff]
    %v3864 = vld [vmem:[%s917 + $0x98] sm:$0xff]
    %v3865 = vld [vmem:[%s917 + $0xa0] sm:$0xff]
    %v3866 = vld [vmem:[%s917 + $0xa8] sm:$0xff]
    %v3867 = vld [vmem:[%s917 + $0xb0] sm:$0xff]
    %v3868 = vld [vmem:[%s917 + $0xb8] sm:$0xff]
    %v3869 = vld [vmem:[%s917 + $0xc0] sm:$0xff]
    %v3870 = vld [vmem:[%s917 + $0xc8] sm:$0xff]
    %v3871 = vld [vmem:[%s917 + $0xd0] sm:$0xff]
    %v3872 = vld [vmem:[%s917 + $0xd8] sm:$0xff]
    %v3873 = vld [vmem:[%s917 + $0xe0] sm:$0xff]
    %v3874 = vld [vmem:[%s917 + $0xe8] sm:$0xff]
    %v3875 = vld [vmem:[%s917 + $0xf0] sm:$0xff]
    %v3876 = vld [vmem:[%s917 + $0xf8] sm:$0xff]
    %v3877 = vld [vmem:[%s917 + $0x100] sm:$0xff]
    %v3878 = vld [vmem:[%s917 + $0x108] sm:$0xff]
    %v3879 = vld [vmem:[%s917 + $0x110] sm:$0xff]
    %v3880 = vld [vmem:[%s917 + $0x118] sm:$0xff]
    %v3881 = vld [vmem:[%s917 + $0x120] sm:$0xff]
    %v3882 = vld [vmem:[%s917 + $0x128] sm:$0xff]
    %v3883 = vld [vmem:[%s917 + $0x130] sm:$0xff]
    %v3884 = vld [vmem:[%s917 + $0x138] sm:$0xff]
    %v3885 = vld [vmem:[%s917 + $0x140] sm:$0xff]
    %v3886 = vld [vmem:[%s917 + $0x148] sm:$0xff]
    %v3887 = vld [vmem:[%s917 + $0x150] sm:$0xff]
    %v3888 = vld [vmem:[%s917 + $0x158] sm:$0xff]
    %v3889 = vld [vmem:[%s917 + $0x160] sm:$0xff]
    %v3890 = vld [vmem:[%s917 + $0x168] sm:$0xff]
    %v3891 = vld [vmem:[%s917 + $0x170] sm:$0xff]
    %v3892 = vld [vmem:[%s917 + $0x178] sm:$0xff]
    %3893 = vmatpush.msra.mxu0 %v3890
    %3894 = vmatpush.msra.mxu0 %v3887
    %3895 = vmatpush.msra.mxu0 %v3884
    %3896 = vmatpush.msra.mxu0 %v3881
    %3897 = vmatpush.msra.mxu0 %v3878
    %3898 = vmatpush.msra.mxu0 %v3875
    %3899 = vmatpush.msra.mxu0 %v3872
    %3900 = vmatpush.msra.mxu0 %v3869
    %3901 = vmatpush.msra.mxu0 %v3866
    %3902 = vmatpush.msra.mxu0 %v3863
    %3903 = vmatpush.msra.mxu0 %v3860
    %3904 = vmatpush.msra.mxu0 %v3857
    %3905 = vmatpush.msra.mxu0 %v3854
    %3906 = vmatpush.msra.mxu0 %v3851
    %3907 = vmatpush.msra.mxu0 %v3848
    %3908 = vmatpush.msra.mxu0 %v3845
    %3909 = vmatmul.f32.gmra.mxu0 %v3604
    %v3910 = vpop.f32.mrf.mxu0
    %v3911 = vadd.f32 0.0, %v3910
    %3912 = vdwg.mxu0
    %3913 = vmatpush.msra.mxu0 %v3891
    %3914 = vmatpush.msra.mxu0 %v3888
    %3915 = vmatpush.msra.mxu0 %v3885
    %3916 = vmatpush.msra.mxu0 %v3882
    %3917 = vmatpush.msra.mxu0 %v3879
    %3918 = vmatpush.msra.mxu0 %v3876
    %3919 = vmatpush.msra.mxu0 %v3873
    %3920 = vmatpush.msra.mxu0 %v3870
    %3921 = vmatpush.msra.mxu0 %v3867
    %3922 = vmatpush.msra.mxu0 %v3864
    %3923 = vmatpush.msra.mxu0 %v3861
    %3924 = vmatpush.msra.mxu0 %v3858
    %3925 = vmatpush.msra.mxu0 %v3855
    %3926 = vmatpush.msra.mxu0 %v3852
    %3927 = vmatpush.msra.mxu0 %v3849
    %3928 = vmatpush.msra.mxu0 %v3846
    %3929 = vmatmul.f32.gmra.mxu0 %v3604
    %v3930 = vpop.f32.mrf.mxu0
    %v3931 = vadd.f32 0.0, %v3930
    %3932 = vdwg.mxu0
    %3933 = vmatpush.msra.mxu0 %v3892
    %3934 = vmatpush.msra.mxu0 %v3889
    %3935 = vmatpush.msra.mxu0 %v3886
    %3936 = vmatpush.msra.mxu0 %v3883
    %3937 = vmatpush.msra.mxu0 %v3880
    %3938 = vmatpush.msra.mxu0 %v3877
    %3939 = vmatpush.msra.mxu0 %v3874
    %3940 = vmatpush.msra.mxu0 %v3871
    %3941 = vmatpush.msra.mxu0 %v3868
    %3942 = vmatpush.msra.mxu0 %v3865
    %3943 = vmatpush.msra.mxu0 %v3862
    %3944 = vmatpush.msra.mxu0 %v3859
    %3945 = vmatpush.msra.mxu0 %v3856
    %3946 = vmatpush.msra.mxu0 %v3853
    %3947 = vmatpush.msra.mxu0 %v3850
    %3948 = vmatpush.msra.mxu0 %v3847
    %3949 = vmatmul.f32.gmra.mxu0 %v3604
    %v3950 = vpop.f32.mrf.mxu0
    %v3951 = vadd.f32 0.0, %v3950
    %3952 = vdwg.mxu0
    %v3953 = vadd.f32 %v3803, %v3911
    %v3954 = vmul.f32 %v3953, 0.5
    %v3955 = vtanh.pop %v3954
    %v3956 = vadd.f32 %v3955, 1.0
    %v3957 = vmul.f32 %v3956, 0.5
    %v3958 = vadd.f32 %v3823, %v3931
    %v3959 = vmul.f32 %v3958, 0.5
    %v3960 = vtanh.pop %v3959
    %v3961 = vadd.f32 %v3960, 1.0
    %v3962 = vmul.f32 %v3961, 0.5
    %v3963 = vadd.f32 %v3951, %v673
    %v3964 = vmul.f32 %v3957, %v3963
    %v3965 = vadd.f32 %v3843, %v3964
    %v3966 = vtanh.pop %v3965
    %v3967 = vsub.f32 1.0, %v3962
    %v3968 = vmul.f32 %v3967, %v3966
    %v3969 = vmul.f32 %v3962, %v3604
    %v3970 = vadd.f32 %v3968, %v3969
    %s3971 = scalar_lea.vmem [#allocation3], 64
    %3972 = vst [vmem:[%s3971] sm:$0xff] %v3970
    %s3973 = scalar_lea.vmem [#allocation2], 216
    %v3974 = vld [vmem:[%s3973] sm:$0xff]
    %v3975 = vld [vmem:[%s3973 + $0x8] sm:$0xff]
    %v3976 = vld [vmem:[%s3973 + $0x10] sm:$0xff]
    %v3977 = vld [vmem:[%s681] sm:$0xff]
    %v3978 = vld [vmem:[%s681 + $0x8] sm:$0xff]
    %v3979 = vld [vmem:[%s681 + $0x10] sm:$0xff]
    %v3980 = vld [vmem:[%s681 + $0x18] sm:$0xff]
    %v3981 = vld [vmem:[%s681 + $0x20] sm:$0xff]
    %v3982 = vld [vmem:[%s681 + $0x28] sm:$0xff]
    %v3983 = vld [vmem:[%s681 + $0x30] sm:$0xff]
    %v3984 = vld [vmem:[%s681 + $0x38] sm:$0xff]
    %v3985 = vld [vmem:[%s681 + $0x40] sm:$0xff]
    %v3986 = vld [vmem:[%s681 + $0x48] sm:$0xff]
    %v3987 = vld [vmem:[%s681 + $0x50] sm:$0xff]
    %v3988 = vld [vmem:[%s681 + $0x58] sm:$0xff]
    %v3989 = vld [vmem:[%s681 + $0x60] sm:$0xff]
    %v3990 = vld [vmem:[%s681 + $0x68] sm:$0xff]
    %v3991 = vld [vmem:[%s681 + $0x70] sm:$0xff]
    %v3992 = vld [vmem:[%s681 + $0x78] sm:$0xff]
    %v3993 = vld [vmem:[%s681 + $0x80] sm:$0xff]
    %v3994 = vld [vmem:[%s681 + $0x88] sm:$0xff]
    %v3995 = vld [vmem:[%s681 + $0x90] sm:$0xff]
    %v3996 = vld [vmem:[%s681 + $0x98] sm:$0xff]
    %v3997 = vld [vmem:[%s681 + $0xa0] sm:$0xff]
    %v3998 = vld [vmem:[%s681 + $0xa8] sm:$0xff]
    %v3999 = vld [vmem:[%s681 + $0xb0] sm:$0xff]
    %v4000 = vld [vmem:[%s681 + $0xb8] sm:$0xff]
    %v4001 = vld [vmem:[%s681 + $0xc0] sm:$0xff]
    %v4002 = vld [vmem:[%s681 + $0xc8] sm:$0xff]
    %v4003 = vld [vmem:[%s681 + $0xd0] sm:$0xff]
    %v4004 = vld [vmem:[%s681 + $0xd8] sm:$0xff]
    %v4005 = vld [vmem:[%s681 + $0xe0] sm:$0xff]
    %v4006 = vld [vmem:[%s681 + $0xe8] sm:$0xff]
    %v4007 = vld [vmem:[%s681 + $0xf0] sm:$0xff]
    %v4008 = vld [vmem:[%s681 + $0xf8] sm:$0xff]
    %v4009 = vld [vmem:[%s681 + $0x100] sm:$0xff]
    %v4010 = vld [vmem:[%s681 + $0x108] sm:$0xff]
    %v4011 = vld [vmem:[%s681 + $0x110] sm:$0xff]
    %v4012 = vld [vmem:[%s681 + $0x118] sm:$0xff]
    %v4013 = vld [vmem:[%s681 + $0x120] sm:$0xff]
    %v4014 = vld [vmem:[%s681 + $0x128] sm:$0xff]
    %v4015 = vld [vmem:[%s681 + $0x130] sm:$0xff]
    %v4016 = vld [vmem:[%s681 + $0x138] sm:$0xff]
    %v4017 = vld [vmem:[%s681 + $0x140] sm:$0xff]
    %v4018 = vld [vmem:[%s681 + $0x148] sm:$0xff]
    %v4019 = vld [vmem:[%s681 + $0x150] sm:$0xff]
    %v4020 = vld [vmem:[%s681 + $0x158] sm:$0xff]
    %v4021 = vld [vmem:[%s681 + $0x160] sm:$0xff]
    %v4022 = vld [vmem:[%s681 + $0x168] sm:$0xff]
    %v4023 = vld [vmem:[%s681 + $0x170] sm:$0xff]
    %v4024 = vld [vmem:[%s681 + $0x178] sm:$0xff]
    %4025 = vmatpush.msra.mxu0 %v4022
    %4026 = vmatpush.msra.mxu0 %v4019
    %4027 = vmatpush.msra.mxu0 %v4016
    %4028 = vmatpush.msra.mxu0 %v4013
    %4029 = vmatpush.msra.mxu0 %v4010
    %4030 = vmatpush.msra.mxu0 %v4007
    %4031 = vmatpush.msra.mxu0 %v4004
    %4032 = vmatpush.msra.mxu0 %v4001
    %4033 = vmatpush.msra.mxu0 %v3998
    %4034 = vmatpush.msra.mxu0 %v3995
    %4035 = vmatpush.msra.mxu0 %v3992
    %4036 = vmatpush.msra.mxu0 %v3989
    %4037 = vmatpush.msra.mxu0 %v3986
    %4038 = vmatpush.msra.mxu0 %v3983
    %4039 = vmatpush.msra.mxu0 %v3980
    %4040 = vmatpush.msra.mxu0 %v3977
    %4041 = vmatmul.f32.gmra.mxu0 %v3736
    %v4042 = vpop.f32.mrf.mxu0
    %v4043 = vadd.f32 0.0, %v4042
    %4044 = vdwg.mxu0
    %4045 = vmatpush.msra.mxu0 %v4023
    %4046 = vmatpush.msra.mxu0 %v4020
    %4047 = vmatpush.msra.mxu0 %v4017
    %4048 = vmatpush.msra.mxu0 %v4014
    %4049 = vmatpush.msra.mxu0 %v4011
    %4050 = vmatpush.msra.mxu0 %v4008
    %4051 = vmatpush.msra.mxu0 %v4005
    %4052 = vmatpush.msra.mxu0 %v4002
    %4053 = vmatpush.msra.mxu0 %v3999
    %4054 = vmatpush.msra.mxu0 %v3996
    %4055 = vmatpush.msra.mxu0 %v3993
    %4056 = vmatpush.msra.mxu0 %v3990
    %4057 = vmatpush.msra.mxu0 %v3987
    %4058 = vmatpush.msra.mxu0 %v3984
    %4059 = vmatpush.msra.mxu0 %v3981
    %4060 = vmatpush.msra.mxu0 %v3978
    %4061 = vmatmul.f32.gmra.mxu0 %v3736
    %v4062 = vpop.f32.mrf.mxu0
    %v4063 = vadd.f32 0.0, %v4062
    %4064 = vdwg.mxu0
    %4065 = vmatpush.msra.mxu0 %v4024
    %4066 = vmatpush.msra.mxu0 %v4021
    %4067 = vmatpush.msra.mxu0 %v4018
    %4068 = vmatpush.msra.mxu0 %v4015
    %4069 = vmatpush.msra.mxu0 %v4012
    %4070 = vmatpush.msra.mxu0 %v4009
    %4071 = vmatpush.msra.mxu0 %v4006
    %4072 = vmatpush.msra.mxu0 %v4003
    %4073 = vmatpush.msra.mxu0 %v4000
    %4074 = vmatpush.msra.mxu0 %v3997
    %4075 = vmatpush.msra.mxu0 %v3994
    %4076 = vmatpush.msra.mxu0 %v3991
    %4077 = vmatpush.msra.mxu0 %v3988
    %4078 = vmatpush.msra.mxu0 %v3985
    %4079 = vmatpush.msra.mxu0 %v3982
    %4080 = vmatpush.msra.mxu0 %v3979
    %4081 = vmatmul.f32.gmra.mxu0 %v3736
    %v4082 = vpop.f32.mrf.mxu0
    %v4083 = vadd.f32 0.0, %v4082
    %4084 = vdwg.mxu0
    %v4085 = vadd.f32 %v3974, %v4043
    %v4086 = vmul.f32 %v4085, 0.5
    %v4087 = vtanh.pop %v4086
    %v4088 = vadd.f32 %v4087, 1.0
    %v4089 = vmul.f32 %v4088, 0.5
    %v4090 = vadd.f32 %v3975, %v4063
    %v4091 = vmul.f32 %v4090, 0.5
    %v4092 = vtanh.pop %v4091
    %v4093 = vadd.f32 %v4092, 1.0
    %v4094 = vmul.f32 %v4093, 0.5
    %v4095 = vadd.f32 %v4083, %v671
    %v4096 = vmul.f32 %v4089, %v4095
    %v4097 = vadd.f32 %v3976, %v4096
    %v4098 = vtanh.pop %v4097
    %v4099 = vsub.f32 1.0, %v4094
    %v4100 = vmul.f32 %v4099, %v4098
    %v4101 = vmul.f32 %v4094, %v3736
    %v4102 = vadd.f32 %v4100, %v4101
    %v4103 = vld [vmem:[%s808] sm:$0xff]
    %v4104 = vld [vmem:[%s808 + $0x8] sm:$0xff]
    %v4105 = vld [vmem:[%s808 + $0x10] sm:$0xff]
    %v4106 = vld [vmem:[%s808 + $0x18] sm:$0xff]
    %v4107 = vld [vmem:[%s808 + $0x20] sm:$0xff]
    %v4108 = vld [vmem:[%s808 + $0x28] sm:$0xff]
    %v4109 = vld [vmem:[%s808 + $0x30] sm:$0xff]
    %v4110 = vld [vmem:[%s808 + $0x38] sm:$0xff]
    %v4111 = vld [vmem:[%s808 + $0x40] sm:$0xff]
    %v4112 = vld [vmem:[%s808 + $0x48] sm:$0xff]
    %v4113 = vld [vmem:[%s808 + $0x50] sm:$0xff]
    %v4114 = vld [vmem:[%s808 + $0x58] sm:$0xff]
    %v4115 = vld [vmem:[%s808 + $0x60] sm:$0xff]
    %v4116 = vld [vmem:[%s808 + $0x68] sm:$0xff]
    %v4117 = vld [vmem:[%s808 + $0x70] sm:$0xff]
    %v4118 = vld [vmem:[%s808 + $0x78] sm:$0xff]
    %v4119 = vld [vmem:[%s808 + $0x80] sm:$0xff]
    %v4120 = vld [vmem:[%s808 + $0x88] sm:$0xff]
    %v4121 = vld [vmem:[%s808 + $0x90] sm:$0xff]
    %v4122 = vld [vmem:[%s808 + $0x98] sm:$0xff]
    %v4123 = vld [vmem:[%s808 + $0xa0] sm:$0xff]
    %v4124 = vld [vmem:[%s808 + $0xa8] sm:$0xff]
    %v4125 = vld [vmem:[%s808 + $0xb0] sm:$0xff]
    %v4126 = vld [vmem:[%s808 + $0xb8] sm:$0xff]
    %v4127 = vld [vmem:[%s808 + $0xc0] sm:$0xff]
    %v4128 = vld [vmem:[%s808 + $0xc8] sm:$0xff]
    %v4129 = vld [vmem:[%s808 + $0xd0] sm:$0xff]
    %v4130 = vld [vmem:[%s808 + $0xd8] sm:$0xff]
    %v4131 = vld [vmem:[%s808 + $0xe0] sm:$0xff]
    %v4132 = vld [vmem:[%s808 + $0xe8] sm:$0xff]
    %v4133 = vld [vmem:[%s808 + $0xf0] sm:$0xff]
    %v4134 = vld [vmem:[%s808 + $0xf8] sm:$0xff]
    %v4135 = vld [vmem:[%s808 + $0x100] sm:$0xff]
    %v4136 = vld [vmem:[%s808 + $0x108] sm:$0xff]
    %v4137 = vld [vmem:[%s808 + $0x110] sm:$0xff]
    %v4138 = vld [vmem:[%s808 + $0x118] sm:$0xff]
    %v4139 = vld [vmem:[%s808 + $0x120] sm:$0xff]
    %v4140 = vld [vmem:[%s808 + $0x128] sm:$0xff]
    %v4141 = vld [vmem:[%s808 + $0x130] sm:$0xff]
    %v4142 = vld [vmem:[%s808 + $0x138] sm:$0xff]
    %v4143 = vld [vmem:[%s808 + $0x140] sm:$0xff]
    %v4144 = vld [vmem:[%s808 + $0x148] sm:$0xff]
    %v4145 = vld [vmem:[%s808 + $0x150] sm:$0xff]
    %v4146 = vld [vmem:[%s808 + $0x158] sm:$0xff]
    %v4147 = vld [vmem:[%s808 + $0x160] sm:$0xff]
    %v4148 = vld [vmem:[%s808 + $0x168] sm:$0xff]
    %v4149 = vld [vmem:[%s808 + $0x170] sm:$0xff]
    %v4150 = vld [vmem:[%s808 + $0x178] sm:$0xff]
    %4151 = vmatpush.msra.mxu0 %v4148
    %4152 = vmatpush.msra.mxu0 %v4145
    %4153 = vmatpush.msra.mxu0 %v4142
    %4154 = vmatpush.msra.mxu0 %v4139
    %4155 = vmatpush.msra.mxu0 %v4136
    %4156 = vmatpush.msra.mxu0 %v4133
    %4157 = vmatpush.msra.mxu0 %v4130
    %4158 = vmatpush.msra.mxu0 %v4127
    %4159 = vmatpush.msra.mxu0 %v4124
    %4160 = vmatpush.msra.mxu0 %v4121
    %4161 = vmatpush.msra.mxu0 %v4118
    %4162 = vmatpush.msra.mxu0 %v4115
    %4163 = vmatpush.msra.mxu0 %v4112
    %4164 = vmatpush.msra.mxu0 %v4109
    %4165 = vmatpush.msra.mxu0 %v4106
    %4166 = vmatpush.msra.mxu0 %v4103
    %4167 = vmatmul.f32.gmra.mxu0 %v4102
    %v4168 = vpop.f32.mrf.mxu0
    %v4169 = vadd.f32 %v675, %v4168
    %4170 = vdwg.mxu0
    %4171 = vmatpush.msra.mxu0 %v4149
    %4172 = vmatpush.msra.mxu0 %v4146
    %4173 = vmatpush.msra.mxu0 %v4143
    %4174 = vmatpush.msra.mxu0 %v4140
    %4175 = vmatpush.msra.mxu0 %v4137
    %4176 = vmatpush.msra.mxu0 %v4134
    %4177 = vmatpush.msra.mxu0 %v4131
    %4178 = vmatpush.msra.mxu0 %v4128
    %4179 = vmatpush.msra.mxu0 %v4125
    %4180 = vmatpush.msra.mxu0 %v4122
    %4181 = vmatpush.msra.mxu0 %v4119
    %4182 = vmatpush.msra.mxu0 %v4116
    %4183 = vmatpush.msra.mxu0 %v4113
    %4184 = vmatpush.msra.mxu0 %v4110
    %4185 = vmatpush.msra.mxu0 %v4107
    %4186 = vmatpush.msra.mxu0 %v4104
    %4187 = vmatmul.f32.gmra.mxu0 %v4102
    %v4188 = vpop.f32.mrf.mxu0
    %v4189 = vadd.f32 %v676, %v4188
    %4190 = vdwg.mxu0
    %4191 = vmatpush.msra.mxu0 %v4150
    %4192 = vmatpush.msra.mxu0 %v4147
    %4193 = vmatpush.msra.mxu0 %v4144
    %4194 = vmatpush.msra.mxu0 %v4141
    %4195 = vmatpush.msra.mxu0 %v4138
    %4196 = vmatpush.msra.mxu0 %v4135
    %4197 = vmatpush.msra.mxu0 %v4132
    %4198 = vmatpush.msra.mxu0 %v4129
    %4199 = vmatpush.msra.mxu0 %v4126
    %4200 = vmatpush.msra.mxu0 %v4123
    %4201 = vmatpush.msra.mxu0 %v4120
    %4202 = vmatpush.msra.mxu0 %v4117
    %4203 = vmatpush.msra.mxu0 %v4114
    %4204 = vmatpush.msra.mxu0 %v4111
    %4205 = vmatpush.msra.mxu0 %v4108
    %4206 = vmatpush.msra.mxu0 %v4105
    %4207 = vmatmul.f32.gmra.mxu0 %v4102
    %v4208 = vpop.f32.mrf.mxu0
    %v4209 = vadd.f32 %v677, %v4208
    %4210 = vdwg.mxu0
    %v4211 = vld [vmem:[%s917] sm:$0xff]
    %v4212 = vld [vmem:[%s917 + $0x8] sm:$0xff]
    %v4213 = vld [vmem:[%s917 + $0x10] sm:$0xff]
    %v4214 = vld [vmem:[%s917 + $0x18] sm:$0xff]
    %v4215 = vld [vmem:[%s917 + $0x20] sm:$0xff]
    %v4216 = vld [vmem:[%s917 + $0x28] sm:$0xff]
    %v4217 = vld [vmem:[%s917 + $0x30] sm:$0xff]
    %v4218 = vld [vmem:[%s917 + $0x38] sm:$0xff]
    %v4219 = vld [vmem:[%s917 + $0x40] sm:$0xff]
    %v4220 = vld [vmem:[%s917 + $0x48] sm:$0xff]
    %v4221 = vld [vmem:[%s917 + $0x50] sm:$0xff]
    %v4222 = vld [vmem:[%s917 + $0x58] sm:$0xff]
    %v4223 = vld [vmem:[%s917 + $0x60] sm:$0xff]
    %v4224 = vld [vmem:[%s917 + $0x68] sm:$0xff]
    %v4225 = vld [vmem:[%s917 + $0x70] sm:$0xff]
    %v4226 = vld [vmem:[%s917 + $0x78] sm:$0xff]
    %v4227 = vld [vmem:[%s917 + $0x80] sm:$0xff]
    %v4228 = vld [vmem:[%s917 + $0x88] sm:$0xff]
    %v4229 = vld [vmem:[%s917 + $0x90] sm:$0xff]
    %v4230 = vld [vmem:[%s917 + $0x98] sm:$0xff]
    %v4231 = vld [vmem:[%s917 + $0xa0] sm:$0xff]
    %v4232 = vld [vmem:[%s917 + $0xa8] sm:$0xff]
    %v4233 = vld [vmem:[%s917 + $0xb0] sm:$0xff]
    %v4234 = vld [vmem:[%s917 + $0xb8] sm:$0xff]
    %v4235 = vld [vmem:[%s917 + $0xc0] sm:$0xff]
    %v4236 = vld [vmem:[%s917 + $0xc8] sm:$0xff]
    %v4237 = vld [vmem:[%s917 + $0xd0] sm:$0xff]
    %v4238 = vld [vmem:[%s917 + $0xd8] sm:$0xff]
    %v4239 = vld [vmem:[%s917 + $0xe0] sm:$0xff]
    %v4240 = vld [vmem:[%s917 + $0xe8] sm:$0xff]
    %v4241 = vld [vmem:[%s917 + $0xf0] sm:$0xff]
    %v4242 = vld [vmem:[%s917 + $0xf8] sm:$0xff]
    %v4243 = vld [vmem:[%s917 + $0x100] sm:$0xff]
    %v4244 = vld [vmem:[%s917 + $0x108] sm:$0xff]
    %v4245 = vld [vmem:[%s917 + $0x110] sm:$0xff]
    %v4246 = vld [vmem:[%s917 + $0x118] sm:$0xff]
    %v4247 = vld [vmem:[%s917 + $0x120] sm:$0xff]
    %v4248 = vld [vmem:[%s917 + $0x128] sm:$0xff]
    %v4249 = vld [vmem:[%s917 + $0x130] sm:$0xff]
    %v4250 = vld [vmem:[%s917 + $0x138] sm:$0xff]
    %v4251 = vld [vmem:[%s917 + $0x140] sm:$0xff]
    %v4252 = vld [vmem:[%s917 + $0x148] sm:$0xff]
    %v4253 = vld [vmem:[%s917 + $0x150] sm:$0xff]
    %v4254 = vld [vmem:[%s917 + $0x158] sm:$0xff]
    %v4255 = vld [vmem:[%s917 + $0x160] sm:$0xff]
    %v4256 = vld [vmem:[%s917 + $0x168] sm:$0xff]
    %v4257 = vld [vmem:[%s917 + $0x170] sm:$0xff]
    %v4258 = vld [vmem:[%s917 + $0x178] sm:$0xff]
    %4259 = vmatpush.msra.mxu0 %v4256
    %4260 = vmatpush.msra.mxu0 %v4253
    %4261 = vmatpush.msra.mxu0 %v4250
    %4262 = vmatpush.msra.mxu0 %v4247
    %4263 = vmatpush.msra.mxu0 %v4244
    %4264 = vmatpush.msra.mxu0 %v4241
    %4265 = vmatpush.msra.mxu0 %v4238
    %4266 = vmatpush.msra.mxu0 %v4235
    %4267 = vmatpush.msra.mxu0 %v4232
    %4268 = vmatpush.msra.mxu0 %v4229
    %4269 = vmatpush.msra.mxu0 %v4226
    %4270 = vmatpush.msra.mxu0 %v4223
    %4271 = vmatpush.msra.mxu0 %v4220
    %4272 = vmatpush.msra.mxu0 %v4217
    %4273 = vmatpush.msra.mxu0 %v4214
    %4274 = vmatpush.msra.mxu0 %v4211
    %4275 = vmatmul.f32.gmra.mxu0 %v3970
    %v4276 = vpop.f32.mrf.mxu0
    %v4277 = vadd.f32 0.0, %v4276
    %4278 = vdwg.mxu0
    %4279 = vmatpush.msra.mxu0 %v4257
    %4280 = vmatpush.msra.mxu0 %v4254
    %4281 = vmatpush.msra.mxu0 %v4251
    %4282 = vmatpush.msra.mxu0 %v4248
    %4283 = vmatpush.msra.mxu0 %v4245
    %4284 = vmatpush.msra.mxu0 %v4242
    %4285 = vmatpush.msra.mxu0 %v4239
    %4286 = vmatpush.msra.mxu0 %v4236
    %4287 = vmatpush.msra.mxu0 %v4233
    %4288 = vmatpush.msra.mxu0 %v4230
    %4289 = vmatpush.msra.mxu0 %v4227
    %4290 = vmatpush.msra.mxu0 %v4224
    %4291 = vmatpush.msra.mxu0 %v4221
    %4292 = vmatpush.msra.mxu0 %v4218
    %4293 = vmatpush.msra.mxu0 %v4215
    %4294 = vmatpush.msra.mxu0 %v4212
    %4295 = vmatmul.f32.gmra.mxu0 %v3970
    %v4296 = vpop.f32.mrf.mxu0
    %v4297 = vadd.f32 0.0, %v4296
    %4298 = vdwg.mxu0
    %4299 = vmatpush.msra.mxu0 %v4258
    %4300 = vmatpush.msra.mxu0 %v4255
    %4301 = vmatpush.msra.mxu0 %v4252
    %4302 = vmatpush.msra.mxu0 %v4249
    %4303 = vmatpush.msra.mxu0 %v4246
    %4304 = vmatpush.msra.mxu0 %v4243
    %4305 = vmatpush.msra.mxu0 %v4240
    %4306 = vmatpush.msra.mxu0 %v4237
    %4307 = vmatpush.msra.mxu0 %v4234
    %4308 = vmatpush.msra.mxu0 %v4231
    %4309 = vmatpush.msra.mxu0 %v4228
    %4310 = vmatpush.msra.mxu0 %v4225
    %4311 = vmatpush.msra.mxu0 %v4222
    %4312 = vmatpush.msra.mxu0 %v4219
    %4313 = vmatpush.msra.mxu0 %v4216
    %4314 = vmatpush.msra.mxu0 %v4213
    %4315 = vmatmul.f32.gmra.mxu0 %v3970
    %v4316 = vpop.f32.mrf.mxu0
    %v4317 = vadd.f32 0.0, %v4316
    %4318 = vdwg.mxu0
    %v4319 = vadd.f32 %v4169, %v4277
    %v4320 = vmul.f32 %v4319, 0.5
    %v4321 = vtanh.pop %v4320
    %v4322 = vadd.f32 %v4321, 1.0
    %v4323 = vmul.f32 %v4322, 0.5
    %v4324 = vadd.f32 %v4189, %v4297
    %v4325 = vmul.f32 %v4324, 0.5
    %v4326 = vtanh.pop %v4325
    %v4327 = vadd.f32 %v4326, 1.0
    %v4328 = vmul.f32 %v4327, 0.5
    %v4329 = vadd.f32 %v4317, %v673
    %v4330 = vmul.f32 %v4323, %v4329
    %v4331 = vadd.f32 %v4209, %v4330
    %v4332 = vtanh.pop %v4331
    %v4333 = vsub.f32 1.0, %v4328
    %v4334 = vmul.f32 %v4333, %v4332
    %v4335 = vmul.f32 %v4328, %v3970
    %v4336 = vadd.f32 %v4334, %v4335
    %s4337 = scalar_lea.vmem [#allocation3], 72
    %4338 = vst [vmem:[%s4337] sm:$0xff] %v4336
    %v4339 = vld [vmem:[#allocation3] sm:$0xff]
    %v4340 = vld [vmem:[#allocation3 + $0x8] sm:$0xff]
    %v4341 = vld [vmem:[#allocation3 + $0x10] sm:$0xff]
    %v4342 = vld [vmem:[#allocation3 + $0x18] sm:$0xff]
    %v4343 = vld [vmem:[#allocation3 + $0x20] sm:$0xff]
    %v4344 = vld [vmem:[#allocation3 + $0x28] sm:$0xff]
    %v4345 = vld [vmem:[#allocation3 + $0x30] sm:$0xff]
    %v4346 = vld [vmem:[#allocation3 + $0x38] sm:$0xff]
    %v4347 = vld [vmem:[#allocation3 + $0x40] sm:$0xff]
    %v4348 = vld [vmem:[#allocation3 + $0x48] sm:$0xff]
    %v4349 = vld [vmem:[#allocation6] sm:$0xff]
    %v4350 = vld [vmem:[#allocation6 + $0x8] sm:$0xff]
    %v4351 = vld [vmem:[#allocation6 + $0x10] sm:$0xff]
    %v4352 = vld [vmem:[#allocation6 + $0x18] sm:$0xff]
    %v4353 = vld [vmem:[#allocation6 + $0x20] sm:$0xff]
    %v4354 = vld [vmem:[#allocation6 + $0x28] sm:$0xff]
    %v4355 = vld [vmem:[#allocation6 + $0x30] sm:$0xff]
    %v4356 = vld [vmem:[#allocation6 + $0x38] sm:$0xff]
    %v4357 = vld [vmem:[#allocation6 + $0x40] sm:$0xff]
    %v4358 = vld [vmem:[#allocation6 + $0x48] sm:$0xff]
    %v4359 = vld [vmem:[#allocation6 + $0x50] sm:$0xff]
    %v4360 = vld [vmem:[#allocation6 + $0x58] sm:$0xff]
    %v4361 = vld [vmem:[#allocation6 + $0x60] sm:$0xff]
    %v4362 = vld [vmem:[#allocation6 + $0x68] sm:$0xff]
    %v4363 = vld [vmem:[#allocation6 + $0x70] sm:$0xff]
    %v4364 = vld [vmem:[#allocation6 + $0x78] sm:$0xff]
    %v4365 = vld [vmem:[%s5] sm:$0x1]
    %v4366 = vperm.slane %v4365, 0
    %4367 = vmatpush.msra.mxu0 %v4364
    %4368 = vmatpush.msra.mxu0 %v4363
    %4369 = vmatpush.msra.mxu0 %v4362
    %4370 = vmatpush.msra.mxu0 %v4361
    %4371 = vmatpush.msra.mxu0 %v4360
    %4372 = vmatpush.msra.mxu0 %v4359
    %4373 = vmatpush.msra.mxu0 %v4358
    %4374 = vmatpush.msra.mxu0 %v4357
    %4375 = vmatpush.msra.mxu0 %v4356
    %4376 = vmatpush.msra.mxu0 %v4355
    %4377 = vmatpush.msra.mxu0 %v4354
    %4378 = vmatpush.msra.mxu0 %v4353
    %4379 = vmatpush.msra.mxu0 %v4352
    %4380 = vmatpush.msra.mxu0 %v4351
    %4381 = vmatpush.msra.mxu0 %v4350
    %4382 = vmatpush.msra.mxu0 %v4349
    %4383 = vmatmul.f32.gmra.mxu0 %v4339
    %v4384 = vpop.f32.mrf.mxu0
    %v4385 = vadd.f32 %v4366, %v4384
    %4386 = vmatmul.f32.gmra.mxu0 %v4340
    %v4387 = vpop.f32.mrf.mxu0
    %v4388 = vadd.f32 %v4366, %v4387
    %4389 = vmatmul.f32.gmra.mxu0 %v4341
    %v4390 = vpop.f32.mrf.mxu0
    %v4391 = vadd.f32 %v4366, %v4390
    %4392 = vmatmul.f32.gmra.mxu0 %v4342
    %v4393 = vpop.f32.mrf.mxu0
    %v4394 = vadd.f32 %v4366, %v4393
    %4395 = vmatmul.f32.gmra.mxu0 %v4343
    %v4396 = vpop.f32.mrf.mxu0
    %v4397 = vadd.f32 %v4366, %v4396
    %4398 = vmatmul.f32.gmra.mxu0 %v4344
    %v4399 = vpop.f32.mrf.mxu0
    %v4400 = vadd.f32 %v4366, %v4399
    %4401 = vmatmul.f32.gmra.mxu0 %v4345
    %v4402 = vpop.f32.mrf.mxu0
    %v4403 = vadd.f32 %v4366, %v4402
    %4404 = vmatmul.f32.gmra.mxu0 %v4346
    %v4405 = vpop.f32.mrf.mxu0
    %v4406 = vadd.f32 %v4366, %v4405
    %4407 = vmatmul.f32.gmra.mxu0 %v4347
    %v4408 = vpop.f32.mrf.mxu0
    %v4409 = vadd.f32 %v4366, %v4408
    %4410 = vmatmul.f32.gmra.mxu0 %v4348
    %v4411 = vpop.f32.mrf.mxu0
    %v4412 = vadd.f32 %v4366, %v4411
    %4413 = vdwg.mxu0
    %v4414 = vmul.f32 %v4385, 0.5
    %v4415 = vmul.f32 %v4388, 0.5
    %v4416 = vmul.f32 %v4391, 0.5
    %v4417 = vmul.f32 %v4394, 0.5
    %v4418 = vmul.f32 %v4397, 0.5
    %v4419 = vmul.f32 %v4400, 0.5
    %v4420 = vmul.f32 %v4403, 0.5
    %v4421 = vmul.f32 %v4406, 0.5
    %v4422 = vmul.f32 %v4409, 0.5
    %v4423 = vmul.f32 %v4412, 0.5
    %v4424 = vmul.f32 %v4385, 0.70710677
    %v4425 = vmul.f32 %v4388, 0.70710677
    %v4426 = vmul.f32 %v4391, 0.70710677
    %v4427 = vmul.f32 %v4394, 0.70710677
    %v4428 = vmul.f32 %v4397, 0.70710677
    %v4429 = vmul.f32 %v4400, 0.70710677
    %v4430 = vmul.f32 %v4403, 0.70710677
    %v4431 = vmul.f32 %v4406, 0.70710677
    %v4432 = vmul.f32 %v4409, 0.70710677
    %v4433 = vmul.f32 %v4412, 0.70710677
    %vm4434 = vcmp.ge.f32.partialorder %v4424, 0.0
    %vm4435 = vcmp.ge.f32.partialorder %v4425, 0.0
    %vm4436 = vcmp.ge.f32.partialorder %v4426, 0.0
    %vm4437 = vcmp.ge.f32.partialorder %v4427, 0.0
    %vm4438 = vcmp.ge.f32.partialorder %v4428, 0.0
    %vm4439 = vcmp.ge.f32.partialorder %v4429, 0.0
    %vm4440 = vcmp.ge.f32.partialorder %v4430, 0.0
    %vm4441 = vcmp.ge.f32.partialorder %v4431, 0.0
    %vm4442 = vcmp.ge.f32.partialorder %v4432, 0.0
    %vm4443 = vcmp.ge.f32.partialorder %v4433, 0.0
    %v4444 = vsel %vm4434, 1.0, -1.0
    %v4445 = vsel %vm4435, 1.0, -1.0
    %v4446 = vsel %vm4436, 1.0, -1.0
    %v4447 = vsel %vm4437, 1.0, -1.0
    %v4448 = vsel %vm4438, 1.0, -1.0
    %v4449 = vsel %vm4439, 1.0, -1.0
    %v4450 = vsel %vm4440, 1.0, -1.0
    %v4451 = vsel %vm4441, 1.0, -1.0
    %v4452 = vsel %vm4442, 1.0, -1.0
    %v4453 = vsel %vm4443, 1.0, -1.0
    %v4454 = vand.u32 2147483647, %v4424
    %v4455 = vand.u32 2147483647, %v4425
    %v4456 = vand.u32 2147483647, %v4426
    %v4457 = vand.u32 2147483647, %v4427
    %v4458 = vand.u32 2147483647, %v4428
    %v4459 = vand.u32 2147483647, %v4429
    %v4460 = vand.u32 2147483647, %v4430
    %v4461 = vand.u32 2147483647, %v4431
    %v4462 = vand.u32 2147483647, %v4432
    %v4463 = vand.u32 2147483647, %v4433
    %v4464 = vmul.f32 %v4454, 0.3275911
    %v4465 = vmul.f32 %v4455, 0.3275911
    %v4466 = vmul.f32 %v4456, 0.3275911
    %v4467 = vmul.f32 %v4457, 0.3275911
    %v4468 = vmul.f32 %v4458, 0.3275911
    %v4469 = vmul.f32 %v4459, 0.3275911
    %v4470 = vmul.f32 %v4460, 0.3275911
    %v4471 = vmul.f32 %v4461, 0.3275911
    %v4472 = vmul.f32 %v4462, 0.3275911
    %v4473 = vmul.f32 %v4463, 0.3275911
    %v4474 = vadd.f32 %v4464, 1.0
    %v4475 = vadd.f32 %v4465, 1.0
    %v4476 = vadd.f32 %v4466, 1.0
    %v4477 = vadd.f32 %v4467, 1.0
    %v4478 = vadd.f32 %v4468, 1.0
    %v4479 = vadd.f32 %v4469, 1.0
    %v4480 = vadd.f32 %v4470, 1.0
    %v4481 = vadd.f32 %v4471, 1.0
    %v4482 = vadd.f32 %v4472, 1.0
    %v4483 = vadd.f32 %v4473, 1.0
    %v4484 = vrcp.pop %v4474
    %v4485 = vmul.f32 %v4474, %v4484
    %v4486 = vsub.f32 1.0, %v4485
    %v4487 = vmul.f32 %v4484, %v4486
    %v4488 = vadd.f32 %v4484, %v4487
    %vm4489 = vweird.f32 %v4474
    %vm4490 = vweird.f32 %v4484
    %vm4491 = vmor %vm4489, %vm4490
    %v4492 = vsel %vm4491, %v4484, %v4488
    %v4493 = vand.u32 2147483647, %v4474
    %vm4494 = vcmp.eq.f32.partialorder %v4493, 8.507059e+37
    %v4495 = vand.u32 %v4474, 2147483648
    %v4496 = vor.u32 1.1754944e-38, %v4495
    %v4497 = vsel %vm4494, %v4496, %v4492
    %v4498 = vmul.f32 1.0, %v4497
    %v4499 = vrcp.pop %v4475
    %v4500 = vmul.f32 %v4475, %v4499
    %v4501 = vsub.f32 1.0, %v4500
    %v4502 = vmul.f32 %v4499, %v4501
    %v4503 = vadd.f32 %v4499, %v4502
    %vm4504 = vweird.f32 %v4475
    %vm4505 = vweird.f32 %v4499
    %vm4506 = vmor %vm4504, %vm4505
    %v4507 = vsel %vm4506, %v4499, %v4503
    %v4508 = vand.u32 2147483647, %v4475
    %vm4509 = vcmp.eq.f32.partialorder %v4508, 8.507059e+37
    %v4510 = vand.u32 %v4475, 2147483648
    %v4511 = vor.u32 1.1754944e-38, %v4510
    %v4512 = vsel %vm4509, %v4511, %v4507
    %v4513 = vmul.f32 1.0, %v4512
    %v4514 = vrcp.pop %v4476
    %v4515 = vmul.f32 %v4476, %v4514
    %v4516 = vsub.f32 1.0, %v4515
    %v4517 = vmul.f32 %v4514, %v4516
    %v4518 = vadd.f32 %v4514, %v4517
    %vm4519 = vweird.f32 %v4476
    %vm4520 = vweird.f32 %v4514
    %vm4521 = vmor %vm4519, %vm4520
    %v4522 = vsel %vm4521, %v4514, %v4518
    %v4523 = vand.u32 2147483647, %v4476
    %vm4524 = vcmp.eq.f32.partialorder %v4523, 8.507059e+37
    %v4525 = vand.u32 %v4476, 2147483648
    %v4526 = vor.u32 1.1754944e-38, %v4525
    %v4527 = vsel %vm4524, %v4526, %v4522
    %v4528 = vmul.f32 1.0, %v4527
    %v4529 = vrcp.pop %v4477
    %v4530 = vmul.f32 %v4477, %v4529
    %v4531 = vsub.f32 1.0, %v4530
    %v4532 = vmul.f32 %v4529, %v4531
    %v4533 = vadd.f32 %v4529, %v4532
    %vm4534 = vweird.f32 %v4477
    %vm4535 = vweird.f32 %v4529
    %vm4536 = vmor %vm4534, %vm4535
    %v4537 = vsel %vm4536, %v4529, %v4533
    %v4538 = vand.u32 2147483647, %v4477
    %vm4539 = vcmp.eq.f32.partialorder %v4538, 8.507059e+37
    %v4540 = vand.u32 %v4477, 2147483648
    %v4541 = vor.u32 1.1754944e-38, %v4540
    %v4542 = vsel %vm4539, %v4541, %v4537
    %v4543 = vmul.f32 1.0, %v4542
    %v4544 = vrcp.pop %v4478
    %v4545 = vmul.f32 %v4478, %v4544
    %v4546 = vsub.f32 1.0, %v4545
    %v4547 = vmul.f32 %v4544, %v4546
    %v4548 = vadd.f32 %v4544, %v4547
    %vm4549 = vweird.f32 %v4478
    %vm4550 = vweird.f32 %v4544
    %vm4551 = vmor %vm4549, %vm4550
    %v4552 = vsel %vm4551, %v4544, %v4548
    %v4553 = vand.u32 2147483647, %v4478
    %vm4554 = vcmp.eq.f32.partialorder %v4553, 8.507059e+37
    %v4555 = vand.u32 %v4478, 2147483648
    %v4556 = vor.u32 1.1754944e-38, %v4555
    %v4557 = vsel %vm4554, %v4556, %v4552
    %v4558 = vmul.f32 1.0, %v4557
    %v4559 = vrcp.pop %v4479
    %v4560 = vmul.f32 %v4479, %v4559
    %v4561 = vsub.f32 1.0, %v4560
    %v4562 = vmul.f32 %v4559, %v4561
    %v4563 = vadd.f32 %v4559, %v4562
    %vm4564 = vweird.f32 %v4479
    %vm4565 = vweird.f32 %v4559
    %vm4566 = vmor %vm4564, %vm4565
    %v4567 = vsel %vm4566, %v4559, %v4563
    %v4568 = vand.u32 2147483647, %v4479
    %vm4569 = vcmp.eq.f32.partialorder %v4568, 8.507059e+37
    %v4570 = vand.u32 %v4479, 2147483648
    %v4571 = vor.u32 1.1754944e-38, %v4570
    %v4572 = vsel %vm4569, %v4571, %v4567
    %v4573 = vmul.f32 1.0, %v4572
    %v4574 = vrcp.pop %v4480
    %v4575 = vmul.f32 %v4480, %v4574
    %v4576 = vsub.f32 1.0, %v4575
    %v4577 = vmul.f32 %v4574, %v4576
    %v4578 = vadd.f32 %v4574, %v4577
    %vm4579 = vweird.f32 %v4480
    %vm4580 = vweird.f32 %v4574
    %vm4581 = vmor %vm4579, %vm4580
    %v4582 = vsel %vm4581, %v4574, %v4578
    %v4583 = vand.u32 2147483647, %v4480
    %vm4584 = vcmp.eq.f32.partialorder %v4583, 8.507059e+37
    %v4585 = vand.u32 %v4480, 2147483648
    %v4586 = vor.u32 1.1754944e-38, %v4585
    %v4587 = vsel %vm4584, %v4586, %v4582
    %v4588 = vmul.f32 1.0, %v4587
    %v4589 = vrcp.pop %v4481
    %v4590 = vmul.f32 %v4481, %v4589
    %v4591 = vsub.f32 1.0, %v4590
    %v4592 = vmul.f32 %v4589, %v4591
    %v4593 = vadd.f32 %v4589, %v4592
    %vm4594 = vweird.f32 %v4481
    %vm4595 = vweird.f32 %v4589
    %vm4596 = vmor %vm4594, %vm4595
    %v4597 = vsel %vm4596, %v4589, %v4593
    %v4598 = vand.u32 2147483647, %v4481
    %vm4599 = vcmp.eq.f32.partialorder %v4598, 8.507059e+37
    %v4600 = vand.u32 %v4481, 2147483648
    %v4601 = vor.u32 1.1754944e-38, %v4600
    %v4602 = vsel %vm4599, %v4601, %v4597
    %v4603 = vmul.f32 1.0, %v4602
    %v4604 = vrcp.pop %v4482
    %v4605 = vmul.f32 %v4482, %v4604
    %v4606 = vsub.f32 1.0, %v4605
    %v4607 = vmul.f32 %v4604, %v4606
    %v4608 = vadd.f32 %v4604, %v4607
    %vm4609 = vweird.f32 %v4482
    %vm4610 = vweird.f32 %v4604
    %vm4611 = vmor %vm4609, %vm4610
    %v4612 = vsel %vm4611, %v4604, %v4608
    %v4613 = vand.u32 2147483647, %v4482
    %vm4614 = vcmp.eq.f32.partialorder %v4613, 8.507059e+37
    %v4615 = vand.u32 %v4482, 2147483648
    %v4616 = vor.u32 1.1754944e-38, %v4615
    %v4617 = vsel %vm4614, %v4616, %v4612
    %v4618 = vmul.f32 1.0, %v4617
    %v4619 = vrcp.pop %v4483
    %v4620 = vmul.f32 %v4483, %v4619
    %v4621 = vsub.f32 1.0, %v4620
    %v4622 = vmul.f32 %v4619, %v4621
    %v4623 = vadd.f32 %v4619, %v4622
    %vm4624 = vweird.f32 %v4483
    %vm4625 = vweird.f32 %v4619
    %vm4626 = vmor %vm4624, %vm4625
    %v4627 = vsel %vm4626, %v4619, %v4623
    %v4628 = vand.u32 2147483647, %v4483
    %vm4629 = vcmp.eq.f32.partialorder %v4628, 8.507059e+37
    %v4630 = vand.u32 %v4483, 2147483648
    %v4631 = vor.u32 1.1754944e-38, %v4630
    %v4632 = vsel %vm4629, %v4631, %v4627
    %v4633 = vmul.f32 1.0, %v4632
    %v4634 = vmul.f32 %v4498, 1.0614054
    %v4635 = vmul.f32 %v4513, 1.0614054
    %v4636 = vmul.f32 %v4528, 1.0614054
    %v4637 = vmul.f32 %v4543, 1.0614054
    %v4638 = vmul.f32 %v4558, 1.0614054
    %v4639 = vmul.f32 %v4573, 1.0614054
    %v4640 = vmul.f32 %v4588, 1.0614054
    %v4641 = vmul.f32 %v4603, 1.0614054
    %v4642 = vmul.f32 %v4618, 1.0614054
    %v4643 = vmul.f32 %v4633, 1.0614054
    %v4644 = vadd.f32 %v4634, -1.4531521
    %v4645 = vadd.f32 %v4635, -1.4531521
    %v4646 = vadd.f32 %v4636, -1.4531521
    %v4647 = vadd.f32 %v4637, -1.4531521
    %v4648 = vadd.f32 %v4638, -1.4531521
    %v4649 = vadd.f32 %v4639, -1.4531521
    %v4650 = vadd.f32 %v4640, -1.4531521
    %v4651 = vadd.f32 %v4641, -1.4531521
    %v4652 = vadd.f32 %v4642, -1.4531521
    %v4653 = vadd.f32 %v4643, -1.4531521
    %v4654 = vmul.f32 %v4644, %v4498
    %v4655 = vmul.f32 %v4645, %v4513
    %v4656 = vmul.f32 %v4646, %v4528
    %v4657 = vmul.f32 %v4647, %v4543
    %v4658 = vmul.f32 %v4648, %v4558
    %v4659 = vmul.f32 %v4649, %v4573
    %v4660 = vmul.f32 %v4650, %v4588
    %v4661 = vmul.f32 %v4651, %v4603
    %v4662 = vmul.f32 %v4652, %v4618
    %v4663 = vmul.f32 %v4653, %v4633
    %v4664 = vadd.f32 %v4654, 1.4214138
    %v4665 = vadd.f32 %v4655, 1.4214138
    %v4666 = vadd.f32 %v4656, 1.4214138
    %v4667 = vadd.f32 %v4657, 1.4214138
    %v4668 = vadd.f32 %v4658, 1.4214138
    %v4669 = vadd.f32 %v4659, 1.4214138
    %v4670 = vadd.f32 %v4660, 1.4214138
    %v4671 = vadd.f32 %v4661, 1.4214138
    %v4672 = vadd.f32 %v4662, 1.4214138
    %v4673 = vadd.f32 %v4663, 1.4214138
    %v4674 = vmul.f32 %v4664, %v4498
    %v4675 = vmul.f32 %v4665, %v4513
    %v4676 = vmul.f32 %v4666, %v4528
    %v4677 = vmul.f32 %v4667, %v4543
    %v4678 = vmul.f32 %v4668, %v4558
    %v4679 = vmul.f32 %v4669, %v4573
    %v4680 = vmul.f32 %v4670, %v4588
    %v4681 = vmul.f32 %v4671, %v4603
    %v4682 = vmul.f32 %v4672, %v4618
    %v4683 = vmul.f32 %v4673, %v4633
    %v4684 = vadd.f32 %v4674, -0.28449672
    %v4685 = vadd.f32 %v4675, -0.28449672
    %v4686 = vadd.f32 %v4676, -0.28449672
    %v4687 = vadd.f32 %v4677, -0.28449672
    %v4688 = vadd.f32 %v4678, -0.28449672
    %v4689 = vadd.f32 %v4679, -0.28449672
    %v4690 = vadd.f32 %v4680, -0.28449672
    %v4691 = vadd.f32 %v4681, -0.28449672
    %v4692 = vadd.f32 %v4682, -0.28449672
    %v4693 = vadd.f32 %v4683, -0.28449672
    %v4694 = vmul.f32 %v4684, %v4498
    %v4695 = vmul.f32 %v4685, %v4513
    %v4696 = vmul.f32 %v4686, %v4528
    %v4697 = vmul.f32 %v4687, %v4543
    %v4698 = vmul.f32 %v4688, %v4558
    %v4699 = vmul.f32 %v4689, %v4573
    %v4700 = vmul.f32 %v4690, %v4588
    %v4701 = vmul.f32 %v4691, %v4603
    %v4702 = vmul.f32 %v4692, %v4618
    %v4703 = vmul.f32 %v4693, %v4633
    %v4704 = vadd.f32 %v4694, 0.2548296
    %v4705 = vadd.f32 %v4695, 0.2548296
    %v4706 = vadd.f32 %v4696, 0.2548296
    %v4707 = vadd.f32 %v4697, 0.2548296
    %v4708 = vadd.f32 %v4698, 0.2548296
    %v4709 = vadd.f32 %v4699, 0.2548296
    %v4710 = vadd.f32 %v4700, 0.2548296
    %v4711 = vadd.f32 %v4701, 0.2548296
    %v4712 = vadd.f32 %v4702, 0.2548296
    %v4713 = vadd.f32 %v4703, 0.2548296
    %v4714 = vmul.f32 %v4704, %v4498
    %v4715 = vmul.f32 %v4705, %v4513
    %v4716 = vmul.f32 %v4706, %v4528
    %v4717 = vmul.f32 %v4707, %v4543
    %v4718 = vmul.f32 %v4708, %v4558
    %v4719 = vmul.f32 %v4709, %v4573
    %v4720 = vmul.f32 %v4710, %v4588
    %v4721 = vmul.f32 %v4711, %v4603
    %v4722 = vmul.f32 %v4712, %v4618
    %v4723 = vmul.f32 %v4713, %v4633
    %v4724 = vsub.f32 0.0, %v4454
    %v4725 = vsub.f32 0.0, %v4455
    %v4726 = vsub.f32 0.0, %v4456
    %v4727 = vsub.f32 0.0, %v4457
    %v4728 = vsub.f32 0.0, %v4458
    %v4729 = vsub.f32 0.0, %v4459
    %v4730 = vsub.f32 0.0, %v4460
    %v4731 = vsub.f32 0.0, %v4461
    %v4732 = vsub.f32 0.0, %v4462
    %v4733 = vsub.f32 0.0, %v4463
    %v4734 = vmul.f32 %v4724, %v4454
    %v4735 = vmul.f32 %v4725, %v4455
    %v4736 = vmul.f32 %v4726, %v4456
    %v4737 = vmul.f32 %v4727, %v4457
    %v4738 = vmul.f32 %v4728, %v4458
    %v4739 = vmul.f32 %v4729, %v4459
    %v4740 = vmul.f32 %v4730, %v4460
    %v4741 = vmul.f32 %v4731, %v4461
    %v4742 = vmul.f32 %v4732, %v4462
    %v4743 = vmul.f32 %v4733, %v4463
    %v4744 = vmul.f32 %v4734, 1.442695
    %v4745 = vpow.pop %v4744
    %v4746 = vmul.f32 %v4735, 1.442695
    %v4747 = vpow.pop %v4746
    %v4748 = vmul.f32 %v4736, 1.442695
    %v4749 = vpow.pop %v4748
    %v4750 = vmul.f32 %v4737, 1.442695
    %v4751 = vpow.pop %v4750
    %v4752 = vmul.f32 %v4738, 1.442695
    %v4753 = vpow.pop %v4752
    %v4754 = vmul.f32 %v4739, 1.442695
    %v4755 = vpow.pop %v4754
    %v4756 = vmul.f32 %v4740, 1.442695
    %v4757 = vpow.pop %v4756
    %v4758 = vmul.f32 %v4741, 1.442695
    %v4759 = vpow.pop %v4758
    %v4760 = vmul.f32 %v4742, 1.442695
    %v4761 = vpow.pop %v4760
    %v4762 = vmul.f32 %v4743, 1.442695
    %v4763 = vpow.pop %v4762
    %v4764 = vmul.f32 %v4714, %v4745
    %v4765 = vmul.f32 %v4715, %v4747
    %v4766 = vmul.f32 %v4716, %v4749
    %v4767 = vmul.f32 %v4717, %v4751
    %v4768 = vmul.f32 %v4718, %v4753
    %v4769 = vmul.f32 %v4719, %v4755
    %v4770 = vmul.f32 %v4720, %v4757
    %v4771 = vmul.f32 %v4721, %v4759
    %v4772 = vmul.f32 %v4722, %v4761
    %v4773 = vmul.f32 %v4723, %v4763
    %v4774 = vsub.f32 1.0, %v4764
    %v4775 = vsub.f32 1.0, %v4765
    %v4776 = vsub.f32 1.0, %v4766
    %v4777 = vsub.f32 1.0, %v4767
    %v4778 = vsub.f32 1.0, %v4768
    %v4779 = vsub.f32 1.0, %v4769
    %v4780 = vsub.f32 1.0, %v4770
    %v4781 = vsub.f32 1.0, %v4771
    %v4782 = vsub.f32 1.0, %v4772
    %v4783 = vsub.f32 1.0, %v4773
    %v4784 = vmul.f32 %v4444, %v4774
    %v4785 = vmul.f32 %v4445, %v4775
    %v4786 = vmul.f32 %v4446, %v4776
    %v4787 = vmul.f32 %v4447, %v4777
    %v4788 = vmul.f32 %v4448, %v4778
    %v4789 = vmul.f32 %v4449, %v4779
    %v4790 = vmul.f32 %v4450, %v4780
    %v4791 = vmul.f32 %v4451, %v4781
    %v4792 = vmul.f32 %v4452, %v4782
    %v4793 = vmul.f32 %v4453, %v4783
    %v4794 = vadd.f32 %v4784, 1.0
    %v4795 = vadd.f32 %v4785, 1.0
    %v4796 = vadd.f32 %v4786, 1.0
    %v4797 = vadd.f32 %v4787, 1.0
    %v4798 = vadd.f32 %v4788, 1.0
    %v4799 = vadd.f32 %v4789, 1.0
    %v4800 = vadd.f32 %v4790, 1.0
    %v4801 = vadd.f32 %v4791, 1.0
    %v4802 = vadd.f32 %v4792, 1.0
    %v4803 = vadd.f32 %v4793, 1.0
    %v4804 = vmul.f32 %v4414, %v4794
    %v4805 = vmul.f32 %v4415, %v4795
    %v4806 = vmul.f32 %v4416, %v4796
    %v4807 = vmul.f32 %v4417, %v4797
    %v4808 = vmul.f32 %v4418, %v4798
    %v4809 = vmul.f32 %v4419, %v4799
    %v4810 = vmul.f32 %v4420, %v4800
    %v4811 = vmul.f32 %v4421, %v4801
    %v4812 = vmul.f32 %v4422, %v4802
    %v4813 = vmul.f32 %v4423, %v4803
    %s4814 = scalar_lea.vmem [#allocation6], 128
    %v4815 = vld [vmem:[%s4814] sm:$0xff]
    %v4816 = vld [vmem:[%s4814 + $0x8] sm:$0xff]
    %v4817 = vld [vmem:[%s4814 + $0x10] sm:$0xff]
    %v4818 = vld [vmem:[%s4814 + $0x18] sm:$0xff]
    %v4819 = vld [vmem:[%s4814 + $0x20] sm:$0xff]
    %v4820 = vld [vmem:[%s4814 + $0x28] sm:$0xff]
    %v4821 = vld [vmem:[%s4814 + $0x30] sm:$0xff]
    %v4822 = vld [vmem:[%s4814 + $0x38] sm:$0xff]
    %v4823 = vld [vmem:[%s4814 + $0x40] sm:$0xff]
    %v4824 = vld [vmem:[%s4814 + $0x48] sm:$0xff]
    %v4825 = vld [vmem:[%s4814 + $0x50] sm:$0xff]
    %v4826 = vld [vmem:[%s4814 + $0x58] sm:$0xff]
    %v4827 = vld [vmem:[%s4814 + $0x60] sm:$0xff]
    %v4828 = vld [vmem:[%s4814 + $0x68] sm:$0xff]
    %v4829 = vld [vmem:[%s4814 + $0x70] sm:$0xff]
    %v4830 = vld [vmem:[%s4814 + $0x78] sm:$0xff]
    %s4831 = scalar_lea.vmem %s5, 8
    %v4832 = vld [vmem:[%s4831] sm:$0x1]
    %v4833 = vperm.slane %v4832, 0
    %4834 = vmatpush.msra.mxu0 %v4830
    %4835 = vmatpush.msra.mxu0 %v4829
    %4836 = vmatpush.msra.mxu0 %v4828
    %4837 = vmatpush.msra.mxu0 %v4827
    %4838 = vmatpush.msra.mxu0 %v4826
    %4839 = vmatpush.msra.mxu0 %v4825
    %4840 = vmatpush.msra.mxu0 %v4824
    %4841 = vmatpush.msra.mxu0 %v4823
    %4842 = vmatpush.msra.mxu0 %v4822
    %4843 = vmatpush.msra.mxu0 %v4821
    %4844 = vmatpush.msra.mxu0 %v4820
    %4845 = vmatpush.msra.mxu0 %v4819
    %4846 = vmatpush.msra.mxu0 %v4818
    %4847 = vmatpush.msra.mxu0 %v4817
    %4848 = vmatpush.msra.mxu0 %v4816
    %4849 = vmatpush.msra.mxu0 %v4815
    %4850 = vmatmul.f32.gmra.mxu0 %v4804
    %v4851 = vpop.f32.mrf.mxu0
    %v4852 = vadd.f32 %v4833, %v4851
    %4853 = vmatmul.f32.gmra.mxu0 %v4805
    %v4854 = vpop.f32.mrf.mxu0
    %v4855 = vadd.f32 %v4833, %v4854
    %4856 = vmatmul.f32.gmra.mxu0 %v4806
    %v4857 = vpop.f32.mrf.mxu0
    %v4858 = vadd.f32 %v4833, %v4857
    %4859 = vmatmul.f32.gmra.mxu0 %v4807
    %v4860 = vpop.f32.mrf.mxu0
    %v4861 = vadd.f32 %v4833, %v4860
    %4862 = vmatmul.f32.gmra.mxu0 %v4808
    %v4863 = vpop.f32.mrf.mxu0
    %v4864 = vadd.f32 %v4833, %v4863
    %4865 = vmatmul.f32.gmra.mxu0 %v4809
    %v4866 = vpop.f32.mrf.mxu0
    %v4867 = vadd.f32 %v4833, %v4866
    %4868 = vmatmul.f32.gmra.mxu0 %v4810
    %v4869 = vpop.f32.mrf.mxu0
    %v4870 = vadd.f32 %v4833, %v4869
    %4871 = vmatmul.f32.gmra.mxu0 %v4811
    %v4872 = vpop.f32.mrf.mxu0
    %v4873 = vadd.f32 %v4833, %v4872
    %4874 = vmatmul.f32.gmra.mxu0 %v4812
    %v4875 = vpop.f32.mrf.mxu0
    %v4876 = vadd.f32 %v4833, %v4875
    %4877 = vmatmul.f32.gmra.mxu0 %v4813
    %v4878 = vpop.f32.mrf.mxu0
    %v4879 = vadd.f32 %v4833, %v4878
    %4880 = vdwg.mxu0
    %v4881 = vmul.f32 %v4852, 0.5
    %v4882 = vmul.f32 %v4855, 0.5
    %v4883 = vmul.f32 %v4858, 0.5
    %v4884 = vmul.f32 %v4861, 0.5
    %v4885 = vmul.f32 %v4864, 0.5
    %v4886 = vmul.f32 %v4867, 0.5
    %v4887 = vmul.f32 %v4870, 0.5
    %v4888 = vmul.f32 %v4873, 0.5
    %v4889 = vmul.f32 %v4876, 0.5
    %v4890 = vmul.f32 %v4879, 0.5
    %v4891 = vmul.f32 %v4852, 0.70710677
    %v4892 = vmul.f32 %v4855, 0.70710677
    %v4893 = vmul.f32 %v4858, 0.70710677
    %v4894 = vmul.f32 %v4861, 0.70710677
    %v4895 = vmul.f32 %v4864, 0.70710677
    %v4896 = vmul.f32 %v4867, 0.70710677
    %v4897 = vmul.f32 %v4870, 0.70710677
    %v4898 = vmul.f32 %v4873, 0.70710677
    %v4899 = vmul.f32 %v4876, 0.70710677
    %v4900 = vmul.f32 %v4879, 0.70710677
    %vm4901 = vcmp.ge.f32.partialorder %v4891, 0.0
    %vm4902 = vcmp.ge.f32.partialorder %v4892, 0.0
    %vm4903 = vcmp.ge.f32.partialorder %v4893, 0.0
    %vm4904 = vcmp.ge.f32.partialorder %v4894, 0.0
    %vm4905 = vcmp.ge.f32.partialorder %v4895, 0.0
    %vm4906 = vcmp.ge.f32.partialorder %v4896, 0.0
    %vm4907 = vcmp.ge.f32.partialorder %v4897, 0.0
    %vm4908 = vcmp.ge.f32.partialorder %v4898, 0.0
    %vm4909 = vcmp.ge.f32.partialorder %v4899, 0.0
    %vm4910 = vcmp.ge.f32.partialorder %v4900, 0.0
    %v4911 = vsel %vm4901, 1.0, -1.0
    %v4912 = vsel %vm4902, 1.0, -1.0
    %v4913 = vsel %vm4903, 1.0, -1.0
    %v4914 = vsel %vm4904, 1.0, -1.0
    %v4915 = vsel %vm4905, 1.0, -1.0
    %v4916 = vsel %vm4906, 1.0, -1.0
    %v4917 = vsel %vm4907, 1.0, -1.0
    %v4918 = vsel %vm4908, 1.0, -1.0
    %v4919 = vsel %vm4909, 1.0, -1.0
    %v4920 = vsel %vm4910, 1.0, -1.0
    %v4921 = vand.u32 2147483647, %v4891
    %v4922 = vand.u32 2147483647, %v4892
    %v4923 = vand.u32 2147483647, %v4893
    %v4924 = vand.u32 2147483647, %v4894
    %v4925 = vand.u32 2147483647, %v4895
    %v4926 = vand.u32 2147483647, %v4896
    %v4927 = vand.u32 2147483647, %v4897
    %v4928 = vand.u32 2147483647, %v4898
    %v4929 = vand.u32 2147483647, %v4899
    %v4930 = vand.u32 2147483647, %v4900
    %v4931 = vmul.f32 %v4921, 0.3275911
    %v4932 = vmul.f32 %v4922, 0.3275911
    %v4933 = vmul.f32 %v4923, 0.3275911
    %v4934 = vmul.f32 %v4924, 0.3275911
    %v4935 = vmul.f32 %v4925, 0.3275911
    %v4936 = vmul.f32 %v4926, 0.3275911
    %v4937 = vmul.f32 %v4927, 0.3275911
    %v4938 = vmul.f32 %v4928, 0.3275911
    %v4939 = vmul.f32 %v4929, 0.3275911
    %v4940 = vmul.f32 %v4930, 0.3275911
    %v4941 = vadd.f32 %v4931, 1.0
    %v4942 = vadd.f32 %v4932, 1.0
    %v4943 = vadd.f32 %v4933, 1.0
    %v4944 = vadd.f32 %v4934, 1.0
    %v4945 = vadd.f32 %v4935, 1.0
    %v4946 = vadd.f32 %v4936, 1.0
    %v4947 = vadd.f32 %v4937, 1.0
    %v4948 = vadd.f32 %v4938, 1.0
    %v4949 = vadd.f32 %v4939, 1.0
    %v4950 = vadd.f32 %v4940, 1.0
    %v4951 = vrcp.pop %v4941
    %v4952 = vmul.f32 %v4941, %v4951
    %v4953 = vsub.f32 1.0, %v4952
    %v4954 = vmul.f32 %v4951, %v4953
    %v4955 = vadd.f32 %v4951, %v4954
    %vm4956 = vweird.f32 %v4941
    %vm4957 = vweird.f32 %v4951
    %vm4958 = vmor %vm4956, %vm4957
    %v4959 = vsel %vm4958, %v4951, %v4955
    %v4960 = vand.u32 2147483647, %v4941
    %vm4961 = vcmp.eq.f32.partialorder %v4960, 8.507059e+37
    %v4962 = vand.u32 %v4941, 2147483648
    %v4963 = vor.u32 1.1754944e-38, %v4962
    %v4964 = vsel %vm4961, %v4963, %v4959
    %v4965 = vmul.f32 1.0, %v4964
    %v4966 = vrcp.pop %v4942
    %v4967 = vmul.f32 %v4942, %v4966
    %v4968 = vsub.f32 1.0, %v4967
    %v4969 = vmul.f32 %v4966, %v4968
    %v4970 = vadd.f32 %v4966, %v4969
    %vm4971 = vweird.f32 %v4942
    %vm4972 = vweird.f32 %v4966
    %vm4973 = vmor %vm4971, %vm4972
    %v4974 = vsel %vm4973, %v4966, %v4970
    %v4975 = vand.u32 2147483647, %v4942
    %vm4976 = vcmp.eq.f32.partialorder %v4975, 8.507059e+37
    %v4977 = vand.u32 %v4942, 2147483648
    %v4978 = vor.u32 1.1754944e-38, %v4977
    %v4979 = vsel %vm4976, %v4978, %v4974
    %v4980 = vmul.f32 1.0, %v4979
    %v4981 = vrcp.pop %v4943
    %v4982 = vmul.f32 %v4943, %v4981
    %v4983 = vsub.f32 1.0, %v4982
    %v4984 = vmul.f32 %v4981, %v4983
    %v4985 = vadd.f32 %v4981, %v4984
    %vm4986 = vweird.f32 %v4943
    %vm4987 = vweird.f32 %v4981
    %vm4988 = vmor %vm4986, %vm4987
    %v4989 = vsel %vm4988, %v4981, %v4985
    %v4990 = vand.u32 2147483647, %v4943
    %vm4991 = vcmp.eq.f32.partialorder %v4990, 8.507059e+37
    %v4992 = vand.u32 %v4943, 2147483648
    %v4993 = vor.u32 1.1754944e-38, %v4992
    %v4994 = vsel %vm4991, %v4993, %v4989
    %v4995 = vmul.f32 1.0, %v4994
    %v4996 = vrcp.pop %v4944
    %v4997 = vmul.f32 %v4944, %v4996
    %v4998 = vsub.f32 1.0, %v4997
    %v4999 = vmul.f32 %v4996, %v4998
    %v5000 = vadd.f32 %v4996, %v4999
    %vm5001 = vweird.f32 %v4944
    %vm5002 = vweird.f32 %v4996
    %vm5003 = vmor %vm5001, %vm5002
    %v5004 = vsel %vm5003, %v4996, %v5000
    %v5005 = vand.u32 2147483647, %v4944
    %vm5006 = vcmp.eq.f32.partialorder %v5005, 8.507059e+37
    %v5007 = vand.u32 %v4944, 2147483648
    %v5008 = vor.u32 1.1754944e-38, %v5007
    %v5009 = vsel %vm5006, %v5008, %v5004
    %v5010 = vmul.f32 1.0, %v5009
    %v5011 = vrcp.pop %v4945
    %v5012 = vmul.f32 %v4945, %v5011
    %v5013 = vsub.f32 1.0, %v5012
    %v5014 = vmul.f32 %v5011, %v5013
    %v5015 = vadd.f32 %v5011, %v5014
    %vm5016 = vweird.f32 %v4945
    %vm5017 = vweird.f32 %v5011
    %vm5018 = vmor %vm5016, %vm5017
    %v5019 = vsel %vm5018, %v5011, %v5015
    %v5020 = vand.u32 2147483647, %v4945
    %vm5021 = vcmp.eq.f32.partialorder %v5020, 8.507059e+37
    %v5022 = vand.u32 %v4945, 2147483648
    %v5023 = vor.u32 1.1754944e-38, %v5022
    %v5024 = vsel %vm5021, %v5023, %v5019
    %v5025 = vmul.f32 1.0, %v5024
    %v5026 = vrcp.pop %v4946
    %v5027 = vmul.f32 %v4946, %v5026
    %v5028 = vsub.f32 1.0, %v5027
    %v5029 = vmul.f32 %v5026, %v5028
    %v5030 = vadd.f32 %v5026, %v5029
    %vm5031 = vweird.f32 %v4946
    %vm5032 = vweird.f32 %v5026
    %vm5033 = vmor %vm5031, %vm5032
    %v5034 = vsel %vm5033, %v5026, %v5030
    %v5035 = vand.u32 2147483647, %v4946
    %vm5036 = vcmp.eq.f32.partialorder %v5035, 8.507059e+37
    %v5037 = vand.u32 %v4946, 2147483648
    %v5038 = vor.u32 1.1754944e-38, %v5037
    %v5039 = vsel %vm5036, %v5038, %v5034
    %v5040 = vmul.f32 1.0, %v5039
    %v5041 = vrcp.pop %v4947
    %v5042 = vmul.f32 %v4947, %v5041
    %v5043 = vsub.f32 1.0, %v5042
    %v5044 = vmul.f32 %v5041, %v5043
    %v5045 = vadd.f32 %v5041, %v5044
    %vm5046 = vweird.f32 %v4947
    %vm5047 = vweird.f32 %v5041
    %vm5048 = vmor %vm5046, %vm5047
    %v5049 = vsel %vm5048, %v5041, %v5045
    %v5050 = vand.u32 2147483647, %v4947
    %vm5051 = vcmp.eq.f32.partialorder %v5050, 8.507059e+37
    %v5052 = vand.u32 %v4947, 2147483648
    %v5053 = vor.u32 1.1754944e-38, %v5052
    %v5054 = vsel %vm5051, %v5053, %v5049
    %v5055 = vmul.f32 1.0, %v5054
    %v5056 = vrcp.pop %v4948
    %v5057 = vmul.f32 %v4948, %v5056
    %v5058 = vsub.f32 1.0, %v5057
    %v5059 = vmul.f32 %v5056, %v5058
    %v5060 = vadd.f32 %v5056, %v5059
    %vm5061 = vweird.f32 %v4948
    %vm5062 = vweird.f32 %v5056
    %vm5063 = vmor %vm5061, %vm5062
    %v5064 = vsel %vm5063, %v5056, %v5060
    %v5065 = vand.u32 2147483647, %v4948
    %vm5066 = vcmp.eq.f32.partialorder %v5065, 8.507059e+37
    %v5067 = vand.u32 %v4948, 2147483648
    %v5068 = vor.u32 1.1754944e-38, %v5067
    %v5069 = vsel %vm5066, %v5068, %v5064
    %v5070 = vmul.f32 1.0, %v5069
    %v5071 = vrcp.pop %v4949
    %v5072 = vmul.f32 %v4949, %v5071
    %v5073 = vsub.f32 1.0, %v5072
    %v5074 = vmul.f32 %v5071, %v5073
    %v5075 = vadd.f32 %v5071, %v5074
    %vm5076 = vweird.f32 %v4949
    %vm5077 = vweird.f32 %v5071
    %vm5078 = vmor %vm5076, %vm5077
    %v5079 = vsel %vm5078, %v5071, %v5075
    %v5080 = vand.u32 2147483647, %v4949
    %vm5081 = vcmp.eq.f32.partialorder %v5080, 8.507059e+37
    %v5082 = vand.u32 %v4949, 2147483648
    %v5083 = vor.u32 1.1754944e-38, %v5082
    %v5084 = vsel %vm5081, %v5083, %v5079
    %v5085 = vmul.f32 1.0, %v5084
    %v5086 = vrcp.pop %v4950
    %v5087 = vmul.f32 %v4950, %v5086
    %v5088 = vsub.f32 1.0, %v5087
    %v5089 = vmul.f32 %v5086, %v5088
    %v5090 = vadd.f32 %v5086, %v5089
    %vm5091 = vweird.f32 %v4950
    %vm5092 = vweird.f32 %v5086
    %vm5093 = vmor %vm5091, %vm5092
    %v5094 = vsel %vm5093, %v5086, %v5090
    %v5095 = vand.u32 2147483647, %v4950
    %vm5096 = vcmp.eq.f32.partialorder %v5095, 8.507059e+37
    %v5097 = vand.u32 %v4950, 2147483648
    %v5098 = vor.u32 1.1754944e-38, %v5097
    %v5099 = vsel %vm5096, %v5098, %v5094
    %v5100 = vmul.f32 1.0, %v5099
    %v5101 = vmul.f32 %v4965, 1.0614054
    %v5102 = vmul.f32 %v4980, 1.0614054
    %v5103 = vmul.f32 %v4995, 1.0614054
    %v5104 = vmul.f32 %v5010, 1.0614054
    %v5105 = vmul.f32 %v5025, 1.0614054
    %v5106 = vmul.f32 %v5040, 1.0614054
    %v5107 = vmul.f32 %v5055, 1.0614054
    %v5108 = vmul.f32 %v5070, 1.0614054
    %v5109 = vmul.f32 %v5085, 1.0614054
    %v5110 = vmul.f32 %v5100, 1.0614054
    %v5111 = vadd.f32 %v5101, -1.4531521
    %v5112 = vadd.f32 %v5102, -1.4531521
    %v5113 = vadd.f32 %v5103, -1.4531521
    %v5114 = vadd.f32 %v5104, -1.4531521
    %v5115 = vadd.f32 %v5105, -1.4531521
    %v5116 = vadd.f32 %v5106, -1.4531521
    %v5117 = vadd.f32 %v5107, -1.4531521
    %v5118 = vadd.f32 %v5108, -1.4531521
    %v5119 = vadd.f32 %v5109, -1.4531521
    %v5120 = vadd.f32 %v5110, -1.4531521
    %v5121 = vmul.f32 %v5111, %v4965
    %v5122 = vmul.f32 %v5112, %v4980
    %v5123 = vmul.f32 %v5113, %v4995
    %v5124 = vmul.f32 %v5114, %v5010
    %v5125 = vmul.f32 %v5115, %v5025
    %v5126 = vmul.f32 %v5116, %v5040
    %v5127 = vmul.f32 %v5117, %v5055
    %v5128 = vmul.f32 %v5118, %v5070
    %v5129 = vmul.f32 %v5119, %v5085
    %v5130 = vmul.f32 %v5120, %v5100
    %v5131 = vadd.f32 %v5121, 1.4214138
    %v5132 = vadd.f32 %v5122, 1.4214138
    %v5133 = vadd.f32 %v5123, 1.4214138
    %v5134 = vadd.f32 %v5124, 1.4214138
    %v5135 = vadd.f32 %v5125, 1.4214138
    %v5136 = vadd.f32 %v5126, 1.4214138
    %v5137 = vadd.f32 %v5127, 1.4214138
    %v5138 = vadd.f32 %v5128, 1.4214138
    %v5139 = vadd.f32 %v5129, 1.4214138
    %v5140 = vadd.f32 %v5130, 1.4214138
    %v5141 = vmul.f32 %v5131, %v4965
    %v5142 = vmul.f32 %v5132, %v4980
    %v5143 = vmul.f32 %v5133, %v4995
    %v5144 = vmul.f32 %v5134, %v5010
    %v5145 = vmul.f32 %v5135, %v5025
    %v5146 = vmul.f32 %v5136, %v5040
    %v5147 = vmul.f32 %v5137, %v5055
    %v5148 = vmul.f32 %v5138, %v5070
    %v5149 = vmul.f32 %v5139, %v5085
    %v5150 = vmul.f32 %v5140, %v5100
    %v5151 = vadd.f32 %v5141, -0.28449672
    %v5152 = vadd.f32 %v5142, -0.28449672
    %v5153 = vadd.f32 %v5143, -0.28449672
    %v5154 = vadd.f32 %v5144, -0.28449672
    %v5155 = vadd.f32 %v5145, -0.28449672
    %v5156 = vadd.f32 %v5146, -0.28449672
    %v5157 = vadd.f32 %v5147, -0.28449672
    %v5158 = vadd.f32 %v5148, -0.28449672
    %v5159 = vadd.f32 %v5149, -0.28449672
    %v5160 = vadd.f32 %v5150, -0.28449672
    %v5161 = vmul.f32 %v5151, %v4965
    %v5162 = vmul.f32 %v5152, %v4980
    %v5163 = vmul.f32 %v5153, %v4995
    %v5164 = vmul.f32 %v5154, %v5010
    %v5165 = vmul.f32 %v5155, %v5025
    %v5166 = vmul.f32 %v5156, %v5040
    %v5167 = vmul.f32 %v5157, %v5055
    %v5168 = vmul.f32 %v5158, %v5070
    %v5169 = vmul.f32 %v5159, %v5085
    %v5170 = vmul.f32 %v5160, %v5100
    %v5171 = vadd.f32 %v5161, 0.2548296
    %v5172 = vadd.f32 %v5162, 0.2548296
    %v5173 = vadd.f32 %v5163, 0.2548296
    %v5174 = vadd.f32 %v5164, 0.2548296
    %v5175 = vadd.f32 %v5165, 0.2548296
    %v5176 = vadd.f32 %v5166, 0.2548296
    %v5177 = vadd.f32 %v5167, 0.2548296
    %v5178 = vadd.f32 %v5168, 0.2548296
    %v5179 = vadd.f32 %v5169, 0.2548296
    %v5180 = vadd.f32 %v5170, 0.2548296
    %v5181 = vmul.f32 %v5171, %v4965
    %v5182 = vmul.f32 %v5172, %v4980
    %v5183 = vmul.f32 %v5173, %v4995
    %v5184 = vmul.f32 %v5174, %v5010
    %v5185 = vmul.f32 %v5175, %v5025
    %v5186 = vmul.f32 %v5176, %v5040
    %v5187 = vmul.f32 %v5177, %v5055
    %v5188 = vmul.f32 %v5178, %v5070
    %v5189 = vmul.f32 %v5179, %v5085
    %v5190 = vmul.f32 %v5180, %v5100
    %v5191 = vsub.f32 0.0, %v4921
    %v5192 = vsub.f32 0.0, %v4922
    %v5193 = vsub.f32 0.0, %v4923
    %v5194 = vsub.f32 0.0, %v4924
    %v5195 = vsub.f32 0.0, %v4925
    %v5196 = vsub.f32 0.0, %v4926
    %v5197 = vsub.f32 0.0, %v4927
    %v5198 = vsub.f32 0.0, %v4928
    %v5199 = vsub.f32 0.0, %v4929
    %v5200 = vsub.f32 0.0, %v4930
    %v5201 = vmul.f32 %v5191, %v4921
    %v5202 = vmul.f32 %v5192, %v4922
    %v5203 = vmul.f32 %v5193, %v4923
    %v5204 = vmul.f32 %v5194, %v4924
    %v5205 = vmul.f32 %v5195, %v4925
    %v5206 = vmul.f32 %v5196, %v4926
    %v5207 = vmul.f32 %v5197, %v4927
    %v5208 = vmul.f32 %v5198, %v4928
    %v5209 = vmul.f32 %v5199, %v4929
    %v5210 = vmul.f32 %v5200, %v4930
    %v5211 = vmul.f32 %v5201, 1.442695
    %v5212 = vpow.pop %v5211
    %v5213 = vmul.f32 %v5202, 1.442695
    %v5214 = vpow.pop %v5213
    %v5215 = vmul.f32 %v5203, 1.442695
    %v5216 = vpow.pop %v5215
    %v5217 = vmul.f32 %v5204, 1.442695
    %v5218 = vpow.pop %v5217
    %v5219 = vmul.f32 %v5205, 1.442695
    %v5220 = vpow.pop %v5219
    %v5221 = vmul.f32 %v5206, 1.442695
    %v5222 = vpow.pop %v5221
    %v5223 = vmul.f32 %v5207, 1.442695
    %v5224 = vpow.pop %v5223
    %v5225 = vmul.f32 %v5208, 1.442695
    %v5226 = vpow.pop %v5225
    %v5227 = vmul.f32 %v5209, 1.442695
    %v5228 = vpow.pop %v5227
    %v5229 = vmul.f32 %v5210, 1.442695
    %v5230 = vpow.pop %v5229
    %v5231 = vmul.f32 %v5181, %v5212
    %v5232 = vmul.f32 %v5182, %v5214
    %v5233 = vmul.f32 %v5183, %v5216
    %v5234 = vmul.f32 %v5184, %v5218
    %v5235 = vmul.f32 %v5185, %v5220
    %v5236 = vmul.f32 %v5186, %v5222
    %v5237 = vmul.f32 %v5187, %v5224
    %v5238 = vmul.f32 %v5188, %v5226
    %v5239 = vmul.f32 %v5189, %v5228
    %v5240 = vmul.f32 %v5190, %v5230
    %v5241 = vsub.f32 1.0, %v5231
    %v5242 = vsub.f32 1.0, %v5232
    %v5243 = vsub.f32 1.0, %v5233
    %v5244 = vsub.f32 1.0, %v5234
    %v5245 = vsub.f32 1.0, %v5235
    %v5246 = vsub.f32 1.0, %v5236
    %v5247 = vsub.f32 1.0, %v5237
    %v5248 = vsub.f32 1.0, %v5238
    %v5249 = vsub.f32 1.0, %v5239
    %v5250 = vsub.f32 1.0, %v5240
    %v5251 = vmul.f32 %v4911, %v5241
    %v5252 = vmul.f32 %v4912, %v5242
    %v5253 = vmul.f32 %v4913, %v5243
    %v5254 = vmul.f32 %v4914, %v5244
    %v5255 = vmul.f32 %v4915, %v5245
    %v5256 = vmul.f32 %v4916, %v5246
    %v5257 = vmul.f32 %v4917, %v5247
    %v5258 = vmul.f32 %v4918, %v5248
    %v5259 = vmul.f32 %v4919, %v5249
    %v5260 = vmul.f32 %v4920, %v5250
    %v5261 = vadd.f32 %v5251, 1.0
    %v5262 = vadd.f32 %v5252, 1.0
    %v5263 = vadd.f32 %v5253, 1.0
    %v5264 = vadd.f32 %v5254, 1.0
    %v5265 = vadd.f32 %v5255, 1.0
    %v5266 = vadd.f32 %v5256, 1.0
    %v5267 = vadd.f32 %v5257, 1.0
    %v5268 = vadd.f32 %v5258, 1.0
    %v5269 = vadd.f32 %v5259, 1.0
    %v5270 = vadd.f32 %v5260, 1.0
    %v5271 = vmul.f32 %v4881, %v5261
    %v5272 = vmul.f32 %v4882, %v5262
    %v5273 = vmul.f32 %v4883, %v5263
    %v5274 = vmul.f32 %v4884, %v5264
    %v5275 = vmul.f32 %v4885, %v5265
    %v5276 = vmul.f32 %v4886, %v5266
    %v5277 = vmul.f32 %v4887, %v5267
    %v5278 = vmul.f32 %v4888, %v5268
    %v5279 = vmul.f32 %v4889, %v5269
    %v5280 = vmul.f32 %v4890, %v5270
    %s5281 = scalar_lea.vmem [#allocation6], 256
    %v5282 = vld [vmem:[%s5281] sm:$0xff]
    %v5283 = vld [vmem:[%s5281 + $0x8] sm:$0xff]
    %v5284 = vld [vmem:[%s5281 + $0x10] sm:$0xff]
    %v5285 = vld [vmem:[%s5281 + $0x18] sm:$0xff]
    %v5286 = vld [vmem:[%s5281 + $0x20] sm:$0xff]
    %v5287 = vld [vmem:[%s5281 + $0x28] sm:$0xff]
    %v5288 = vld [vmem:[%s5281 + $0x30] sm:$0xff]
    %v5289 = vld [vmem:[%s5281 + $0x38] sm:$0xff]
    %v5290 = vld [vmem:[%s5281 + $0x40] sm:$0xff]
    %v5291 = vld [vmem:[%s5281 + $0x48] sm:$0xff]
    %v5292 = vld [vmem:[%s5281 + $0x50] sm:$0xff]
    %v5293 = vld [vmem:[%s5281 + $0x58] sm:$0xff]
    %v5294 = vld [vmem:[%s5281 + $0x60] sm:$0xff]
    %v5295 = vld [vmem:[%s5281 + $0x68] sm:$0xff]
    %v5296 = vld [vmem:[%s5281 + $0x70] sm:$0xff]
    %v5297 = vld [vmem:[%s5281 + $0x78] sm:$0xff]
    %s5298 = scalar_lea.vmem %s5, 16
    %v5299 = vld [vmem:[%s5298] sm:$0x1]
    %v5300 = vperm.slane %v5299, 0
    %5301 = vmatpush.msra.mxu0 %v5297
    %5302 = vmatpush.msra.mxu0 %v5296
    %5303 = vmatpush.msra.mxu0 %v5295
    %5304 = vmatpush.msra.mxu0 %v5294
    %5305 = vmatpush.msra.mxu0 %v5293
    %5306 = vmatpush.msra.mxu0 %v5292
    %5307 = vmatpush.msra.mxu0 %v5291
    %5308 = vmatpush.msra.mxu0 %v5290
    %5309 = vmatpush.msra.mxu0 %v5289
    %5310 = vmatpush.msra.mxu0 %v5288
    %5311 = vmatpush.msra.mxu0 %v5287
    %5312 = vmatpush.msra.mxu0 %v5286
    %5313 = vmatpush.msra.mxu0 %v5285
    %5314 = vmatpush.msra.mxu0 %v5284
    %5315 = vmatpush.msra.mxu0 %v5283
    %5316 = vmatpush.msra.mxu0 %v5282
    %5317 = vmatmul.f32.gmra.mxu0 %v5271
    %v5318 = vpop.f32.mrf.mxu0
    %v5319 = vadd.f32 %v5300, %v5318
    %5320 = vmatmul.f32.gmra.mxu0 %v5272
    %v5321 = vpop.f32.mrf.mxu0
    %v5322 = vadd.f32 %v5300, %v5321
    %5323 = vmatmul.f32.gmra.mxu0 %v5273
    %v5324 = vpop.f32.mrf.mxu0
    %v5325 = vadd.f32 %v5300, %v5324
    %5326 = vmatmul.f32.gmra.mxu0 %v5274
    %v5327 = vpop.f32.mrf.mxu0
    %v5328 = vadd.f32 %v5300, %v5327
    %5329 = vmatmul.f32.gmra.mxu0 %v5275
    %v5330 = vpop.f32.mrf.mxu0
    %v5331 = vadd.f32 %v5300, %v5330
    %5332 = vmatmul.f32.gmra.mxu0 %v5276
    %v5333 = vpop.f32.mrf.mxu0
    %v5334 = vadd.f32 %v5300, %v5333
    %5335 = vmatmul.f32.gmra.mxu0 %v5277
    %v5336 = vpop.f32.mrf.mxu0
    %v5337 = vadd.f32 %v5300, %v5336
    %5338 = vmatmul.f32.gmra.mxu0 %v5278
    %v5339 = vpop.f32.mrf.mxu0
    %v5340 = vadd.f32 %v5300, %v5339
    %5341 = vmatmul.f32.gmra.mxu0 %v5279
    %v5342 = vpop.f32.mrf.mxu0
    %v5343 = vadd.f32 %v5300, %v5342
    %5344 = vmatmul.f32.gmra.mxu0 %v5280
    %v5345 = vpop.f32.mrf.mxu0
    %v5346 = vadd.f32 %v5300, %v5345
    %5347 = vdwg.mxu0
    %v5348 = vmul.f32 %v5319, 0.5
    %v5349 = vmul.f32 %v5322, 0.5
    %v5350 = vmul.f32 %v5325, 0.5
    %v5351 = vmul.f32 %v5328, 0.5
    %v5352 = vmul.f32 %v5331, 0.5
    %v5353 = vmul.f32 %v5334, 0.5
    %v5354 = vmul.f32 %v5337, 0.5
    %v5355 = vmul.f32 %v5340, 0.5
    %v5356 = vmul.f32 %v5343, 0.5
    %v5357 = vmul.f32 %v5346, 0.5
    %v5358 = vmul.f32 %v5319, 0.70710677
    %v5359 = vmul.f32 %v5322, 0.70710677
    %v5360 = vmul.f32 %v5325, 0.70710677
    %v5361 = vmul.f32 %v5328, 0.70710677
    %v5362 = vmul.f32 %v5331, 0.70710677
    %v5363 = vmul.f32 %v5334, 0.70710677
    %v5364 = vmul.f32 %v5337, 0.70710677
    %v5365 = vmul.f32 %v5340, 0.70710677
    %v5366 = vmul.f32 %v5343, 0.70710677
    %v5367 = vmul.f32 %v5346, 0.70710677
    %vm5368 = vcmp.ge.f32.partialorder %v5358, 0.0
    %vm5369 = vcmp.ge.f32.partialorder %v5359, 0.0
    %vm5370 = vcmp.ge.f32.partialorder %v5360, 0.0
    %vm5371 = vcmp.ge.f32.partialorder %v5361, 0.0
    %vm5372 = vcmp.ge.f32.partialorder %v5362, 0.0
    %vm5373 = vcmp.ge.f32.partialorder %v5363, 0.0
    %vm5374 = vcmp.ge.f32.partialorder %v5364, 0.0
    %vm5375 = vcmp.ge.f32.partialorder %v5365, 0.0
    %vm5376 = vcmp.ge.f32.partialorder %v5366, 0.0
    %vm5377 = vcmp.ge.f32.partialorder %v5367, 0.0
    %v5378 = vsel %vm5368, 1.0, -1.0
    %v5379 = vsel %vm5369, 1.0, -1.0
    %v5380 = vsel %vm5370, 1.0, -1.0
    %v5381 = vsel %vm5371, 1.0, -1.0
    %v5382 = vsel %vm5372, 1.0, -1.0
    %v5383 = vsel %vm5373, 1.0, -1.0
    %v5384 = vsel %vm5374, 1.0, -1.0
    %v5385 = vsel %vm5375, 1.0, -1.0
    %v5386 = vsel %vm5376, 1.0, -1.0
    %v5387 = vsel %vm5377, 1.0, -1.0
    %v5388 = vand.u32 2147483647, %v5358
    %v5389 = vand.u32 2147483647, %v5359
    %v5390 = vand.u32 2147483647, %v5360
    %v5391 = vand.u32 2147483647, %v5361
    %v5392 = vand.u32 2147483647, %v5362
    %v5393 = vand.u32 2147483647, %v5363
    %v5394 = vand.u32 2147483647, %v5364
    %v5395 = vand.u32 2147483647, %v5365
    %v5396 = vand.u32 2147483647, %v5366
    %v5397 = vand.u32 2147483647, %v5367
    %v5398 = vmul.f32 %v5388, 0.3275911
    %v5399 = vmul.f32 %v5389, 0.3275911
    %v5400 = vmul.f32 %v5390, 0.3275911
    %v5401 = vmul.f32 %v5391, 0.3275911
    %v5402 = vmul.f32 %v5392, 0.3275911
    %v5403 = vmul.f32 %v5393, 0.3275911
    %v5404 = vmul.f32 %v5394, 0.3275911
    %v5405 = vmul.f32 %v5395, 0.3275911
    %v5406 = vmul.f32 %v5396, 0.3275911
    %v5407 = vmul.f32 %v5397, 0.3275911
    %v5408 = vadd.f32 %v5398, 1.0
    %v5409 = vadd.f32 %v5399, 1.0
    %v5410 = vadd.f32 %v5400, 1.0
    %v5411 = vadd.f32 %v5401, 1.0
    %v5412 = vadd.f32 %v5402, 1.0
    %v5413 = vadd.f32 %v5403, 1.0
    %v5414 = vadd.f32 %v5404, 1.0
    %v5415 = vadd.f32 %v5405, 1.0
    %v5416 = vadd.f32 %v5406, 1.0
    %v5417 = vadd.f32 %v5407, 1.0
    %v5418 = vrcp.pop %v5408
    %v5419 = vmul.f32 %v5408, %v5418
    %v5420 = vsub.f32 1.0, %v5419
    %v5421 = vmul.f32 %v5418, %v5420
    %v5422 = vadd.f32 %v5418, %v5421
    %vm5423 = vweird.f32 %v5408
    %vm5424 = vweird.f32 %v5418
    %vm5425 = vmor %vm5423, %vm5424
    %v5426 = vsel %vm5425, %v5418, %v5422
    %v5427 = vand.u32 2147483647, %v5408
    %vm5428 = vcmp.eq.f32.partialorder %v5427, 8.507059e+37
    %v5429 = vand.u32 %v5408, 2147483648
    %v5430 = vor.u32 1.1754944e-38, %v5429
    %v5431 = vsel %vm5428, %v5430, %v5426
    %v5432 = vmul.f32 1.0, %v5431
    %v5433 = vrcp.pop %v5409
    %v5434 = vmul.f32 %v5409, %v5433
    %v5435 = vsub.f32 1.0, %v5434
    %v5436 = vmul.f32 %v5433, %v5435
    %v5437 = vadd.f32 %v5433, %v5436
    %vm5438 = vweird.f32 %v5409
    %vm5439 = vweird.f32 %v5433
    %vm5440 = vmor %vm5438, %vm5439
    %v5441 = vsel %vm5440, %v5433, %v5437
    %v5442 = vand.u32 2147483647, %v5409
    %vm5443 = vcmp.eq.f32.partialorder %v5442, 8.507059e+37
    %v5444 = vand.u32 %v5409, 2147483648
    %v5445 = vor.u32 1.1754944e-38, %v5444
    %v5446 = vsel %vm5443, %v5445, %v5441
    %v5447 = vmul.f32 1.0, %v5446
    %v5448 = vrcp.pop %v5410
    %v5449 = vmul.f32 %v5410, %v5448
    %v5450 = vsub.f32 1.0, %v5449
    %v5451 = vmul.f32 %v5448, %v5450
    %v5452 = vadd.f32 %v5448, %v5451
    %vm5453 = vweird.f32 %v5410
    %vm5454 = vweird.f32 %v5448
    %vm5455 = vmor %vm5453, %vm5454
    %v5456 = vsel %vm5455, %v5448, %v5452
    %v5457 = vand.u32 2147483647, %v5410
    %vm5458 = vcmp.eq.f32.partialorder %v5457, 8.507059e+37
    %v5459 = vand.u32 %v5410, 2147483648
    %v5460 = vor.u32 1.1754944e-38, %v5459
    %v5461 = vsel %vm5458, %v5460, %v5456
    %v5462 = vmul.f32 1.0, %v5461
    %v5463 = vrcp.pop %v5411
    %v5464 = vmul.f32 %v5411, %v5463
    %v5465 = vsub.f32 1.0, %v5464
    %v5466 = vmul.f32 %v5463, %v5465
    %v5467 = vadd.f32 %v5463, %v5466
    %vm5468 = vweird.f32 %v5411
    %vm5469 = vweird.f32 %v5463
    %vm5470 = vmor %vm5468, %vm5469
    %v5471 = vsel %vm5470, %v5463, %v5467
    %v5472 = vand.u32 2147483647, %v5411
    %vm5473 = vcmp.eq.f32.partialorder %v5472, 8.507059e+37
    %v5474 = vand.u32 %v5411, 2147483648
    %v5475 = vor.u32 1.1754944e-38, %v5474
    %v5476 = vsel %vm5473, %v5475, %v5471
    %v5477 = vmul.f32 1.0, %v5476
    %v5478 = vrcp.pop %v5412
    %v5479 = vmul.f32 %v5412, %v5478
    %v5480 = vsub.f32 1.0, %v5479
    %v5481 = vmul.f32 %v5478, %v5480
    %v5482 = vadd.f32 %v5478, %v5481
    %vm5483 = vweird.f32 %v5412
    %vm5484 = vweird.f32 %v5478
    %vm5485 = vmor %vm5483, %vm5484
    %v5486 = vsel %vm5485, %v5478, %v5482
    %v5487 = vand.u32 2147483647, %v5412
    %vm5488 = vcmp.eq.f32.partialorder %v5487, 8.507059e+37
    %v5489 = vand.u32 %v5412, 2147483648
    %v5490 = vor.u32 1.1754944e-38, %v5489
    %v5491 = vsel %vm5488, %v5490, %v5486
    %v5492 = vmul.f32 1.0, %v5491
    %v5493 = vrcp.pop %v5413
    %v5494 = vmul.f32 %v5413, %v5493
    %v5495 = vsub.f32 1.0, %v5494
    %v5496 = vmul.f32 %v5493, %v5495
    %v5497 = vadd.f32 %v5493, %v5496
    %vm5498 = vweird.f32 %v5413
    %vm5499 = vweird.f32 %v5493
    %vm5500 = vmor %vm5498, %vm5499
    %v5501 = vsel %vm5500, %v5493, %v5497
    %v5502 = vand.u32 2147483647, %v5413
    %vm5503 = vcmp.eq.f32.partialorder %v5502, 8.507059e+37
    %v5504 = vand.u32 %v5413, 2147483648
    %v5505 = vor.u32 1.1754944e-38, %v5504
    %v5506 = vsel %vm5503, %v5505, %v5501
    %v5507 = vmul.f32 1.0, %v5506
    %v5508 = vrcp.pop %v5414
    %v5509 = vmul.f32 %v5414, %v5508
    %v5510 = vsub.f32 1.0, %v5509
    %v5511 = vmul.f32 %v5508, %v5510
    %v5512 = vadd.f32 %v5508, %v5511
    %vm5513 = vweird.f32 %v5414
    %vm5514 = vweird.f32 %v5508
    %vm5515 = vmor %vm5513, %vm5514
    %v5516 = vsel %vm5515, %v5508, %v5512
    %v5517 = vand.u32 2147483647, %v5414
    %vm5518 = vcmp.eq.f32.partialorder %v5517, 8.507059e+37
    %v5519 = vand.u32 %v5414, 2147483648
    %v5520 = vor.u32 1.1754944e-38, %v5519
    %v5521 = vsel %vm5518, %v5520, %v5516
    %v5522 = vmul.f32 1.0, %v5521
    %v5523 = vrcp.pop %v5415
    %v5524 = vmul.f32 %v5415, %v5523
    %v5525 = vsub.f32 1.0, %v5524
    %v5526 = vmul.f32 %v5523, %v5525
    %v5527 = vadd.f32 %v5523, %v5526
    %vm5528 = vweird.f32 %v5415
    %vm5529 = vweird.f32 %v5523
    %vm5530 = vmor %vm5528, %vm5529
    %v5531 = vsel %vm5530, %v5523, %v5527
    %v5532 = vand.u32 2147483647, %v5415
    %vm5533 = vcmp.eq.f32.partialorder %v5532, 8.507059e+37
    %v5534 = vand.u32 %v5415, 2147483648
    %v5535 = vor.u32 1.1754944e-38, %v5534
    %v5536 = vsel %vm5533, %v5535, %v5531
    %v5537 = vmul.f32 1.0, %v5536
    %v5538 = vrcp.pop %v5416
    %v5539 = vmul.f32 %v5416, %v5538
    %v5540 = vsub.f32 1.0, %v5539
    %v5541 = vmul.f32 %v5538, %v5540
    %v5542 = vadd.f32 %v5538, %v5541
    %vm5543 = vweird.f32 %v5416
    %vm5544 = vweird.f32 %v5538
    %vm5545 = vmor %vm5543, %vm5544
    %v5546 = vsel %vm5545, %v5538, %v5542
    %v5547 = vand.u32 2147483647, %v5416
    %vm5548 = vcmp.eq.f32.partialorder %v5547, 8.507059e+37
    %v5549 = vand.u32 %v5416, 2147483648
    %v5550 = vor.u32 1.1754944e-38, %v5549
    %v5551 = vsel %vm5548, %v5550, %v5546
    %v5552 = vmul.f32 1.0, %v5551
    %v5553 = vrcp.pop %v5417
    %v5554 = vmul.f32 %v5417, %v5553
    %v5555 = vsub.f32 1.0, %v5554
    %v5556 = vmul.f32 %v5553, %v5555
    %v5557 = vadd.f32 %v5553, %v5556
    %vm5558 = vweird.f32 %v5417
    %vm5559 = vweird.f32 %v5553
    %vm5560 = vmor %vm5558, %vm5559
    %v5561 = vsel %vm5560, %v5553, %v5557
    %v5562 = vand.u32 2147483647, %v5417
    %vm5563 = vcmp.eq.f32.partialorder %v5562, 8.507059e+37
    %v5564 = vand.u32 %v5417, 2147483648
    %v5565 = vor.u32 1.1754944e-38, %v5564
    %v5566 = vsel %vm5563, %v5565, %v5561
    %v5567 = vmul.f32 1.0, %v5566
    %v5568 = vmul.f32 %v5432, 1.0614054
    %v5569 = vmul.f32 %v5447, 1.0614054
    %v5570 = vmul.f32 %v5462, 1.0614054
    %v5571 = vmul.f32 %v5477, 1.0614054
    %v5572 = vmul.f32 %v5492, 1.0614054
    %v5573 = vmul.f32 %v5507, 1.0614054
    %v5574 = vmul.f32 %v5522, 1.0614054
    %v5575 = vmul.f32 %v5537, 1.0614054
    %v5576 = vmul.f32 %v5552, 1.0614054
    %v5577 = vmul.f32 %v5567, 1.0614054
    %v5578 = vadd.f32 %v5568, -1.4531521
    %v5579 = vadd.f32 %v5569, -1.4531521
    %v5580 = vadd.f32 %v5570, -1.4531521
    %v5581 = vadd.f32 %v5571, -1.4531521
    %v5582 = vadd.f32 %v5572, -1.4531521
    %v5583 = vadd.f32 %v5573, -1.4531521
    %v5584 = vadd.f32 %v5574, -1.4531521
    %v5585 = vadd.f32 %v5575, -1.4531521
    %v5586 = vadd.f32 %v5576, -1.4531521
    %v5587 = vadd.f32 %v5577, -1.4531521
    %v5588 = vmul.f32 %v5578, %v5432
    %v5589 = vmul.f32 %v5579, %v5447
    %v5590 = vmul.f32 %v5580, %v5462
    %v5591 = vmul.f32 %v5581, %v5477
    %v5592 = vmul.f32 %v5582, %v5492
    %v5593 = vmul.f32 %v5583, %v5507
    %v5594 = vmul.f32 %v5584, %v5522
    %v5595 = vmul.f32 %v5585, %v5537
    %v5596 = vmul.f32 %v5586, %v5552
    %v5597 = vmul.f32 %v5587, %v5567
    %v5598 = vadd.f32 %v5588, 1.4214138
    %v5599 = vadd.f32 %v5589, 1.4214138
    %v5600 = vadd.f32 %v5590, 1.4214138
    %v5601 = vadd.f32 %v5591, 1.4214138
    %v5602 = vadd.f32 %v5592, 1.4214138
    %v5603 = vadd.f32 %v5593, 1.4214138
    %v5604 = vadd.f32 %v5594, 1.4214138
    %v5605 = vadd.f32 %v5595, 1.4214138
    %v5606 = vadd.f32 %v5596, 1.4214138
    %v5607 = vadd.f32 %v5597, 1.4214138
    %v5608 = vmul.f32 %v5598, %v5432
    %v5609 = vmul.f32 %v5599, %v5447
    %v5610 = vmul.f32 %v5600, %v5462
    %v5611 = vmul.f32 %v5601, %v5477
    %v5612 = vmul.f32 %v5602, %v5492
    %v5613 = vmul.f32 %v5603, %v5507
    %v5614 = vmul.f32 %v5604, %v5522
    %v5615 = vmul.f32 %v5605, %v5537
    %v5616 = vmul.f32 %v5606, %v5552
    %v5617 = vmul.f32 %v5607, %v5567
    %v5618 = vadd.f32 %v5608, -0.28449672
    %v5619 = vadd.f32 %v5609, -0.28449672
    %v5620 = vadd.f32 %v5610, -0.28449672
    %v5621 = vadd.f32 %v5611, -0.28449672
    %v5622 = vadd.f32 %v5612, -0.28449672
    %v5623 = vadd.f32 %v5613, -0.28449672
    %v5624 = vadd.f32 %v5614, -0.28449672
    %v5625 = vadd.f32 %v5615, -0.28449672
    %v5626 = vadd.f32 %v5616, -0.28449672
    %v5627 = vadd.f32 %v5617, -0.28449672
    %v5628 = vmul.f32 %v5618, %v5432
    %v5629 = vmul.f32 %v5619, %v5447
    %v5630 = vmul.f32 %v5620, %v5462
    %v5631 = vmul.f32 %v5621, %v5477
    %v5632 = vmul.f32 %v5622, %v5492
    %v5633 = vmul.f32 %v5623, %v5507
    %v5634 = vmul.f32 %v5624, %v5522
    %v5635 = vmul.f32 %v5625, %v5537
    %v5636 = vmul.f32 %v5626, %v5552
    %v5637 = vmul.f32 %v5627, %v5567
    %v5638 = vadd.f32 %v5628, 0.2548296
    %v5639 = vadd.f32 %v5629, 0.2548296
    %v5640 = vadd.f32 %v5630, 0.2548296
    %v5641 = vadd.f32 %v5631, 0.2548296
    %v5642 = vadd.f32 %v5632, 0.2548296
    %v5643 = vadd.f32 %v5633, 0.2548296
    %v5644 = vadd.f32 %v5634, 0.2548296
    %v5645 = vadd.f32 %v5635, 0.2548296
    %v5646 = vadd.f32 %v5636, 0.2548296
    %v5647 = vadd.f32 %v5637, 0.2548296
    %v5648 = vmul.f32 %v5638, %v5432
    %v5649 = vmul.f32 %v5639, %v5447
    %v5650 = vmul.f32 %v5640, %v5462
    %v5651 = vmul.f32 %v5641, %v5477
    %v5652 = vmul.f32 %v5642, %v5492
    %v5653 = vmul.f32 %v5643, %v5507
    %v5654 = vmul.f32 %v5644, %v5522
    %v5655 = vmul.f32 %v5645, %v5537
    %v5656 = vmul.f32 %v5646, %v5552
    %v5657 = vmul.f32 %v5647, %v5567
    %v5658 = vsub.f32 0.0, %v5388
    %v5659 = vsub.f32 0.0, %v5389
    %v5660 = vsub.f32 0.0, %v5390
    %v5661 = vsub.f32 0.0, %v5391
    %v5662 = vsub.f32 0.0, %v5392
    %v5663 = vsub.f32 0.0, %v5393
    %v5664 = vsub.f32 0.0, %v5394
    %v5665 = vsub.f32 0.0, %v5395
    %v5666 = vsub.f32 0.0, %v5396
    %v5667 = vsub.f32 0.0, %v5397
    %v5668 = vmul.f32 %v5658, %v5388
    %v5669 = vmul.f32 %v5659, %v5389
    %v5670 = vmul.f32 %v5660, %v5390
    %v5671 = vmul.f32 %v5661, %v5391
    %v5672 = vmul.f32 %v5662, %v5392
    %v5673 = vmul.f32 %v5663, %v5393
    %v5674 = vmul.f32 %v5664, %v5394
    %v5675 = vmul.f32 %v5665, %v5395
    %v5676 = vmul.f32 %v5666, %v5396
    %v5677 = vmul.f32 %v5667, %v5397
    %v5678 = vmul.f32 %v5668, 1.442695
    %v5679 = vpow.pop %v5678
    %v5680 = vmul.f32 %v5669, 1.442695
    %v5681 = vpow.pop %v5680
    %v5682 = vmul.f32 %v5670, 1.442695
    %v5683 = vpow.pop %v5682
    %v5684 = vmul.f32 %v5671, 1.442695
    %v5685 = vpow.pop %v5684
    %v5686 = vmul.f32 %v5672, 1.442695
    %v5687 = vpow.pop %v5686
    %v5688 = vmul.f32 %v5673, 1.442695
    %v5689 = vpow.pop %v5688
    %v5690 = vmul.f32 %v5674, 1.442695
    %v5691 = vpow.pop %v5690
    %v5692 = vmul.f32 %v5675, 1.442695
    %v5693 = vpow.pop %v5692
    %v5694 = vmul.f32 %v5676, 1.442695
    %v5695 = vpow.pop %v5694
    %v5696 = vmul.f32 %v5677, 1.442695
    %v5697 = vpow.pop %v5696
    %v5698 = vmul.f32 %v5648, %v5679
    %v5699 = vmul.f32 %v5649, %v5681
    %v5700 = vmul.f32 %v5650, %v5683
    %v5701 = vmul.f32 %v5651, %v5685
    %v5702 = vmul.f32 %v5652, %v5687
    %v5703 = vmul.f32 %v5653, %v5689
    %v5704 = vmul.f32 %v5654, %v5691
    %v5705 = vmul.f32 %v5655, %v5693
    %v5706 = vmul.f32 %v5656, %v5695
    %v5707 = vmul.f32 %v5657, %v5697
    %v5708 = vsub.f32 1.0, %v5698
    %v5709 = vsub.f32 1.0, %v5699
    %v5710 = vsub.f32 1.0, %v5700
    %v5711 = vsub.f32 1.0, %v5701
    %v5712 = vsub.f32 1.0, %v5702
    %v5713 = vsub.f32 1.0, %v5703
    %v5714 = vsub.f32 1.0, %v5704
    %v5715 = vsub.f32 1.0, %v5705
    %v5716 = vsub.f32 1.0, %v5706
    %v5717 = vsub.f32 1.0, %v5707
    %v5718 = vmul.f32 %v5378, %v5708
    %v5719 = vmul.f32 %v5379, %v5709
    %v5720 = vmul.f32 %v5380, %v5710
    %v5721 = vmul.f32 %v5381, %v5711
    %v5722 = vmul.f32 %v5382, %v5712
    %v5723 = vmul.f32 %v5383, %v5713
    %v5724 = vmul.f32 %v5384, %v5714
    %v5725 = vmul.f32 %v5385, %v5715
    %v5726 = vmul.f32 %v5386, %v5716
    %v5727 = vmul.f32 %v5387, %v5717
    %v5728 = vadd.f32 %v5718, 1.0
    %v5729 = vadd.f32 %v5719, 1.0
    %v5730 = vadd.f32 %v5720, 1.0
    %v5731 = vadd.f32 %v5721, 1.0
    %v5732 = vadd.f32 %v5722, 1.0
    %v5733 = vadd.f32 %v5723, 1.0
    %v5734 = vadd.f32 %v5724, 1.0
    %v5735 = vadd.f32 %v5725, 1.0
    %v5736 = vadd.f32 %v5726, 1.0
    %v5737 = vadd.f32 %v5727, 1.0
    %v5738 = vmul.f32 %v5348, %v5728
    %v5739 = vmul.f32 %v5349, %v5729
    %v5740 = vmul.f32 %v5350, %v5730
    %v5741 = vmul.f32 %v5351, %v5731
    %v5742 = vmul.f32 %v5352, %v5732
    %v5743 = vmul.f32 %v5353, %v5733
    %v5744 = vmul.f32 %v5354, %v5734
    %v5745 = vmul.f32 %v5355, %v5735
    %v5746 = vmul.f32 %v5356, %v5736
    %v5747 = vmul.f32 %v5357, %v5737
    %s5748 = scalar_lea.vmem [#allocation6], 384
    %v5749 = vld [vmem:[%s5748] sm:$0xff]
    %v5750 = vld [vmem:[%s5748 + $0x8] sm:$0xff]
    %v5751 = vld [vmem:[%s5748 + $0x10] sm:$0xff]
    %v5752 = vld [vmem:[%s5748 + $0x18] sm:$0xff]
    %v5753 = vld [vmem:[%s5748 + $0x20] sm:$0xff]
    %v5754 = vld [vmem:[%s5748 + $0x28] sm:$0xff]
    %v5755 = vld [vmem:[%s5748 + $0x30] sm:$0xff]
    %v5756 = vld [vmem:[%s5748 + $0x38] sm:$0xff]
    %v5757 = vld [vmem:[%s5748 + $0x40] sm:$0xff]
    %v5758 = vld [vmem:[%s5748 + $0x48] sm:$0xff]
    %v5759 = vld [vmem:[%s5748 + $0x50] sm:$0xff]
    %v5760 = vld [vmem:[%s5748 + $0x58] sm:$0xff]
    %v5761 = vld [vmem:[%s5748 + $0x60] sm:$0xff]
    %v5762 = vld [vmem:[%s5748 + $0x68] sm:$0xff]
    %v5763 = vld [vmem:[%s5748 + $0x70] sm:$0xff]
    %v5764 = vld [vmem:[%s5748 + $0x78] sm:$0xff]
    %s5765 = scalar_lea.vmem %s5, 24
    %v5766 = vld [vmem:[%s5765] sm:$0x1]
    %v5767 = vperm.slane %v5766, 0
    %5768 = vmatpush.msra.mxu0 %v5764
    %5769 = vmatpush.msra.mxu0 %v5763
    %5770 = vmatpush.msra.mxu0 %v5762
    %5771 = vmatpush.msra.mxu0 %v5761
    %5772 = vmatpush.msra.mxu0 %v5760
    %5773 = vmatpush.msra.mxu0 %v5759
    %5774 = vmatpush.msra.mxu0 %v5758
    %5775 = vmatpush.msra.mxu0 %v5757
    %5776 = vmatpush.msra.mxu0 %v5756
    %5777 = vmatpush.msra.mxu0 %v5755
    %5778 = vmatpush.msra.mxu0 %v5754
    %5779 = vmatpush.msra.mxu0 %v5753
    %5780 = vmatpush.msra.mxu0 %v5752
    %5781 = vmatpush.msra.mxu0 %v5751
    %5782 = vmatpush.msra.mxu0 %v5750
    %5783 = vmatpush.msra.mxu0 %v5749
    %5784 = vmatmul.f32.gmra.mxu0 %v5738
    %v5785 = vpop.f32.mrf.mxu0
    %v5786 = vadd.f32 %v5767, %v5785
    %5787 = vmatmul.f32.gmra.mxu0 %v5739
    %v5788 = vpop.f32.mrf.mxu0
    %v5789 = vadd.f32 %v5767, %v5788
    %5790 = vmatmul.f32.gmra.mxu0 %v5740
    %v5791 = vpop.f32.mrf.mxu0
    %v5792 = vadd.f32 %v5767, %v5791
    %5793 = vmatmul.f32.gmra.mxu0 %v5741
    %v5794 = vpop.f32.mrf.mxu0
    %v5795 = vadd.f32 %v5767, %v5794
    %5796 = vmatmul.f32.gmra.mxu0 %v5742
    %v5797 = vpop.f32.mrf.mxu0
    %v5798 = vadd.f32 %v5767, %v5797
    %5799 = vmatmul.f32.gmra.mxu0 %v5743
    %v5800 = vpop.f32.mrf.mxu0
    %v5801 = vadd.f32 %v5767, %v5800
    %5802 = vmatmul.f32.gmra.mxu0 %v5744
    %v5803 = vpop.f32.mrf.mxu0
    %v5804 = vadd.f32 %v5767, %v5803
    %5805 = vmatmul.f32.gmra.mxu0 %v5745
    %v5806 = vpop.f32.mrf.mxu0
    %v5807 = vadd.f32 %v5767, %v5806
    %5808 = vmatmul.f32.gmra.mxu0 %v5746
    %v5809 = vpop.f32.mrf.mxu0
    %v5810 = vadd.f32 %v5767, %v5809
    %5811 = vmatmul.f32.gmra.mxu0 %v5747
    %v5812 = vpop.f32.mrf.mxu0
    %v5813 = vadd.f32 %v5767, %v5812
    %5814 = vdwg.mxu0
    %v5815 = vmul.f32 %v5786, 0.5
    %v5816 = vmul.f32 %v5789, 0.5
    %v5817 = vmul.f32 %v5792, 0.5
    %v5818 = vmul.f32 %v5795, 0.5
    %v5819 = vmul.f32 %v5798, 0.5
    %v5820 = vmul.f32 %v5801, 0.5
    %v5821 = vmul.f32 %v5804, 0.5
    %v5822 = vmul.f32 %v5807, 0.5
    %v5823 = vmul.f32 %v5810, 0.5
    %v5824 = vmul.f32 %v5813, 0.5
    %v5825 = vmul.f32 %v5786, 0.70710677
    %v5826 = vmul.f32 %v5789, 0.70710677
    %v5827 = vmul.f32 %v5792, 0.70710677
    %v5828 = vmul.f32 %v5795, 0.70710677
    %v5829 = vmul.f32 %v5798, 0.70710677
    %v5830 = vmul.f32 %v5801, 0.70710677
    %v5831 = vmul.f32 %v5804, 0.70710677
    %v5832 = vmul.f32 %v5807, 0.70710677
    %v5833 = vmul.f32 %v5810, 0.70710677
    %v5834 = vmul.f32 %v5813, 0.70710677
    %vm5835 = vcmp.ge.f32.partialorder %v5825, 0.0
    %vm5836 = vcmp.ge.f32.partialorder %v5826, 0.0
    %vm5837 = vcmp.ge.f32.partialorder %v5827, 0.0
    %vm5838 = vcmp.ge.f32.partialorder %v5828, 0.0
    %vm5839 = vcmp.ge.f32.partialorder %v5829, 0.0
    %vm5840 = vcmp.ge.f32.partialorder %v5830, 0.0
    %vm5841 = vcmp.ge.f32.partialorder %v5831, 0.0
    %vm5842 = vcmp.ge.f32.partialorder %v5832, 0.0
    %vm5843 = vcmp.ge.f32.partialorder %v5833, 0.0
    %vm5844 = vcmp.ge.f32.partialorder %v5834, 0.0
    %v5845 = vsel %vm5835, 1.0, -1.0
    %v5846 = vsel %vm5836, 1.0, -1.0
    %v5847 = vsel %vm5837, 1.0, -1.0
    %v5848 = vsel %vm5838, 1.0, -1.0
    %v5849 = vsel %vm5839, 1.0, -1.0
    %v5850 = vsel %vm5840, 1.0, -1.0
    %v5851 = vsel %vm5841, 1.0, -1.0
    %v5852 = vsel %vm5842, 1.0, -1.0
    %v5853 = vsel %vm5843, 1.0, -1.0
    %v5854 = vsel %vm5844, 1.0, -1.0
    %v5855 = vand.u32 2147483647, %v5825
    %v5856 = vand.u32 2147483647, %v5826
    %v5857 = vand.u32 2147483647, %v5827
    %v5858 = vand.u32 2147483647, %v5828
    %v5859 = vand.u32 2147483647, %v5829
    %v5860 = vand.u32 2147483647, %v5830
    %v5861 = vand.u32 2147483647, %v5831
    %v5862 = vand.u32 2147483647, %v5832
    %v5863 = vand.u32 2147483647, %v5833
    %v5864 = vand.u32 2147483647, %v5834
    %v5865 = vmul.f32 %v5855, 0.3275911
    %v5866 = vmul.f32 %v5856, 0.3275911
    %v5867 = vmul.f32 %v5857, 0.3275911
    %v5868 = vmul.f32 %v5858, 0.3275911
    %v5869 = vmul.f32 %v5859, 0.3275911
    %v5870 = vmul.f32 %v5860, 0.3275911
    %v5871 = vmul.f32 %v5861, 0.3275911
    %v5872 = vmul.f32 %v5862, 0.3275911
    %v5873 = vmul.f32 %v5863, 0.3275911
    %v5874 = vmul.f32 %v5864, 0.3275911
    %v5875 = vadd.f32 %v5865, 1.0
    %v5876 = vadd.f32 %v5866, 1.0
    %v5877 = vadd.f32 %v5867, 1.0
    %v5878 = vadd.f32 %v5868, 1.0
    %v5879 = vadd.f32 %v5869, 1.0
    %v5880 = vadd.f32 %v5870, 1.0
    %v5881 = vadd.f32 %v5871, 1.0
    %v5882 = vadd.f32 %v5872, 1.0
    %v5883 = vadd.f32 %v5873, 1.0
    %v5884 = vadd.f32 %v5874, 1.0
    %v5885 = vrcp.pop %v5875
    %v5886 = vmul.f32 %v5875, %v5885
    %v5887 = vsub.f32 1.0, %v5886
    %v5888 = vmul.f32 %v5885, %v5887
    %v5889 = vadd.f32 %v5885, %v5888
    %vm5890 = vweird.f32 %v5875
    %vm5891 = vweird.f32 %v5885
    %vm5892 = vmor %vm5890, %vm5891
    %v5893 = vsel %vm5892, %v5885, %v5889
    %v5894 = vand.u32 2147483647, %v5875
    %vm5895 = vcmp.eq.f32.partialorder %v5894, 8.507059e+37
    %v5896 = vand.u32 %v5875, 2147483648
    %v5897 = vor.u32 1.1754944e-38, %v5896
    %v5898 = vsel %vm5895, %v5897, %v5893
    %v5899 = vmul.f32 1.0, %v5898
    %v5900 = vrcp.pop %v5876
    %v5901 = vmul.f32 %v5876, %v5900
    %v5902 = vsub.f32 1.0, %v5901
    %v5903 = vmul.f32 %v5900, %v5902
    %v5904 = vadd.f32 %v5900, %v5903
    %vm5905 = vweird.f32 %v5876
    %vm5906 = vweird.f32 %v5900
    %vm5907 = vmor %vm5905, %vm5906
    %v5908 = vsel %vm5907, %v5900, %v5904
    %v5909 = vand.u32 2147483647, %v5876
    %vm5910 = vcmp.eq.f32.partialorder %v5909, 8.507059e+37
    %v5911 = vand.u32 %v5876, 2147483648
    %v5912 = vor.u32 1.1754944e-38, %v5911
    %v5913 = vsel %vm5910, %v5912, %v5908
    %v5914 = vmul.f32 1.0, %v5913
    %v5915 = vrcp.pop %v5877
    %v5916 = vmul.f32 %v5877, %v5915
    %v5917 = vsub.f32 1.0, %v5916
    %v5918 = vmul.f32 %v5915, %v5917
    %v5919 = vadd.f32 %v5915, %v5918
    %vm5920 = vweird.f32 %v5877
    %vm5921 = vweird.f32 %v5915
    %vm5922 = vmor %vm5920, %vm5921
    %v5923 = vsel %vm5922, %v5915, %v5919
    %v5924 = vand.u32 2147483647, %v5877
    %vm5925 = vcmp.eq.f32.partialorder %v5924, 8.507059e+37
    %v5926 = vand.u32 %v5877, 2147483648
    %v5927 = vor.u32 1.1754944e-38, %v5926
    %v5928 = vsel %vm5925, %v5927, %v5923
    %v5929 = vmul.f32 1.0, %v5928
    %v5930 = vrcp.pop %v5878
    %v5931 = vmul.f32 %v5878, %v5930
    %v5932 = vsub.f32 1.0, %v5931
    %v5933 = vmul.f32 %v5930, %v5932
    %v5934 = vadd.f32 %v5930, %v5933
    %vm5935 = vweird.f32 %v5878
    %vm5936 = vweird.f32 %v5930
    %vm5937 = vmor %vm5935, %vm5936
    %v5938 = vsel %vm5937, %v5930, %v5934
    %v5939 = vand.u32 2147483647, %v5878
    %vm5940 = vcmp.eq.f32.partialorder %v5939, 8.507059e+37
    %v5941 = vand.u32 %v5878, 2147483648
    %v5942 = vor.u32 1.1754944e-38, %v5941
    %v5943 = vsel %vm5940, %v5942, %v5938
    %v5944 = vmul.f32 1.0, %v5943
    %v5945 = vrcp.pop %v5879
    %v5946 = vmul.f32 %v5879, %v5945
    %v5947 = vsub.f32 1.0, %v5946
    %v5948 = vmul.f32 %v5945, %v5947
    %v5949 = vadd.f32 %v5945, %v5948
    %vm5950 = vweird.f32 %v5879
    %vm5951 = vweird.f32 %v5945
    %vm5952 = vmor %vm5950, %vm5951
    %v5953 = vsel %vm5952, %v5945, %v5949
    %v5954 = vand.u32 2147483647, %v5879
    %vm5955 = vcmp.eq.f32.partialorder %v5954, 8.507059e+37
    %v5956 = vand.u32 %v5879, 2147483648
    %v5957 = vor.u32 1.1754944e-38, %v5956
    %v5958 = vsel %vm5955, %v5957, %v5953
    %v5959 = vmul.f32 1.0, %v5958
    %v5960 = vrcp.pop %v5880
    %v5961 = vmul.f32 %v5880, %v5960
    %v5962 = vsub.f32 1.0, %v5961
    %v5963 = vmul.f32 %v5960, %v5962
    %v5964 = vadd.f32 %v5960, %v5963
    %vm5965 = vweird.f32 %v5880
    %vm5966 = vweird.f32 %v5960
    %vm5967 = vmor %vm5965, %vm5966
    %v5968 = vsel %vm5967, %v5960, %v5964
    %v5969 = vand.u32 2147483647, %v5880
    %vm5970 = vcmp.eq.f32.partialorder %v5969, 8.507059e+37
    %v5971 = vand.u32 %v5880, 2147483648
    %v5972 = vor.u32 1.1754944e-38, %v5971
    %v5973 = vsel %vm5970, %v5972, %v5968
    %v5974 = vmul.f32 1.0, %v5973
    %v5975 = vrcp.pop %v5881
    %v5976 = vmul.f32 %v5881, %v5975
    %v5977 = vsub.f32 1.0, %v5976
    %v5978 = vmul.f32 %v5975, %v5977
    %v5979 = vadd.f32 %v5975, %v5978
    %vm5980 = vweird.f32 %v5881
    %vm5981 = vweird.f32 %v5975
    %vm5982 = vmor %vm5980, %vm5981
    %v5983 = vsel %vm5982, %v5975, %v5979
    %v5984 = vand.u32 2147483647, %v5881
    %vm5985 = vcmp.eq.f32.partialorder %v5984, 8.507059e+37
    %v5986 = vand.u32 %v5881, 2147483648
    %v5987 = vor.u32 1.1754944e-38, %v5986
    %v5988 = vsel %vm5985, %v5987, %v5983
    %v5989 = vmul.f32 1.0, %v5988
    %v5990 = vrcp.pop %v5882
    %v5991 = vmul.f32 %v5882, %v5990
    %v5992 = vsub.f32 1.0, %v5991
    %v5993 = vmul.f32 %v5990, %v5992
    %v5994 = vadd.f32 %v5990, %v5993
    %vm5995 = vweird.f32 %v5882
    %vm5996 = vweird.f32 %v5990
    %vm5997 = vmor %vm5995, %vm5996
    %v5998 = vsel %vm5997, %v5990, %v5994
    %v5999 = vand.u32 2147483647, %v5882
    %vm6000 = vcmp.eq.f32.partialorder %v5999, 8.507059e+37
    %v6001 = vand.u32 %v5882, 2147483648
    %v6002 = vor.u32 1.1754944e-38, %v6001
    %v6003 = vsel %vm6000, %v6002, %v5998
    %v6004 = vmul.f32 1.0, %v6003
    %v6005 = vrcp.pop %v5883
    %v6006 = vmul.f32 %v5883, %v6005
    %v6007 = vsub.f32 1.0, %v6006
    %v6008 = vmul.f32 %v6005, %v6007
    %v6009 = vadd.f32 %v6005, %v6008
    %vm6010 = vweird.f32 %v5883
    %vm6011 = vweird.f32 %v6005
    %vm6012 = vmor %vm6010, %vm6011
    %v6013 = vsel %vm6012, %v6005, %v6009
    %v6014 = vand.u32 2147483647, %v5883
    %vm6015 = vcmp.eq.f32.partialorder %v6014, 8.507059e+37
    %v6016 = vand.u32 %v5883, 2147483648
    %v6017 = vor.u32 1.1754944e-38, %v6016
    %v6018 = vsel %vm6015, %v6017, %v6013
    %v6019 = vmul.f32 1.0, %v6018
    %v6020 = vrcp.pop %v5884
    %v6021 = vmul.f32 %v5884, %v6020
    %v6022 = vsub.f32 1.0, %v6021
    %v6023 = vmul.f32 %v6020, %v6022
    %v6024 = vadd.f32 %v6020, %v6023
    %vm6025 = vweird.f32 %v5884
    %vm6026 = vweird.f32 %v6020
    %vm6027 = vmor %vm6025, %vm6026
    %v6028 = vsel %vm6027, %v6020, %v6024
    %v6029 = vand.u32 2147483647, %v5884
    %vm6030 = vcmp.eq.f32.partialorder %v6029, 8.507059e+37
    %v6031 = vand.u32 %v5884, 2147483648
    %v6032 = vor.u32 1.1754944e-38, %v6031
    %v6033 = vsel %vm6030, %v6032, %v6028
    %v6034 = vmul.f32 1.0, %v6033
    %v6035 = vmul.f32 %v5899, 1.0614054
    %v6036 = vmul.f32 %v5914, 1.0614054
    %v6037 = vmul.f32 %v5929, 1.0614054
    %v6038 = vmul.f32 %v5944, 1.0614054
    %v6039 = vmul.f32 %v5959, 1.0614054
    %v6040 = vmul.f32 %v5974, 1.0614054
    %v6041 = vmul.f32 %v5989, 1.0614054
    %v6042 = vmul.f32 %v6004, 1.0614054
    %v6043 = vmul.f32 %v6019, 1.0614054
    %v6044 = vmul.f32 %v6034, 1.0614054
    %v6045 = vadd.f32 %v6035, -1.4531521
    %v6046 = vadd.f32 %v6036, -1.4531521
    %v6047 = vadd.f32 %v6037, -1.4531521
    %v6048 = vadd.f32 %v6038, -1.4531521
    %v6049 = vadd.f32 %v6039, -1.4531521
    %v6050 = vadd.f32 %v6040, -1.4531521
    %v6051 = vadd.f32 %v6041, -1.4531521
    %v6052 = vadd.f32 %v6042, -1.4531521
    %v6053 = vadd.f32 %v6043, -1.4531521
    %v6054 = vadd.f32 %v6044, -1.4531521
    %v6055 = vmul.f32 %v6045, %v5899
    %v6056 = vmul.f32 %v6046, %v5914
    %v6057 = vmul.f32 %v6047, %v5929
    %v6058 = vmul.f32 %v6048, %v5944
    %v6059 = vmul.f32 %v6049, %v5959
    %v6060 = vmul.f32 %v6050, %v5974
    %v6061 = vmul.f32 %v6051, %v5989
    %v6062 = vmul.f32 %v6052, %v6004
    %v6063 = vmul.f32 %v6053, %v6019
    %v6064 = vmul.f32 %v6054, %v6034
    %v6065 = vadd.f32 %v6055, 1.4214138
    %v6066 = vadd.f32 %v6056, 1.4214138
    %v6067 = vadd.f32 %v6057, 1.4214138
    %v6068 = vadd.f32 %v6058, 1.4214138
    %v6069 = vadd.f32 %v6059, 1.4214138
    %v6070 = vadd.f32 %v6060, 1.4214138
    %v6071 = vadd.f32 %v6061, 1.4214138
    %v6072 = vadd.f32 %v6062, 1.4214138
    %v6073 = vadd.f32 %v6063, 1.4214138
    %v6074 = vadd.f32 %v6064, 1.4214138
    %v6075 = vmul.f32 %v6065, %v5899
    %v6076 = vmul.f32 %v6066, %v5914
    %v6077 = vmul.f32 %v6067, %v5929
    %v6078 = vmul.f32 %v6068, %v5944
    %v6079 = vmul.f32 %v6069, %v5959
    %v6080 = vmul.f32 %v6070, %v5974
    %v6081 = vmul.f32 %v6071, %v5989
    %v6082 = vmul.f32 %v6072, %v6004
    %v6083 = vmul.f32 %v6073, %v6019
    %v6084 = vmul.f32 %v6074, %v6034
    %v6085 = vadd.f32 %v6075, -0.28449672
    %v6086 = vadd.f32 %v6076, -0.28449672
    %v6087 = vadd.f32 %v6077, -0.28449672
    %v6088 = vadd.f32 %v6078, -0.28449672
    %v6089 = vadd.f32 %v6079, -0.28449672
    %v6090 = vadd.f32 %v6080, -0.28449672
    %v6091 = vadd.f32 %v6081, -0.28449672
    %v6092 = vadd.f32 %v6082, -0.28449672
    %v6093 = vadd.f32 %v6083, -0.28449672
    %v6094 = vadd.f32 %v6084, -0.28449672
    %v6095 = vmul.f32 %v6085, %v5899
    %v6096 = vmul.f32 %v6086, %v5914
    %v6097 = vmul.f32 %v6087, %v5929
    %v6098 = vmul.f32 %v6088, %v5944
    %v6099 = vmul.f32 %v6089, %v5959
    %v6100 = vmul.f32 %v6090, %v5974
    %v6101 = vmul.f32 %v6091, %v5989
    %v6102 = vmul.f32 %v6092, %v6004
    %v6103 = vmul.f32 %v6093, %v6019
    %v6104 = vmul.f32 %v6094, %v6034
    %v6105 = vadd.f32 %v6095, 0.2548296
    %v6106 = vadd.f32 %v6096, 0.2548296
    %v6107 = vadd.f32 %v6097, 0.2548296
    %v6108 = vadd.f32 %v6098, 0.2548296
    %v6109 = vadd.f32 %v6099, 0.2548296
    %v6110 = vadd.f32 %v6100, 0.2548296
    %v6111 = vadd.f32 %v6101, 0.2548296
    %v6112 = vadd.f32 %v6102, 0.2548296
    %v6113 = vadd.f32 %v6103, 0.2548296
    %v6114 = vadd.f32 %v6104, 0.2548296
    %v6115 = vmul.f32 %v6105, %v5899
    %v6116 = vmul.f32 %v6106, %v5914
    %v6117 = vmul.f32 %v6107, %v5929
    %v6118 = vmul.f32 %v6108, %v5944
    %v6119 = vmul.f32 %v6109, %v5959
    %v6120 = vmul.f32 %v6110, %v5974
    %v6121 = vmul.f32 %v6111, %v5989
    %v6122 = vmul.f32 %v6112, %v6004
    %v6123 = vmul.f32 %v6113, %v6019
    %v6124 = vmul.f32 %v6114, %v6034
    %v6125 = vsub.f32 0.0, %v5855
    %v6126 = vsub.f32 0.0, %v5856
    %v6127 = vsub.f32 0.0, %v5857
    %v6128 = vsub.f32 0.0, %v5858
    %v6129 = vsub.f32 0.0, %v5859
    %v6130 = vsub.f32 0.0, %v5860
    %v6131 = vsub.f32 0.0, %v5861
    %v6132 = vsub.f32 0.0, %v5862
    %v6133 = vsub.f32 0.0, %v5863
    %v6134 = vsub.f32 0.0, %v5864
    %v6135 = vmul.f32 %v6125, %v5855
    %v6136 = vmul.f32 %v6126, %v5856
    %v6137 = vmul.f32 %v6127, %v5857
    %v6138 = vmul.f32 %v6128, %v5858
    %v6139 = vmul.f32 %v6129, %v5859
    %v6140 = vmul.f32 %v6130, %v5860
    %v6141 = vmul.f32 %v6131, %v5861
    %v6142 = vmul.f32 %v6132, %v5862
    %v6143 = vmul.f32 %v6133, %v5863
    %v6144 = vmul.f32 %v6134, %v5864
    %v6145 = vmul.f32 %v6135, 1.442695
    %v6146 = vpow.pop %v6145
    %v6147 = vmul.f32 %v6136, 1.442695
    %v6148 = vpow.pop %v6147
    %v6149 = vmul.f32 %v6137, 1.442695
    %v6150 = vpow.pop %v6149
    %v6151 = vmul.f32 %v6138, 1.442695
    %v6152 = vpow.pop %v6151
    %v6153 = vmul.f32 %v6139, 1.442695
    %v6154 = vpow.pop %v6153
    %v6155 = vmul.f32 %v6140, 1.442695
    %v6156 = vpow.pop %v6155
    %v6157 = vmul.f32 %v6141, 1.442695
    %v6158 = vpow.pop %v6157
    %v6159 = vmul.f32 %v6142, 1.442695
    %v6160 = vpow.pop %v6159
    %v6161 = vmul.f32 %v6143, 1.442695
    %v6162 = vpow.pop %v6161
    %v6163 = vmul.f32 %v6144, 1.442695
    %v6164 = vpow.pop %v6163
    %v6165 = vmul.f32 %v6115, %v6146
    %v6166 = vmul.f32 %v6116, %v6148
    %v6167 = vmul.f32 %v6117, %v6150
    %v6168 = vmul.f32 %v6118, %v6152
    %v6169 = vmul.f32 %v6119, %v6154
    %v6170 = vmul.f32 %v6120, %v6156
    %v6171 = vmul.f32 %v6121, %v6158
    %v6172 = vmul.f32 %v6122, %v6160
    %v6173 = vmul.f32 %v6123, %v6162
    %v6174 = vmul.f32 %v6124, %v6164
    %v6175 = vsub.f32 1.0, %v6165
    %v6176 = vsub.f32 1.0, %v6166
    %v6177 = vsub.f32 1.0, %v6167
    %v6178 = vsub.f32 1.0, %v6168
    %v6179 = vsub.f32 1.0, %v6169
    %v6180 = vsub.f32 1.0, %v6170
    %v6181 = vsub.f32 1.0, %v6171
    %v6182 = vsub.f32 1.0, %v6172
    %v6183 = vsub.f32 1.0, %v6173
    %v6184 = vsub.f32 1.0, %v6174
    %v6185 = vmul.f32 %v5845, %v6175
    %v6186 = vmul.f32 %v5846, %v6176
    %v6187 = vmul.f32 %v5847, %v6177
    %v6188 = vmul.f32 %v5848, %v6178
    %v6189 = vmul.f32 %v5849, %v6179
    %v6190 = vmul.f32 %v5850, %v6180
    %v6191 = vmul.f32 %v5851, %v6181
    %v6192 = vmul.f32 %v5852, %v6182
    %v6193 = vmul.f32 %v5853, %v6183
    %v6194 = vmul.f32 %v5854, %v6184
    %v6195 = vadd.f32 %v6185, 1.0
    %v6196 = vadd.f32 %v6186, 1.0
    %v6197 = vadd.f32 %v6187, 1.0
    %v6198 = vadd.f32 %v6188, 1.0
    %v6199 = vadd.f32 %v6189, 1.0
    %v6200 = vadd.f32 %v6190, 1.0
    %v6201 = vadd.f32 %v6191, 1.0
    %v6202 = vadd.f32 %v6192, 1.0
    %v6203 = vadd.f32 %v6193, 1.0
    %v6204 = vadd.f32 %v6194, 1.0
    %v6205 = vmul.f32 %v5815, %v6195
    %v6206 = vmul.f32 %v5816, %v6196
    %v6207 = vmul.f32 %v5817, %v6197
    %v6208 = vmul.f32 %v5818, %v6198
    %v6209 = vmul.f32 %v5819, %v6199
    %v6210 = vmul.f32 %v5820, %v6200
    %v6211 = vmul.f32 %v5821, %v6201
    %v6212 = vmul.f32 %v5822, %v6202
    %v6213 = vmul.f32 %v5823, %v6203
    %v6214 = vmul.f32 %v5824, %v6204
    %6215 = vst [vmem:[%s6] sm:$0xff] %v6205
    %6216 = vst [vmem:[%s6 + $0x8] sm:$0xff] %v6206
    %6217 = vst [vmem:[%s6 + $0x10] sm:$0xff] %v6207
    %6218 = vst [vmem:[%s6 + $0x18] sm:$0xff] %v6208
    %6219 = vst [vmem:[%s6 + $0x20] sm:$0xff] %v6209
    %6220 = vst [vmem:[%s6 + $0x28] sm:$0xff] %v6210
    %6221 = vst [vmem:[%s6 + $0x30] sm:$0xff] %v6211
    %6222 = vst [vmem:[%s6 + $0x38] sm:$0xff] %v6212
    %6223 = vst [vmem:[%s6 + $0x40] sm:$0xff] %v6213
    %6224 = vst [vmem:[%s6 + $0x48] sm:$0xff] %v6214
    // Predicated region
    $region34: #{_lambda_.1} parent=1 // pred_check
      _
    $region35: #{_lambda_.1} parent=1 // pred_check_branch
      %6226 = sbr.rel (0) target = $region37
    $region36: #{_lambda_.1} parent=1 // pred_region
      _
    $region37: #{_lambda_.1} parent=1 // pred_fallthru
      _
    // Predicated region
    $region38: #{_lambda_.1} parent=1 // pred_check
      _
    $region39: #{_lambda_.1} parent=1 // pred_check_branch
      %6228 = sbr.rel (0) target = $region41
    $region40: #{_lambda_.1} parent=1 // pred_region
      _
    $region41: #{_lambda_.1} parent=1 // pred_fallthru
      _
    %6229 = vsyncpa [#allocation5], 1
    %6230 = vsyncpa [#allocation7], 1

</llo_original>
